<compile_context>
chip_gen: v6e
topology: v6e:2x2x1
jax: 0.10.0
libtpu: 0.0.40
codegen_flags: <defaults>
</compile_context>

<pallas_src>
import functools

import jax
import jax.numpy as jnp
from jax import lax
from jax.experimental import pallas as pl
from jax.experimental.pallas import tpu as pltpu


# k=3 convs that read *staged* (windowed) activations: 2 per residual block x 4
# blocks = 8.  The halo must cover that so window-edge errors never reach the
# tile's center rows.  (The stem is exact: its taps are gathered in the wrapper.)
_NUM_STAGED_CONV3 = 8
_HALO = 16                      # >= _NUM_STAGED_CONV3, multiple of 16 for bf16 tiling
assert _HALO >= _NUM_STAGED_CONV3, "halo must cover every staged k=3 conv"
assert _HALO % 16 == 0
_LANE = 128


def _round_up(x, m):
    return ((x + m - 1) // m) * m


# ------------------------------ fused kernel ---------------------------------

def _transaid_fused_kernel(
        xw_ref,                                           # (tw, 3*Cin) bf16, stem taps folded
        w0, s0, t0,                                       # stem (12,32) bf16 + folded BN
        b1w1, b1s1, b1t1, b1w2, b1s2, b1t2,               # block1 32->32 (folded, identity sc)
        b2w1, b2s1, b2t1, b2w2, b2s2, b2t2, b2ws, b2ts,   # block2 32->64 (folded)
        b3w1, b3s1, b3t1, b3w2, b3s2, b3t2, b3ws, b3ts,   # block3 64->128 (conv1 folded)
        b4w1, b4s1, b4t1, b4w2, b4s2, b4t2, b4ws, b4ts,   # block4 128->256 (3-tap)
        wf, tf,                                           # 1x1 head (lane-padded)
        o_ref,
        s96, s192, s128, s256,                            # f32 staging scratches
        *, seq_len, tile_l, halo):
    tw = tile_l + 2 * halo
    lt = pl.program_id(1)

    # Validity mask: window row r corresponds to true position p = lt*tile_l + r - halo.
    # Zeroing invalid rows per layer reproduces conv pad=1's zero padding at the
    # true sequence ends (which may fall in the middle of a window).
    r = lax.broadcasted_iota(jnp.int32, (tw, 1), 0)
    p = lt * tile_l + r - halo
    valid = jnp.logical_and(p >= 0, p < seq_len)

    def mask(v):
        return jnp.where(valid, v, 0.0)

    def bn_relu(acc, s, t):
        return jnp.maximum(acc * s[...] + t[...], 0.0)

    def conv3_folded(h, scr, wcat, cin):
        # h: (tw, cin) f32.  scr: (tw+2, 3*cin) f32.  wcat: (3*cin, cout) bf16.
        # Column group g of scr holds h shifted so reading rows [1, 1+tw) yields
        # [h[r-1] | h[r] | h[r+1]] with zero rows at the window boundaries.
        c3 = 3 * cin
        scr[pl.ds(0, 2), :] = jnp.zeros((2, c3), jnp.float32)
        scr[pl.ds(tw, 2), :] = jnp.zeros((2, c3), jnp.float32)
        scr[pl.ds(2, tw), pl.ds(0, cin)] = h            # -> h[r-1] at read row 1+r
        scr[pl.ds(1, tw), pl.ds(cin, cin)] = h          # -> h[r]
        scr[pl.ds(0, tw), pl.ds(2 * cin, cin)] = h      # -> h[r+1]
        hcat = scr[pl.ds(1, tw), :].astype(jnp.bfloat16)
        return jnp.dot(hcat, wcat[...], preferred_element_type=jnp.float32)

    def conv3_taps(h, scr, w3):
        # h: (tw, cin) f32.  scr: (tw+2, cin) f32 zero-edged.  w3: (3, cin, cout) bf16.
        c = scr.shape[1]
        scr[pl.ds(0, 1), :] = jnp.zeros((1, c), jnp.float32)
        scr[pl.ds(tw + 1, 1), :] = jnp.zeros((1, c), jnp.float32)
        scr[pl.ds(1, tw), :] = h
        acc = jnp.dot(h.astype(jnp.bfloat16), w3[1], preferred_element_type=jnp.float32)
        acc = acc + jnp.dot(scr[pl.ds(0, tw), :].astype(jnp.bfloat16), w3[0],
                            preferred_element_type=jnp.float32)
        acc = acc + jnp.dot(scr[pl.ds(2, tw), :].astype(jnp.bfloat16), w3[2],
                            preferred_element_type=jnp.float32)
        return acc

    def shortcut(h, ws, ts):
        return jnp.dot(h.astype(jnp.bfloat16), ws[...],
                       preferred_element_type=jnp.float32) + ts[...]

    # --- stem: taps already folded onto the input channels by the wrapper ------
    h = mask(bn_relu(jnp.dot(xw_ref[...], w0[...],
                             preferred_element_type=jnp.float32), s0, t0))

    # --- block 1: 32 -> 32, identity shortcut ----------------------------------
    u = mask(bn_relu(conv3_folded(h, s96, b1w1, 32), b1s1, b1t1))
    u = conv3_folded(u, s96, b1w2, 32) * b1s2[...] + b1t2[...]
    h = mask(jnp.maximum(u + h, 0.0))

    # --- block 2: 32 -> 64 ------------------------------------------------------
    u = mask(bn_relu(conv3_folded(h, s96, b2w1, 32), b2s1, b2t1))
    u = conv3_folded(u, s192, b2w2, 64) * b2s2[...] + b2t2[...]
    h = mask(jnp.maximum(u + shortcut(h, b2ws, b2ts), 0.0))

    # --- block 3: 64 -> 128 -----------------------------------------------------
    u = mask(bn_relu(conv3_folded(h, s192, b3w1, 64), b3s1, b3t1))
    u = conv3_taps(u, s128, b3w2) * b3s2[...] + b3t2[...]
    h = mask(jnp.maximum(u + shortcut(h, b3ws, b3ts), 0.0))

    # --- block 4: 128 -> 256 (final mask skipped: head is 1x1, tail is sliced) --
    u = mask(bn_relu(conv3_taps(h, s128, b4w1), b4s1, b4t1))
    u = conv3_taps(u, s256, b4w2) * b4s2[...] + b4t2[...]
    h = jnp.maximum(u + shortcut(h, b4ws, b4ts), 0.0)

    # --- 1x1 head on the center rows only (lane-dense, C_out padded to 128) ----
    hc = h[halo:halo + tile_l, :].astype(jnp.bfloat16)
    o_ref[...] = (jnp.dot(hc, wf[...], preferred_element_type=jnp.float32)
                  + tf[...]).astype(o_ref.dtype)


# --------------------------- pallas_call wrapper ------------------------------

def _fold_w(w):
    # (3, cin, cout) -> (3*cin, cout); tap-major to match the staged layout.
    return jnp.concatenate([w[0], w[1], w[2]], axis=0)


def _vmem_limit_bytes():
    # ~3/4 of per-core VMEM: ~96 MiB on v5e/v6e (128 MiB), ~48 MiB on v7x (64 MiB).
    try:
        cap = int(getattr(pltpu.get_tpu_info(), "vmem_capacity_bytes",
                          64 * 1024 * 1024))
    except Exception:
        cap = 64 * 1024 * 1024
    return max(32 * 1024 * 1024, min(100 * 1024 * 1024, (cap * 3) // 4))


def transaid_forward(x, params, tile_l=None):
    """Fused TRANSAID forward. x: (N, L, C_in) -> (N, L, C_out)."""
    stem, blocks, head = params
    n, seq_len, cin = x.shape
    halo = _HALO

    if tile_l is None:
        tile_l = 2048                               # large tile: halo waste < 2%
    tile_l = max(16, _round_up(min(tile_l, _round_up(seq_len, 16)), 16))
    lp = _round_up(seq_len, tile_l)
    n_lt = lp // tile_l
    tw = tile_l + 2 * halo

    # Overlapping halo windows with the stem's 3 conv taps folded onto channels:
    #   xwin[b, j, r, :] = [x[p-1] | x[p] | x[p+1]],  p = j*tile_l + r - halo,
    # zeros outside [0, seq_len).  VMEM usage per grid step is O(tile), not O(L).
    pade = halo + 1
    xpad = jnp.zeros((n, lp + 2 * pade, cin), jnp.float32)
    xpad = xpad.at[:, pade:pade + seq_len, :].set(x.astype(jnp.float32))
    row = (jnp.arange(n_lt, dtype=jnp.int32)[:, None] * tile_l
           + jnp.arange(tw, dtype=jnp.int32)[None, :] + (pade - halo))       # (n_lt, tw)
    xwin = jnp.concatenate(
        [xpad[:, row - 1, :], xpad[:, row, :], xpad[:, row + 1, :]], axis=-1)
    xwin = xwin.astype(jnp.bfloat16)                                         # (n, n_lt, tw, 3*cin)

    # Weights: bf16 (single-pass MXU), conv taps folded for C_in in {4, 32, 64};
    # BN scale/shift and biases stay f32 (applied to the f32 accumulators).
    bf = jnp.bfloat16
    w0, s0, t0 = stem
    flat = [_fold_w(w0).astype(bf), s0, t0]

    w1, s1, t1, w2, s2, t2 = blocks[0]                       # 32->32 identity
    flat += [_fold_w(w1).astype(bf), s1, t1, _fold_w(w2).astype(bf), s2, t2]

    w1, s1, t1, w2, s2, t2, ws, ts = blocks[1]               # 32->64
    flat += [_fold_w(w1).astype(bf), s1, t1, _fold_w(w2).astype(bf), s2, t2,
             ws.astype(bf), ts]

    w1, s1, t1, w2, s2, t2, ws, ts = blocks[2]               # 64->128
    flat += [_fold_w(w1).astype(bf), s1, t1, w2.astype(bf), s2, t2,
             ws.astype(bf), ts]

    w1, s1, t1, w2, s2, t2, ws, ts = blocks[3]               # 128->256
    flat += [w1.astype(bf), s1, t1, w2.astype(bf), s2, t2, ws.astype(bf), ts]

    wf, tf = head
    cout = wf.shape[1]
    cout_pad = _round_up(max(cout, _LANE), _LANE)            # lane-dense output stores
    wf_p = jnp.zeros((wf.shape[0], cout_pad), jnp.float32).at[:, :cout].set(wf).astype(bf)
    tf_p = jnp.zeros((1, cout_pad), jnp.float32).at[:, :cout].set(tf)
    flat += [wf_p, tf_p]

    # Windowed input block; constant-index full-shape blocks keep weights resident.
    in_specs = [pl.BlockSpec((None, None, tw, 3 * cin), lambda i, j: (i, j, 0, 0))]
    for prm in flat:
        in_specs.append(
            pl.BlockSpec(prm.shape, lambda i, j, _nd=prm.ndim: (0,) * _nd))
    out_specs = pl.BlockSpec((None, tile_l, cout_pad), lambda i, j: (i, j, 0))

    scratch_shapes = [pltpu.VMEM((tw + 2, c), jnp.float32)
                      for c in (96, 192, 128, 256)]

    macs_per_row = 0
    for prm in flat:
        if prm.ndim == 3:
            macs_per_row += prm.shape[0] * prm.shape[1] * prm.shape[2]
        elif prm.ndim == 2 and prm.shape[0] > 1:
            macs_per_row += prm.shape[0] * prm.shape[1]
    cost = pl.CostEstimate(
        flops=2 * n * lp * macs_per_row,
        transcendentals=0,
        bytes_accessed=int(xwin.size) * 2
        + sum(int(prm.size) * prm.dtype.itemsize for prm in flat)
        + n * lp * cout_pad * 4)

    kern = functools.partial(_transaid_fused_kernel,
                             seq_len=seq_len, tile_l=tile_l, halo=halo)

    out = pl.pallas_call(
        kern,
        out_shape=jax.ShapeDtypeStruct((n, lp, cout_pad), jnp.float32),
        grid=(n, n_lt),
        in_specs=in_specs,
        out_specs=out_specs,
        scratch_shapes=scratch_shapes,
        compiler_params=pltpu.CompilerParams(
            dimension_semantics=("parallel", "parallel"),
            vmem_limit_bytes=_vmem_limit_bytes()),
        cost_estimate=cost,
    )(xwin, *flat)

    return out[:, :seq_len, :cout]


# ------------------------- parameter construction ----------------------------

def init_conv3_bn(key, cin, cout, eps=1e-5):
    k1, k2, k3, k4, k5, k6 = jax.random.split(key, 6)
    w = 0.1 * jax.random.normal(k1, (3, cin, cout), jnp.float32)   # torch w[co,ci,k] transposed
    b = 0.1 * jax.random.normal(k2, (cout,), jnp.float32)
    gamma = 1.0 + 0.1 * jax.random.normal(k3, (cout,), jnp.float32)
    beta = 0.1 * jax.random.normal(k4, (cout,), jnp.float32)
    mean = 0.1 * jax.random.normal(k5, (cout,), jnp.float32)
    var = 1.0 + 0.1 * jnp.abs(jax.random.normal(k6, (cout,), jnp.float32))
    s = gamma / jnp.sqrt(var + eps)
    t = (b - mean) * s + beta
    return w, s.reshape(1, cout), t.reshape(1, cout)


def init_resblock(key, cin, cout):
    k1, k2, k3, k4 = jax.random.split(key, 4)
    w1, s1, t1 = init_conv3_bn(k1, cin, cout)
    w2, s2, t2 = init_conv3_bn(k2, cout, cout)
    if cin == cout:
        return (w1, s1, t1, w2, s2, t2)                  # identity shortcut
    ws = 0.1 * jax.random.normal(k3, (cin, cout), jnp.float32)
    ts = 0.1 * jax.random.normal(k4, (1, cout), jnp.float32)
    return (w1, s1, t1, w2, s2, t2, ws, ts)


def init_transaid(key, input_channels=4, output_channels=3):
    keys = jax.random.split(key, 7)
    stem = init_conv3_bn(keys[0], input_channels, 32)
    blocks = [
        init_resblock(keys[1], 32, 32),
        init_resblock(keys[2], 32, 64),
        init_resblock(keys[3], 64, 128),
        init_resblock(keys[4], 128, 256),
    ]
    wf = 0.1 * jax.random.normal(keys[5], (256, output_channels), jnp.float32)
    tf = 0.1 * jax.random.normal(keys[6], (1, output_channels), jnp.float32)
    return stem, blocks, (wf, tf)


# ---------------------------- pure-JAX reference ------------------------------
# Matches the kernel's (documented) precision policy: bf16 matmul inputs with f32
# accumulation; BN / ReLU / residual math in f32.

def _dot_bf16(a, b):
    return jnp.dot(a.astype(jnp.bfloat16), b.astype(jnp.bfloat16),
                   preferred_element_type=jnp.float32)


def _conv3_ref(x, w):
    xz = jnp.pad(x, ((0, 0), (1, 1), (0, 0)))
    return (_dot_bf16(xz[:, :-2], w[0]) + _dot_bf16(xz[:, 1:-1], w[1])
            + _dot_bf16(xz[:, 2:], w[2]))


def transaid_ref(x, params):
    stem, blocks, head = params
    w, s, t = stem
    h = jnp.maximum(_conv3_ref(x, w) * s + t, 0.0)
    for blk in blocks:
        if len(blk) == 6:
            w1, s1, t1, w2, s2, t2 = blk
            ws = ts = None
        else:
            w1, s1, t1, w2, s2, t2, ws, ts = blk
        u = jnp.maximum(_conv3_ref(h, w1) * s1 + t1, 0.0)
        u = _conv3_ref(u, w2) * s2 + t2
        sc = h if ws is None else (_dot_bf16(h, ws) + ts)
        h = jnp.maximum(u + sc, 0.0)
    wf, tf = head
    return _dot_bf16(h, wf) + tf


# --------------------------------- main ---------------------------------------

if __name__ == "__main__":
    key = jax.random.PRNGKey(0)
    pkey, xkey = jax.random.split(key)
    params = init_transaid(pkey, input_channels=4, output_channels=3)

    # L=300 with a 128-row tile -> 3 L tiles including a ragged tail: exercises the
    # halo windows and the sequence-boundary validity mask.
    N, L, C_IN = 2, 300, 4
    x = jax.random.normal(xkey, (N, L, C_IN), jnp.float32)   # PyTorch-equivalent (N, L, C)

    fwd = jax.jit(functools.partial(transaid_forward, tile_l=128))
    out = jax.block_until_ready(fwd(x, params))

    ref = transaid_ref(x, params)
    assert out.shape == (N, L, 3), out.shape
    err = float(jnp.max(jnp.abs(out - ref)))
    assert jnp.allclose(out, ref, atol=1e-2, rtol=1e-2), err

    print("KERNEL_OK")
</pallas_src>

<mosaic_0001>
module attributes {stable_mosaic.version = 11 : i64} {
  func.func @_transaid_fused_kernel(%arg0: i32, %arg1: i32, %arg2: memref<1x1x160x12xbf16, #tpu.memory_space<vmem>>, %arg3: memref<12x32xbf16, #tpu.memory_space<vmem>>, %arg4: memref<1x32xf32, #tpu.memory_space<vmem>>, %arg5: memref<1x32xf32, #tpu.memory_space<vmem>>, %arg6: memref<96x32xbf16, #tpu.memory_space<vmem>>, %arg7: memref<1x32xf32, #tpu.memory_space<vmem>>, %arg8: memref<1x32xf32, #tpu.memory_space<vmem>>, %arg9: memref<96x32xbf16, #tpu.memory_space<vmem>>, %arg10: memref<1x32xf32, #tpu.memory_space<vmem>>, %arg11: memref<1x32xf32, #tpu.memory_space<vmem>>, %arg12: memref<96x64xbf16, #tpu.memory_space<vmem>>, %arg13: memref<1x64xf32, #tpu.memory_space<vmem>>, %arg14: memref<1x64xf32, #tpu.memory_space<vmem>>, %arg15: memref<192x64xbf16, #tpu.memory_space<vmem>>, %arg16: memref<1x64xf32, #tpu.memory_space<vmem>>, %arg17: memref<1x64xf32, #tpu.memory_space<vmem>>, %arg18: memref<32x64xbf16, #tpu.memory_space<vmem>>, %arg19: memref<1x64xf32, #tpu.memory_space<vmem>>, %arg20: memref<192x128xbf16, #tpu.memory_space<vmem>>, %arg21: memref<1x128xf32, #tpu.memory_space<vmem>>, %arg22: memref<1x128xf32, #tpu.memory_space<vmem>>, %arg23: memref<3x128x128xbf16, #tpu.memory_space<vmem>>, %arg24: memref<1x128xf32, #tpu.memory_space<vmem>>, %arg25: memref<1x128xf32, #tpu.memory_space<vmem>>, %arg26: memref<64x128xbf16, #tpu.memory_space<vmem>>, %arg27: memref<1x128xf32, #tpu.memory_space<vmem>>, %arg28: memref<3x128x256xbf16, #tpu.memory_space<vmem>>, %arg29: memref<1x256xf32, #tpu.memory_space<vmem>>, %arg30: memref<1x256xf32, #tpu.memory_space<vmem>>, %arg31: memref<3x256x256xbf16, #tpu.memory_space<vmem>>, %arg32: memref<1x256xf32, #tpu.memory_space<vmem>>, %arg33: memref<1x256xf32, #tpu.memory_space<vmem>>, %arg34: memref<128x256xbf16, #tpu.memory_space<vmem>>, %arg35: memref<1x256xf32, #tpu.memory_space<vmem>>, %arg36: memref<256x128xbf16, #tpu.memory_space<vmem>>, %arg37: memref<1x128xf32, #tpu.memory_space<vmem>>, %arg38: memref<1x128x128xf32, #tpu.memory_space<vmem>>, %arg39: memref<162x96xf32, #tpu.memory_space<vmem>>, %arg40: memref<162x192xf32, #tpu.memory_space<vmem>>, %arg41: memref<162x128xf32, #tpu.memory_space<vmem>>, %arg42: memref<162x256xf32, #tpu.memory_space<vmem>>) attributes {dimension_semantics = [#tpu.dimension_semantics<parallel>, #tpu.dimension_semantics<parallel>], iteration_bounds = array<i64: 2, 3>, scalar_prefetch = 0 : i64, scratch_operands = 4 : i64, tpu.core_type = #tpu.core_type<tc>, window_params = [{transform_indices = @transform_0, window_bounds = array<i64: 1, 1, 160, 12>}, {pipeline_mode = #tpu.pipeline_mode<synchronous>, transform_indices = @transform_1, window_bounds = array<i64: 12, 32>}, {pipeline_mode = #tpu.pipeline_mode<synchronous>, transform_indices = @transform_2, window_bounds = array<i64: 1, 32>}, {pipeline_mode = #tpu.pipeline_mode<synchronous>, transform_indices = @transform_3, window_bounds = array<i64: 1, 32>}, {pipeline_mode = #tpu.pipeline_mode<synchronous>, transform_indices = @transform_4, window_bounds = array<i64: 96, 32>}, {pipeline_mode = #tpu.pipeline_mode<synchronous>, transform_indices = @transform_5, window_bounds = array<i64: 1, 32>}, {pipeline_mode = #tpu.pipeline_mode<synchronous>, transform_indices = @transform_6, window_bounds = array<i64: 1, 32>}, {pipeline_mode = #tpu.pipeline_mode<synchronous>, transform_indices = @transform_7, window_bounds = array<i64: 96, 32>}, {pipeline_mode = #tpu.pipeline_mode<synchronous>, transform_indices = @transform_8, window_bounds = array<i64: 1, 32>}, {pipeline_mode = #tpu.pipeline_mode<synchronous>, transform_indices = @transform_9, window_bounds = array<i64: 1, 32>}, {pipeline_mode = #tpu.pipeline_mode<synchronous>, transform_indices = @transform_10, window_bounds = array<i64: 96, 64>}, {pipeline_mode = #tpu.pipeline_mode<synchronous>, transform_indices = @transform_11, window_bounds = array<i64: 1, 64>}, {pipeline_mode = #tpu.pipeline_mode<synchronous>, transform_indices = @transform_12, window_bounds = array<i64: 1, 64>}, {pipeline_mode = #tpu.pipeline_mode<synchronous>, transform_indices = @transform_13, window_bounds = array<i64: 192, 64>}, {pipeline_mode = #tpu.pipeline_mode<synchronous>, transform_indices = @transform_14, window_bounds = array<i64: 1, 64>}, {pipeline_mode = #tpu.pipeline_mode<synchronous>, transform_indices = @transform_15, window_bounds = array<i64: 1, 64>}, {pipeline_mode = #tpu.pipeline_mode<synchronous>, transform_indices = @transform_16, window_bounds = array<i64: 32, 64>}, {pipeline_mode = #tpu.pipeline_mode<synchronous>, transform_indices = @transform_17, window_bounds = array<i64: 1, 64>}, {pipeline_mode = #tpu.pipeline_mode<synchronous>, transform_indices = @transform_18, window_bounds = array<i64: 192, 128>}, {pipeline_mode = #tpu.pipeline_mode<synchronous>, transform_indices = @transform_19, window_bounds = array<i64: 1, 128>}, {pipeline_mode = #tpu.pipeline_mode<synchronous>, transform_indices = @transform_20, window_bounds = array<i64: 1, 128>}, {pipeline_mode = #tpu.pipeline_mode<synchronous>, transform_indices = @transform_21, window_bounds = array<i64: 3, 128, 128>}, {pipeline_mode = #tpu.pipeline_mode<synchronous>, transform_indices = @transform_22, window_bounds = array<i64: 1, 128>}, {pipeline_mode = #tpu.pipeline_mode<synchronous>, transform_indices = @transform_23, window_bounds = array<i64: 1, 128>}, {pipeline_mode = #tpu.pipeline_mode<synchronous>, transform_indices = @transform_24, window_bounds = array<i64: 64, 128>}, {pipeline_mode = #tpu.pipeline_mode<synchronous>, transform_indices = @transform_25, window_bounds = array<i64: 1, 128>}, {pipeline_mode = #tpu.pipeline_mode<synchronous>, transform_indices = @transform_26, window_bounds = array<i64: 3, 128, 256>}, {pipeline_mode = #tpu.pipeline_mode<synchronous>, transform_indices = @transform_27, window_bounds = array<i64: 1, 256>}, {pipeline_mode = #tpu.pipeline_mode<synchronous>, transform_indices = @transform_28, window_bounds = array<i64: 1, 256>}, {pipeline_mode = #tpu.pipeline_mode<synchronous>, transform_indices = @transform_29, window_bounds = array<i64: 3, 256, 256>}, {pipeline_mode = #tpu.pipeline_mode<synchronous>, transform_indices = @transform_30, window_bounds = array<i64: 1, 256>}, {pipeline_mode = #tpu.pipeline_mode<synchronous>, transform_indices = @transform_31, window_bounds = array<i64: 1, 256>}, {pipeline_mode = #tpu.pipeline_mode<synchronous>, transform_indices = @transform_32, window_bounds = array<i64: 128, 256>}, {pipeline_mode = #tpu.pipeline_mode<synchronous>, transform_indices = @transform_33, window_bounds = array<i64: 1, 256>}, {pipeline_mode = #tpu.pipeline_mode<synchronous>, transform_indices = @transform_34, window_bounds = array<i64: 256, 128>}, {pipeline_mode = #tpu.pipeline_mode<synchronous>, transform_indices = @transform_35, window_bounds = array<i64: 1, 128>}, {transform_indices = @transform_36, window_bounds = array<i64: 1, 128, 128>}]} {
    %0 = tpu.iota {dimensions = array<i32: 0>} : vector<160x1xi32>
    %c128_i32 = arith.constant 128 : i32
    %1 = arith.muli %arg1, %c128_i32 : i32
    %2 = vector.broadcast %1 : i32 to vector<160x1xi32>
    %3 = arith.addi %2, %0 : vector<160x1xi32>
    %c16_i32 = arith.constant 16 : i32
    %4 = vector.broadcast %c16_i32 : i32 to vector<160x1xi32>
    %5 = arith.subi %3, %4 : vector<160x1xi32>
    %c0_i32 = arith.constant 0 : i32
    %6 = vector.broadcast %c0_i32 : i32 to vector<160x1xi32>
    %7 = arith.cmpi sge, %5, %6 : vector<160x1xi32>
    %c300_i32 = arith.constant 300 : i32
    %8 = vector.broadcast %c300_i32 : i32 to vector<160x1xi32>
    %9 = arith.cmpi slt, %5, %8 : vector<160x1xi32>
    %10 = arith.andi %7, %9 : vector<160x1xi1>
    %c0 = arith.constant 0 : index
    %c0_0 = arith.constant 0 : index
    %c0_1 = arith.constant 0 : index
    %c0_2 = arith.constant 0 : index
    %11 = vector.load %arg2[%c0, %c0_0, %c0_1, %c0_2] : memref<1x1x160x12xbf16, #tpu.memory_space<vmem>>, vector<1x1x160x12xbf16>
    %12 = vector.shape_cast %11 : vector<1x1x160x12xbf16> to vector<160x12xbf16>
    %c0_3 = arith.constant 0 : index
    %c0_4 = arith.constant 0 : index
    %13 = vector.load %arg3[%c0_3, %c0_4] : memref<12x32xbf16, #tpu.memory_space<vmem>>, vector<12x32xbf16>
    %cst = arith.constant dense<0.000000e+00> : vector<160x32xf32>
    %14 = tpu.matmul %12, %13, %cst {dimension_numbers = #tpu.dot_dimension_numbers<[1], [0], [0], [1], [0, 0, 1, 1], [], []>} : vector<160x12xbf16>, vector<12x32xbf16>, vector<160x32xf32> -> vector<160x32xf32>
    %c0_5 = arith.constant 0 : index
    %c0_6 = arith.constant 0 : index
    %15 = vector.load %arg4[%c0_5, %c0_6] : memref<1x32xf32, #tpu.memory_space<vmem>>, vector<1x32xf32>
    %16 = vector.broadcast %15 : vector<1x32xf32> to vector<160x32xf32>
    %17 = arith.mulf %14, %16 : vector<160x32xf32>
    %c0_7 = arith.constant 0 : index
    %c0_8 = arith.constant 0 : index
    %18 = vector.load %arg5[%c0_7, %c0_8] : memref<1x32xf32, #tpu.memory_space<vmem>>, vector<1x32xf32>
    %19 = vector.broadcast %18 : vector<1x32xf32> to vector<160x32xf32>
    %20 = arith.addf %17, %19 : vector<160x32xf32>
    %cst_9 = arith.constant 0.000000e+00 : f32
    %21 = vector.broadcast %cst_9 : f32 to vector<160x32xf32>
    %22 = arith.maximumf %20, %21 : vector<160x32xf32>
    %cst_10 = arith.constant 0.000000e+00 : f32
    %23 = vector.shape_cast %10 : vector<160x1xi1> to vector<160x1xi1>
    %24 = vector.broadcast %23 : vector<160x1xi1> to vector<160x32xi1>
    %25 = vector.broadcast %cst_10 : f32 to vector<160x32xf32>
    %26 = arith.select %24, %22, %25 : vector<160x32xi1>, vector<160x32xf32>
    %cst_11 = arith.constant 0.000000e+00 : f32
    %27 = vector.broadcast %cst_11 : f32 to vector<2x96xf32>
    %c0_12 = arith.constant 0 : index
    %c0_13 = arith.constant 0 : index
    %28 = vector.load %arg39[%c0_12, %c0_13] : memref<162x96xf32, #tpu.memory_space<vmem>>, vector<2x96xf32>
    tpu.vector_store %arg39[%c0_12, %c0_13], %27 {strides = array<i32>} : memref<162x96xf32, #tpu.memory_space<vmem>>, vector<2x96xf32>,
    %cst_14 = arith.constant 0.000000e+00 : f32
    %29 = vector.broadcast %cst_14 : f32 to vector<2x96xf32>
    %c160 = arith.constant 160 : index
    %c0_15 = arith.constant 0 : index
    %30 = vector.load %arg39[%c160, %c0_15] : memref<162x96xf32, #tpu.memory_space<vmem>>, vector<2x96xf32>
    tpu.vector_store %arg39[%c160, %c0_15], %29 {strides = array<i32>} : memref<162x96xf32, #tpu.memory_space<vmem>>, vector<2x96xf32>,
    %c2 = arith.constant 2 : index
    %c0_16 = arith.constant 0 : index
    %31 = vector.load %arg39[%c2, %c0_16] : memref<162x96xf32, #tpu.memory_space<vmem>>, vector<160x32xf32>
    tpu.vector_store %arg39[%c2, %c0_16], %26 {strides = array<i32>} : memref<162x96xf32, #tpu.memory_space<vmem>>, vector<160x32xf32>,
    %c1 = arith.constant 1 : index
    %c32 = arith.constant 32 : index
    %32 = vector.load %arg39[%c1, %c32] : memref<162x96xf32, #tpu.memory_space<vmem>>, vector<160x32xf32>
    tpu.vector_store %arg39[%c1, %c32], %26 {strides = array<i32>} : memref<162x96xf32, #tpu.memory_space<vmem>>, vector<160x32xf32>,
    %c0_17 = arith.constant 0 : index
    %c64 = arith.constant 64 : index
    %33 = vector.load %arg39[%c0_17, %c64] : memref<162x96xf32, #tpu.memory_space<vmem>>, vector<160x32xf32>
    tpu.vector_store %arg39[%c0_17, %c64], %26 {strides = array<i32>} : memref<162x96xf32, #tpu.memory_space<vmem>>, vector<160x32xf32>,
    %c1_18 = arith.constant 1 : index
    %c0_19 = arith.constant 0 : index
    %34 = vector.load %arg39[%c1_18, %c0_19] : memref<162x96xf32, #tpu.memory_space<vmem>>, vector<160x96xf32>
    %35 = arith.truncf %34 : vector<160x96xf32> to vector<160x96xbf16>
    %c0_20 = arith.constant 0 : index
    %c0_21 = arith.constant 0 : index
    %36 = vector.load %arg6[%c0_20, %c0_21] : memref<96x32xbf16, #tpu.memory_space<vmem>>, vector<96x32xbf16>
    %cst_22 = arith.constant dense<0.000000e+00> : vector<160x32xf32>
    %37 = tpu.matmul %35, %36, %cst_22 {dimension_numbers = #tpu.dot_dimension_numbers<[1], [0], [0], [1], [0, 0, 1, 1], [], []>} : vector<160x96xbf16>, vector<96x32xbf16>, vector<160x32xf32> -> vector<160x32xf32>
    %c0_23 = arith.constant 0 : index
    %c0_24 = arith.constant 0 : index
    %38 = vector.load %arg7[%c0_23, %c0_24] : memref<1x32xf32, #tpu.memory_space<vmem>>, vector<1x32xf32>
    %39 = vector.broadcast %38 : vector<1x32xf32> to vector<160x32xf32>
    %40 = arith.mulf %37, %39 : vector<160x32xf32>
    %c0_25 = arith.constant 0 : index
    %c0_26 = arith.constant 0 : index
    %41 = vector.load %arg8[%c0_25, %c0_26] : memref<1x32xf32, #tpu.memory_space<vmem>>, vector<1x32xf32>
    %42 = vector.broadcast %41 : vector<1x32xf32> to vector<160x32xf32>
    %43 = arith.addf %40, %42 : vector<160x32xf32>
    %cst_27 = arith.constant 0.000000e+00 : f32
    %44 = vector.broadcast %cst_27 : f32 to vector<160x32xf32>
    %45 = arith.maximumf %43, %44 : vector<160x32xf32>
    %cst_28 = arith.constant 0.000000e+00 : f32
    %46 = vector.shape_cast %10 : vector<160x1xi1> to vector<160x1xi1>
    %47 = vector.broadcast %46 : vector<160x1xi1> to vector<160x32xi1>
    %48 = vector.broadcast %cst_28 : f32 to vector<160x32xf32>
    %49 = arith.select %47, %45, %48 : vector<160x32xi1>, vector<160x32xf32>
    %cst_29 = arith.constant 0.000000e+00 : f32
    %50 = vector.broadcast %cst_29 : f32 to vector<2x96xf32>
    %c0_30 = arith.constant 0 : index
    %c0_31 = arith.constant 0 : index
    %51 = vector.load %arg39[%c0_30, %c0_31] : memref<162x96xf32, #tpu.memory_space<vmem>>, vector<2x96xf32>
    tpu.vector_store %arg39[%c0_30, %c0_31], %50 {strides = array<i32>} : memref<162x96xf32, #tpu.memory_space<vmem>>, vector<2x96xf32>,
    %cst_32 = arith.constant 0.000000e+00 : f32
    %52 = vector.broadcast %cst_32 : f32 to vector<2x96xf32>
    %c160_33 = arith.constant 160 : index
    %c0_34 = arith.constant 0 : index
    %53 = vector.load %arg39[%c160_33, %c0_34] : memref<162x96xf32, #tpu.memory_space<vmem>>, vector<2x96xf32>
    tpu.vector_store %arg39[%c160_33, %c0_34], %52 {strides = array<i32>} : memref<162x96xf32, #tpu.memory_space<vmem>>, vector<2x96xf32>,
    %c2_35 = arith.constant 2 : index
    %c0_36 = arith.constant 0 : index
    %54 = vector.load %arg39[%c2_35, %c0_36] : memref<162x96xf32, #tpu.memory_space<vmem>>, vector<160x32xf32>
    tpu.vector_store %arg39[%c2_35, %c0_36], %49 {strides = array<i32>} : memref<162x96xf32, #tpu.memory_space<vmem>>, vector<160x32xf32>,
    %c1_37 = arith.constant 1 : index
    %c32_38 = arith.constant 32 : index
    %55 = vector.load %arg39[%c1_37, %c32_38] : memref<162x96xf32, #tpu.memory_space<vmem>>, vector<160x32xf32>
    tpu.vector_store %arg39[%c1_37, %c32_38], %49 {strides = array<i32>} : memref<162x96xf32, #tpu.memory_space<vmem>>, vector<160x32xf32>,
    %c0_39 = arith.constant 0 : index
    %c64_40 = arith.constant 64 : index
    %56 = vector.load %arg39[%c0_39, %c64_40] : memref<162x96xf32, #tpu.memory_space<vmem>>, vector<160x32xf32>
    tpu.vector_store %arg39[%c0_39, %c64_40], %49 {strides = array<i32>} : memref<162x96xf32, #tpu.memory_space<vmem>>, vector<160x32xf32>,
    %c1_41 = arith.constant 1 : index
    %c0_42 = arith.constant 0 : index
    %57 = vector.load %arg39[%c1_41, %c0_42] : memref<162x96xf32, #tpu.memory_space<vmem>>, vector<160x96xf32>
    %58 = arith.truncf %57 : vector<160x96xf32> to vector<160x96xbf16>
    %c0_43 = arith.constant 0 : index
    %c0_44 = arith.constant 0 : index
    %59 = vector.load %arg9[%c0_43, %c0_44] : memref<96x32xbf16, #tpu.memory_space<vmem>>, vector<96x32xbf16>
    %cst_45 = arith.constant dense<0.000000e+00> : vector<160x32xf32>
    %60 = tpu.matmul %58, %59, %cst_45 {dimension_numbers = #tpu.dot_dimension_numbers<[1], [0], [0], [1], [0, 0, 1, 1], [], []>} : vector<160x96xbf16>, vector<96x32xbf16>, vector<160x32xf32> -> vector<160x32xf32>
    %c0_46 = arith.constant 0 : index
    %c0_47 = arith.constant 0 : index
    %61 = vector.load %arg10[%c0_46, %c0_47] : memref<1x32xf32, #tpu.memory_space<vmem>>, vector<1x32xf32>
    %62 = vector.broadcast %61 : vector<1x32xf32> to vector<160x32xf32>
    %63 = arith.mulf %60, %62 : vector<160x32xf32>
    %c0_48 = arith.constant 0 : index
    %c0_49 = arith.constant 0 : index
    %64 = vector.load %arg11[%c0_48, %c0_49] : memref<1x32xf32, #tpu.memory_space<vmem>>, vector<1x32xf32>
    %65 = vector.broadcast %64 : vector<1x32xf32> to vector<160x32xf32>
    %66 = arith.addf %63, %65 : vector<160x32xf32>
    %67 = arith.addf %66, %26 : vector<160x32xf32>
    %cst_50 = arith.constant 0.000000e+00 : f32
    %68 = vector.broadcast %cst_50 : f32 to vector<160x32xf32>
    %69 = arith.maximumf %67, %68 : vector<160x32xf32>
    %cst_51 = arith.constant 0.000000e+00 : f32
    %70 = vector.shape_cast %10 : vector<160x1xi1> to vector<160x1xi1>
    %71 = vector.broadcast %70 : vector<160x1xi1> to vector<160x32xi1>
    %72 = vector.broadcast %cst_51 : f32 to vector<160x32xf32>
    %73 = arith.select %71, %69, %72 : vector<160x32xi1>, vector<160x32xf32>
    %cst_52 = arith.constant 0.000000e+00 : f32
    %74 = vector.broadcast %cst_52 : f32 to vector<2x96xf32>
    %c0_53 = arith.constant 0 : index
    %c0_54 = arith.constant 0 : index
    %75 = vector.load %arg39[%c0_53, %c0_54] : memref<162x96xf32, #tpu.memory_space<vmem>>, vector<2x96xf32>
    tpu.vector_store %arg39[%c0_53, %c0_54], %74 {strides = array<i32>} : memref<162x96xf32, #tpu.memory_space<vmem>>, vector<2x96xf32>,
    %cst_55 = arith.constant 0.000000e+00 : f32
    %76 = vector.broadcast %cst_55 : f32 to vector<2x96xf32>
    %c160_56 = arith.constant 160 : index
    %c0_57 = arith.constant 0 : index
    %77 = vector.load %arg39[%c160_56, %c0_57] : memref<162x96xf32, #tpu.memory_space<vmem>>, vector<2x96xf32>
    tpu.vector_store %arg39[%c160_56, %c0_57], %76 {strides = array<i32>} : memref<162x96xf32, #tpu.memory_space<vmem>>, vector<2x96xf32>,
    %c2_58 = arith.constant 2 : index
    %c0_59 = arith.constant 0 : index
    %78 = vector.load %arg39[%c2_58, %c0_59] : memref<162x96xf32, #tpu.memory_space<vmem>>, vector<160x32xf32>
    tpu.vector_store %arg39[%c2_58, %c0_59], %73 {strides = array<i32>} : memref<162x96xf32, #tpu.memory_space<vmem>>, vector<160x32xf32>,
    %c1_60 = arith.constant 1 : index
    %c32_61 = arith.constant 32 : index
    %79 = vector.load %arg39[%c1_60, %c32_61] : memref<162x96xf32, #tpu.memory_space<vmem>>, vector<160x32xf32>
    tpu.vector_store %arg39[%c1_60, %c32_61], %73 {strides = array<i32>} : memref<162x96xf32, #tpu.memory_space<vmem>>, vector<160x32xf32>,
    %c0_62 = arith.constant 0 : index
    %c64_63 = arith.constant 64 : index
    %80 = vector.load %arg39[%c0_62, %c64_63] : memref<162x96xf32, #tpu.memory_space<vmem>>, vector<160x32xf32>
    tpu.vector_store %arg39[%c0_62, %c64_63], %73 {strides = array<i32>} : memref<162x96xf32, #tpu.memory_space<vmem>>, vector<160x32xf32>,
    %c1_64 = arith.constant 1 : index
    %c0_65 = arith.constant 0 : index
    %81 = vector.load %arg39[%c1_64, %c0_65] : memref<162x96xf32, #tpu.memory_space<vmem>>, vector<160x96xf32>
    %82 = arith.truncf %81 : vector<160x96xf32> to vector<160x96xbf16>
    %c0_66 = arith.constant 0 : index
    %c0_67 = arith.constant 0 : index
    %83 = vector.load %arg12[%c0_66, %c0_67] : memref<96x64xbf16, #tpu.memory_space<vmem>>, vector<96x64xbf16>
    %cst_68 = arith.constant dense<0.000000e+00> : vector<160x64xf32>
    %84 = tpu.matmul %82, %83, %cst_68 {dimension_numbers = #tpu.dot_dimension_numbers<[1], [0], [0], [1], [0, 0, 1, 1], [], []>} : vector<160x96xbf16>, vector<96x64xbf16>, vector<160x64xf32> -> vector<160x64xf32>
    %c0_69 = arith.constant 0 : index
    %c0_70 = arith.constant 0 : index
    %85 = vector.load %arg13[%c0_69, %c0_70] : memref<1x64xf32, #tpu.memory_space<vmem>>, vector<1x64xf32>
    %86 = vector.broadcast %85 : vector<1x64xf32> to vector<160x64xf32>
    %87 = arith.mulf %84, %86 : vector<160x64xf32>
    %c0_71 = arith.constant 0 : index
    %c0_72 = arith.constant 0 : index
    %88 = vector.load %arg14[%c0_71, %c0_72] : memref<1x64xf32, #tpu.memory_space<vmem>>, vector<1x64xf32>
    %89 = vector.broadcast %88 : vector<1x64xf32> to vector<160x64xf32>
    %90 = arith.addf %87, %89 : vector<160x64xf32>
    %cst_73 = arith.constant 0.000000e+00 : f32
    %91 = vector.broadcast %cst_73 : f32 to vector<160x64xf32>
    %92 = arith.maximumf %90, %91 : vector<160x64xf32>
    %cst_74 = arith.constant 0.000000e+00 : f32
    %93 = vector.shape_cast %10 : vector<160x1xi1> to vector<160x1xi1>
    %94 = vector.broadcast %93 : vector<160x1xi1> to vector<160x64xi1>
    %95 = vector.broadcast %cst_74 : f32 to vector<160x64xf32>
    %96 = arith.select %94, %92, %95 : vector<160x64xi1>, vector<160x64xf32>
    %cst_75 = arith.constant 0.000000e+00 : f32
    %97 = vector.broadcast %cst_75 : f32 to vector<2x192xf32>
    %c0_76 = arith.constant 0 : index
    %c0_77 = arith.constant 0 : index
    %98 = vector.load %arg40[%c0_76, %c0_77] : memref<162x192xf32, #tpu.memory_space<vmem>>, vector<2x192xf32>
    tpu.vector_store %arg40[%c0_76, %c0_77], %97 {strides = array<i32>} : memref<162x192xf32, #tpu.memory_space<vmem>>, vector<2x192xf32>,
    %cst_78 = arith.constant 0.000000e+00 : f32
    %99 = vector.broadcast %cst_78 : f32 to vector<2x192xf32>
    %c160_79 = arith.constant 160 : index
    %c0_80 = arith.constant 0 : index
    %100 = vector.load %arg40[%c160_79, %c0_80] : memref<162x192xf32, #tpu.memory_space<vmem>>, vector<2x192xf32>
    tpu.vector_store %arg40[%c160_79, %c0_80], %99 {strides = array<i32>} : memref<162x192xf32, #tpu.memory_space<vmem>>, vector<2x192xf32>,
    %c2_81 = arith.constant 2 : index
    %c0_82 = arith.constant 0 : index
    %101 = vector.load %arg40[%c2_81, %c0_82] : memref<162x192xf32, #tpu.memory_space<vmem>>, vector<160x64xf32>
    tpu.vector_store %arg40[%c2_81, %c0_82], %96 {strides = array<i32>} : memref<162x192xf32, #tpu.memory_space<vmem>>, vector<160x64xf32>,
    %c1_83 = arith.constant 1 : index
    %c64_84 = arith.constant 64 : index
    %102 = vector.load %arg40[%c1_83, %c64_84] : memref<162x192xf32, #tpu.memory_space<vmem>>, vector<160x64xf32>
    tpu.vector_store %arg40[%c1_83, %c64_84], %96 {strides = array<i32>} : memref<162x192xf32, #tpu.memory_space<vmem>>, vector<160x64xf32>,
    %c0_85 = arith.constant 0 : index
    %c128 = arith.constant 128 : index
    %103 = vector.load %arg40[%c0_85, %c128] : memref<162x192xf32, #tpu.memory_space<vmem>>, vector<160x64xf32>
    tpu.vector_store %arg40[%c0_85, %c128], %96 {strides = array<i32>} : memref<162x192xf32, #tpu.memory_space<vmem>>, vector<160x64xf32>,
    %c1_86 = arith.constant 1 : index
    %c0_87 = arith.constant 0 : index
    %104 = vector.load %arg40[%c1_86, %c0_87] : memref<162x192xf32, #tpu.memory_space<vmem>>, vector<160x192xf32>
    %105 = arith.truncf %104 : vector<160x192xf32> to vector<160x192xbf16>
    %c0_88 = arith.constant 0 : index
    %c0_89 = arith.constant 0 : index
    %106 = vector.load %arg15[%c0_88, %c0_89] : memref<192x64xbf16, #tpu.memory_space<vmem>>, vector<192x64xbf16>
    %cst_90 = arith.constant dense<0.000000e+00> : vector<160x64xf32>
    %107 = tpu.matmul %105, %106, %cst_90 {dimension_numbers = #tpu.dot_dimension_numbers<[1], [0], [0], [1], [0, 0, 1, 1], [], []>} : vector<160x192xbf16>, vector<192x64xbf16>, vector<160x64xf32> -> vector<160x64xf32>
    %c0_91 = arith.constant 0 : index
    %c0_92 = arith.constant 0 : index
    %108 = vector.load %arg16[%c0_91, %c0_92] : memref<1x64xf32, #tpu.memory_space<vmem>>, vector<1x64xf32>
    %109 = vector.broadcast %108 : vector<1x64xf32> to vector<160x64xf32>
    %110 = arith.mulf %107, %109 : vector<160x64xf32>
    %c0_93 = arith.constant 0 : index
    %c0_94 = arith.constant 0 : index
    %111 = vector.load %arg17[%c0_93, %c0_94] : memref<1x64xf32, #tpu.memory_space<vmem>>, vector<1x64xf32>
    %112 = vector.broadcast %111 : vector<1x64xf32> to vector<160x64xf32>
    %113 = arith.addf %110, %112 : vector<160x64xf32>
    %114 = arith.truncf %73 : vector<160x32xf32> to vector<160x32xbf16>
    %c0_95 = arith.constant 0 : index
    %c0_96 = arith.constant 0 : index
    %115 = vector.load %arg18[%c0_95, %c0_96] : memref<32x64xbf16, #tpu.memory_space<vmem>>, vector<32x64xbf16>
    %cst_97 = arith.constant dense<0.000000e+00> : vector<160x64xf32>
    %116 = tpu.matmul %114, %115, %cst_97 {dimension_numbers = #tpu.dot_dimension_numbers<[1], [0], [0], [1], [0, 0, 1, 1], [], []>} : vector<160x32xbf16>, vector<32x64xbf16>, vector<160x64xf32> -> vector<160x64xf32>
    %c0_98 = arith.constant 0 : index
    %c0_99 = arith.constant 0 : index
    %117 = vector.load %arg19[%c0_98, %c0_99] : memref<1x64xf32, #tpu.memory_space<vmem>>, vector<1x64xf32>
    %118 = vector.broadcast %117 : vector<1x64xf32> to vector<160x64xf32>
    %119 = arith.addf %116, %118 : vector<160x64xf32>
    %120 = arith.addf %113, %119 : vector<160x64xf32>
    %cst_100 = arith.constant 0.000000e+00 : f32
    %121 = vector.broadcast %cst_100 : f32 to vector<160x64xf32>
    %122 = arith.maximumf %120, %121 : vector<160x64xf32>
    %cst_101 = arith.constant 0.000000e+00 : f32
    %123 = vector.shape_cast %10 : vector<160x1xi1> to vector<160x1xi1>
    %124 = vector.broadcast %123 : vector<160x1xi1> to vector<160x64xi1>
    %125 = vector.broadcast %cst_101 : f32 to vector<160x64xf32>
    %126 = arith.select %124, %122, %125 : vector<160x64xi1>, vector<160x64xf32>
    %cst_102 = arith.constant 0.000000e+00 : f32
    %127 = vector.broadcast %cst_102 : f32 to vector<2x192xf32>
    %c0_103 = arith.constant 0 : index
    %c0_104 = arith.constant 0 : index
    %128 = vector.load %arg40[%c0_103, %c0_104] : memref<162x192xf32, #tpu.memory_space<vmem>>, vector<2x192xf32>
    tpu.vector_store %arg40[%c0_103, %c0_104], %127 {strides = array<i32>} : memref<162x192xf32, #tpu.memory_space<vmem>>, vector<2x192xf32>,
    %cst_105 = arith.constant 0.000000e+00 : f32
    %129 = vector.broadcast %cst_105 : f32 to vector<2x192xf32>
    %c160_106 = arith.constant 160 : index
    %c0_107 = arith.constant 0 : index
    %130 = vector.load %arg40[%c160_106, %c0_107] : memref<162x192xf32, #tpu.memory_space<vmem>>, vector<2x192xf32>
    tpu.vector_store %arg40[%c160_106, %c0_107], %129 {strides = array<i32>} : memref<162x192xf32, #tpu.memory_space<vmem>>, vector<2x192xf32>,
    %c2_108 = arith.constant 2 : index
    %c0_109 = arith.constant 0 : index
    %131 = vector.load %arg40[%c2_108, %c0_109] : memref<162x192xf32, #tpu.memory_space<vmem>>, vector<160x64xf32>
    tpu.vector_store %arg40[%c2_108, %c0_109], %126 {strides = array<i32>} : memref<162x192xf32, #tpu.memory_space<vmem>>, vector<160x64xf32>,
    %c1_110 = arith.constant 1 : index
    %c64_111 = arith.constant 64 : index
    %132 = vector.load %arg40[%c1_110, %c64_111] : memref<162x192xf32, #tpu.memory_space<vmem>>, vector<160x64xf32>
    tpu.vector_store %arg40[%c1_110, %c64_111], %126 {strides = array<i32>} : memref<162x192xf32, #tpu.memory_space<vmem>>, vector<160x64xf32>,
    %c0_112 = arith.constant 0 : index
    %c128_113 = arith.constant 128 : index
    %133 = vector.load %arg40[%c0_112, %c128_113] : memref<162x192xf32, #tpu.memory_space<vmem>>, vector<160x64xf32>
    tpu.vector_store %arg40[%c0_112, %c128_113], %126 {strides = array<i32>} : memref<162x192xf32, #tpu.memory_space<vmem>>, vector<160x64xf32>,
    %c1_114 = arith.constant 1 : index
    %c0_115 = arith.constant 0 : index
    %134 = vector.load %arg40[%c1_114, %c0_115] : memref<162x192xf32, #tpu.memory_space<vmem>>, vector<160x192xf32>
    %135 = arith.truncf %134 : vector<160x192xf32> to vector<160x192xbf16>
    %c0_116 = arith.constant 0 : index
    %c0_117 = arith.constant 0 : index
    %136 = vector.load %arg20[%c0_116, %c0_117] : memref<192x128xbf16, #tpu.memory_space<vmem>>, vector<192x128xbf16>
    %cst_118 = arith.constant dense<0.000000e+00> : vector<160x128xf32>
    %137 = tpu.matmul %135, %136, %cst_118 {dimension_numbers = #tpu.dot_dimension_numbers<[1], [0], [0], [1], [0, 0, 1, 1], [], []>} : vector<160x192xbf16>, vector<192x128xbf16>, vector<160x128xf32> -> vector<160x128xf32>
    %c0_119 = arith.constant 0 : index
    %c0_120 = arith.constant 0 : index
    %138 = vector.load %arg21[%c0_119, %c0_120] : memref<1x128xf32, #tpu.memory_space<vmem>>, vector<1x128xf32>
    %139 = vector.broadcast %138 : vector<1x128xf32> to vector<160x128xf32>
    %140 = arith.mulf %137, %139 : vector<160x128xf32>
    %c0_121 = arith.constant 0 : index
    %c0_122 = arith.constant 0 : index
    %141 = vector.load %arg22[%c0_121, %c0_122] : memref<1x128xf32, #tpu.memory_space<vmem>>, vector<1x128xf32>
    %142 = vector.broadcast %141 : vector<1x128xf32> to vector<160x128xf32>
    %143 = arith.addf %140, %142 : vector<160x128xf32>
    %cst_123 = arith.constant 0.000000e+00 : f32
    %144 = vector.broadcast %cst_123 : f32 to vector<160x128xf32>
    %145 = arith.maximumf %143, %144 : vector<160x128xf32>
    %cst_124 = arith.constant 0.000000e+00 : f32
    %146 = vector.shape_cast %10 : vector<160x1xi1> to vector<160x1xi1>
    %147 = vector.broadcast %146 : vector<160x1xi1> to vector<160x128xi1>
    %148 = vector.broadcast %cst_124 : f32 to vector<160x128xf32>
    %149 = arith.select %147, %145, %148 : vector<160x128xi1>, vector<160x128xf32>
    %cst_125 = arith.constant 0.000000e+00 : f32
    %150 = vector.broadcast %cst_125 : f32 to vector<1x128xf32>
    %c0_126 = arith.constant 0 : index
    %c0_127 = arith.constant 0 : index
    %151 = vector.load %arg41[%c0_126, %c0_127] : memref<162x128xf32, #tpu.memory_space<vmem>>, vector<1x128xf32>
    tpu.vector_store %arg41[%c0_126, %c0_127], %150 {strides = array<i32>} : memref<162x128xf32, #tpu.memory_space<vmem>>, vector<1x128xf32>,
    %cst_128 = arith.constant 0.000000e+00 : f32
    %152 = vector.broadcast %cst_128 : f32 to vector<1x128xf32>
    %c161 = arith.constant 161 : index
    %c0_129 = arith.constant 0 : index
    %153 = vector.load %arg41[%c161, %c0_129] : memref<162x128xf32, #tpu.memory_space<vmem>>, vector<1x128xf32>
    tpu.vector_store %arg41[%c161, %c0_129], %152 {strides = array<i32>} : memref<162x128xf32, #tpu.memory_space<vmem>>, vector<1x128xf32>,
    %c1_130 = arith.constant 1 : index
    %c0_131 = arith.constant 0 : index
    %154 = vector.load %arg41[%c1_130, %c0_131] : memref<162x128xf32, #tpu.memory_space<vmem>>, vector<160x128xf32>
    tpu.vector_store %arg41[%c1_130, %c0_131], %149 {strides = array<i32>} : memref<162x128xf32, #tpu.memory_space<vmem>>, vector<160x128xf32>,
    %155 = arith.truncf %149 : vector<160x128xf32> to vector<160x128xbf16>
    %c1_132 = arith.constant 1 : index
    %c0_133 = arith.constant 0 : index
    %c0_134 = arith.constant 0 : index
    %156 = vector.load %arg23[%c1_132, %c0_133, %c0_134] : memref<3x128x128xbf16, #tpu.memory_space<vmem>>, vector<1x128x128xbf16>
    %157 = vector.shape_cast %156 : vector<1x128x128xbf16> to vector<128x128xbf16>
    %cst_135 = arith.constant dense<0.000000e+00> : vector<160x128xf32>
    %158 = tpu.matmul %155, %157, %cst_135 {dimension_numbers = #tpu.dot_dimension_numbers<[1], [0], [0], [1], [0, 0, 1, 1], [], []>} : vector<160x128xbf16>, vector<128x128xbf16>, vector<160x128xf32> -> vector<160x128xf32>
    %c0_136 = arith.constant 0 : index
    %c0_137 = arith.constant 0 : index
    %159 = vector.load %arg41[%c0_136, %c0_137] : memref<162x128xf32, #tpu.memory_space<vmem>>, vector<160x128xf32>
    %160 = arith.truncf %159 : vector<160x128xf32> to vector<160x128xbf16>
    %c0_138 = arith.constant 0 : index
    %c0_139 = arith.constant 0 : index
    %c0_140 = arith.constant 0 : index
    %161 = vector.load %arg23[%c0_138, %c0_139, %c0_140] : memref<3x128x128xbf16, #tpu.memory_space<vmem>>, vector<1x128x128xbf16>
    %162 = vector.shape_cast %161 : vector<1x128x128xbf16> to vector<128x128xbf16>
    %cst_141 = arith.constant dense<0.000000e+00> : vector<160x128xf32>
    %163 = tpu.matmul %160, %162, %cst_141 {dimension_numbers = #tpu.dot_dimension_numbers<[1], [0], [0], [1], [0, 0, 1, 1], [], []>} : vector<160x128xbf16>, vector<128x128xbf16>, vector<160x128xf32> -> vector<160x128xf32>
    %164 = arith.addf %158, %163 : vector<160x128xf32>
    %c2_142 = arith.constant 2 : index
    %c0_143 = arith.constant 0 : index
    %165 = vector.load %arg41[%c2_142, %c0_143] : memref<162x128xf32, #tpu.memory_space<vmem>>, vector<160x128xf32>
    %166 = arith.truncf %165 : vector<160x128xf32> to vector<160x128xbf16>
    %c2_144 = arith.constant 2 : index
    %c0_145 = arith.constant 0 : index
    %c0_146 = arith.constant 0 : index
    %167 = vector.load %arg23[%c2_144, %c0_145, %c0_146] : memref<3x128x128xbf16, #tpu.memory_space<vmem>>, vector<1x128x128xbf16>
    %168 = vector.shape_cast %167 : vector<1x128x128xbf16> to vector<128x128xbf16>
    %cst_147 = arith.constant dense<0.000000e+00> : vector<160x128xf32>
    %169 = tpu.matmul %166, %168, %cst_147 {dimension_numbers = #tpu.dot_dimension_numbers<[1], [0], [0], [1], [0, 0, 1, 1], [], []>} : vector<160x128xbf16>, vector<128x128xbf16>, vector<160x128xf32> -> vector<160x128xf32>
    %170 = arith.addf %164, %169 : vector<160x128xf32>
    %c0_148 = arith.constant 0 : index
    %c0_149 = arith.constant 0 : index
    %171 = vector.load %arg24[%c0_148, %c0_149] : memref<1x128xf32, #tpu.memory_space<vmem>>, vector<1x128xf32>
    %172 = vector.broadcast %171 : vector<1x128xf32> to vector<160x128xf32>
    %173 = arith.mulf %170, %172 : vector<160x128xf32>
    %c0_150 = arith.constant 0 : index
    %c0_151 = arith.constant 0 : index
    %174 = vector.load %arg25[%c0_150, %c0_151] : memref<1x128xf32, #tpu.memory_space<vmem>>, vector<1x128xf32>
    %175 = vector.broadcast %174 : vector<1x128xf32> to vector<160x128xf32>
    %176 = arith.addf %173, %175 : vector<160x128xf32>
    %177 = arith.truncf %126 : vector<160x64xf32> to vector<160x64xbf16>
    %c0_152 = arith.constant 0 : index
    %c0_153 = arith.constant 0 : index
    %178 = vector.load %arg26[%c0_152, %c0_153] : memref<64x128xbf16, #tpu.memory_space<vmem>>, vector<64x128xbf16>
    %cst_154 = arith.constant dense<0.000000e+00> : vector<160x128xf32>
    %179 = tpu.matmul %177, %178, %cst_154 {dimension_numbers = #tpu.dot_dimension_numbers<[1], [0], [0], [1], [0, 0, 1, 1], [], []>} : vector<160x64xbf16>, vector<64x128xbf16>, vector<160x128xf32> -> vector<160x128xf32>
    %c0_155 = arith.constant 0 : index
    %c0_156 = arith.constant 0 : index
    %180 = vector.load %arg27[%c0_155, %c0_156] : memref<1x128xf32, #tpu.memory_space<vmem>>, vector<1x128xf32>
    %181 = vector.broadcast %180 : vector<1x128xf32> to vector<160x128xf32>
    %182 = arith.addf %179, %181 : vector<160x128xf32>
    %183 = arith.addf %176, %182 : vector<160x128xf32>
    %cst_157 = arith.constant 0.000000e+00 : f32
    %184 = vector.broadcast %cst_157 : f32 to vector<160x128xf32>
    %185 = arith.maximumf %183, %184 : vector<160x128xf32>
    %cst_158 = arith.constant 0.000000e+00 : f32
    %186 = vector.shape_cast %10 : vector<160x1xi1> to vector<160x1xi1>
    %187 = vector.broadcast %186 : vector<160x1xi1> to vector<160x128xi1>
    %188 = vector.broadcast %cst_158 : f32 to vector<160x128xf32>
    %189 = arith.select %187, %185, %188 : vector<160x128xi1>, vector<160x128xf32>
    %cst_159 = arith.constant 0.000000e+00 : f32
    %190 = vector.broadcast %cst_159 : f32 to vector<1x128xf32>
    %c0_160 = arith.constant 0 : index
    %c0_161 = arith.constant 0 : index
    %191 = vector.load %arg41[%c0_160, %c0_161] : memref<162x128xf32, #tpu.memory_space<vmem>>, vector<1x128xf32>
    tpu.vector_store %arg41[%c0_160, %c0_161], %190 {strides = array<i32>} : memref<162x128xf32, #tpu.memory_space<vmem>>, vector<1x128xf32>,
    %cst_162 = arith.constant 0.000000e+00 : f32
    %192 = vector.broadcast %cst_162 : f32 to vector<1x128xf32>
    %c161_163 = arith.constant 161 : index
    %c0_164 = arith.constant 0 : index
    %193 = vector.load %arg41[%c161_163, %c0_164] : memref<162x128xf32, #tpu.memory_space<vmem>>, vector<1x128xf32>
    tpu.vector_store %arg41[%c161_163, %c0_164], %192 {strides = array<i32>} : memref<162x128xf32, #tpu.memory_space<vmem>>, vector<1x128xf32>,
    %c1_165 = arith.constant 1 : index
    %c0_166 = arith.constant 0 : index
    %194 = vector.load %arg41[%c1_165, %c0_166] : memref<162x128xf32, #tpu.memory_space<vmem>>, vector<160x128xf32>
    tpu.vector_store %arg41[%c1_165, %c0_166], %189 {strides = array<i32>} : memref<162x128xf32, #tpu.memory_space<vmem>>, vector<160x128xf32>,
    %195 = arith.truncf %189 : vector<160x128xf32> to vector<160x128xbf16>
    %c1_167 = arith.constant 1 : index
    %c0_168 = arith.constant 0 : index
    %c0_169 = arith.constant 0 : index
    %196 = vector.load %arg28[%c1_167, %c0_168, %c0_169] : memref<3x128x256xbf16, #tpu.memory_space<vmem>>, vector<1x128x256xbf16>
    %197 = vector.shape_cast %196 : vector<1x128x256xbf16> to vector<128x256xbf16>
    %cst_170 = arith.constant dense<0.000000e+00> : vector<160x256xf32>
    %198 = tpu.matmul %195, %197, %cst_170 {dimension_numbers = #tpu.dot_dimension_numbers<[1], [0], [0], [1], [0, 0, 1, 1], [], []>} : vector<160x128xbf16>, vector<128x256xbf16>, vector<160x256xf32> -> vector<160x256xf32>
    %c0_171 = arith.constant 0 : index
    %c0_172 = arith.constant 0 : index
    %199 = vector.load %arg41[%c0_171, %c0_172] : memref<162x128xf32, #tpu.memory_space<vmem>>, vector<160x128xf32>
    %200 = arith.truncf %199 : vector<160x128xf32> to vector<160x128xbf16>
    %c0_173 = arith.constant 0 : index
    %c0_174 = arith.constant 0 : index
    %c0_175 = arith.constant 0 : index
    %201 = vector.load %arg28[%c0_173, %c0_174, %c0_175] : memref<3x128x256xbf16, #tpu.memory_space<vmem>>, vector<1x128x256xbf16>
    %202 = vector.shape_cast %201 : vector<1x128x256xbf16> to vector<128x256xbf16>
    %cst_176 = arith.constant dense<0.000000e+00> : vector<160x256xf32>
    %203 = tpu.matmul %200, %202, %cst_176 {dimension_numbers = #tpu.dot_dimension_numbers<[1], [0], [0], [1], [0, 0, 1, 1], [], []>} : vector<160x128xbf16>, vector<128x256xbf16>, vector<160x256xf32> -> vector<160x256xf32>
    %204 = arith.addf %198, %203 : vector<160x256xf32>
    %c2_177 = arith.constant 2 : index
    %c0_178 = arith.constant 0 : index
    %205 = vector.load %arg41[%c2_177, %c0_178] : memref<162x128xf32, #tpu.memory_space<vmem>>, vector<160x128xf32>
    %206 = arith.truncf %205 : vector<160x128xf32> to vector<160x128xbf16>
    %c2_179 = arith.constant 2 : index
    %c0_180 = arith.constant 0 : index
    %c0_181 = arith.constant 0 : index
    %207 = vector.load %arg28[%c2_179, %c0_180, %c0_181] : memref<3x128x256xbf16, #tpu.memory_space<vmem>>, vector<1x128x256xbf16>
    %208 = vector.shape_cast %207 : vector<1x128x256xbf16> to vector<128x256xbf16>
    %cst_182 = arith.constant dense<0.000000e+00> : vector<160x256xf32>
    %209 = tpu.matmul %206, %208, %cst_182 {dimension_numbers = #tpu.dot_dimension_numbers<[1], [0], [0], [1], [0, 0, 1, 1], [], []>} : vector<160x128xbf16>, vector<128x256xbf16>, vector<160x256xf32> -> vector<160x256xf32>
    %210 = arith.addf %204, %209 : vector<160x256xf32>
    %c0_183 = arith.constant 0 : index
    %c0_184 = arith.constant 0 : index
    %211 = vector.load %arg29[%c0_183, %c0_184] : memref<1x256xf32, #tpu.memory_space<vmem>>, vector<1x256xf32>
    %212 = vector.broadcast %211 : vector<1x256xf32> to vector<160x256xf32>
    %213 = arith.mulf %210, %212 : vector<160x256xf32>
    %c0_185 = arith.constant 0 : index
    %c0_186 = arith.constant 0 : index
    %214 = vector.load %arg30[%c0_185, %c0_186] : memref<1x256xf32, #tpu.memory_space<vmem>>, vector<1x256xf32>
    %215 = vector.broadcast %214 : vector<1x256xf32> to vector<160x256xf32>
    %216 = arith.addf %213, %215 : vector<160x256xf32>
    %cst_187 = arith.constant 0.000000e+00 : f32
    %217 = vector.broadcast %cst_187 : f32 to vector<160x256xf32>
    %218 = arith.maximumf %216, %217 : vector<160x256xf32>
    %cst_188 = arith.constant 0.000000e+00 : f32
    %219 = vector.shape_cast %10 : vector<160x1xi1> to vector<160x1xi1>
    %220 = vector.broadcast %219 : vector<160x1xi1> to vector<160x256xi1>
    %221 = vector.broadcast %cst_188 : f32 to vector<160x256xf32>
    %222 = arith.select %220, %218, %221 : vector<160x256xi1>, vector<160x256xf32>
    %cst_189 = arith.constant 0.000000e+00 : f32
    %223 = vector.broadcast %cst_189 : f32 to vector<1x256xf32>
    %c0_190 = arith.constant 0 : index
    %c0_191 = arith.constant 0 : index
    %224 = vector.load %arg42[%c0_190, %c0_191] : memref<162x256xf32, #tpu.memory_space<vmem>>, vector<1x256xf32>
    tpu.vector_store %arg42[%c0_190, %c0_191], %223 {strides = array<i32>} : memref<162x256xf32, #tpu.memory_space<vmem>>, vector<1x256xf32>,
    %cst_192 = arith.constant 0.000000e+00 : f32
    %225 = vector.broadcast %cst_192 : f32 to vector<1x256xf32>
    %c161_193 = arith.constant 161 : index
    %c0_194 = arith.constant 0 : index
    %226 = vector.load %arg42[%c161_193, %c0_194] : memref<162x256xf32, #tpu.memory_space<vmem>>, vector<1x256xf32>
    tpu.vector_store %arg42[%c161_193, %c0_194], %225 {strides = array<i32>} : memref<162x256xf32, #tpu.memory_space<vmem>>, vector<1x256xf32>,
    %c1_195 = arith.constant 1 : index
    %c0_196 = arith.constant 0 : index
    %227 = vector.load %arg42[%c1_195, %c0_196] : memref<162x256xf32, #tpu.memory_space<vmem>>, vector<160x256xf32>
    tpu.vector_store %arg42[%c1_195, %c0_196], %222 {strides = array<i32>} : memref<162x256xf32, #tpu.memory_space<vmem>>, vector<160x256xf32>,
    %228 = arith.truncf %222 : vector<160x256xf32> to vector<160x256xbf16>
    %c1_197 = arith.constant 1 : index
    %c0_198 = arith.constant 0 : index
    %c0_199 = arith.constant 0 : index
    %229 = vector.load %arg31[%c1_197, %c0_198, %c0_199] : memref<3x256x256xbf16, #tpu.memory_space<vmem>>, vector<1x256x256xbf16>
    %230 = vector.shape_cast %229 : vector<1x256x256xbf16> to vector<256x256xbf16>
    %cst_200 = arith.constant dense<0.000000e+00> : vector<160x256xf32>
    %231 = tpu.matmul %228, %230, %cst_200 {dimension_numbers = #tpu.dot_dimension_numbers<[1], [0], [0], [1], [0, 0, 1, 1], [], []>} : vector<160x256xbf16>, vector<256x256xbf16>, vector<160x256xf32> -> vector<160x256xf32>
    %c0_201 = arith.constant 0 : index
    %c0_202 = arith.constant 0 : index
    %232 = vector.load %arg42[%c0_201, %c0_202] : memref<162x256xf32, #tpu.memory_space<vmem>>, vector<160x256xf32>
    %233 = arith.truncf %232 : vector<160x256xf32> to vector<160x256xbf16>
    %c0_203 = arith.constant 0 : index
    %c0_204 = arith.constant 0 : index
    %c0_205 = arith.constant 0 : index
    %234 = vector.load %arg31[%c0_203, %c0_204, %c0_205] : memref<3x256x256xbf16, #tpu.memory_space<vmem>>, vector<1x256x256xbf16>
    %235 = vector.shape_cast %234 : vector<1x256x256xbf16> to vector<256x256xbf16>
    %cst_206 = arith.constant dense<0.000000e+00> : vector<160x256xf32>
    %236 = tpu.matmul %233, %235, %cst_206 {dimension_numbers = #tpu.dot_dimension_numbers<[1], [0], [0], [1], [0, 0, 1, 1], [], []>} : vector<160x256xbf16>, vector<256x256xbf16>, vector<160x256xf32> -> vector<160x256xf32>
    %237 = arith.addf %231, %236 : vector<160x256xf32>
    %c2_207 = arith.constant 2 : index
    %c0_208 = arith.constant 0 : index
    %238 = vector.load %arg42[%c2_207, %c0_208] : memref<162x256xf32, #tpu.memory_space<vmem>>, vector<160x256xf32>
    %239 = arith.truncf %238 : vector<160x256xf32> to vector<160x256xbf16>
    %c2_209 = arith.constant 2 : index
    %c0_210 = arith.constant 0 : index
    %c0_211 = arith.constant 0 : index
    %240 = vector.load %arg31[%c2_209, %c0_210, %c0_211] : memref<3x256x256xbf16, #tpu.memory_space<vmem>>, vector<1x256x256xbf16>
    %241 = vector.shape_cast %240 : vector<1x256x256xbf16> to vector<256x256xbf16>
    %cst_212 = arith.constant dense<0.000000e+00> : vector<160x256xf32>
    %242 = tpu.matmul %239, %241, %cst_212 {dimension_numbers = #tpu.dot_dimension_numbers<[1], [0], [0], [1], [0, 0, 1, 1], [], []>} : vector<160x256xbf16>, vector<256x256xbf16>, vector<160x256xf32> -> vector<160x256xf32>
    %243 = arith.addf %237, %242 : vector<160x256xf32>
    %c0_213 = arith.constant 0 : index
    %c0_214 = arith.constant 0 : index
    %244 = vector.load %arg32[%c0_213, %c0_214] : memref<1x256xf32, #tpu.memory_space<vmem>>, vector<1x256xf32>
    %245 = vector.broadcast %244 : vector<1x256xf32> to vector<160x256xf32>
    %246 = arith.mulf %243, %245 : vector<160x256xf32>
    %c0_215 = arith.constant 0 : index
    %c0_216 = arith.constant 0 : index
    %247 = vector.load %arg33[%c0_215, %c0_216] : memref<1x256xf32, #tpu.memory_space<vmem>>, vector<1x256xf32>
    %248 = vector.broadcast %247 : vector<1x256xf32> to vector<160x256xf32>
    %249 = arith.addf %246, %248 : vector<160x256xf32>
    %250 = arith.truncf %189 : vector<160x128xf32> to vector<160x128xbf16>
    %c0_217 = arith.constant 0 : index
    %c0_218 = arith.constant 0 : index
    %251 = vector.load %arg34[%c0_217, %c0_218] : memref<128x256xbf16, #tpu.memory_space<vmem>>, vector<128x256xbf16>
    %cst_219 = arith.constant dense<0.000000e+00> : vector<160x256xf32>
    %252 = tpu.matmul %250, %251, %cst_219 {dimension_numbers = #tpu.dot_dimension_numbers<[1], [0], [0], [1], [0, 0, 1, 1], [], []>} : vector<160x128xbf16>, vector<128x256xbf16>, vector<160x256xf32> -> vector<160x256xf32>
    %c0_220 = arith.constant 0 : index
    %c0_221 = arith.constant 0 : index
    %253 = vector.load %arg35[%c0_220, %c0_221] : memref<1x256xf32, #tpu.memory_space<vmem>>, vector<1x256xf32>
    %254 = vector.broadcast %253 : vector<1x256xf32> to vector<160x256xf32>
    %255 = arith.addf %252, %254 : vector<160x256xf32>
    %256 = arith.addf %249, %255 : vector<160x256xf32>
    %cst_222 = arith.constant 0.000000e+00 : f32
    %257 = vector.broadcast %cst_222 : f32 to vector<160x256xf32>
    %258 = arith.maximumf %256, %257 : vector<160x256xf32>
    %259 = vector.extract_strided_slice %258 {offsets = [16, 0], sizes = [128, 256], strides = [1, 1]} : vector<160x256xf32> to vector<128x256xf32>
    %260 = arith.truncf %259 : vector<128x256xf32> to vector<128x256xbf16>
    %c0_223 = arith.constant 0 : index
    %c0_224 = arith.constant 0 : index
    %261 = vector.load %arg36[%c0_223, %c0_224] : memref<256x128xbf16, #tpu.memory_space<vmem>>, vector<256x128xbf16>
    %cst_225 = arith.constant dense<0.000000e+00> : vector<128x128xf32>
    %262 = tpu.matmul %260, %261, %cst_225 {dimension_numbers = #tpu.dot_dimension_numbers<[1], [0], [0], [1], [0, 0, 1, 1], [], []>} : vector<128x256xbf16>, vector<256x128xbf16>, vector<128x128xf32> -> vector<128x128xf32>
    %c0_226 = arith.constant 0 : index
    %c0_227 = arith.constant 0 : index
    %263 = vector.load %arg37[%c0_226, %c0_227] : memref<1x128xf32, #tpu.memory_space<vmem>>, vector<1x128xf32>
    %264 = vector.broadcast %263 : vector<1x128xf32> to vector<128x128xf32>
    %265 = arith.addf %262, %264 : vector<128x128xf32>
    %c0_228 = arith.constant 0 : index
    %c0_229 = arith.constant 0 : index
    %c0_230 = arith.constant 0 : index
    %266 = vector.load %arg38[%c0_228, %c0_229, %c0_230] : memref<1x128x128xf32, #tpu.memory_space<vmem>>, vector<1x128x128xf32>
    %267 = vector.shape_cast %266 : vector<1x128x128xf32> to vector<128x128xf32>
    %268 = vector.shape_cast %265 : vector<128x128xf32> to vector<1x128x128xf32>
    tpu.vector_store %arg38[%c0_228, %c0_229, %c0_230], %268 {strides = array<i32>} : memref<1x128x128xf32, #tpu.memory_space<vmem>>, vector<1x128x128xf32>,
    return
  }
  func.func @transform_0(%arg0: i32, %arg1: i32) -> (i32, i32, i32, i32) {
    %c0_i32 = arith.constant 0 : i32
    %c0_i32_0 = arith.constant 0 : i32
    %c0_i32_1 = arith.constant 0 : i32
    return %arg0, %arg1, %c0_i32, %c0_i32_0 : i32, i32, i32, i32
  }
  func.func @transform_1(%arg0: i32, %arg1: i32) -> (i32, i32) {
    %c0_i32 = arith.constant 0 : i32
    %c0_i32_0 = arith.constant 0 : i32
    %c0_i32_1 = arith.constant 0 : i32
    return %c0_i32, %c0_i32_0 : i32, i32
  }
  func.func @transform_2(%arg0: i32, %arg1: i32) -> (i32, i32) {
    %c0_i32 = arith.constant 0 : i32
    %c0_i32_0 = arith.constant 0 : i32
    %c0_i32_1 = arith.constant 0 : i32
    return %c0_i32, %c0_i32_0 : i32, i32
  }
  func.func @transform_3(%arg0: i32, %arg1: i32) -> (i32, i32) {
    %c0_i32 = arith.constant 0 : i32
    %c0_i32_0 = arith.constant 0 : i32
    %c0_i32_1 = arith.constant 0 : i32
    return %c0_i32, %c0_i32_0 : i32, i32
  }
  func.func @transform_4(%arg0: i32, %arg1: i32) -> (i32, i32) {
    %c0_i32 = arith.constant 0 : i32
    %c0_i32_0 = arith.constant 0 : i32
    %c0_i32_1 = arith.constant 0 : i32
    return %c0_i32, %c0_i32_0 : i32, i32
  }
  func.func @transform_5(%arg0: i32, %arg1: i32) -> (i32, i32) {
    %c0_i32 = arith.constant 0 : i32
    %c0_i32_0 = arith.constant 0 : i32
    %c0_i32_1 = arith.constant 0 : i32
    return %c0_i32, %c0_i32_0 : i32, i32
  }
  func.func @transform_6(%arg0: i32, %arg1: i32) -> (i32, i32) {
    %c0_i32 = arith.constant 0 : i32
    %c0_i32_0 = arith.constant 0 : i32
    %c0_i32_1 = arith.constant 0 : i32
    return %c0_i32, %c0_i32_0 : i32, i32
  }
  func.func @transform_7(%arg0: i32, %arg1: i32) -> (i32, i32) {
    %c0_i32 = arith.constant 0 : i32
    %c0_i32_0 = arith.constant 0 : i32
    %c0_i32_1 = arith.constant 0 : i32
    return %c0_i32, %c0_i32_0 : i32, i32
  }
  func.func @transform_8(%arg0: i32, %arg1: i32) -> (i32, i32) {
    %c0_i32 = arith.constant 0 : i32
    %c0_i32_0 = arith.constant 0 : i32
    %c0_i32_1 = arith.constant 0 : i32
    return %c0_i32, %c0_i32_0 : i32, i32
  }
  func.func @transform_9(%arg0: i32, %arg1: i32) -> (i32, i32) {
    %c0_i32 = arith.constant 0 : i32
    %c0_i32_0 = arith.constant 0 : i32
    %c0_i32_1 = arith.constant 0 : i32
    return %c0_i32, %c0_i32_0 : i32, i32
  }
  func.func @transform_10(%arg0: i32, %arg1: i32) -> (i32, i32) {
    %c0_i32 = arith.constant 0 : i32
    %c0_i32_0 = arith.constant 0 : i32
    %c0_i32_1 = arith.constant 0 : i32
    return %c0_i32, %c0_i32_0 : i32, i32
  }
  func.func @transform_11(%arg0: i32, %arg1: i32) -> (i32, i32) {
    %c0_i32 = arith.constant 0 : i32
    %c0_i32_0 = arith.constant 0 : i32
    %c0_i32_1 = arith.constant 0 : i32
    return %c0_i32, %c0_i32_0 : i32, i32
  }
  func.func @transform_12(%arg0: i32, %arg1: i32) -> (i32, i32) {
    %c0_i32 = arith.constant 0 : i32
    %c0_i32_0 = arith.constant 0 : i32
    %c0_i32_1 = arith.constant 0 : i32
    return %c0_i32, %c0_i32_0 : i32, i32
  }
  func.func @transform_13(%arg0: i32, %arg1: i32) -> (i32, i32) {
    %c0_i32 = arith.constant 0 : i32
    %c0_i32_0 = arith.constant 0 : i32
    %c0_i32_1 = arith.constant 0 : i32
    return %c0_i32, %c0_i32_0 : i32, i32
  }
  func.func @transform_14(%arg0: i32, %arg1: i32) -> (i32, i32) {
    %c0_i32 = arith.constant 0 : i32
    %c0_i32_0 = arith.constant 0 : i32
    %c0_i32_1 = arith.constant 0 : i32
    return %c0_i32, %c0_i32_0 : i32, i32
  }
  func.func @transform_15(%arg0: i32, %arg1: i32) -> (i32, i32) {
    %c0_i32 = arith.constant 0 : i32
    %c0_i32_0 = arith.constant 0 : i32
    %c0_i32_1 = arith.constant 0 : i32
    return %c0_i32, %c0_i32_0 : i32, i32
  }
  func.func @transform_16(%arg0: i32, %arg1: i32) -> (i32, i32) {
    %c0_i32 = arith.constant 0 : i32
    %c0_i32_0 = arith.constant 0 : i32
    %c0_i32_1 = arith.constant 0 : i32
    return %c0_i32, %c0_i32_0 : i32, i32
  }
  func.func @transform_17(%arg0: i32, %arg1: i32) -> (i32, i32) {
    %c0_i32 = arith.constant 0 : i32
    %c0_i32_0 = arith.constant 0 : i32
    %c0_i32_1 = arith.constant 0 : i32
    return %c0_i32, %c0_i32_0 : i32, i32
  }
  func.func @transform_18(%arg0: i32, %arg1: i32) -> (i32, i32) {
    %c0_i32 = arith.constant 0 : i32
    %c0_i32_0 = arith.constant 0 : i32
    %c0_i32_1 = arith.constant 0 : i32
    return %c0_i32, %c0_i32_0 : i32, i32
  }
  func.func @transform_19(%arg0: i32, %arg1: i32) -> (i32, i32) {
    %c0_i32 = arith.constant 0 : i32
    %c0_i32_0 = arith.constant 0 : i32
    %c0_i32_1 = arith.constant 0 : i32
    return %c0_i32, %c0_i32_0 : i32, i32
  }
  func.func @transform_20(%arg0: i32, %arg1: i32) -> (i32, i32) {
    %c0_i32 = arith.constant 0 : i32
    %c0_i32_0 = arith.constant 0 : i32
    %c0_i32_1 = arith.constant 0 : i32
    return %c0_i32, %c0_i32_0 : i32, i32
  }
  func.func @transform_21(%arg0: i32, %arg1: i32) -> (i32, i32, i32) {
    %c0_i32 = arith.constant 0 : i32
    %c0_i32_0 = arith.constant 0 : i32
    %c0_i32_1 = arith.constant 0 : i32
    %c0_i32_2 = arith.constant 0 : i32
    return %c0_i32, %c0_i32_0, %c0_i32_1 : i32, i32, i32
  }
  func.func @transform_22(%arg0: i32, %arg1: i32) -> (i32, i32) {
    %c0_i32 = arith.constant 0 : i32
    %c0_i32_0 = arith.constant 0 : i32
    %c0_i32_1 = arith.constant 0 : i32
    return %c0_i32, %c0_i32_0 : i32, i32
  }
  func.func @transform_23(%arg0: i32, %arg1: i32) -> (i32, i32) {
    %c0_i32 = arith.constant 0 : i32
    %c0_i32_0 = arith.constant 0 : i32
    %c0_i32_1 = arith.constant 0 : i32
    return %c0_i32, %c0_i32_0 : i32, i32
  }
  func.func @transform_24(%arg0: i32, %arg1: i32) -> (i32, i32) {
    %c0_i32 = arith.constant 0 : i32
    %c0_i32_0 = arith.constant 0 : i32
    %c0_i32_1 = arith.constant 0 : i32
    return %c0_i32, %c0_i32_0 : i32, i32
  }
  func.func @transform_25(%arg0: i32, %arg1: i32) -> (i32, i32) {
    %c0_i32 = arith.constant 0 : i32
    %c0_i32_0 = arith.constant 0 : i32
    %c0_i32_1 = arith.constant 0 : i32
    return %c0_i32, %c0_i32_0 : i32, i32
  }
  func.func @transform_26(%arg0: i32, %arg1: i32) -> (i32, i32, i32) {
    %c0_i32 = arith.constant 0 : i32
    %c0_i32_0 = arith.constant 0 : i32
    %c0_i32_1 = arith.constant 0 : i32
    %c0_i32_2 = arith.constant 0 : i32
    return %c0_i32, %c0_i32_0, %c0_i32_1 : i32, i32, i32
  }
  func.func @transform_27(%arg0: i32, %arg1: i32) -> (i32, i32) {
    %c0_i32 = arith.constant 0 : i32
    %c0_i32_0 = arith.constant 0 : i32
    %c0_i32_1 = arith.constant 0 : i32
    return %c0_i32, %c0_i32_0 : i32, i32
  }
  func.func @transform_28(%arg0: i32, %arg1: i32) -> (i32, i32) {
    %c0_i32 = arith.constant 0 : i32
    %c0_i32_0 = arith.constant 0 : i32
    %c0_i32_1 = arith.constant 0 : i32
    return %c0_i32, %c0_i32_0 : i32, i32
  }
  func.func @transform_29(%arg0: i32, %arg1: i32) -> (i32, i32, i32) {
    %c0_i32 = arith.constant 0 : i32
    %c0_i32_0 = arith.constant 0 : i32
    %c0_i32_1 = arith.constant 0 : i32
    %c0_i32_2 = arith.constant 0 : i32
    return %c0_i32, %c0_i32_0, %c0_i32_1 : i32, i32, i32
  }
  func.func @transform_30(%arg0: i32, %arg1: i32) -> (i32, i32) {
    %c0_i32 = arith.constant 0 : i32
    %c0_i32_0 = arith.constant 0 : i32
    %c0_i32_1 = arith.constant 0 : i32
    return %c0_i32, %c0_i32_0 : i32, i32
  }
  func.func @transform_31(%arg0: i32, %arg1: i32) -> (i32, i32) {
    %c0_i32 = arith.constant 0 : i32
    %c0_i32_0 = arith.constant 0 : i32
    %c0_i32_1 = arith.constant 0 : i32
    return %c0_i32, %c0_i32_0 : i32, i32
  }
  func.func @transform_32(%arg0: i32, %arg1: i32) -> (i32, i32) {
    %c0_i32 = arith.constant 0 : i32
    %c0_i32_0 = arith.constant 0 : i32
    %c0_i32_1 = arith.constant 0 : i32
    return %c0_i32, %c0_i32_0 : i32, i32
  }
  func.func @transform_33(%arg0: i32, %arg1: i32) -> (i32, i32) {
    %c0_i32 = arith.constant 0 : i32
    %c0_i32_0 = arith.constant 0 : i32
    %c0_i32_1 = arith.constant 0 : i32
    return %c0_i32, %c0_i32_0 : i32, i32
  }
  func.func @transform_34(%arg0: i32, %arg1: i32) -> (i32, i32) {
    %c0_i32 = arith.constant 0 : i32
    %c0_i32_0 = arith.constant 0 : i32
    %c0_i32_1 = arith.constant 0 : i32
    return %c0_i32, %c0_i32_0 : i32, i32
  }
  func.func @transform_35(%arg0: i32, %arg1: i32) -> (i32, i32) {
    %c0_i32 = arith.constant 0 : i32
    %c0_i32_0 = arith.constant 0 : i32
    %c0_i32_1 = arith.constant 0 : i32
    return %c0_i32, %c0_i32_0 : i32, i32
  }
  func.func @transform_36(%arg0: i32, %arg1: i32) -> (i32, i32, i32) {
    %c0_i32 = arith.constant 0 : i32
    %c0_i32_0 = arith.constant 0 : i32
    return %arg0, %arg1, %c0_i32 : i32, i32, i32
  }
}

</mosaic_0001>

<llo_original>
// kernel: transaid_forward.1
$region0: #{transaid_forward.1}
  #allocation0 [shape = 'u32[]', space=smem, size = 0x4, offset = 0x4, fixed_abs, tag = 'smem constant byte address 0x4 - core index']
  #allocation1 [shape = 'u32[144,128]{1,0:T(1,128)}', space=vmem, size = 0x12000, scoped, tag = 'internal scratch']
  #allocation2 [shape = 'f32[162,96]{1,0:T(8,128)}', space=vmem, size = 0x15000, scoped, tag = 'scratch operand']
  #allocation3 [shape = 'f32[162,192]{1,0:T(8,128)}', space=vmem, size = 0x2a000, scoped, tag = 'scratch operand']
  #allocation4 [shape = 'f32[162,128]{1,0:T(8,128)}', space=vmem, size = 0x15000, scoped, tag = 'scratch operand']
  #allocation5 [shape = 'f32[162,256]{1,0:T(8,128)}', space=vmem, size = 0x2a000, scoped, tag = 'scratch operand']
  %s0 = inlined_call_operand.smem [shape: u32[37], index: -1, kind: input, shape index: {}]
  %s1 = sld [smem:[%s0]]
  %s2 = scalar_lea.smem %s0, 1
  %s3 = sld [smem:[%s2]]
  %s4 = scalar_lea.smem %s0, 2
  %s5 = sld [smem:[%s4]]
  %s6 = scalar_lea.smem %s0, 3
  %s7 = sld [smem:[%s6]]
  %s8 = scalar_lea.smem %s0, 4
  %s9 = sld [smem:[%s8]]
  %s10 = scalar_lea.smem %s0, 5
  %s11 = sld [smem:[%s10]]
  %s12 = scalar_lea.smem %s0, 6
  %s13 = sld [smem:[%s12]]
  %s14 = scalar_lea.smem %s0, 7
  %s15 = sld [smem:[%s14]]
  %s16 = scalar_lea.smem %s0, 8
  %s17 = sld [smem:[%s16]]
  %s18 = scalar_lea.smem %s0, 9
  %s19 = sld [smem:[%s18]]
  %s20 = scalar_lea.smem %s0, 10
  %s21 = sld [smem:[%s20]]
  %s22 = scalar_lea.smem %s0, 11
  %s23 = sld [smem:[%s22]]
  %s24 = scalar_lea.smem %s0, 12
  %s25 = sld [smem:[%s24]]
  %s26 = scalar_lea.smem %s0, 13
  %s27 = sld [smem:[%s26]]
  %s28 = scalar_lea.smem %s0, 14
  %s29 = sld [smem:[%s28]]
  %s30 = scalar_lea.smem %s0, 15
  %s31 = sld [smem:[%s30]]
  %s32 = scalar_lea.smem %s0, 16
  %s33 = sld [smem:[%s32]]
  %s34 = scalar_lea.smem %s0, 17
  %s35 = sld [smem:[%s34]]
  %s36 = scalar_lea.smem %s0, 18
  %s37 = sld [smem:[%s36]]
  %s38 = scalar_lea.smem %s0, 19
  %s39 = sld [smem:[%s38]]
  %s40 = scalar_lea.smem %s0, 20
  %s41 = sld [smem:[%s40]]
  %s42 = scalar_lea.smem %s0, 21
  %s43 = sld [smem:[%s42]]
  %s44 = scalar_lea.smem %s0, 22
  %s45 = sld [smem:[%s44]]
  %s46 = scalar_lea.smem %s0, 23
  %s47 = sld [smem:[%s46]]
  %s48 = scalar_lea.smem %s0, 24
  %s49 = sld [smem:[%s48]]
  %s50 = scalar_lea.smem %s0, 25
  %s51 = sld [smem:[%s50]]
  %s52 = scalar_lea.smem %s0, 26
  %s53 = sld [smem:[%s52]]
  %s54 = scalar_lea.smem %s0, 27
  %s55 = sld [smem:[%s54]]
  %s56 = scalar_lea.smem %s0, 28
  %s57 = sld [smem:[%s56]]
  %s58 = scalar_lea.smem %s0, 29
  %s59 = sld [smem:[%s58]]
  %s60 = scalar_lea.smem %s0, 30
  %s61 = sld [smem:[%s60]]
  %s62 = scalar_lea.smem %s0, 31
  %s63 = sld [smem:[%s62]]
  %s64 = scalar_lea.smem %s0, 32
  %s65 = sld [smem:[%s64]]
  %s66 = scalar_lea.smem %s0, 33
  %s67 = sld [smem:[%s66]]
  %s68 = scalar_lea.smem %s0, 34
  %s69 = sld [smem:[%s68]]
  %s70 = scalar_lea.smem %s0, 35
  %s71 = sld [smem:[%s70]]
  %s72 = scalar_lea.smem %s0, 36
  %s73 = sld [smem:[%s72]]
  %s74 = sld [smem:[#allocation0]]
  $region177: #{transaid_forward.1} parent=0
    _
  %s76 = ssub.s32 1, %s74
  %s77 = scalar_select 0, %s76, %s74
  loop: start=0, step=1, limit=8
  $region2: #{transaid_forward.1} parent=0 // loop_pre_header
    _
  $region3: #{transaid_forward.1} parent=0 // loop_header
    %s79 = sphi 0, %s83
    %p80 = scmp.ge.s32.totalorder %s79, 8
    %s86 = sphi 0, %s98
    %s87 = sphi 0, %s94
    %s88 = sphi 0, %s86
    %s89 = sphi 0, %s87
    %s90 = sphi 0, %s88
    %s91 = sphi 0, %s89
    %s103 = sphi 0, %s105
    %s106 = sphi 0, %s103
    %s107 = sphi 0, %s106
    %s123 = sphi 0, %s107
    %s127 = sphi 0, %s127
    %s129 = sphi 0, %s127
    %s130 = sphi 0, %s129
    %s144 = sphi 0, %s130
    %s148 = sphi 0, %s148
    %s150 = sphi 0, %s148
    %s151 = sphi 0, %s150
    %s165 = sphi 0, %s151
    %s169 = sphi 0, %s169
    %s171 = sphi 0, %s169
    %s172 = sphi 0, %s171
    %s186 = sphi 0, %s172
    %s190 = sphi 0, %s190
    %s192 = sphi 0, %s190
    %s193 = sphi 0, %s192
    %s207 = sphi 0, %s193
    %s211 = sphi 0, %s211
    %s213 = sphi 0, %s211
    %s214 = sphi 0, %s213
    %s228 = sphi 0, %s214
    %s232 = sphi 0, %s232
    %s234 = sphi 0, %s232
    %s235 = sphi 0, %s234
    %s249 = sphi 0, %s235
    %s253 = sphi 0, %s253
    %s255 = sphi 0, %s253
    %s256 = sphi 0, %s255
    %s270 = sphi 0, %s256
    %s274 = sphi 0, %s274
    %s276 = sphi 0, %s274
    %s277 = sphi 0, %s276
    %s291 = sphi 0, %s277
    %s295 = sphi 0, %s295
    %s297 = sphi 0, %s295
    %s298 = sphi 0, %s297
    %s312 = sphi 0, %s298
    %s316 = sphi 0, %s316
    %s318 = sphi 0, %s316
    %s319 = sphi 0, %s318
    %s333 = sphi 0, %s319
    %s337 = sphi 0, %s337
    %s339 = sphi 0, %s337
    %s340 = sphi 0, %s339
    %s354 = sphi 0, %s340
    %s358 = sphi 0, %s358
    %s360 = sphi 0, %s358
    %s361 = sphi 0, %s360
    %s375 = sphi 0, %s361
    %s379 = sphi 0, %s379
    %s381 = sphi 0, %s379
    %s382 = sphi 0, %s381
    %s396 = sphi 0, %s382
    %s400 = sphi 0, %s400
    %s402 = sphi 0, %s400
    %s403 = sphi 0, %s402
    %s417 = sphi 0, %s403
    %s421 = sphi 0, %s421
    %s423 = sphi 0, %s421
    %s424 = sphi 0, %s423
    %s438 = sphi 0, %s424
    %s442 = sphi 0, %s442
    %s444 = sphi 0, %s442
    %s445 = sphi 0, %s444
    %s459 = sphi 0, %s445
    %s463 = sphi 0, %s463
    %s465 = sphi 0, %s463
    %s466 = sphi 0, %s465
    %s480 = sphi 0, %s466
    %s484 = sphi 0, %s484
    %s486 = sphi 0, %s484
    %s487 = sphi 0, %s486
    %s501 = sphi 0, %s487
    %s505 = sphi 0, %s505
    %s507 = sphi 0, %s505
    %s508 = sphi 0, %s507
    %s522 = sphi 0, %s508
    %s526 = sphi 0, %s526
    %s528 = sphi 0, %s526
    %s529 = sphi 0, %s528
    %s543 = sphi 0, %s529
    %s547 = sphi 0, %s547
    %s549 = sphi 0, %s547
    %s550 = sphi 0, %s549
    %s564 = sphi 0, %s550
    %s568 = sphi 0, %s568
    %s570 = sphi 0, %s568
    %s571 = sphi 0, %s570
    %s585 = sphi 0, %s571
    %s589 = sphi 0, %s589
    %s591 = sphi 0, %s589
    %s592 = sphi 0, %s591
    %s606 = sphi 0, %s592
    %s610 = sphi 0, %s610
    %s612 = sphi 0, %s610
    %s613 = sphi 0, %s612
    %s627 = sphi 0, %s613
    %s631 = sphi 0, %s631
    %s633 = sphi 0, %s631
    %s634 = sphi 0, %s633
    %s648 = sphi 0, %s634
    %s652 = sphi 0, %s652
    %s654 = sphi 0, %s652
    %s655 = sphi 0, %s654
    %s669 = sphi 0, %s655
    %s673 = sphi 0, %s673
    %s675 = sphi 0, %s673
    %s676 = sphi 0, %s675
    %s690 = sphi 0, %s676
    %s694 = sphi 0, %s694
    %s696 = sphi 0, %s694
    %s697 = sphi 0, %s696
    %s711 = sphi 0, %s697
    %s715 = sphi 0, %s715
    %s717 = sphi 0, %s715
    %s718 = sphi 0, %s717
    %s732 = sphi 0, %s718
    %s736 = sphi 0, %s736
    %s738 = sphi 0, %s736
    %s739 = sphi 0, %s738
    %s753 = sphi 0, %s739
    %s757 = sphi 0, %s757
    %s759 = sphi 0, %s757
    %s760 = sphi 0, %s759
    %s774 = sphi 0, %s760
    %s778 = sphi 0, %s778
    %s780 = sphi 0, %s778
    %s781 = sphi 0, %s780
    %s795 = sphi 0, %s781
    %s799 = sphi 0, %s799
    %s801 = sphi 0, %s799
    %s802 = sphi 0, %s801
    %s816 = sphi 0, %s802
    %s820 = sphi 0, %s820
    %s822 = sphi 0, %s820
    %s823 = sphi 0, %s822
    %s837 = sphi 0, %s823
    %s841 = sphi 0, %s841
    %s843 = sphi 0, %s841
    %s844 = sphi 0, %s843
    %s858 = sphi 0, %s844
    %s866 = sphi 0, %s868
    %s869 = sphi 0, %s866
    %s870 = sphi 0, %s869
    %s886 = sphi 0, %s870
  $region4: #{transaid_forward.1} parent=0 // loop_header_branch
    %82 = sbr.rel (%p80) target = $region8
  $region5: #{transaid_forward.1} parent=0 // loop_body
    %s84 = ssub.s32 %s79, 1
    %s85 = ssub.s32 %s79, 2
    %s92 = sadd.s32 1, %s87
    %p93 = scmp.ge.s32.totalorder %s92, 3
    %s94 = scalar_select %p93, 0, %s92
    %s95 = sadd.s32 1, %s86
    %s96 = scalar_select %p93, %s95, %s86
    %p97 = scmp.ge.s32.totalorder %s96, 2
    %s98 = scalar_select %p97, 0, %s96
    %s99 = ssub.s32 %s86, %s98
    %s100 = ssub.s32 %s87, %s94
    %s101 = sor.u32 %s99, %s100
    %p102 = scmp.eq.s32.totalorder %s101, 0
    %s104 = sadd.s32 %s103, 1
    %s105 = scalar_select %p102, %s103, %s104
    %p108 = pneg %p102
    %p109 = scmp.eq.s32.totalorder %s79, 5
    %p110 = por %p108, %p109
    %p111 = scmp.ne.s32.totalorder %s103, %s106
    %p112 = scmp.eq.s32.totalorder %s79, 0
    %p113 = por %p111, %p112
    %p114 = scmp.ne.s32.totalorder %s103, %s106
    %p115 = scmp.eq.s32.totalorder %s84, 5
    %p116 = por %p114, %p115
    %p117 = scmp.ne.s32.totalorder %s106, %s107
    %p118 = scmp.eq.s32.totalorder %s84, 0
    %p119 = por %p117, %p118
    %p120 = scmp.ne.s32.totalorder %s106, %s107
    %p121 = scmp.eq.s32.totalorder %s85, 5
    %p122 = por %p120, %p121
    %p124 = scmp.ne.s32.totalorder %s107, %s123
    %p125 = scmp.eq.s32.totalorder %s85, 0
    %p126 = por %p124, %p125
    %s128 = sadd.s32 %s127, 1
    %p131 = scmp.eq.s32.totalorder %s79, 5
    %p132 = scmp.ne.s32.totalorder %s127, %s129
    %p133 = scmp.eq.s32.totalorder %s79, 0
    %p134 = por %p132, %p133
    %p135 = scmp.ne.s32.totalorder %s127, %s129
    %p136 = scmp.eq.s32.totalorder %s84, 5
    %p137 = por %p135, %p136
    %p138 = scmp.ne.s32.totalorder %s129, %s130
    %p139 = scmp.eq.s32.totalorder %s84, 0
    %p140 = por %p138, %p139
    %p141 = scmp.ne.s32.totalorder %s129, %s130
    %p142 = scmp.eq.s32.totalorder %s85, 5
    %p143 = por %p141, %p142
    %p145 = scmp.ne.s32.totalorder %s130, %s144
    %p146 = scmp.eq.s32.totalorder %s85, 0
    %p147 = por %p145, %p146
    %s149 = sadd.s32 %s148, 1
    %p152 = scmp.eq.s32.totalorder %s79, 5
    %p153 = scmp.ne.s32.totalorder %s148, %s150
    %p154 = scmp.eq.s32.totalorder %s79, 0
    %p155 = por %p153, %p154
    %p156 = scmp.ne.s32.totalorder %s148, %s150
    %p157 = scmp.eq.s32.totalorder %s84, 5
    %p158 = por %p156, %p157
    %p159 = scmp.ne.s32.totalorder %s150, %s151
    %p160 = scmp.eq.s32.totalorder %s84, 0
    %p161 = por %p159, %p160
    %p162 = scmp.ne.s32.totalorder %s150, %s151
    %p163 = scmp.eq.s32.totalorder %s85, 5
    %p164 = por %p162, %p163
    %p166 = scmp.ne.s32.totalorder %s151, %s165
    %p167 = scmp.eq.s32.totalorder %s85, 0
    %p168 = por %p166, %p167
    %s170 = sadd.s32 %s169, 1
    %p173 = scmp.eq.s32.totalorder %s79, 5
    %p174 = scmp.ne.s32.totalorder %s169, %s171
    %p175 = scmp.eq.s32.totalorder %s79, 0
    %p176 = por %p174, %p175
    %p177 = scmp.ne.s32.totalorder %s169, %s171
    %p178 = scmp.eq.s32.totalorder %s84, 5
    %p179 = por %p177, %p178
    %p180 = scmp.ne.s32.totalorder %s171, %s172
    %p181 = scmp.eq.s32.totalorder %s84, 0
    %p182 = por %p180, %p181
    %p183 = scmp.ne.s32.totalorder %s171, %s172
    %p184 = scmp.eq.s32.totalorder %s85, 5
    %p185 = por %p183, %p184
    %p187 = scmp.ne.s32.totalorder %s172, %s186
    %p188 = scmp.eq.s32.totalorder %s85, 0
    %p189 = por %p187, %p188
    %s191 = sadd.s32 %s190, 1
    %p194 = scmp.eq.s32.totalorder %s79, 5
    %p195 = scmp.ne.s32.totalorder %s190, %s192
    %p196 = scmp.eq.s32.totalorder %s79, 0
    %p197 = por %p195, %p196
    %p198 = scmp.ne.s32.totalorder %s190, %s192
    %p199 = scmp.eq.s32.totalorder %s84, 5
    %p200 = por %p198, %p199
    %p201 = scmp.ne.s32.totalorder %s192, %s193
    %p202 = scmp.eq.s32.totalorder %s84, 0
    %p203 = por %p201, %p202
    %p204 = scmp.ne.s32.totalorder %s192, %s193
    %p205 = scmp.eq.s32.totalorder %s85, 5
    %p206 = por %p204, %p205
    %p208 = scmp.ne.s32.totalorder %s193, %s207
    %p209 = scmp.eq.s32.totalorder %s85, 0
    %p210 = por %p208, %p209
    %s212 = sadd.s32 %s211, 1
    %p215 = scmp.eq.s32.totalorder %s79, 5
    %p216 = scmp.ne.s32.totalorder %s211, %s213
    %p217 = scmp.eq.s32.totalorder %s79, 0
    %p218 = por %p216, %p217
    %p219 = scmp.ne.s32.totalorder %s211, %s213
    %p220 = scmp.eq.s32.totalorder %s84, 5
    %p221 = por %p219, %p220
    %p222 = scmp.ne.s32.totalorder %s213, %s214
    %p223 = scmp.eq.s32.totalorder %s84, 0
    %p224 = por %p222, %p223
    %p225 = scmp.ne.s32.totalorder %s213, %s214
    %p226 = scmp.eq.s32.totalorder %s85, 5
    %p227 = por %p225, %p226
    %p229 = scmp.ne.s32.totalorder %s214, %s228
    %p230 = scmp.eq.s32.totalorder %s85, 0
    %p231 = por %p229, %p230
    %s233 = sadd.s32 %s232, 1
    %p236 = scmp.eq.s32.totalorder %s79, 5
    %p237 = scmp.ne.s32.totalorder %s232, %s234
    %p238 = scmp.eq.s32.totalorder %s79, 0
    %p239 = por %p237, %p238
    %p240 = scmp.ne.s32.totalorder %s232, %s234
    %p241 = scmp.eq.s32.totalorder %s84, 5
    %p242 = por %p240, %p241
    %p243 = scmp.ne.s32.totalorder %s234, %s235
    %p244 = scmp.eq.s32.totalorder %s84, 0
    %p245 = por %p243, %p244
    %p246 = scmp.ne.s32.totalorder %s234, %s235
    %p247 = scmp.eq.s32.totalorder %s85, 5
    %p248 = por %p246, %p247
    %p250 = scmp.ne.s32.totalorder %s235, %s249
    %p251 = scmp.eq.s32.totalorder %s85, 0
    %p252 = por %p250, %p251
    %s254 = sadd.s32 %s253, 1
    %p257 = scmp.eq.s32.totalorder %s79, 5
    %p258 = scmp.ne.s32.totalorder %s253, %s255
    %p259 = scmp.eq.s32.totalorder %s79, 0
    %p260 = por %p258, %p259
    %p261 = scmp.ne.s32.totalorder %s253, %s255
    %p262 = scmp.eq.s32.totalorder %s84, 5
    %p263 = por %p261, %p262
    %p264 = scmp.ne.s32.totalorder %s255, %s256
    %p265 = scmp.eq.s32.totalorder %s84, 0
    %p266 = por %p264, %p265
    %p267 = scmp.ne.s32.totalorder %s255, %s256
    %p268 = scmp.eq.s32.totalorder %s85, 5
    %p269 = por %p267, %p268
    %p271 = scmp.ne.s32.totalorder %s256, %s270
    %p272 = scmp.eq.s32.totalorder %s85, 0
    %p273 = por %p271, %p272
    %s275 = sadd.s32 %s274, 1
    %p278 = scmp.eq.s32.totalorder %s79, 5
    %p279 = scmp.ne.s32.totalorder %s274, %s276
    %p280 = scmp.eq.s32.totalorder %s79, 0
    %p281 = por %p279, %p280
    %p282 = scmp.ne.s32.totalorder %s274, %s276
    %p283 = scmp.eq.s32.totalorder %s84, 5
    %p284 = por %p282, %p283
    %p285 = scmp.ne.s32.totalorder %s276, %s277
    %p286 = scmp.eq.s32.totalorder %s84, 0
    %p287 = por %p285, %p286
    %p288 = scmp.ne.s32.totalorder %s276, %s277
    %p289 = scmp.eq.s32.totalorder %s85, 5
    %p290 = por %p288, %p289
    %p292 = scmp.ne.s32.totalorder %s277, %s291
    %p293 = scmp.eq.s32.totalorder %s85, 0
    %p294 = por %p292, %p293
    %s296 = sadd.s32 %s295, 1
    %p299 = scmp.eq.s32.totalorder %s79, 5
    %p300 = scmp.ne.s32.totalorder %s295, %s297
    %p301 = scmp.eq.s32.totalorder %s79, 0
    %p302 = por %p300, %p301
    %p303 = scmp.ne.s32.totalorder %s295, %s297
    %p304 = scmp.eq.s32.totalorder %s84, 5
    %p305 = por %p303, %p304
    %p306 = scmp.ne.s32.totalorder %s297, %s298
    %p307 = scmp.eq.s32.totalorder %s84, 0
    %p308 = por %p306, %p307
    %p309 = scmp.ne.s32.totalorder %s297, %s298
    %p310 = scmp.eq.s32.totalorder %s85, 5
    %p311 = por %p309, %p310
    %p313 = scmp.ne.s32.totalorder %s298, %s312
    %p314 = scmp.eq.s32.totalorder %s85, 0
    %p315 = por %p313, %p314
    %s317 = sadd.s32 %s316, 1
    %p320 = scmp.eq.s32.totalorder %s79, 5
    %p321 = scmp.ne.s32.totalorder %s316, %s318
    %p322 = scmp.eq.s32.totalorder %s79, 0
    %p323 = por %p321, %p322
    %p324 = scmp.ne.s32.totalorder %s316, %s318
    %p325 = scmp.eq.s32.totalorder %s84, 5
    %p326 = por %p324, %p325
    %p327 = scmp.ne.s32.totalorder %s318, %s319
    %p328 = scmp.eq.s32.totalorder %s84, 0
    %p329 = por %p327, %p328
    %p330 = scmp.ne.s32.totalorder %s318, %s319
    %p331 = scmp.eq.s32.totalorder %s85, 5
    %p332 = por %p330, %p331
    %p334 = scmp.ne.s32.totalorder %s319, %s333
    %p335 = scmp.eq.s32.totalorder %s85, 0
    %p336 = por %p334, %p335
    %s338 = sadd.s32 %s337, 1
    %p341 = scmp.eq.s32.totalorder %s79, 5
    %p342 = scmp.ne.s32.totalorder %s337, %s339
    %p343 = scmp.eq.s32.totalorder %s79, 0
    %p344 = por %p342, %p343
    %p345 = scmp.ne.s32.totalorder %s337, %s339
    %p346 = scmp.eq.s32.totalorder %s84, 5
    %p347 = por %p345, %p346
    %p348 = scmp.ne.s32.totalorder %s339, %s340
    %p349 = scmp.eq.s32.totalorder %s84, 0
    %p350 = por %p348, %p349
    %p351 = scmp.ne.s32.totalorder %s339, %s340
    %p352 = scmp.eq.s32.totalorder %s85, 5
    %p353 = por %p351, %p352
    %p355 = scmp.ne.s32.totalorder %s340, %s354
    %p356 = scmp.eq.s32.totalorder %s85, 0
    %p357 = por %p355, %p356
    %s359 = sadd.s32 %s358, 1
    %p362 = scmp.eq.s32.totalorder %s79, 5
    %p363 = scmp.ne.s32.totalorder %s358, %s360
    %p364 = scmp.eq.s32.totalorder %s79, 0
    %p365 = por %p363, %p364
    %p366 = scmp.ne.s32.totalorder %s358, %s360
    %p367 = scmp.eq.s32.totalorder %s84, 5
    %p368 = por %p366, %p367
    %p369 = scmp.ne.s32.totalorder %s360, %s361
    %p370 = scmp.eq.s32.totalorder %s84, 0
    %p371 = por %p369, %p370
    %p372 = scmp.ne.s32.totalorder %s360, %s361
    %p373 = scmp.eq.s32.totalorder %s85, 5
    %p374 = por %p372, %p373
    %p376 = scmp.ne.s32.totalorder %s361, %s375
    %p377 = scmp.eq.s32.totalorder %s85, 0
    %p378 = por %p376, %p377
    %s380 = sadd.s32 %s379, 1
    %p383 = scmp.eq.s32.totalorder %s79, 5
    %p384 = scmp.ne.s32.totalorder %s379, %s381
    %p385 = scmp.eq.s32.totalorder %s79, 0
    %p386 = por %p384, %p385
    %p387 = scmp.ne.s32.totalorder %s379, %s381
    %p388 = scmp.eq.s32.totalorder %s84, 5
    %p389 = por %p387, %p388
    %p390 = scmp.ne.s32.totalorder %s381, %s382
    %p391 = scmp.eq.s32.totalorder %s84, 0
    %p392 = por %p390, %p391
    %p393 = scmp.ne.s32.totalorder %s381, %s382
    %p394 = scmp.eq.s32.totalorder %s85, 5
    %p395 = por %p393, %p394
    %p397 = scmp.ne.s32.totalorder %s382, %s396
    %p398 = scmp.eq.s32.totalorder %s85, 0
    %p399 = por %p397, %p398
    %s401 = sadd.s32 %s400, 1
    %p404 = scmp.eq.s32.totalorder %s79, 5
    %p405 = scmp.ne.s32.totalorder %s400, %s402
    %p406 = scmp.eq.s32.totalorder %s79, 0
    %p407 = por %p405, %p406
    %p408 = scmp.ne.s32.totalorder %s400, %s402
    %p409 = scmp.eq.s32.totalorder %s84, 5
    %p410 = por %p408, %p409
    %p411 = scmp.ne.s32.totalorder %s402, %s403
    %p412 = scmp.eq.s32.totalorder %s84, 0
    %p413 = por %p411, %p412
    %p414 = scmp.ne.s32.totalorder %s402, %s403
    %p415 = scmp.eq.s32.totalorder %s85, 5
    %p416 = por %p414, %p415
    %p418 = scmp.ne.s32.totalorder %s403, %s417
    %p419 = scmp.eq.s32.totalorder %s85, 0
    %p420 = por %p418, %p419
    %s422 = sadd.s32 %s421, 1
    %p425 = scmp.eq.s32.totalorder %s79, 5
    %p426 = scmp.ne.s32.totalorder %s421, %s423
    %p427 = scmp.eq.s32.totalorder %s79, 0
    %p428 = por %p426, %p427
    %p429 = scmp.ne.s32.totalorder %s421, %s423
    %p430 = scmp.eq.s32.totalorder %s84, 5
    %p431 = por %p429, %p430
    %p432 = scmp.ne.s32.totalorder %s423, %s424
    %p433 = scmp.eq.s32.totalorder %s84, 0
    %p434 = por %p432, %p433
    %p435 = scmp.ne.s32.totalorder %s423, %s424
    %p436 = scmp.eq.s32.totalorder %s85, 5
    %p437 = por %p435, %p436
    %p439 = scmp.ne.s32.totalorder %s424, %s438
    %p440 = scmp.eq.s32.totalorder %s85, 0
    %p441 = por %p439, %p440
    %s443 = sadd.s32 %s442, 1
    %p446 = scmp.eq.s32.totalorder %s79, 5
    %p447 = scmp.ne.s32.totalorder %s442, %s444
    %p448 = scmp.eq.s32.totalorder %s79, 0
    %p449 = por %p447, %p448
    %p450 = scmp.ne.s32.totalorder %s442, %s444
    %p451 = scmp.eq.s32.totalorder %s84, 5
    %p452 = por %p450, %p451
    %p453 = scmp.ne.s32.totalorder %s444, %s445
    %p454 = scmp.eq.s32.totalorder %s84, 0
    %p455 = por %p453, %p454
    %p456 = scmp.ne.s32.totalorder %s444, %s445
    %p457 = scmp.eq.s32.totalorder %s85, 5
    %p458 = por %p456, %p457
    %p460 = scmp.ne.s32.totalorder %s445, %s459
    %p461 = scmp.eq.s32.totalorder %s85, 0
    %p462 = por %p460, %p461
    %s464 = sadd.s32 %s463, 1
    %p467 = scmp.eq.s32.totalorder %s79, 5
    %p468 = scmp.ne.s32.totalorder %s463, %s465
    %p469 = scmp.eq.s32.totalorder %s79, 0
    %p470 = por %p468, %p469
    %p471 = scmp.ne.s32.totalorder %s463, %s465
    %p472 = scmp.eq.s32.totalorder %s84, 5
    %p473 = por %p471, %p472
    %p474 = scmp.ne.s32.totalorder %s465, %s466
    %p475 = scmp.eq.s32.totalorder %s84, 0
    %p476 = por %p474, %p475
    %p477 = scmp.ne.s32.totalorder %s465, %s466
    %p478 = scmp.eq.s32.totalorder %s85, 5
    %p479 = por %p477, %p478
    %p481 = scmp.ne.s32.totalorder %s466, %s480
    %p482 = scmp.eq.s32.totalorder %s85, 0
    %p483 = por %p481, %p482
    %s485 = sadd.s32 %s484, 1
    %p488 = scmp.eq.s32.totalorder %s79, 5
    %p489 = scmp.ne.s32.totalorder %s484, %s486
    %p490 = scmp.eq.s32.totalorder %s79, 0
    %p491 = por %p489, %p490
    %p492 = scmp.ne.s32.totalorder %s484, %s486
    %p493 = scmp.eq.s32.totalorder %s84, 5
    %p494 = por %p492, %p493
    %p495 = scmp.ne.s32.totalorder %s486, %s487
    %p496 = scmp.eq.s32.totalorder %s84, 0
    %p497 = por %p495, %p496
    %p498 = scmp.ne.s32.totalorder %s486, %s487
    %p499 = scmp.eq.s32.totalorder %s85, 5
    %p500 = por %p498, %p499
    %p502 = scmp.ne.s32.totalorder %s487, %s501
    %p503 = scmp.eq.s32.totalorder %s85, 0
    %p504 = por %p502, %p503
    %s506 = sadd.s32 %s505, 1
    %p509 = scmp.eq.s32.totalorder %s79, 5
    %p510 = scmp.ne.s32.totalorder %s505, %s507
    %p511 = scmp.eq.s32.totalorder %s79, 0
    %p512 = por %p510, %p511
    %p513 = scmp.ne.s32.totalorder %s505, %s507
    %p514 = scmp.eq.s32.totalorder %s84, 5
    %p515 = por %p513, %p514
    %p516 = scmp.ne.s32.totalorder %s507, %s508
    %p517 = scmp.eq.s32.totalorder %s84, 0
    %p518 = por %p516, %p517
    %p519 = scmp.ne.s32.totalorder %s507, %s508
    %p520 = scmp.eq.s32.totalorder %s85, 5
    %p521 = por %p519, %p520
    %p523 = scmp.ne.s32.totalorder %s508, %s522
    %p524 = scmp.eq.s32.totalorder %s85, 0
    %p525 = por %p523, %p524
    %s527 = sadd.s32 %s526, 1
    %p530 = scmp.eq.s32.totalorder %s79, 5
    %p531 = scmp.ne.s32.totalorder %s526, %s528
    %p532 = scmp.eq.s32.totalorder %s79, 0
    %p533 = por %p531, %p532
    %p534 = scmp.ne.s32.totalorder %s526, %s528
    %p535 = scmp.eq.s32.totalorder %s84, 5
    %p536 = por %p534, %p535
    %p537 = scmp.ne.s32.totalorder %s528, %s529
    %p538 = scmp.eq.s32.totalorder %s84, 0
    %p539 = por %p537, %p538
    %p540 = scmp.ne.s32.totalorder %s528, %s529
    %p541 = scmp.eq.s32.totalorder %s85, 5
    %p542 = por %p540, %p541
    %p544 = scmp.ne.s32.totalorder %s529, %s543
    %p545 = scmp.eq.s32.totalorder %s85, 0
    %p546 = por %p544, %p545
    %s548 = sadd.s32 %s547, 1
    %p551 = scmp.eq.s32.totalorder %s79, 5
    %p552 = scmp.ne.s32.totalorder %s547, %s549
    %p553 = scmp.eq.s32.totalorder %s79, 0
    %p554 = por %p552, %p553
    %p555 = scmp.ne.s32.totalorder %s547, %s549
    %p556 = scmp.eq.s32.totalorder %s84, 5
    %p557 = por %p555, %p556
    %p558 = scmp.ne.s32.totalorder %s549, %s550
    %p559 = scmp.eq.s32.totalorder %s84, 0
    %p560 = por %p558, %p559
    %p561 = scmp.ne.s32.totalorder %s549, %s550
    %p562 = scmp.eq.s32.totalorder %s85, 5
    %p563 = por %p561, %p562
    %p565 = scmp.ne.s32.totalorder %s550, %s564
    %p566 = scmp.eq.s32.totalorder %s85, 0
    %p567 = por %p565, %p566
    %s569 = sadd.s32 %s568, 1
    %p572 = scmp.eq.s32.totalorder %s79, 5
    %p573 = scmp.ne.s32.totalorder %s568, %s570
    %p574 = scmp.eq.s32.totalorder %s79, 0
    %p575 = por %p573, %p574
    %p576 = scmp.ne.s32.totalorder %s568, %s570
    %p577 = scmp.eq.s32.totalorder %s84, 5
    %p578 = por %p576, %p577
    %p579 = scmp.ne.s32.totalorder %s570, %s571
    %p580 = scmp.eq.s32.totalorder %s84, 0
    %p581 = por %p579, %p580
    %p582 = scmp.ne.s32.totalorder %s570, %s571
    %p583 = scmp.eq.s32.totalorder %s85, 5
    %p584 = por %p582, %p583
    %p586 = scmp.ne.s32.totalorder %s571, %s585
    %p587 = scmp.eq.s32.totalorder %s85, 0
    %p588 = por %p586, %p587
    %s590 = sadd.s32 %s589, 1
    %p593 = scmp.eq.s32.totalorder %s79, 5
    %p594 = scmp.ne.s32.totalorder %s589, %s591
    %p595 = scmp.eq.s32.totalorder %s79, 0
    %p596 = por %p594, %p595
    %p597 = scmp.ne.s32.totalorder %s589, %s591
    %p598 = scmp.eq.s32.totalorder %s84, 5
    %p599 = por %p597, %p598
    %p600 = scmp.ne.s32.totalorder %s591, %s592
    %p601 = scmp.eq.s32.totalorder %s84, 0
    %p602 = por %p600, %p601
    %p603 = scmp.ne.s32.totalorder %s591, %s592
    %p604 = scmp.eq.s32.totalorder %s85, 5
    %p605 = por %p603, %p604
    %p607 = scmp.ne.s32.totalorder %s592, %s606
    %p608 = scmp.eq.s32.totalorder %s85, 0
    %p609 = por %p607, %p608
    %s611 = sadd.s32 %s610, 1
    %p614 = scmp.eq.s32.totalorder %s79, 5
    %p615 = scmp.ne.s32.totalorder %s610, %s612
    %p616 = scmp.eq.s32.totalorder %s79, 0
    %p617 = por %p615, %p616
    %p618 = scmp.ne.s32.totalorder %s610, %s612
    %p619 = scmp.eq.s32.totalorder %s84, 5
    %p620 = por %p618, %p619
    %p621 = scmp.ne.s32.totalorder %s612, %s613
    %p622 = scmp.eq.s32.totalorder %s84, 0
    %p623 = por %p621, %p622
    %p624 = scmp.ne.s32.totalorder %s612, %s613
    %p625 = scmp.eq.s32.totalorder %s85, 5
    %p626 = por %p624, %p625
    %p628 = scmp.ne.s32.totalorder %s613, %s627
    %p629 = scmp.eq.s32.totalorder %s85, 0
    %p630 = por %p628, %p629
    %s632 = sadd.s32 %s631, 1
    %p635 = scmp.eq.s32.totalorder %s79, 5
    %p636 = scmp.ne.s32.totalorder %s631, %s633
    %p637 = scmp.eq.s32.totalorder %s79, 0
    %p638 = por %p636, %p637
    %p639 = scmp.ne.s32.totalorder %s631, %s633
    %p640 = scmp.eq.s32.totalorder %s84, 5
    %p641 = por %p639, %p640
    %p642 = scmp.ne.s32.totalorder %s633, %s634
    %p643 = scmp.eq.s32.totalorder %s84, 0
    %p644 = por %p642, %p643
    %p645 = scmp.ne.s32.totalorder %s633, %s634
    %p646 = scmp.eq.s32.totalorder %s85, 5
    %p647 = por %p645, %p646
    %p649 = scmp.ne.s32.totalorder %s634, %s648
    %p650 = scmp.eq.s32.totalorder %s85, 0
    %p651 = por %p649, %p650
    %s653 = sadd.s32 %s652, 1
    %p656 = scmp.eq.s32.totalorder %s79, 5
    %p657 = scmp.ne.s32.totalorder %s652, %s654
    %p658 = scmp.eq.s32.totalorder %s79, 0
    %p659 = por %p657, %p658
    %p660 = scmp.ne.s32.totalorder %s652, %s654
    %p661 = scmp.eq.s32.totalorder %s84, 5
    %p662 = por %p660, %p661
    %p663 = scmp.ne.s32.totalorder %s654, %s655
    %p664 = scmp.eq.s32.totalorder %s84, 0
    %p665 = por %p663, %p664
    %p666 = scmp.ne.s32.totalorder %s654, %s655
    %p667 = scmp.eq.s32.totalorder %s85, 5
    %p668 = por %p666, %p667
    %p670 = scmp.ne.s32.totalorder %s655, %s669
    %p671 = scmp.eq.s32.totalorder %s85, 0
    %p672 = por %p670, %p671
    %s674 = sadd.s32 %s673, 1
    %p677 = scmp.eq.s32.totalorder %s79, 5
    %p678 = scmp.ne.s32.totalorder %s673, %s675
    %p679 = scmp.eq.s32.totalorder %s79, 0
    %p680 = por %p678, %p679
    %p681 = scmp.ne.s32.totalorder %s673, %s675
    %p682 = scmp.eq.s32.totalorder %s84, 5
    %p683 = por %p681, %p682
    %p684 = scmp.ne.s32.totalorder %s675, %s676
    %p685 = scmp.eq.s32.totalorder %s84, 0
    %p686 = por %p684, %p685
    %p687 = scmp.ne.s32.totalorder %s675, %s676
    %p688 = scmp.eq.s32.totalorder %s85, 5
    %p689 = por %p687, %p688
    %p691 = scmp.ne.s32.totalorder %s676, %s690
    %p692 = scmp.eq.s32.totalorder %s85, 0
    %p693 = por %p691, %p692
    %s695 = sadd.s32 %s694, 1
    %p698 = scmp.eq.s32.totalorder %s79, 5
    %p699 = scmp.ne.s32.totalorder %s694, %s696
    %p700 = scmp.eq.s32.totalorder %s79, 0
    %p701 = por %p699, %p700
    %p702 = scmp.ne.s32.totalorder %s694, %s696
    %p703 = scmp.eq.s32.totalorder %s84, 5
    %p704 = por %p702, %p703
    %p705 = scmp.ne.s32.totalorder %s696, %s697
    %p706 = scmp.eq.s32.totalorder %s84, 0
    %p707 = por %p705, %p706
    %p708 = scmp.ne.s32.totalorder %s696, %s697
    %p709 = scmp.eq.s32.totalorder %s85, 5
    %p710 = por %p708, %p709
    %p712 = scmp.ne.s32.totalorder %s697, %s711
    %p713 = scmp.eq.s32.totalorder %s85, 0
    %p714 = por %p712, %p713
    %s716 = sadd.s32 %s715, 1
    %p719 = scmp.eq.s32.totalorder %s79, 5
    %p720 = scmp.ne.s32.totalorder %s715, %s717
    %p721 = scmp.eq.s32.totalorder %s79, 0
    %p722 = por %p720, %p721
    %p723 = scmp.ne.s32.totalorder %s715, %s717
    %p724 = scmp.eq.s32.totalorder %s84, 5
    %p725 = por %p723, %p724
    %p726 = scmp.ne.s32.totalorder %s717, %s718
    %p727 = scmp.eq.s32.totalorder %s84, 0
    %p728 = por %p726, %p727
    %p729 = scmp.ne.s32.totalorder %s717, %s718
    %p730 = scmp.eq.s32.totalorder %s85, 5
    %p731 = por %p729, %p730
    %p733 = scmp.ne.s32.totalorder %s718, %s732
    %p734 = scmp.eq.s32.totalorder %s85, 0
    %p735 = por %p733, %p734
    %s737 = sadd.s32 %s736, 1
    %p740 = scmp.eq.s32.totalorder %s79, 5
    %p741 = scmp.ne.s32.totalorder %s736, %s738
    %p742 = scmp.eq.s32.totalorder %s79, 0
    %p743 = por %p741, %p742
    %p744 = scmp.ne.s32.totalorder %s736, %s738
    %p745 = scmp.eq.s32.totalorder %s84, 5
    %p746 = por %p744, %p745
    %p747 = scmp.ne.s32.totalorder %s738, %s739
    %p748 = scmp.eq.s32.totalorder %s84, 0
    %p749 = por %p747, %p748
    %p750 = scmp.ne.s32.totalorder %s738, %s739
    %p751 = scmp.eq.s32.totalorder %s85, 5
    %p752 = por %p750, %p751
    %p754 = scmp.ne.s32.totalorder %s739, %s753
    %p755 = scmp.eq.s32.totalorder %s85, 0
    %p756 = por %p754, %p755
    %s758 = sadd.s32 %s757, 1
    %p761 = scmp.eq.s32.totalorder %s79, 5
    %p762 = scmp.ne.s32.totalorder %s757, %s759
    %p763 = scmp.eq.s32.totalorder %s79, 0
    %p764 = por %p762, %p763
    %p765 = scmp.ne.s32.totalorder %s757, %s759
    %p766 = scmp.eq.s32.totalorder %s84, 5
    %p767 = por %p765, %p766
    %p768 = scmp.ne.s32.totalorder %s759, %s760
    %p769 = scmp.eq.s32.totalorder %s84, 0
    %p770 = por %p768, %p769
    %p771 = scmp.ne.s32.totalorder %s759, %s760
    %p772 = scmp.eq.s32.totalorder %s85, 5
    %p773 = por %p771, %p772
    %p775 = scmp.ne.s32.totalorder %s760, %s774
    %p776 = scmp.eq.s32.totalorder %s85, 0
    %p777 = por %p775, %p776
    %s779 = sadd.s32 %s778, 1
    %p782 = scmp.eq.s32.totalorder %s79, 5
    %p783 = scmp.ne.s32.totalorder %s778, %s780
    %p784 = scmp.eq.s32.totalorder %s79, 0
    %p785 = por %p783, %p784
    %p786 = scmp.ne.s32.totalorder %s778, %s780
    %p787 = scmp.eq.s32.totalorder %s84, 5
    %p788 = por %p786, %p787
    %p789 = scmp.ne.s32.totalorder %s780, %s781
    %p790 = scmp.eq.s32.totalorder %s84, 0
    %p791 = por %p789, %p790
    %p792 = scmp.ne.s32.totalorder %s780, %s781
    %p793 = scmp.eq.s32.totalorder %s85, 5
    %p794 = por %p792, %p793
    %p796 = scmp.ne.s32.totalorder %s781, %s795
    %p797 = scmp.eq.s32.totalorder %s85, 0
    %p798 = por %p796, %p797
    %s800 = sadd.s32 %s799, 1
    %p803 = scmp.eq.s32.totalorder %s79, 5
    %p804 = scmp.ne.s32.totalorder %s799, %s801
    %p805 = scmp.eq.s32.totalorder %s79, 0
    %p806 = por %p804, %p805
    %p807 = scmp.ne.s32.totalorder %s799, %s801
    %p808 = scmp.eq.s32.totalorder %s84, 5
    %p809 = por %p807, %p808
    %p810 = scmp.ne.s32.totalorder %s801, %s802
    %p811 = scmp.eq.s32.totalorder %s84, 0
    %p812 = por %p810, %p811
    %p813 = scmp.ne.s32.totalorder %s801, %s802
    %p814 = scmp.eq.s32.totalorder %s85, 5
    %p815 = por %p813, %p814
    %p817 = scmp.ne.s32.totalorder %s802, %s816
    %p818 = scmp.eq.s32.totalorder %s85, 0
    %p819 = por %p817, %p818
    %s821 = sadd.s32 %s820, 1
    %p824 = scmp.eq.s32.totalorder %s79, 5
    %p825 = scmp.ne.s32.totalorder %s820, %s822
    %p826 = scmp.eq.s32.totalorder %s79, 0
    %p827 = por %p825, %p826
    %p828 = scmp.ne.s32.totalorder %s820, %s822
    %p829 = scmp.eq.s32.totalorder %s84, 5
    %p830 = por %p828, %p829
    %p831 = scmp.ne.s32.totalorder %s822, %s823
    %p832 = scmp.eq.s32.totalorder %s84, 0
    %p833 = por %p831, %p832
    %p834 = scmp.ne.s32.totalorder %s822, %s823
    %p835 = scmp.eq.s32.totalorder %s85, 5
    %p836 = por %p834, %p835
    %p838 = scmp.ne.s32.totalorder %s823, %s837
    %p839 = scmp.eq.s32.totalorder %s85, 0
    %p840 = por %p838, %p839
    %s842 = sadd.s32 %s841, 1
    %p845 = scmp.eq.s32.totalorder %s79, 5
    %p846 = scmp.ne.s32.totalorder %s841, %s843
    %p847 = scmp.eq.s32.totalorder %s79, 0
    %p848 = por %p846, %p847
    %p849 = scmp.ne.s32.totalorder %s841, %s843
    %p850 = scmp.eq.s32.totalorder %s84, 5
    %p851 = por %p849, %p850
    %p852 = scmp.ne.s32.totalorder %s843, %s844
    %p853 = scmp.eq.s32.totalorder %s84, 0
    %p854 = por %p852, %p853
    %p855 = scmp.ne.s32.totalorder %s843, %s844
    %p856 = scmp.eq.s32.totalorder %s85, 5
    %p857 = por %p855, %p856
    %p859 = scmp.ne.s32.totalorder %s844, %s858
    %p860 = scmp.eq.s32.totalorder %s85, 0
    %p861 = por %p859, %p860
    %s862 = ssub.s32 %s86, %s98
    %s863 = ssub.s32 %s87, %s94
    %s864 = sor.u32 %s862, %s863
    %p865 = scmp.eq.s32.totalorder %s864, 0
    %s867 = sadd.s32 %s866, 1
    %s868 = scalar_select %p865, %s866, %s867
    %p871 = pneg %p865
    %p872 = scmp.eq.s32.totalorder %s79, 5
    %p873 = por %p871, %p872
    %p874 = scmp.ne.s32.totalorder %s866, %s869
    %p875 = scmp.eq.s32.totalorder %s79, 0
    %p876 = por %p874, %p875
    %p877 = scmp.ne.s32.totalorder %s866, %s869
    %p878 = scmp.eq.s32.totalorder %s84, 5
    %p879 = por %p877, %p878
    %p880 = scmp.ne.s32.totalorder %s869, %s870
    %p881 = scmp.eq.s32.totalorder %s84, 0
    %p882 = por %p880, %p881
    %p883 = scmp.ne.s32.totalorder %s869, %s870
    %p884 = scmp.eq.s32.totalorder %s85, 5
    %p885 = por %p883, %p884
    %p887 = scmp.ne.s32.totalorder %s870, %s886
    %p888 = scmp.eq.s32.totalorder %s85, 0
    %p889 = por %p887, %p888
    %p890 = scmp.le.s32.totalorder 1, %s79
    %p891 = scmp.lt.s32.totalorder %s79, 7
    %p892 = pnand %p890, %p891
    %p893 = pneg %p892
    // Predicated region
    $region9: #{transaid_forward.1} parent=5 // pred_check
      _
    $region10: #{transaid_forward.1} parent=5 // pred_check_branch
      %895 = sbr.rel (%p892) target = $region12
    $region11: #{transaid_forward.1} parent=5 // pred_region
      %s896 = ssub.s32 %s79, 1
      // Predicated region
      $region13: #{transaid_forward.1} parent=11 // pred_check
        %p897 = pneg %p140
      $region14: #{transaid_forward.1} parent=11 // pred_check_branch
        %899 = sbr.rel (%p897) target = $region16
      $region15: #{transaid_forward.1} parent=11 // pred_region
        _
      $region16: #{transaid_forward.1} parent=11 // pred_fallthru
        _
      // Predicated region
      $region17: #{transaid_forward.1} parent=11 // pred_check
        %p900 = pneg %p161
      $region18: #{transaid_forward.1} parent=11 // pred_check_branch
        %902 = sbr.rel (%p900) target = $region20
      $region19: #{transaid_forward.1} parent=11 // pred_region
        _
      $region20: #{transaid_forward.1} parent=11 // pred_fallthru
        _
      // Predicated region
      $region21: #{transaid_forward.1} parent=11 // pred_check
        %p903 = pneg %p182
      $region22: #{transaid_forward.1} parent=11 // pred_check_branch
        %905 = sbr.rel (%p903) target = $region24
      $region23: #{transaid_forward.1} parent=11 // pred_region
        _
      $region24: #{transaid_forward.1} parent=11 // pred_fallthru
        _
      // Predicated region
      $region25: #{transaid_forward.1} parent=11 // pred_check
        %p906 = pneg %p203
      $region26: #{transaid_forward.1} parent=11 // pred_check_branch
        %908 = sbr.rel (%p906) target = $region28
      $region27: #{transaid_forward.1} parent=11 // pred_region
        _
      $region28: #{transaid_forward.1} parent=11 // pred_fallthru
        _
      // Predicated region
      $region29: #{transaid_forward.1} parent=11 // pred_check
        %p909 = pneg %p224
      $region30: #{transaid_forward.1} parent=11 // pred_check_branch
        %911 = sbr.rel (%p909) target = $region32
      $region31: #{transaid_forward.1} parent=11 // pred_region
        _
      $region32: #{transaid_forward.1} parent=11 // pred_fallthru
        _
      // Predicated region
      $region33: #{transaid_forward.1} parent=11 // pred_check
        %p912 = pneg %p245
      $region34: #{transaid_forward.1} parent=11 // pred_check_branch
        %914 = sbr.rel (%p912) target = $region36
      $region35: #{transaid_forward.1} parent=11 // pred_region
        _
      $region36: #{transaid_forward.1} parent=11 // pred_fallthru
        _
      // Predicated region
      $region37: #{transaid_forward.1} parent=11 // pred_check
        %p915 = pneg %p266
      $region38: #{transaid_forward.1} parent=11 // pred_check_branch
        %917 = sbr.rel (%p915) target = $region40
      $region39: #{transaid_forward.1} parent=11 // pred_region
        _
      $region40: #{transaid_forward.1} parent=11 // pred_fallthru
        _
      // Predicated region
      $region41: #{transaid_forward.1} parent=11 // pred_check
        %p918 = pneg %p287
      $region42: #{transaid_forward.1} parent=11 // pred_check_branch
        %920 = sbr.rel (%p918) target = $region44
      $region43: #{transaid_forward.1} parent=11 // pred_region
        _
      $region44: #{transaid_forward.1} parent=11 // pred_fallthru
        _
      // Predicated region
      $region45: #{transaid_forward.1} parent=11 // pred_check
        %p921 = pneg %p308
      $region46: #{transaid_forward.1} parent=11 // pred_check_branch
        %923 = sbr.rel (%p921) target = $region48
      $region47: #{transaid_forward.1} parent=11 // pred_region
        _
      $region48: #{transaid_forward.1} parent=11 // pred_fallthru
        _
      // Predicated region
      $region49: #{transaid_forward.1} parent=11 // pred_check
        %p924 = pneg %p329
      $region50: #{transaid_forward.1} parent=11 // pred_check_branch
        %926 = sbr.rel (%p924) target = $region52
      $region51: #{transaid_forward.1} parent=11 // pred_region
        _
      $region52: #{transaid_forward.1} parent=11 // pred_fallthru
        _
      // Predicated region
      $region53: #{transaid_forward.1} parent=11 // pred_check
        %p927 = pneg %p350
      $region54: #{transaid_forward.1} parent=11 // pred_check_branch
        %929 = sbr.rel (%p927) target = $region56
      $region55: #{transaid_forward.1} parent=11 // pred_region
        _
      $region56: #{transaid_forward.1} parent=11 // pred_fallthru
        _
      // Predicated region
      $region57: #{transaid_forward.1} parent=11 // pred_check
        %p930 = pneg %p371
      $region58: #{transaid_forward.1} parent=11 // pred_check_branch
        %932 = sbr.rel (%p930) target = $region60
      $region59: #{transaid_forward.1} parent=11 // pred_region
        _
      $region60: #{transaid_forward.1} parent=11 // pred_fallthru
        _
      // Predicated region
      $region61: #{transaid_forward.1} parent=11 // pred_check
        %p933 = pneg %p392
      $region62: #{transaid_forward.1} parent=11 // pred_check_branch
        %935 = sbr.rel (%p933) target = $region64
      $region63: #{transaid_forward.1} parent=11 // pred_region
        _
      $region64: #{transaid_forward.1} parent=11 // pred_fallthru
        _
      // Predicated region
      $region65: #{transaid_forward.1} parent=11 // pred_check
        %p936 = pneg %p413
      $region66: #{transaid_forward.1} parent=11 // pred_check_branch
        %938 = sbr.rel (%p936) target = $region68
      $region67: #{transaid_forward.1} parent=11 // pred_region
        _
      $region68: #{transaid_forward.1} parent=11 // pred_fallthru
        _
      // Predicated region
      $region69: #{transaid_forward.1} parent=11 // pred_check
        %p939 = pneg %p434
      $region70: #{transaid_forward.1} parent=11 // pred_check_branch
        %941 = sbr.rel (%p939) target = $region72
      $region71: #{transaid_forward.1} parent=11 // pred_region
        _
      $region72: #{transaid_forward.1} parent=11 // pred_fallthru
        _
      // Predicated region
      $region73: #{transaid_forward.1} parent=11 // pred_check
        %p942 = pneg %p455
      $region74: #{transaid_forward.1} parent=11 // pred_check_branch
        %944 = sbr.rel (%p942) target = $region76
      $region75: #{transaid_forward.1} parent=11 // pred_region
        _
      $region76: #{transaid_forward.1} parent=11 // pred_fallthru
        _
      // Predicated region
      $region77: #{transaid_forward.1} parent=11 // pred_check
        %p945 = pneg %p476
      $region78: #{transaid_forward.1} parent=11 // pred_check_branch
        %947 = sbr.rel (%p945) target = $region80
      $region79: #{transaid_forward.1} parent=11 // pred_region
        _
      $region80: #{transaid_forward.1} parent=11 // pred_fallthru
        _
      // Predicated region
      $region81: #{transaid_forward.1} parent=11 // pred_check
        %p948 = pneg %p497
      $region82: #{transaid_forward.1} parent=11 // pred_check_branch
        %950 = sbr.rel (%p948) target = $region84
      $region83: #{transaid_forward.1} parent=11 // pred_region
        _
      $region84: #{transaid_forward.1} parent=11 // pred_fallthru
        _
      // Predicated region
      $region85: #{transaid_forward.1} parent=11 // pred_check
        %p951 = pneg %p518
      $region86: #{transaid_forward.1} parent=11 // pred_check_branch
        %953 = sbr.rel (%p951) target = $region88
      $region87: #{transaid_forward.1} parent=11 // pred_region
        _
      $region88: #{transaid_forward.1} parent=11 // pred_fallthru
        _
      // Predicated region
      $region89: #{transaid_forward.1} parent=11 // pred_check
        %p954 = pneg %p539
      $region90: #{transaid_forward.1} parent=11 // pred_check_branch
        %956 = sbr.rel (%p954) target = $region92
      $region91: #{transaid_forward.1} parent=11 // pred_region
        _
      $region92: #{transaid_forward.1} parent=11 // pred_fallthru
        _
      // Predicated region
      $region93: #{transaid_forward.1} parent=11 // pred_check
        %p957 = pneg %p560
      $region94: #{transaid_forward.1} parent=11 // pred_check_branch
        %959 = sbr.rel (%p957) target = $region96
      $region95: #{transaid_forward.1} parent=11 // pred_region
        _
      $region96: #{transaid_forward.1} parent=11 // pred_fallthru
        _
      // Predicated region
      $region97: #{transaid_forward.1} parent=11 // pred_check
        %p960 = pneg %p581
      $region98: #{transaid_forward.1} parent=11 // pred_check_branch
        %962 = sbr.rel (%p960) target = $region100
      $region99: #{transaid_forward.1} parent=11 // pred_region
        _
      $region100: #{transaid_forward.1} parent=11 // pred_fallthru
        _
      // Predicated region
      $region101: #{transaid_forward.1} parent=11 // pred_check
        %p963 = pneg %p602
      $region102: #{transaid_forward.1} parent=11 // pred_check_branch
        %965 = sbr.rel (%p963) target = $region104
      $region103: #{transaid_forward.1} parent=11 // pred_region
        _
      $region104: #{transaid_forward.1} parent=11 // pred_fallthru
        _
      // Predicated region
      $region105: #{transaid_forward.1} parent=11 // pred_check
        %p966 = pneg %p623
      $region106: #{transaid_forward.1} parent=11 // pred_check_branch
        %968 = sbr.rel (%p966) target = $region108
      $region107: #{transaid_forward.1} parent=11 // pred_region
        _
      $region108: #{transaid_forward.1} parent=11 // pred_fallthru
        _
      // Predicated region
      $region109: #{transaid_forward.1} parent=11 // pred_check
        %p969 = pneg %p644
      $region110: #{transaid_forward.1} parent=11 // pred_check_branch
        %971 = sbr.rel (%p969) target = $region112
      $region111: #{transaid_forward.1} parent=11 // pred_region
        _
      $region112: #{transaid_forward.1} parent=11 // pred_fallthru
        _
      // Predicated region
      $region113: #{transaid_forward.1} parent=11 // pred_check
        %p972 = pneg %p665
      $region114: #{transaid_forward.1} parent=11 // pred_check_branch
        %974 = sbr.rel (%p972) target = $region116
      $region115: #{transaid_forward.1} parent=11 // pred_region
        _
      $region116: #{transaid_forward.1} parent=11 // pred_fallthru
        _
      // Predicated region
      $region117: #{transaid_forward.1} parent=11 // pred_check
        %p975 = pneg %p686
      $region118: #{transaid_forward.1} parent=11 // pred_check_branch
        %977 = sbr.rel (%p975) target = $region120
      $region119: #{transaid_forward.1} parent=11 // pred_region
        _
      $region120: #{transaid_forward.1} parent=11 // pred_fallthru
        _
      // Predicated region
      $region121: #{transaid_forward.1} parent=11 // pred_check
        %p978 = pneg %p707
      $region122: #{transaid_forward.1} parent=11 // pred_check_branch
        %980 = sbr.rel (%p978) target = $region124
      $region123: #{transaid_forward.1} parent=11 // pred_region
        _
      $region124: #{transaid_forward.1} parent=11 // pred_fallthru
        _
      // Predicated region
      $region125: #{transaid_forward.1} parent=11 // pred_check
        %p981 = pneg %p728
      $region126: #{transaid_forward.1} parent=11 // pred_check_branch
        %983 = sbr.rel (%p981) target = $region128
      $region127: #{transaid_forward.1} parent=11 // pred_region
        _
      $region128: #{transaid_forward.1} parent=11 // pred_fallthru
        _
      // Predicated region
      $region129: #{transaid_forward.1} parent=11 // pred_check
        %p984 = pneg %p749
      $region130: #{transaid_forward.1} parent=11 // pred_check_branch
        %986 = sbr.rel (%p984) target = $region132
      $region131: #{transaid_forward.1} parent=11 // pred_region
        _
      $region132: #{transaid_forward.1} parent=11 // pred_fallthru
        _
      // Predicated region
      $region133: #{transaid_forward.1} parent=11 // pred_check
        %p987 = pneg %p770
      $region134: #{transaid_forward.1} parent=11 // pred_check_branch
        %989 = sbr.rel (%p987) target = $region136
      $region135: #{transaid_forward.1} parent=11 // pred_region
        _
      $region136: #{transaid_forward.1} parent=11 // pred_fallthru
        _
      // Predicated region
      $region137: #{transaid_forward.1} parent=11 // pred_check
        %p990 = pneg %p791
      $region138: #{transaid_forward.1} parent=11 // pred_check_branch
        %992 = sbr.rel (%p990) target = $region140
      $region139: #{transaid_forward.1} parent=11 // pred_region
        _
      $region140: #{transaid_forward.1} parent=11 // pred_fallthru
        _
      // Predicated region
      $region141: #{transaid_forward.1} parent=11 // pred_check
        %p993 = pneg %p812
      $region142: #{transaid_forward.1} parent=11 // pred_check_branch
        %995 = sbr.rel (%p993) target = $region144
      $region143: #{transaid_forward.1} parent=11 // pred_region
        _
      $region144: #{transaid_forward.1} parent=11 // pred_fallthru
        _
      // Predicated region
      $region145: #{transaid_forward.1} parent=11 // pred_check
        %p996 = pneg %p833
      $region146: #{transaid_forward.1} parent=11 // pred_check_branch
        %998 = sbr.rel (%p996) target = $region148
      $region147: #{transaid_forward.1} parent=11 // pred_region
        _
      $region148: #{transaid_forward.1} parent=11 // pred_fallthru
        _
      // Predicated region
      $region149: #{transaid_forward.1} parent=11 // pred_check
        %p999 = pneg %p854
      $region150: #{transaid_forward.1} parent=11 // pred_check_branch
        %1001 = sbr.rel (%p999) target = $region152
      $region151: #{transaid_forward.1} parent=11 // pred_region
        _
      $region152: #{transaid_forward.1} parent=11 // pred_fallthru
        _
    $region12: #{transaid_forward.1} parent=5 // pred_fallthru
      _
    %p1002 = scmp.lt.s32.totalorder %s79, 6
    // Predicated region
    $region153: #{transaid_forward.1} parent=5 // pred_check
      %p1003 = pneg %p1002
    $region154: #{transaid_forward.1} parent=5 // pred_check_branch
      %1005 = sbr.rel (%p1003) target = $region156
    $region155: #{transaid_forward.1} parent=5 // pred_region
      // Predicated region
      $region157: #{transaid_forward.1} parent=155 // pred_check
        %p1006 = pneg %p113
      $region158: #{transaid_forward.1} parent=155 // pred_check_branch
        %1008 = sbr.rel (%p1006) target = $region160
      $region159: #{transaid_forward.1} parent=155 // pred_region
        %p1009 = scmp.lt.s32.totalorder %s86, 1
        %s1010 = scalar_select %p1009, %s86, 1
        %p1011 = scmp.lt.s32.totalorder %s87, 2
        %s1012 = scalar_select %p1011, %s87, 2
        %s1013 = smul.addr %s1012, 20
        %s1014 = smul.addr %s1010, 60
        %s1015 = sadd.s32 %s1013, %s1014
        %s1016 = smul.addr %s1015, 4
        %s1017 = scalar_lea.vmem %s1, %s1016
      $region160: #{transaid_forward.1} parent=155 // pred_fallthru
        _
    $region156: #{transaid_forward.1} parent=5 // pred_fallthru
      _
    %p1018 = scmp.le.s32.totalorder 1, %s79
    %p1019 = scmp.lt.s32.totalorder %s79, 7
    %p1020 = pnand %p1018, %p1019
    %p1021 = pneg %p1020
    // Predicated region
    $region161: #{transaid_forward.1} parent=5 // pred_check
      _
    $region162: #{transaid_forward.1} parent=5 // pred_check_branch
      %1023 = sbr.rel (%p1020) target = $region164
    $region163: #{transaid_forward.1} parent=5 // pred_region
      %s1024 = ssub.s32 %s79, 1
      %p1025 = scmp.lt.s32.totalorder %s88, 1
      %s1026 = scalar_select %p1025, %s88, 1
      %p1027 = scmp.lt.s32.totalorder %s89, 2
      %s1028 = scalar_select %p1027, %s89, 2
      %s1029 = smul.addr %s1028, 20
      %s1030 = smul.addr %s1026, 60
      %s1031 = sadd.s32 %s1029, %s1030
      %s1032 = smul.addr %s1031, 4
      %s1033 = scalar_lea.vmem %s1, %s1032
      %p1034 = pneg %p119
      %p1035 = pneg %p116
      %p1036 = pneg %p140
      %p1037 = pneg %p137
      %p1038 = pneg %p161
      %p1039 = pneg %p158
      %p1040 = pneg %p182
      %p1041 = pneg %p179
      %p1042 = pneg %p203
      %p1043 = pneg %p200
      %p1044 = pneg %p224
      %p1045 = pneg %p221
      %p1046 = pneg %p245
      %p1047 = pneg %p242
      %p1048 = pneg %p266
      %p1049 = pneg %p263
      %p1050 = pneg %p287
      %p1051 = pneg %p284
      %p1052 = pneg %p308
      %p1053 = pneg %p305
      %p1054 = pneg %p329
      %p1055 = pneg %p326
      %p1056 = pneg %p350
      %p1057 = pneg %p347
      %p1058 = pneg %p371
      %p1059 = pneg %p368
      %p1060 = pneg %p392
      %p1061 = pneg %p389
      %p1062 = pneg %p413
      %p1063 = pneg %p410
      %p1064 = pneg %p434
      %p1065 = pneg %p431
      %p1066 = pneg %p455
      %p1067 = pneg %p452
      %p1068 = pneg %p476
      %p1069 = pneg %p473
      %p1070 = pneg %p497
      %p1071 = pneg %p494
      %p1072 = pneg %p518
      %p1073 = pneg %p515
      %p1074 = pneg %p539
      %p1075 = pneg %p536
      %p1076 = pneg %p560
      %p1077 = pneg %p557
      %p1078 = pneg %p581
      %p1079 = pneg %p578
      %p1080 = pneg %p602
      %p1081 = pneg %p599
      %p1082 = pneg %p623
      %p1083 = pneg %p620
      %p1084 = pneg %p644
      %p1085 = pneg %p641
      %p1086 = pneg %p665
      %p1087 = pneg %p662
      %p1088 = pneg %p686
      %p1089 = pneg %p683
      %p1090 = pneg %p707
      %p1091 = pneg %p704
      %p1092 = pneg %p728
      %p1093 = pneg %p725
      %p1094 = pneg %p749
      %p1095 = pneg %p746
      %p1096 = pneg %p770
      %p1097 = pneg %p767
      %p1098 = pneg %p791
      %p1099 = pneg %p788
      %p1100 = pneg %p812
      %p1101 = pneg %p809
      %p1102 = pneg %p833
      %p1103 = pneg %p830
      %p1104 = pneg %p854
      %p1105 = pneg %p851
      %p1106 = pneg %p882
      %p1107 = pneg %p879
      %s1108 = smul.u32 16, %s89
      %p1109 = scmp.lt.s32.totalorder %s88, 1
      %s1110 = scalar_select %p1109, %s88, 1
      %p1111 = scmp.lt.s32.totalorder %s1108, 47
      %s1112 = scalar_select %p1111, %s1108, 47
      %s1113 = smul.addr %s1110, 48
      %s1114 = sadd.s32 %s1112, %s1113
      %s1115 = smul.addr %s1114, 8
      %s1116 = scalar_lea.vmem %s73, %s1115
      %p1117 = scmp.lt.s32.totalorder %s88, 1
      %s1118 = scalar_select %p1117, %s88, 1
      %p1119 = scmp.lt.s32.totalorder %s89, 2
      %s1120 = scalar_select %p1119, %s89, 2
      %s1121 = smul.addr %s1120, 20
      %s1122 = smul.addr %s1118, 60
      %s1123 = sadd.s32 %s1121, %s1122
      %s1124 = smul.addr %s1123, 4
      %s1125 = scalar_lea.vmem %s1, %s1124
      %s1126 = smul.u32 16, %s89
      %p1127 = scmp.lt.s32.totalorder %s88, 1
      %s1128 = scalar_select %p1127, %s88, 1
      %p1129 = scmp.lt.s32.totalorder %s1126, 47
      %s1130 = scalar_select %p1129, %s1126, 47
      %s1131 = smul.addr %s1128, 48
      %s1132 = sadd.s32 %s1130, %s1131
      %s1133 = smul.addr %s1132, 8
      %s1134 = scalar_lea.vmem %s73, %s1133
      %s1135 = smul.u32 16, %s89
      %v1137 = vlaneseq
      %v1138 = vshrl.u32 %v1137, 7
      %v1139 = vadd.s32 %v1138, 8
      %v1140 = vadd.s32 %v1138, 16
      %v1141 = vadd.s32 %v1138, 24
      %v1142 = vadd.s32 %v1138, 32
      %v1143 = vadd.s32 %v1138, 40
      %v1144 = vadd.s32 %v1138, 48
      %v1145 = vadd.s32 %v1138, 56
      %v1146 = vadd.s32 %v1138, 64
      %v1147 = vadd.s32 %v1138, 72
      %v1148 = vadd.s32 %v1138, 80
      %v1149 = vadd.s32 %v1138, 88
      %v1150 = vadd.s32 %v1138, 96
      %v1151 = vadd.s32 %v1138, 104
      %v1152 = vadd.s32 %v1138, 112
      %v1153 = vadd.s32 %v1138, 120
      %v1154 = vadd.s32 %v1138, 128
      %v1155 = vadd.s32 %v1138, 136
      %v1156 = vadd.s32 %v1138, 144
      %v1157 = vadd.s32 %v1138, 152
      %s1158 = smul.u32 %s89, 128
      %v1159 = vstv %s1158
      %v1160 = vadd.s32 %v1159, %v1138
      %v1161 = vadd.s32 %v1159, %v1139
      %v1162 = vadd.s32 %v1159, %v1140
      %v1163 = vadd.s32 %v1159, %v1141
      %v1164 = vadd.s32 %v1159, %v1142
      %v1165 = vadd.s32 %v1159, %v1143
      %v1166 = vadd.s32 %v1159, %v1144
      %v1167 = vadd.s32 %v1159, %v1145
      %v1168 = vadd.s32 %v1159, %v1146
      %v1169 = vadd.s32 %v1159, %v1147
      %v1170 = vadd.s32 %v1159, %v1148
      %v1171 = vadd.s32 %v1159, %v1149
      %v1172 = vadd.s32 %v1159, %v1150
      %v1173 = vadd.s32 %v1159, %v1151
      %v1174 = vadd.s32 %v1159, %v1152
      %v1175 = vadd.s32 %v1159, %v1153
      %v1176 = vadd.s32 %v1159, %v1154
      %v1177 = vadd.s32 %v1159, %v1155
      %v1178 = vadd.s32 %v1159, %v1156
      %v1179 = vadd.s32 %v1159, %v1157
      %v1180 = vsub.s32 %v1160, 16
      %v1181 = vsub.s32 %v1161, 16
      %v1182 = vsub.s32 %v1162, 16
      %v1183 = vsub.s32 %v1163, 16
      %v1184 = vsub.s32 %v1164, 16
      %v1185 = vsub.s32 %v1165, 16
      %v1186 = vsub.s32 %v1166, 16
      %v1187 = vsub.s32 %v1167, 16
      %v1188 = vsub.s32 %v1168, 16
      %v1189 = vsub.s32 %v1169, 16
      %v1190 = vsub.s32 %v1170, 16
      %v1191 = vsub.s32 %v1171, 16
      %v1192 = vsub.s32 %v1172, 16
      %v1193 = vsub.s32 %v1173, 16
      %v1194 = vsub.s32 %v1174, 16
      %v1195 = vsub.s32 %v1175, 16
      %v1196 = vsub.s32 %v1176, 16
      %v1197 = vsub.s32 %v1177, 16
      %v1198 = vsub.s32 %v1178, 16
      %v1199 = vsub.s32 %v1179, 16
      %vm1200 = vcmp.ge.s32.totalorder %v1180, 0
      %vm1201 = vcmp.ge.s32.totalorder %v1181, 0
      %vm1202 = vcmp.ge.s32.totalorder %v1182, 0
      %vm1203 = vcmp.ge.s32.totalorder %v1183, 0
      %vm1204 = vcmp.ge.s32.totalorder %v1184, 0
      %vm1205 = vcmp.ge.s32.totalorder %v1185, 0
      %vm1206 = vcmp.ge.s32.totalorder %v1186, 0
      %vm1207 = vcmp.ge.s32.totalorder %v1187, 0
      %vm1208 = vcmp.ge.s32.totalorder %v1188, 0
      %vm1209 = vcmp.ge.s32.totalorder %v1189, 0
      %vm1210 = vcmp.ge.s32.totalorder %v1190, 0
      %vm1211 = vcmp.ge.s32.totalorder %v1191, 0
      %vm1212 = vcmp.ge.s32.totalorder %v1192, 0
      %vm1213 = vcmp.ge.s32.totalorder %v1193, 0
      %vm1214 = vcmp.ge.s32.totalorder %v1194, 0
      %vm1215 = vcmp.ge.s32.totalorder %v1195, 0
      %vm1216 = vcmp.ge.s32.totalorder %v1196, 0
      %vm1217 = vcmp.ge.s32.totalorder %v1197, 0
      %vm1218 = vcmp.ge.s32.totalorder %v1198, 0
      %vm1219 = vcmp.ge.s32.totalorder %v1199, 0
      %vm1220 = vcmp.lt.s32.totalorder %v1180, 300
      %vm1221 = vcmp.lt.s32.totalorder %v1181, 300
      %vm1222 = vcmp.lt.s32.totalorder %v1182, 300
      %vm1223 = vcmp.lt.s32.totalorder %v1183, 300
      %vm1224 = vcmp.lt.s32.totalorder %v1184, 300
      %vm1225 = vcmp.lt.s32.totalorder %v1185, 300
      %vm1226 = vcmp.lt.s32.totalorder %v1186, 300
      %vm1227 = vcmp.lt.s32.totalorder %v1187, 300
      %vm1228 = vcmp.lt.s32.totalorder %v1188, 300
      %vm1229 = vcmp.lt.s32.totalorder %v1189, 300
      %vm1230 = vcmp.lt.s32.totalorder %v1190, 300
      %vm1231 = vcmp.lt.s32.totalorder %v1191, 300
      %vm1232 = vcmp.lt.s32.totalorder %v1192, 300
      %vm1233 = vcmp.lt.s32.totalorder %v1193, 300
      %vm1234 = vcmp.lt.s32.totalorder %v1194, 300
      %vm1235 = vcmp.lt.s32.totalorder %v1195, 300
      %vm1236 = vcmp.lt.s32.totalorder %v1196, 300
      %vm1237 = vcmp.lt.s32.totalorder %v1197, 300
      %vm1238 = vcmp.lt.s32.totalorder %v1198, 300
      %vm1239 = vcmp.lt.s32.totalorder %v1199, 300
      %vm1240 = vmand %vm1200, %vm1220
      %vm1241 = vmand %vm1201, %vm1221
      %vm1242 = vmand %vm1202, %vm1222
      %vm1243 = vmand %vm1203, %vm1223
      %vm1244 = vmand %vm1204, %vm1224
      %vm1245 = vmand %vm1205, %vm1225
      %vm1246 = vmand %vm1206, %vm1226
      %vm1247 = vmand %vm1207, %vm1227
      %vm1248 = vmand %vm1208, %vm1228
      %vm1249 = vmand %vm1209, %vm1229
      %vm1250 = vmand %vm1210, %vm1230
      %vm1251 = vmand %vm1211, %vm1231
      %vm1252 = vmand %vm1212, %vm1232
      %vm1253 = vmand %vm1213, %vm1233
      %vm1254 = vmand %vm1214, %vm1234
      %vm1255 = vmand %vm1215, %vm1235
      %vm1256 = vmand %vm1216, %vm1236
      %vm1257 = vmand %vm1217, %vm1237
      %vm1258 = vmand %vm1218, %vm1238
      %vm1259 = vmand %vm1219, %vm1239
      %v1260 = vld [vmem:[%s1125] sm:$0xf]
      %v1261 = vld [vmem:[%s1125 + $0x4] sm:$0xf]
      %v1262 = vld [vmem:[%s1125 + $0x8] sm:$0xf]
      %v1263 = vld [vmem:[%s1125 + $0xc] sm:$0xf]
      %v1264 = vld [vmem:[%s1125 + $0x10] sm:$0xf]
      %v1265 = vld [vmem:[%s1125 + $0x14] sm:$0xf]
      %v1266 = vld [vmem:[%s1125 + $0x18] sm:$0xf]
      %v1267 = vld [vmem:[%s1125 + $0x1c] sm:$0xf]
      %v1268 = vld [vmem:[%s1125 + $0x20] sm:$0xf]
      %v1269 = vld [vmem:[%s1125 + $0x24] sm:$0xf]
      %v1270 = vld [vmem:[%s1125 + $0x28] sm:$0xf]
      %v1271 = vld [vmem:[%s1125 + $0x2c] sm:$0xf]
      %v1272 = vld [vmem:[%s1125 + $0x30] sm:$0xf]
      %v1273 = vld [vmem:[%s1125 + $0x34] sm:$0xf]
      %v1274 = vld [vmem:[%s1125 + $0x38] sm:$0xf]
      %v1275 = vld [vmem:[%s1125 + $0x3c] sm:$0xf]
      %v1276 = vld [vmem:[%s1125 + $0x40] sm:$0xf]
      %v1277 = vld [vmem:[%s1125 + $0x44] sm:$0xf]
      %v1278 = vld [vmem:[%s1125 + $0x48] sm:$0xf]
      %v1279 = vld [vmem:[%s1125 + $0x4c] sm:$0xf]
      %v1280 = vld [vmem:[%s3] sm:$0xf]
      %v1281 = vld [vmem:[%s3 + $0x4] sm:$0x3]
      %v1302 = vunpack.c.l.b16 %v1260
      %v1303 = vunpack.c.l.b16 %v1261
      %v1304 = vunpack.c.l.b16 %v1262
      %v1305 = vunpack.c.l.b16 %v1263
      %v1306 = vunpack.c.l.b16 %v1264
      %v1307 = vunpack.c.l.b16 %v1265
      %v1308 = vunpack.c.l.b16 %v1266
      %v1309 = vunpack.c.l.b16 %v1267
      %v1310 = vunpack.c.l.b16 %v1268
      %v1311 = vunpack.c.l.b16 %v1269
      %v1312 = vunpack.c.l.b16 %v1270
      %v1313 = vunpack.c.l.b16 %v1271
      %v1314 = vunpack.c.l.b16 %v1272
      %v1315 = vunpack.c.l.b16 %v1273
      %v1316 = vunpack.c.l.b16 %v1274
      %v1317 = vunpack.c.l.b16 %v1275
      %v1318 = vunpack.c.l.b16 %v1276
      %v1319 = vunpack.c.l.b16 %v1277
      %v1320 = vunpack.c.l.b16 %v1278
      %v1321 = vunpack.c.l.b16 %v1279
      %v1322 = vpack.c.b16 %v1303, %v1302
      %v1323 = vpack.c.b16 %v1305, %v1304
      %v1324 = vpack.c.b16 %v1307, %v1306
      %v1325 = vpack.c.b16 %v1309, %v1308
      %v1326 = vpack.c.b16 %v1311, %v1310
      %v1327 = vpack.c.b16 %v1313, %v1312
      %v1328 = vpack.c.b16 %v1315, %v1314
      %v1329 = vpack.c.b16 %v1317, %v1316
      %v1330 = vpack.c.b16 %v1319, %v1318
      %v1331 = vpack.c.b16 %v1321, %v1320
      %v1334 = vunpack.c.l.b16 %v1280
      %v1335 = vunpack.c.l.b16 %v1281
      %v1336 = vpack.c.b16 %v1335, %v1334
      %vm1337 = vcmask 97280
      %v1339 = vsel %vm1337, %v1322, 0
      %v1342 = vsel %vm1337, %v1323, 0
      %v1345 = vsel %vm1337, %v1324, 0
      %v1348 = vsel %vm1337, %v1325, 0
      %v1351 = vsel %vm1337, %v1326, 0
      %v1354 = vsel %vm1337, %v1327, 0
      %v1357 = vsel %vm1337, %v1328, 0
      %v1360 = vsel %vm1337, %v1329, 0
      %v1363 = vsel %vm1337, %v1330, 0
      %v1366 = vsel %vm1337, %v1331, 0
      %vm1368 = vcmask 1045504
      %v1370 = vsel %vm1368, %v1336, 0
      %1372 = vmatprep.subr.bf16.mxu0 0
      %1373 = vmatpush1.bf16.msra.mxu0 0
      %1374 = vmatprep.subr.bf16.mxu0 0
      %1375 = vmatpush1.bf16.msra.mxu0 0
      %1376 = vmatprep.subr.bf16.mxu0 0
      %1377 = vmatpush1.bf16.msra.mxu0 0
      %1378 = vmatprep.subr.bf16.mxu0 0
      %1379 = vmatpush1.bf16.msra.mxu0 0
      %1380 = vmatprep.subr.bf16.mxu0 0
      %1381 = vmatpush1.bf16.msra.mxu0 0
      %1382 = vmatprep.subr.bf16.mxu0 0
      %1383 = vmatpush1.bf16.msra.mxu0 0
      %1384 = vmatprep.subr.bf16.mxu0 0
      %1385 = vmatpush1.bf16.msra.mxu0 0
      %1386 = vmatprep.subr.bf16.mxu0 0
      %1387 = vmatpush1.bf16.msra.mxu0 %v1370
      %1388 = vmatprep.subr.bf16.mxu0 0
      %1389 = vmatpush2.bf16.msra.mxu0 0
      %1390 = vmatprep.subr.bf16.mxu0 0
      %1391 = vmatpush2.bf16.msra.mxu0 0
      %1392 = vmatprep.subr.bf16.mxu0 0
      %1393 = vmatpush2.bf16.msra.mxu0 0
      %1394 = vmatprep.subr.bf16.mxu0 0
      %1395 = vmatpush2.bf16.msra.mxu0 0
      %1396 = vmatprep.subr.bf16.mxu0 0
      %1397 = vmatpush2.bf16.msra.mxu0 0
      %1398 = vmatprep.subr.bf16.mxu0 0
      %1399 = vmatpush2.bf16.msra.mxu0 0
      %1400 = vmatprep.subr.bf16.mxu0 0
      %1401 = vmatpush2.bf16.msra.mxu0 0
      %1402 = vmatprep.subr.bf16.mxu0 0
      %1403 = vmatpush2.bf16.msra.mxu0 0
      %1404 = vmatprep.mubr.bf16.mxu0 0
      %1405 = vmatmul.mubr.bf16.gmra.mxu0 %v1339
      %v1406 = vpop.f32.mrf.mxu0
      %v1407 = vadd.f32 0.0, %v1406
      %v1408 = vpop.f32.mrf.mxu0
      %v1409 = vpop.f32.mrf.mxu0
      %v1410 = vadd.f32 0.0, %v1409
      %v1411 = vpop.f32.mrf.mxu0
      %1412 = vmatprep.mubr.bf16.mxu0 0
      %1413 = vmatmul.mubr.bf16.gmra.mxu0 %v1342
      %v1414 = vpop.f32.mrf.mxu0
      %v1415 = vadd.f32 0.0, %v1414
      %v1416 = vpop.f32.mrf.mxu0
      %v1417 = vpop.f32.mrf.mxu0
      %v1418 = vadd.f32 0.0, %v1417
      %v1419 = vpop.f32.mrf.mxu0
      %1420 = vmatprep.mubr.bf16.mxu0 0
      %1421 = vmatmul.mubr.bf16.gmra.mxu0 %v1345
      %v1422 = vpop.f32.mrf.mxu0
      %v1423 = vadd.f32 0.0, %v1422
      %v1424 = vpop.f32.mrf.mxu0
      %v1425 = vpop.f32.mrf.mxu0
      %v1426 = vadd.f32 0.0, %v1425
      %v1427 = vpop.f32.mrf.mxu0
      %1428 = vmatprep.mubr.bf16.mxu0 0
      %1429 = vmatmul.mubr.bf16.gmra.mxu0 %v1348
      %v1430 = vpop.f32.mrf.mxu0
      %v1431 = vadd.f32 0.0, %v1430
      %v1432 = vpop.f32.mrf.mxu0
      %v1433 = vpop.f32.mrf.mxu0
      %v1434 = vadd.f32 0.0, %v1433
      %v1435 = vpop.f32.mrf.mxu0
      %1436 = vmatprep.mubr.bf16.mxu0 0
      %1437 = vmatmul.mubr.bf16.gmra.mxu0 %v1351
      %v1438 = vpop.f32.mrf.mxu0
      %v1439 = vadd.f32 0.0, %v1438
      %v1440 = vpop.f32.mrf.mxu0
      %v1441 = vpop.f32.mrf.mxu0
      %v1442 = vadd.f32 0.0, %v1441
      %v1443 = vpop.f32.mrf.mxu0
      %1444 = vmatprep.mubr.bf16.mxu0 0
      %1445 = vmatmul.mubr.bf16.gmra.mxu0 %v1354
      %v1446 = vpop.f32.mrf.mxu0
      %v1447 = vadd.f32 0.0, %v1446
      %v1448 = vpop.f32.mrf.mxu0
      %v1449 = vpop.f32.mrf.mxu0
      %v1450 = vadd.f32 0.0, %v1449
      %v1451 = vpop.f32.mrf.mxu0
      %1452 = vmatprep.mubr.bf16.mxu0 0
      %1453 = vmatmul.mubr.bf16.gmra.mxu0 %v1357
      %v1454 = vpop.f32.mrf.mxu0
      %v1455 = vadd.f32 0.0, %v1454
      %v1456 = vpop.f32.mrf.mxu0
      %v1457 = vpop.f32.mrf.mxu0
      %v1458 = vadd.f32 0.0, %v1457
      %v1459 = vpop.f32.mrf.mxu0
      %1460 = vmatprep.mubr.bf16.mxu0 0
      %1461 = vmatmul.mubr.bf16.gmra.mxu0 %v1360
      %v1462 = vpop.f32.mrf.mxu0
      %v1463 = vadd.f32 0.0, %v1462
      %v1464 = vpop.f32.mrf.mxu0
      %v1465 = vpop.f32.mrf.mxu0
      %v1466 = vadd.f32 0.0, %v1465
      %v1467 = vpop.f32.mrf.mxu0
      %1468 = vmatprep.mubr.bf16.mxu0 0
      %1469 = vmatmul.mubr.bf16.gmra.mxu0 %v1363
      %v1470 = vpop.f32.mrf.mxu0
      %v1471 = vadd.f32 0.0, %v1470
      %v1472 = vpop.f32.mrf.mxu0
      %v1473 = vpop.f32.mrf.mxu0
      %v1474 = vadd.f32 0.0, %v1473
      %v1475 = vpop.f32.mrf.mxu0
      %1476 = vmatprep.mubr.bf16.mxu0 0
      %1477 = vmatmul.mubr.bf16.gmra.mxu0 %v1366
      %v1478 = vpop.f32.mrf.mxu0
      %v1479 = vadd.f32 0.0, %v1478
      %v1480 = vpop.f32.mrf.mxu0
      %v1481 = vpop.f32.mrf.mxu0
      %v1482 = vadd.f32 0.0, %v1481
      %v1483 = vpop.f32.mrf.mxu0
      %1484 = vdwg.mxu0
      %v1485 = vld [vmem:[%s5] sm:$0x1]
      %v1487 = vlaneseq
      %v1488 = vshrl.u32 %v1487, 7
      %v1489 = vsub.s32 0, %v1488
      %v1490 = vrot.slane %v1485, %v1489
      %v1492 = vmul.f32 %v1407, %v1490
      %v1493 = vmul.f32 %v1410, %v1490
      %v1494 = vmul.f32 %v1415, %v1490
      %v1495 = vmul.f32 %v1418, %v1490
      %v1496 = vmul.f32 %v1423, %v1490
      %v1497 = vmul.f32 %v1426, %v1490
      %v1498 = vmul.f32 %v1431, %v1490
      %v1499 = vmul.f32 %v1434, %v1490
      %v1500 = vmul.f32 %v1439, %v1490
      %v1501 = vmul.f32 %v1442, %v1490
      %v1502 = vmul.f32 %v1447, %v1490
      %v1503 = vmul.f32 %v1450, %v1490
      %v1504 = vmul.f32 %v1455, %v1490
      %v1505 = vmul.f32 %v1458, %v1490
      %v1506 = vmul.f32 %v1463, %v1490
      %v1507 = vmul.f32 %v1466, %v1490
      %v1508 = vmul.f32 %v1471, %v1490
      %v1509 = vmul.f32 %v1474, %v1490
      %v1510 = vmul.f32 %v1479, %v1490
      %v1511 = vmul.f32 %v1482, %v1490
      %v1512 = vld [vmem:[%s7] sm:$0x1]
      %v1514 = vlaneseq
      %v1515 = vshrl.u32 %v1514, 7
      %v1516 = vsub.s32 0, %v1515
      %v1517 = vrot.slane %v1512, %v1516
      %v1519 = vadd.f32 %v1492, %v1517
      %v1520 = vadd.f32 %v1493, %v1517
      %v1521 = vadd.f32 %v1494, %v1517
      %v1522 = vadd.f32 %v1495, %v1517
      %v1523 = vadd.f32 %v1496, %v1517
      %v1524 = vadd.f32 %v1497, %v1517
      %v1525 = vadd.f32 %v1498, %v1517
      %v1526 = vadd.f32 %v1499, %v1517
      %v1527 = vadd.f32 %v1500, %v1517
      %v1528 = vadd.f32 %v1501, %v1517
      %v1529 = vadd.f32 %v1502, %v1517
      %v1530 = vadd.f32 %v1503, %v1517
      %v1531 = vadd.f32 %v1504, %v1517
      %v1532 = vadd.f32 %v1505, %v1517
      %v1533 = vadd.f32 %v1506, %v1517
      %v1534 = vadd.f32 %v1507, %v1517
      %v1535 = vadd.f32 %v1508, %v1517
      %v1536 = vadd.f32 %v1509, %v1517
      %v1537 = vadd.f32 %v1510, %v1517
      %v1538 = vadd.f32 %v1511, %v1517
      %v1539 = vmax.f32 %v1519, 0.0
      %v1540 = vmax.f32 %v1520, 0.0
      %v1541 = vmax.f32 %v1521, 0.0
      %v1542 = vmax.f32 %v1522, 0.0
      %v1543 = vmax.f32 %v1523, 0.0
      %v1544 = vmax.f32 %v1524, 0.0
      %v1545 = vmax.f32 %v1525, 0.0
      %v1546 = vmax.f32 %v1526, 0.0
      %v1547 = vmax.f32 %v1527, 0.0
      %v1548 = vmax.f32 %v1528, 0.0
      %v1549 = vmax.f32 %v1529, 0.0
      %v1550 = vmax.f32 %v1530, 0.0
      %v1551 = vmax.f32 %v1531, 0.0
      %v1552 = vmax.f32 %v1532, 0.0
      %v1553 = vmax.f32 %v1533, 0.0
      %v1554 = vmax.f32 %v1534, 0.0
      %v1555 = vmax.f32 %v1535, 0.0
      %v1556 = vmax.f32 %v1536, 0.0
      %v1557 = vmax.f32 %v1537, 0.0
      %v1558 = vmax.f32 %v1538, 0.0
      %v1559 = vsel %vm1240, 1, 0
      %v1560 = vsel %vm1241, 1, 0
      %v1561 = vsel %vm1242, 1, 0
      %v1562 = vsel %vm1243, 1, 0
      %v1563 = vsel %vm1244, 1, 0
      %v1564 = vsel %vm1245, 1, 0
      %v1565 = vsel %vm1246, 1, 0
      %v1566 = vsel %vm1247, 1, 0
      %v1567 = vsel %vm1248, 1, 0
      %v1568 = vsel %vm1249, 1, 0
      %v1569 = vsel %vm1250, 1, 0
      %v1570 = vsel %vm1251, 1, 0
      %v1571 = vsel %vm1252, 1, 0
      %v1572 = vsel %vm1253, 1, 0
      %v1573 = vsel %vm1254, 1, 0
      %v1574 = vsel %vm1255, 1, 0
      %v1575 = vsel %vm1256, 1, 0
      %v1576 = vsel %vm1257, 1, 0
      %v1577 = vsel %vm1258, 1, 0
      %v1578 = vsel %vm1259, 1, 0
      %vm1579 = vcmp.eq.s32.totalorder %v1559, 1
      %vm1580 = vcmp.eq.s32.totalorder %v1560, 1
      %vm1581 = vcmp.eq.s32.totalorder %v1561, 1
      %vm1582 = vcmp.eq.s32.totalorder %v1562, 1
      %vm1583 = vcmp.eq.s32.totalorder %v1563, 1
      %vm1584 = vcmp.eq.s32.totalorder %v1564, 1
      %vm1585 = vcmp.eq.s32.totalorder %v1565, 1
      %vm1586 = vcmp.eq.s32.totalorder %v1566, 1
      %vm1587 = vcmp.eq.s32.totalorder %v1567, 1
      %vm1588 = vcmp.eq.s32.totalorder %v1568, 1
      %vm1589 = vcmp.eq.s32.totalorder %v1569, 1
      %vm1590 = vcmp.eq.s32.totalorder %v1570, 1
      %vm1591 = vcmp.eq.s32.totalorder %v1571, 1
      %vm1592 = vcmp.eq.s32.totalorder %v1572, 1
      %vm1593 = vcmp.eq.s32.totalorder %v1573, 1
      %vm1594 = vcmp.eq.s32.totalorder %v1574, 1
      %vm1595 = vcmp.eq.s32.totalorder %v1575, 1
      %vm1596 = vcmp.eq.s32.totalorder %v1576, 1
      %vm1597 = vcmp.eq.s32.totalorder %v1577, 1
      %vm1598 = vcmp.eq.s32.totalorder %v1578, 1
      %v1599 = vsel %vm1579, %v1539, 0.0
      %v1600 = vsel %vm1580, %v1540, 0.0
      %v1601 = vsel %vm1581, %v1541, 0.0
      %v1602 = vsel %vm1582, %v1542, 0.0
      %v1603 = vsel %vm1583, %v1543, 0.0
      %v1604 = vsel %vm1584, %v1544, 0.0
      %v1605 = vsel %vm1585, %v1545, 0.0
      %v1606 = vsel %vm1586, %v1546, 0.0
      %v1607 = vsel %vm1587, %v1547, 0.0
      %v1608 = vsel %vm1588, %v1548, 0.0
      %v1609 = vsel %vm1589, %v1549, 0.0
      %v1610 = vsel %vm1590, %v1550, 0.0
      %v1611 = vsel %vm1591, %v1551, 0.0
      %v1612 = vsel %vm1592, %v1552, 0.0
      %v1613 = vsel %vm1593, %v1553, 0.0
      %v1614 = vsel %vm1594, %v1554, 0.0
      %v1615 = vsel %vm1595, %v1555, 0.0
      %v1616 = vsel %vm1596, %v1556, 0.0
      %v1617 = vsel %vm1597, %v1557, 0.0
      %v1618 = vsel %vm1598, %v1558, 0.0
      %vm1619 = vcmask 779264
      %1620 = vst.msk [vmem:[#allocation2] sm:$0x3] %vm1619, 0.0
      %1621 = vst.msk [vmem:[#allocation2 + $0xa0] sm:$0x3] %vm1619, 0.0
      %vm1622 = vcmask 261120
      %1623 = vst.msk [vmem:[#allocation2 + $0x2] sm:$0xff] %vm1622, %v1599
      %1624 = vst.msk [vmem:[#allocation2 + $0xa] sm:$0xff] %vm1622, %v1600
      %1625 = vst.msk [vmem:[#allocation2 + $0x12] sm:$0xff] %vm1622, %v1601
      %1626 = vst.msk [vmem:[#allocation2 + $0x1a] sm:$0xff] %vm1622, %v1602
      %1627 = vst.msk [vmem:[#allocation2 + $0x22] sm:$0xff] %vm1622, %v1603
      %1628 = vst.msk [vmem:[#allocation2 + $0x2a] sm:$0xff] %vm1622, %v1604
      %1629 = vst.msk [vmem:[#allocation2 + $0x32] sm:$0xff] %vm1622, %v1605
      %1630 = vst.msk [vmem:[#allocation2 + $0x3a] sm:$0xff] %vm1622, %v1606
      %1631 = vst.msk [vmem:[#allocation2 + $0x42] sm:$0xff] %vm1622, %v1607
      %1632 = vst.msk [vmem:[#allocation2 + $0x4a] sm:$0xff] %vm1622, %v1608
      %1633 = vst.msk [vmem:[#allocation2 + $0x52] sm:$0xff] %vm1622, %v1609
      %1634 = vst.msk [vmem:[#allocation2 + $0x5a] sm:$0xff] %vm1622, %v1610
      %1635 = vst.msk [vmem:[#allocation2 + $0x62] sm:$0xff] %vm1622, %v1611
      %1636 = vst.msk [vmem:[#allocation2 + $0x6a] sm:$0xff] %vm1622, %v1612
      %1637 = vst.msk [vmem:[#allocation2 + $0x72] sm:$0xff] %vm1622, %v1613
      %1638 = vst.msk [vmem:[#allocation2 + $0x7a] sm:$0xff] %vm1622, %v1614
      %1639 = vst.msk [vmem:[#allocation2 + $0x82] sm:$0xff] %vm1622, %v1615
      %1640 = vst.msk [vmem:[#allocation2 + $0x8a] sm:$0xff] %vm1622, %v1616
      %1641 = vst.msk [vmem:[#allocation2 + $0x92] sm:$0xff] %vm1622, %v1617
      %1642 = vst.msk [vmem:[#allocation2 + $0x9a] sm:$0xff] %vm1622, %v1618
      %1663 = vrot.lane.b32.xlu0 %v1599, 32
      %v1664 = vpop.permute.xlu0 %1663
      %1665 = vrot.lane.b32.xlu0 %v1600, 32
      %v1666 = vpop.permute.xlu0 %1665
      %1667 = vrot.lane.b32.xlu0 %v1601, 32
      %v1668 = vpop.permute.xlu0 %1667
      %1669 = vrot.lane.b32.xlu0 %v1602, 32
      %v1670 = vpop.permute.xlu0 %1669
      %1671 = vrot.lane.b32.xlu0 %v1603, 32
      %v1672 = vpop.permute.xlu0 %1671
      %1673 = vrot.lane.b32.xlu0 %v1604, 32
      %v1674 = vpop.permute.xlu0 %1673
      %1675 = vrot.lane.b32.xlu0 %v1605, 32
      %v1676 = vpop.permute.xlu0 %1675
      %1677 = vrot.lane.b32.xlu0 %v1606, 32
      %v1678 = vpop.permute.xlu0 %1677
      %1679 = vrot.lane.b32.xlu0 %v1607, 32
      %v1680 = vpop.permute.xlu0 %1679
      %1681 = vrot.lane.b32.xlu0 %v1608, 32
      %v1682 = vpop.permute.xlu0 %1681
      %1683 = vrot.lane.b32.xlu0 %v1609, 32
      %v1684 = vpop.permute.xlu0 %1683
      %1685 = vrot.lane.b32.xlu0 %v1610, 32
      %v1686 = vpop.permute.xlu0 %1685
      %1687 = vrot.lane.b32.xlu0 %v1611, 32
      %v1688 = vpop.permute.xlu0 %1687
      %1689 = vrot.lane.b32.xlu0 %v1612, 32
      %v1690 = vpop.permute.xlu0 %1689
      %1691 = vrot.lane.b32.xlu0 %v1613, 32
      %v1692 = vpop.permute.xlu0 %1691
      %1693 = vrot.lane.b32.xlu0 %v1614, 32
      %v1694 = vpop.permute.xlu0 %1693
      %1695 = vrot.lane.b32.xlu0 %v1615, 32
      %v1696 = vpop.permute.xlu0 %1695
      %1697 = vrot.lane.b32.xlu0 %v1616, 32
      %v1698 = vpop.permute.xlu0 %1697
      %1699 = vrot.lane.b32.xlu0 %v1617, 32
      %v1700 = vpop.permute.xlu0 %1699
      %1701 = vrot.lane.b32.xlu0 %v1618, 32
      %v1702 = vpop.permute.xlu0 %1701
      %vm1723 = vcmask 523520
      %1724 = vst.msk [vmem:[#allocation2 + $0x1] sm:$0xff] %vm1723, %v1664
      %1725 = vst.msk [vmem:[#allocation2 + $0x9] sm:$0xff] %vm1723, %v1666
      %1726 = vst.msk [vmem:[#allocation2 + $0x11] sm:$0xff] %vm1723, %v1668
      %1727 = vst.msk [vmem:[#allocation2 + $0x19] sm:$0xff] %vm1723, %v1670
      %1728 = vst.msk [vmem:[#allocation2 + $0x21] sm:$0xff] %vm1723, %v1672
      %1729 = vst.msk [vmem:[#allocation2 + $0x29] sm:$0xff] %vm1723, %v1674
      %1730 = vst.msk [vmem:[#allocation2 + $0x31] sm:$0xff] %vm1723, %v1676
      %1731 = vst.msk [vmem:[#allocation2 + $0x39] sm:$0xff] %vm1723, %v1678
      %1732 = vst.msk [vmem:[#allocation2 + $0x41] sm:$0xff] %vm1723, %v1680
      %1733 = vst.msk [vmem:[#allocation2 + $0x49] sm:$0xff] %vm1723, %v1682
      %1734 = vst.msk [vmem:[#allocation2 + $0x51] sm:$0xff] %vm1723, %v1684
      %1735 = vst.msk [vmem:[#allocation2 + $0x59] sm:$0xff] %vm1723, %v1686
      %1736 = vst.msk [vmem:[#allocation2 + $0x61] sm:$0xff] %vm1723, %v1688
      %1737 = vst.msk [vmem:[#allocation2 + $0x69] sm:$0xff] %vm1723, %v1690
      %1738 = vst.msk [vmem:[#allocation2 + $0x71] sm:$0xff] %vm1723, %v1692
      %1739 = vst.msk [vmem:[#allocation2 + $0x79] sm:$0xff] %vm1723, %v1694
      %1740 = vst.msk [vmem:[#allocation2 + $0x81] sm:$0xff] %vm1723, %v1696
      %1741 = vst.msk [vmem:[#allocation2 + $0x89] sm:$0xff] %vm1723, %v1698
      %1742 = vst.msk [vmem:[#allocation2 + $0x91] sm:$0xff] %vm1723, %v1700
      %1743 = vst.msk [vmem:[#allocation2 + $0x99] sm:$0xff] %vm1723, %v1702
      %1744 = vrot.lane.b32.xlu0 %v1599, 64
      %v1745 = vpop.permute.xlu0 %1744
      %1746 = vrot.lane.b32.xlu0 %v1600, 64
      %v1747 = vpop.permute.xlu0 %1746
      %1748 = vrot.lane.b32.xlu0 %v1601, 64
      %v1749 = vpop.permute.xlu0 %1748
      %1750 = vrot.lane.b32.xlu0 %v1602, 64
      %v1751 = vpop.permute.xlu0 %1750
      %1752 = vrot.lane.b32.xlu0 %v1603, 64
      %v1753 = vpop.permute.xlu0 %1752
      %1754 = vrot.lane.b32.xlu0 %v1604, 64
      %v1755 = vpop.permute.xlu0 %1754
      %1756 = vrot.lane.b32.xlu0 %v1605, 64
      %v1757 = vpop.permute.xlu0 %1756
      %1758 = vrot.lane.b32.xlu0 %v1606, 64
      %v1759 = vpop.permute.xlu0 %1758
      %1760 = vrot.lane.b32.xlu0 %v1607, 64
      %v1761 = vpop.permute.xlu0 %1760
      %1762 = vrot.lane.b32.xlu0 %v1608, 64
      %v1763 = vpop.permute.xlu0 %1762
      %1764 = vrot.lane.b32.xlu0 %v1609, 64
      %v1765 = vpop.permute.xlu0 %1764
      %1766 = vrot.lane.b32.xlu0 %v1610, 64
      %v1767 = vpop.permute.xlu0 %1766
      %1768 = vrot.lane.b32.xlu0 %v1611, 64
      %v1769 = vpop.permute.xlu0 %1768
      %1770 = vrot.lane.b32.xlu0 %v1612, 64
      %v1771 = vpop.permute.xlu0 %1770
      %1772 = vrot.lane.b32.xlu0 %v1613, 64
      %v1773 = vpop.permute.xlu0 %1772
      %1774 = vrot.lane.b32.xlu0 %v1614, 64
      %v1775 = vpop.permute.xlu0 %1774
      %1776 = vrot.lane.b32.xlu0 %v1615, 64
      %v1777 = vpop.permute.xlu0 %1776
      %1778 = vrot.lane.b32.xlu0 %v1616, 64
      %v1779 = vpop.permute.xlu0 %1778
      %1780 = vrot.lane.b32.xlu0 %v1617, 64
      %v1781 = vpop.permute.xlu0 %1780
      %1782 = vrot.lane.b32.xlu0 %v1618, 64
      %v1783 = vpop.permute.xlu0 %1782
      %vm1804 = vcmask 785920
      %1805 = vst.msk [vmem:[#allocation2] sm:$0xff] %vm1804, %v1745
      %1806 = vst.msk [vmem:[#allocation2 + $0x8] sm:$0xff] %vm1804, %v1747
      %1807 = vst.msk [vmem:[#allocation2 + $0x10] sm:$0xff] %vm1804, %v1749
      %1808 = vst.msk [vmem:[#allocation2 + $0x18] sm:$0xff] %vm1804, %v1751
      %1809 = vst.msk [vmem:[#allocation2 + $0x20] sm:$0xff] %vm1804, %v1753
      %1810 = vst.msk [vmem:[#allocation2 + $0x28] sm:$0xff] %vm1804, %v1755
      %1811 = vst.msk [vmem:[#allocation2 + $0x30] sm:$0xff] %vm1804, %v1757
      %1812 = vst.msk [vmem:[#allocation2 + $0x38] sm:$0xff] %vm1804, %v1759
      %1813 = vst.msk [vmem:[#allocation2 + $0x40] sm:$0xff] %vm1804, %v1761
      %1814 = vst.msk [vmem:[#allocation2 + $0x48] sm:$0xff] %vm1804, %v1763
      %1815 = vst.msk [vmem:[#allocation2 + $0x50] sm:$0xff] %vm1804, %v1765
      %1816 = vst.msk [vmem:[#allocation2 + $0x58] sm:$0xff] %vm1804, %v1767
      %1817 = vst.msk [vmem:[#allocation2 + $0x60] sm:$0xff] %vm1804, %v1769
      %1818 = vst.msk [vmem:[#allocation2 + $0x68] sm:$0xff] %vm1804, %v1771
      %1819 = vst.msk [vmem:[#allocation2 + $0x70] sm:$0xff] %vm1804, %v1773
      %1820 = vst.msk [vmem:[#allocation2 + $0x78] sm:$0xff] %vm1804, %v1775
      %1821 = vst.msk [vmem:[#allocation2 + $0x80] sm:$0xff] %vm1804, %v1777
      %1822 = vst.msk [vmem:[#allocation2 + $0x88] sm:$0xff] %vm1804, %v1779
      %1823 = vst.msk [vmem:[#allocation2 + $0x90] sm:$0xff] %vm1804, %v1781
      %1824 = vst.msk [vmem:[#allocation2 + $0x98] sm:$0xff] %vm1804, %v1783
      %v1825 = vld [vmem:[#allocation2 + $0x1] sm:$0xff]
      %v1826 = vld [vmem:[#allocation2 + $0x9] sm:$0xff]
      %v1827 = vld [vmem:[#allocation2 + $0x11] sm:$0xff]
      %v1828 = vld [vmem:[#allocation2 + $0x19] sm:$0xff]
      %v1829 = vld [vmem:[#allocation2 + $0x21] sm:$0xff]
      %v1830 = vld [vmem:[#allocation2 + $0x29] sm:$0xff]
      %v1831 = vld [vmem:[#allocation2 + $0x31] sm:$0xff]
      %v1832 = vld [vmem:[#allocation2 + $0x39] sm:$0xff]
      %v1833 = vld [vmem:[#allocation2 + $0x41] sm:$0xff]
      %v1834 = vld [vmem:[#allocation2 + $0x49] sm:$0xff]
      %v1835 = vld [vmem:[#allocation2 + $0x51] sm:$0xff]
      %v1836 = vld [vmem:[#allocation2 + $0x59] sm:$0xff]
      %v1837 = vld [vmem:[#allocation2 + $0x61] sm:$0xff]
      %v1838 = vld [vmem:[#allocation2 + $0x69] sm:$0xff]
      %v1839 = vld [vmem:[#allocation2 + $0x71] sm:$0xff]
      %v1840 = vld [vmem:[#allocation2 + $0x79] sm:$0xff]
      %v1841 = vld [vmem:[#allocation2 + $0x81] sm:$0xff]
      %v1842 = vld [vmem:[#allocation2 + $0x89] sm:$0xff]
      %v1843 = vld [vmem:[#allocation2 + $0x91] sm:$0xff]
      %v1844 = vld [vmem:[#allocation2 + $0x99] sm:$0xff]
      %v1845 = vpack.c.bf16 %v1826, %v1825
      %v1846 = vpack.c.bf16 %v1828, %v1827
      %v1847 = vpack.c.bf16 %v1830, %v1829
      %v1848 = vpack.c.bf16 %v1832, %v1831
      %v1849 = vpack.c.bf16 %v1834, %v1833
      %v1850 = vpack.c.bf16 %v1836, %v1835
      %v1851 = vpack.c.bf16 %v1838, %v1837
      %v1852 = vpack.c.bf16 %v1840, %v1839
      %v1853 = vpack.c.bf16 %v1842, %v1841
      %v1854 = vpack.c.bf16 %v1844, %v1843
      %v1855 = vld [vmem:[%s9] sm:$0xf]
      %v1856 = vld [vmem:[%s9 + $0x4] sm:$0xf]
      %v1857 = vld [vmem:[%s9 + $0x8] sm:$0xf]
      %v1858 = vld [vmem:[%s9 + $0xc] sm:$0xf]
      %v1859 = vld [vmem:[%s9 + $0x10] sm:$0xf]
      %v1860 = vld [vmem:[%s9 + $0x14] sm:$0xf]
      %v1861 = vld [vmem:[%s9 + $0x18] sm:$0xf]
      %v1862 = vld [vmem:[%s9 + $0x1c] sm:$0xf]
      %v1863 = vld [vmem:[%s9 + $0x20] sm:$0xf]
      %v1864 = vld [vmem:[%s9 + $0x24] sm:$0xf]
      %v1865 = vld [vmem:[%s9 + $0x28] sm:$0xf]
      %v1866 = vld [vmem:[%s9 + $0x2c] sm:$0xf]
      %v1879 = vunpack.c.l.b16 %v1855
      %v1880 = vunpack.c.l.b16 %v1856
      %v1881 = vunpack.c.l.b16 %v1857
      %v1882 = vunpack.c.l.b16 %v1858
      %v1883 = vunpack.c.l.b16 %v1859
      %v1884 = vunpack.c.l.b16 %v1860
      %v1885 = vunpack.c.l.b16 %v1861
      %v1886 = vunpack.c.l.b16 %v1862
      %v1887 = vunpack.c.l.b16 %v1863
      %v1888 = vunpack.c.l.b16 %v1864
      %v1889 = vunpack.c.l.b16 %v1865
      %v1890 = vunpack.c.l.b16 %v1866
      %v1891 = vpack.c.b16 %v1880, %v1879
      %v1892 = vpack.c.b16 %v1882, %v1881
      %v1893 = vpack.c.b16 %v1884, %v1883
      %v1894 = vpack.c.b16 %v1886, %v1885
      %v1895 = vpack.c.b16 %v1888, %v1887
      %v1896 = vpack.c.b16 %v1890, %v1889
      %vm1903 = vcmask 785408
      %v1905 = vsel %vm1903, %v1845, 0
      %v1908 = vsel %vm1903, %v1846, 0
      %v1911 = vsel %vm1903, %v1847, 0
      %v1914 = vsel %vm1903, %v1848, 0
      %v1917 = vsel %vm1903, %v1849, 0
      %v1920 = vsel %vm1903, %v1850, 0
      %v1923 = vsel %vm1903, %v1851, 0
      %v1926 = vsel %vm1903, %v1852, 0
      %v1929 = vsel %vm1903, %v1853, 0
      %v1932 = vsel %vm1903, %v1854, 0
      %1934 = vmatprep.subr.bf16.mxu0 0
      %1935 = vmatpush1.bf16.msra.mxu0 0
      %1936 = vmatprep.subr.bf16.mxu0 0
      %1937 = vmatpush1.bf16.msra.mxu0 0
      %1938 = vmatprep.subr.bf16.mxu0 0
      %1939 = vmatpush1.bf16.msra.mxu0 %v1896
      %1940 = vmatprep.subr.bf16.mxu0 0
      %1941 = vmatpush1.bf16.msra.mxu0 %v1895
      %1942 = vmatprep.subr.bf16.mxu0 0
      %1943 = vmatpush1.bf16.msra.mxu0 %v1894
      %1944 = vmatprep.subr.bf16.mxu0 0
      %1945 = vmatpush1.bf16.msra.mxu0 %v1893
      %1946 = vmatprep.subr.bf16.mxu0 0
      %1947 = vmatpush1.bf16.msra.mxu0 %v1892
      %1948 = vmatprep.subr.bf16.mxu0 0
      %1949 = vmatpush1.bf16.msra.mxu0 %v1891
      %1950 = vmatprep.subr.bf16.mxu0 0
      %1951 = vmatpush2.bf16.msra.mxu0 0
      %1952 = vmatprep.subr.bf16.mxu0 0
      %1953 = vmatpush2.bf16.msra.mxu0 0
      %1954 = vmatprep.subr.bf16.mxu0 0
      %1955 = vmatpush2.bf16.msra.mxu0 0
      %1956 = vmatprep.subr.bf16.mxu0 0
      %1957 = vmatpush2.bf16.msra.mxu0 0
      %1958 = vmatprep.subr.bf16.mxu0 0
      %1959 = vmatpush2.bf16.msra.mxu0 0
      %1960 = vmatprep.subr.bf16.mxu0 0
      %1961 = vmatpush2.bf16.msra.mxu0 0
      %1962 = vmatprep.subr.bf16.mxu0 0
      %1963 = vmatpush2.bf16.msra.mxu0 0
      %1964 = vmatprep.subr.bf16.mxu0 0
      %1965 = vmatpush2.bf16.msra.mxu0 0
      %1966 = vmatprep.mubr.bf16.mxu0 0
      %1967 = vmatmul.mubr.bf16.gmra.mxu0 %v1905
      %v1968 = vpop.f32.mrf.mxu0
      %v1969 = vadd.f32 0.0, %v1968
      %v1970 = vpop.f32.mrf.mxu0
      %v1971 = vpop.f32.mrf.mxu0
      %v1972 = vadd.f32 0.0, %v1971
      %v1973 = vpop.f32.mrf.mxu0
      %1974 = vmatprep.mubr.bf16.mxu0 0
      %1975 = vmatmul.mubr.bf16.gmra.mxu0 %v1908
      %v1976 = vpop.f32.mrf.mxu0
      %v1977 = vadd.f32 0.0, %v1976
      %v1978 = vpop.f32.mrf.mxu0
      %v1979 = vpop.f32.mrf.mxu0
      %v1980 = vadd.f32 0.0, %v1979
      %v1981 = vpop.f32.mrf.mxu0
      %1982 = vmatprep.mubr.bf16.mxu0 0
      %1983 = vmatmul.mubr.bf16.gmra.mxu0 %v1911
      %v1984 = vpop.f32.mrf.mxu0
      %v1985 = vadd.f32 0.0, %v1984
      %v1986 = vpop.f32.mrf.mxu0
      %v1987 = vpop.f32.mrf.mxu0
      %v1988 = vadd.f32 0.0, %v1987
      %v1989 = vpop.f32.mrf.mxu0
      %1990 = vmatprep.mubr.bf16.mxu0 0
      %1991 = vmatmul.mubr.bf16.gmra.mxu0 %v1914
      %v1992 = vpop.f32.mrf.mxu0
      %v1993 = vadd.f32 0.0, %v1992
      %v1994 = vpop.f32.mrf.mxu0
      %v1995 = vpop.f32.mrf.mxu0
      %v1996 = vadd.f32 0.0, %v1995
      %v1997 = vpop.f32.mrf.mxu0
      %1998 = vmatprep.mubr.bf16.mxu0 0
      %1999 = vmatmul.mubr.bf16.gmra.mxu0 %v1917
      %v2000 = vpop.f32.mrf.mxu0
      %v2001 = vadd.f32 0.0, %v2000
      %v2002 = vpop.f32.mrf.mxu0
      %v2003 = vpop.f32.mrf.mxu0
      %v2004 = vadd.f32 0.0, %v2003
      %v2005 = vpop.f32.mrf.mxu0
      %2006 = vmatprep.mubr.bf16.mxu0 0
      %2007 = vmatmul.mubr.bf16.gmra.mxu0 %v1920
      %v2008 = vpop.f32.mrf.mxu0
      %v2009 = vadd.f32 0.0, %v2008
      %v2010 = vpop.f32.mrf.mxu0
      %v2011 = vpop.f32.mrf.mxu0
      %v2012 = vadd.f32 0.0, %v2011
      %v2013 = vpop.f32.mrf.mxu0
      %2014 = vmatprep.mubr.bf16.mxu0 0
      %2015 = vmatmul.mubr.bf16.gmra.mxu0 %v1923
      %v2016 = vpop.f32.mrf.mxu0
      %v2017 = vadd.f32 0.0, %v2016
      %v2018 = vpop.f32.mrf.mxu0
      %v2019 = vpop.f32.mrf.mxu0
      %v2020 = vadd.f32 0.0, %v2019
      %v2021 = vpop.f32.mrf.mxu0
      %2022 = vmatprep.mubr.bf16.mxu0 0
      %2023 = vmatmul.mubr.bf16.gmra.mxu0 %v1926
      %v2024 = vpop.f32.mrf.mxu0
      %v2025 = vadd.f32 0.0, %v2024
      %v2026 = vpop.f32.mrf.mxu0
      %v2027 = vpop.f32.mrf.mxu0
      %v2028 = vadd.f32 0.0, %v2027
      %v2029 = vpop.f32.mrf.mxu0
      %2030 = vmatprep.mubr.bf16.mxu0 0
      %2031 = vmatmul.mubr.bf16.gmra.mxu0 %v1929
      %v2032 = vpop.f32.mrf.mxu0
      %v2033 = vadd.f32 0.0, %v2032
      %v2034 = vpop.f32.mrf.mxu0
      %v2035 = vpop.f32.mrf.mxu0
      %v2036 = vadd.f32 0.0, %v2035
      %v2037 = vpop.f32.mrf.mxu0
      %2038 = vmatprep.mubr.bf16.mxu0 0
      %2039 = vmatmul.mubr.bf16.gmra.mxu0 %v1932
      %v2040 = vpop.f32.mrf.mxu0
      %v2041 = vadd.f32 0.0, %v2040
      %v2042 = vpop.f32.mrf.mxu0
      %v2043 = vpop.f32.mrf.mxu0
      %v2044 = vadd.f32 0.0, %v2043
      %v2045 = vpop.f32.mrf.mxu0
      %2046 = vdwg.mxu0
      %v2047 = vld [vmem:[%s11] sm:$0x1]
      %v2049 = vlaneseq
      %v2050 = vshrl.u32 %v2049, 7
      %v2051 = vsub.s32 0, %v2050
      %v2052 = vrot.slane %v2047, %v2051
      %v2054 = vmul.f32 %v1969, %v2052
      %v2055 = vmul.f32 %v1972, %v2052
      %v2056 = vmul.f32 %v1977, %v2052
      %v2057 = vmul.f32 %v1980, %v2052
      %v2058 = vmul.f32 %v1985, %v2052
      %v2059 = vmul.f32 %v1988, %v2052
      %v2060 = vmul.f32 %v1993, %v2052
      %v2061 = vmul.f32 %v1996, %v2052
      %v2062 = vmul.f32 %v2001, %v2052
      %v2063 = vmul.f32 %v2004, %v2052
      %v2064 = vmul.f32 %v2009, %v2052
      %v2065 = vmul.f32 %v2012, %v2052
      %v2066 = vmul.f32 %v2017, %v2052
      %v2067 = vmul.f32 %v2020, %v2052
      %v2068 = vmul.f32 %v2025, %v2052
      %v2069 = vmul.f32 %v2028, %v2052
      %v2070 = vmul.f32 %v2033, %v2052
      %v2071 = vmul.f32 %v2036, %v2052
      %v2072 = vmul.f32 %v2041, %v2052
      %v2073 = vmul.f32 %v2044, %v2052
      %v2074 = vld [vmem:[%s13] sm:$0x1]
      %v2076 = vlaneseq
      %v2077 = vshrl.u32 %v2076, 7
      %v2078 = vsub.s32 0, %v2077
      %v2079 = vrot.slane %v2074, %v2078
      %v2081 = vadd.f32 %v2054, %v2079
      %v2082 = vadd.f32 %v2055, %v2079
      %v2083 = vadd.f32 %v2056, %v2079
      %v2084 = vadd.f32 %v2057, %v2079
      %v2085 = vadd.f32 %v2058, %v2079
      %v2086 = vadd.f32 %v2059, %v2079
      %v2087 = vadd.f32 %v2060, %v2079
      %v2088 = vadd.f32 %v2061, %v2079
      %v2089 = vadd.f32 %v2062, %v2079
      %v2090 = vadd.f32 %v2063, %v2079
      %v2091 = vadd.f32 %v2064, %v2079
      %v2092 = vadd.f32 %v2065, %v2079
      %v2093 = vadd.f32 %v2066, %v2079
      %v2094 = vadd.f32 %v2067, %v2079
      %v2095 = vadd.f32 %v2068, %v2079
      %v2096 = vadd.f32 %v2069, %v2079
      %v2097 = vadd.f32 %v2070, %v2079
      %v2098 = vadd.f32 %v2071, %v2079
      %v2099 = vadd.f32 %v2072, %v2079
      %v2100 = vadd.f32 %v2073, %v2079
      %v2101 = vmax.f32 %v2081, 0.0
      %v2102 = vmax.f32 %v2082, 0.0
      %v2103 = vmax.f32 %v2083, 0.0
      %v2104 = vmax.f32 %v2084, 0.0
      %v2105 = vmax.f32 %v2085, 0.0
      %v2106 = vmax.f32 %v2086, 0.0
      %v2107 = vmax.f32 %v2087, 0.0
      %v2108 = vmax.f32 %v2088, 0.0
      %v2109 = vmax.f32 %v2089, 0.0
      %v2110 = vmax.f32 %v2090, 0.0
      %v2111 = vmax.f32 %v2091, 0.0
      %v2112 = vmax.f32 %v2092, 0.0
      %v2113 = vmax.f32 %v2093, 0.0
      %v2114 = vmax.f32 %v2094, 0.0
      %v2115 = vmax.f32 %v2095, 0.0
      %v2116 = vmax.f32 %v2096, 0.0
      %v2117 = vmax.f32 %v2097, 0.0
      %v2118 = vmax.f32 %v2098, 0.0
      %v2119 = vmax.f32 %v2099, 0.0
      %v2120 = vmax.f32 %v2100, 0.0
      %v2121 = vsel %vm1579, %v2101, 0.0
      %v2122 = vsel %vm1580, %v2102, 0.0
      %v2123 = vsel %vm1581, %v2103, 0.0
      %v2124 = vsel %vm1582, %v2104, 0.0
      %v2125 = vsel %vm1583, %v2105, 0.0
      %v2126 = vsel %vm1584, %v2106, 0.0
      %v2127 = vsel %vm1585, %v2107, 0.0
      %v2128 = vsel %vm1586, %v2108, 0.0
      %v2129 = vsel %vm1587, %v2109, 0.0
      %v2130 = vsel %vm1588, %v2110, 0.0
      %v2131 = vsel %vm1589, %v2111, 0.0
      %v2132 = vsel %vm1590, %v2112, 0.0
      %v2133 = vsel %vm1591, %v2113, 0.0
      %v2134 = vsel %vm1592, %v2114, 0.0
      %v2135 = vsel %vm1593, %v2115, 0.0
      %v2136 = vsel %vm1594, %v2116, 0.0
      %v2137 = vsel %vm1595, %v2117, 0.0
      %v2138 = vsel %vm1596, %v2118, 0.0
      %v2139 = vsel %vm1597, %v2119, 0.0
      %v2140 = vsel %vm1598, %v2120, 0.0
      %2141 = vst.msk [vmem:[#allocation2] sm:$0x3] %vm1619, 0.0
      %2142 = vst.msk [vmem:[#allocation2 + $0xa0] sm:$0x3] %vm1619, 0.0
      %2143 = vst.msk [vmem:[#allocation2 + $0x2] sm:$0xff] %vm1622, %v2121
      %2144 = vst.msk [vmem:[#allocation2 + $0xa] sm:$0xff] %vm1622, %v2122
      %2145 = vst.msk [vmem:[#allocation2 + $0x12] sm:$0xff] %vm1622, %v2123
      %2146 = vst.msk [vmem:[#allocation2 + $0x1a] sm:$0xff] %vm1622, %v2124
      %2147 = vst.msk [vmem:[#allocation2 + $0x22] sm:$0xff] %vm1622, %v2125
      %2148 = vst.msk [vmem:[#allocation2 + $0x2a] sm:$0xff] %vm1622, %v2126
      %2149 = vst.msk [vmem:[#allocation2 + $0x32] sm:$0xff] %vm1622, %v2127
      %2150 = vst.msk [vmem:[#allocation2 + $0x3a] sm:$0xff] %vm1622, %v2128
      %2151 = vst.msk [vmem:[#allocation2 + $0x42] sm:$0xff] %vm1622, %v2129
      %2152 = vst.msk [vmem:[#allocation2 + $0x4a] sm:$0xff] %vm1622, %v2130
      %2153 = vst.msk [vmem:[#allocation2 + $0x52] sm:$0xff] %vm1622, %v2131
      %2154 = vst.msk [vmem:[#allocation2 + $0x5a] sm:$0xff] %vm1622, %v2132
      %2155 = vst.msk [vmem:[#allocation2 + $0x62] sm:$0xff] %vm1622, %v2133
      %2156 = vst.msk [vmem:[#allocation2 + $0x6a] sm:$0xff] %vm1622, %v2134
      %2157 = vst.msk [vmem:[#allocation2 + $0x72] sm:$0xff] %vm1622, %v2135
      %2158 = vst.msk [vmem:[#allocation2 + $0x7a] sm:$0xff] %vm1622, %v2136
      %2159 = vst.msk [vmem:[#allocation2 + $0x82] sm:$0xff] %vm1622, %v2137
      %2160 = vst.msk [vmem:[#allocation2 + $0x8a] sm:$0xff] %vm1622, %v2138
      %2161 = vst.msk [vmem:[#allocation2 + $0x92] sm:$0xff] %vm1622, %v2139
      %2162 = vst.msk [vmem:[#allocation2 + $0x9a] sm:$0xff] %vm1622, %v2140
      %2183 = vrot.lane.b32.xlu0 %v2121, 32
      %v2184 = vpop.permute.xlu0 %2183
      %2185 = vrot.lane.b32.xlu0 %v2122, 32
      %v2186 = vpop.permute.xlu0 %2185
      %2187 = vrot.lane.b32.xlu0 %v2123, 32
      %v2188 = vpop.permute.xlu0 %2187
      %2189 = vrot.lane.b32.xlu0 %v2124, 32
      %v2190 = vpop.permute.xlu0 %2189
      %2191 = vrot.lane.b32.xlu0 %v2125, 32
      %v2192 = vpop.permute.xlu0 %2191
      %2193 = vrot.lane.b32.xlu0 %v2126, 32
      %v2194 = vpop.permute.xlu0 %2193
      %2195 = vrot.lane.b32.xlu0 %v2127, 32
      %v2196 = vpop.permute.xlu0 %2195
      %2197 = vrot.lane.b32.xlu0 %v2128, 32
      %v2198 = vpop.permute.xlu0 %2197
      %2199 = vrot.lane.b32.xlu0 %v2129, 32
      %v2200 = vpop.permute.xlu0 %2199
      %2201 = vrot.lane.b32.xlu0 %v2130, 32
      %v2202 = vpop.permute.xlu0 %2201
      %2203 = vrot.lane.b32.xlu0 %v2131, 32
      %v2204 = vpop.permute.xlu0 %2203
      %2205 = vrot.lane.b32.xlu0 %v2132, 32
      %v2206 = vpop.permute.xlu0 %2205
      %2207 = vrot.lane.b32.xlu0 %v2133, 32
      %v2208 = vpop.permute.xlu0 %2207
      %2209 = vrot.lane.b32.xlu0 %v2134, 32
      %v2210 = vpop.permute.xlu0 %2209
      %2211 = vrot.lane.b32.xlu0 %v2135, 32
      %v2212 = vpop.permute.xlu0 %2211
      %2213 = vrot.lane.b32.xlu0 %v2136, 32
      %v2214 = vpop.permute.xlu0 %2213
      %2215 = vrot.lane.b32.xlu0 %v2137, 32
      %v2216 = vpop.permute.xlu0 %2215
      %2217 = vrot.lane.b32.xlu0 %v2138, 32
      %v2218 = vpop.permute.xlu0 %2217
      %2219 = vrot.lane.b32.xlu0 %v2139, 32
      %v2220 = vpop.permute.xlu0 %2219
      %2221 = vrot.lane.b32.xlu0 %v2140, 32
      %v2222 = vpop.permute.xlu0 %2221
      %2243 = vst.msk [vmem:[#allocation2 + $0x1] sm:$0xff] %vm1723, %v2184
      %2244 = vst.msk [vmem:[#allocation2 + $0x9] sm:$0xff] %vm1723, %v2186
      %2245 = vst.msk [vmem:[#allocation2 + $0x11] sm:$0xff] %vm1723, %v2188
      %2246 = vst.msk [vmem:[#allocation2 + $0x19] sm:$0xff] %vm1723, %v2190
      %2247 = vst.msk [vmem:[#allocation2 + $0x21] sm:$0xff] %vm1723, %v2192
      %2248 = vst.msk [vmem:[#allocation2 + $0x29] sm:$0xff] %vm1723, %v2194
      %2249 = vst.msk [vmem:[#allocation2 + $0x31] sm:$0xff] %vm1723, %v2196
      %2250 = vst.msk [vmem:[#allocation2 + $0x39] sm:$0xff] %vm1723, %v2198
      %2251 = vst.msk [vmem:[#allocation2 + $0x41] sm:$0xff] %vm1723, %v2200
      %2252 = vst.msk [vmem:[#allocation2 + $0x49] sm:$0xff] %vm1723, %v2202
      %2253 = vst.msk [vmem:[#allocation2 + $0x51] sm:$0xff] %vm1723, %v2204
      %2254 = vst.msk [vmem:[#allocation2 + $0x59] sm:$0xff] %vm1723, %v2206
      %2255 = vst.msk [vmem:[#allocation2 + $0x61] sm:$0xff] %vm1723, %v2208
      %2256 = vst.msk [vmem:[#allocation2 + $0x69] sm:$0xff] %vm1723, %v2210
      %2257 = vst.msk [vmem:[#allocation2 + $0x71] sm:$0xff] %vm1723, %v2212
      %2258 = vst.msk [vmem:[#allocation2 + $0x79] sm:$0xff] %vm1723, %v2214
      %2259 = vst.msk [vmem:[#allocation2 + $0x81] sm:$0xff] %vm1723, %v2216
      %2260 = vst.msk [vmem:[#allocation2 + $0x89] sm:$0xff] %vm1723, %v2218
      %2261 = vst.msk [vmem:[#allocation2 + $0x91] sm:$0xff] %vm1723, %v2220
      %2262 = vst.msk [vmem:[#allocation2 + $0x99] sm:$0xff] %vm1723, %v2222
      %2263 = vrot.lane.b32.xlu0 %v2121, 64
      %v2264 = vpop.permute.xlu0 %2263
      %2265 = vrot.lane.b32.xlu0 %v2122, 64
      %v2266 = vpop.permute.xlu0 %2265
      %2267 = vrot.lane.b32.xlu0 %v2123, 64
      %v2268 = vpop.permute.xlu0 %2267
      %2269 = vrot.lane.b32.xlu0 %v2124, 64
      %v2270 = vpop.permute.xlu0 %2269
      %2271 = vrot.lane.b32.xlu0 %v2125, 64
      %v2272 = vpop.permute.xlu0 %2271
      %2273 = vrot.lane.b32.xlu0 %v2126, 64
      %v2274 = vpop.permute.xlu0 %2273
      %2275 = vrot.lane.b32.xlu0 %v2127, 64
      %v2276 = vpop.permute.xlu0 %2275
      %2277 = vrot.lane.b32.xlu0 %v2128, 64
      %v2278 = vpop.permute.xlu0 %2277
      %2279 = vrot.lane.b32.xlu0 %v2129, 64
      %v2280 = vpop.permute.xlu0 %2279
      %2281 = vrot.lane.b32.xlu0 %v2130, 64
      %v2282 = vpop.permute.xlu0 %2281
      %2283 = vrot.lane.b32.xlu0 %v2131, 64
      %v2284 = vpop.permute.xlu0 %2283
      %2285 = vrot.lane.b32.xlu0 %v2132, 64
      %v2286 = vpop.permute.xlu0 %2285
      %2287 = vrot.lane.b32.xlu0 %v2133, 64
      %v2288 = vpop.permute.xlu0 %2287
      %2289 = vrot.lane.b32.xlu0 %v2134, 64
      %v2290 = vpop.permute.xlu0 %2289
      %2291 = vrot.lane.b32.xlu0 %v2135, 64
      %v2292 = vpop.permute.xlu0 %2291
      %2293 = vrot.lane.b32.xlu0 %v2136, 64
      %v2294 = vpop.permute.xlu0 %2293
      %2295 = vrot.lane.b32.xlu0 %v2137, 64
      %v2296 = vpop.permute.xlu0 %2295
      %2297 = vrot.lane.b32.xlu0 %v2138, 64
      %v2298 = vpop.permute.xlu0 %2297
      %2299 = vrot.lane.b32.xlu0 %v2139, 64
      %v2300 = vpop.permute.xlu0 %2299
      %2301 = vrot.lane.b32.xlu0 %v2140, 64
      %v2302 = vpop.permute.xlu0 %2301
      %2323 = vst.msk [vmem:[#allocation2] sm:$0xff] %vm1804, %v2264
      %2324 = vst.msk [vmem:[#allocation2 + $0x8] sm:$0xff] %vm1804, %v2266
      %2325 = vst.msk [vmem:[#allocation2 + $0x10] sm:$0xff] %vm1804, %v2268
      %2326 = vst.msk [vmem:[#allocation2 + $0x18] sm:$0xff] %vm1804, %v2270
      %2327 = vst.msk [vmem:[#allocation2 + $0x20] sm:$0xff] %vm1804, %v2272
      %2328 = vst.msk [vmem:[#allocation2 + $0x28] sm:$0xff] %vm1804, %v2274
      %2329 = vst.msk [vmem:[#allocation2 + $0x30] sm:$0xff] %vm1804, %v2276
      %2330 = vst.msk [vmem:[#allocation2 + $0x38] sm:$0xff] %vm1804, %v2278
      %2331 = vst.msk [vmem:[#allocation2 + $0x40] sm:$0xff] %vm1804, %v2280
      %2332 = vst.msk [vmem:[#allocation2 + $0x48] sm:$0xff] %vm1804, %v2282
      %2333 = vst.msk [vmem:[#allocation2 + $0x50] sm:$0xff] %vm1804, %v2284
      %2334 = vst.msk [vmem:[#allocation2 + $0x58] sm:$0xff] %vm1804, %v2286
      %2335 = vst.msk [vmem:[#allocation2 + $0x60] sm:$0xff] %vm1804, %v2288
      %2336 = vst.msk [vmem:[#allocation2 + $0x68] sm:$0xff] %vm1804, %v2290
      %2337 = vst.msk [vmem:[#allocation2 + $0x70] sm:$0xff] %vm1804, %v2292
      %2338 = vst.msk [vmem:[#allocation2 + $0x78] sm:$0xff] %vm1804, %v2294
      %2339 = vst.msk [vmem:[#allocation2 + $0x80] sm:$0xff] %vm1804, %v2296
      %2340 = vst.msk [vmem:[#allocation2 + $0x88] sm:$0xff] %vm1804, %v2298
      %2341 = vst.msk [vmem:[#allocation2 + $0x90] sm:$0xff] %vm1804, %v2300
      %2342 = vst.msk [vmem:[#allocation2 + $0x98] sm:$0xff] %vm1804, %v2302
      %v2343 = vld [vmem:[#allocation2 + $0x1] sm:$0xff]
      %v2344 = vld [vmem:[#allocation2 + $0x9] sm:$0xff]
      %v2345 = vld [vmem:[#allocation2 + $0x11] sm:$0xff]
      %v2346 = vld [vmem:[#allocation2 + $0x19] sm:$0xff]
      %v2347 = vld [vmem:[#allocation2 + $0x21] sm:$0xff]
      %v2348 = vld [vmem:[#allocation2 + $0x29] sm:$0xff]
      %v2349 = vld [vmem:[#allocation2 + $0x31] sm:$0xff]
      %v2350 = vld [vmem:[#allocation2 + $0x39] sm:$0xff]
      %v2351 = vld [vmem:[#allocation2 + $0x41] sm:$0xff]
      %v2352 = vld [vmem:[#allocation2 + $0x49] sm:$0xff]
      %v2353 = vld [vmem:[#allocation2 + $0x51] sm:$0xff]
      %v2354 = vld [vmem:[#allocation2 + $0x59] sm:$0xff]
      %v2355 = vld [vmem:[#allocation2 + $0x61] sm:$0xff]
      %v2356 = vld [vmem:[#allocation2 + $0x69] sm:$0xff]
      %v2357 = vld [vmem:[#allocation2 + $0x71] sm:$0xff]
      %v2358 = vld [vmem:[#allocation2 + $0x79] sm:$0xff]
      %v2359 = vld [vmem:[#allocation2 + $0x81] sm:$0xff]
      %v2360 = vld [vmem:[#allocation2 + $0x89] sm:$0xff]
      %v2361 = vld [vmem:[#allocation2 + $0x91] sm:$0xff]
      %v2362 = vld [vmem:[#allocation2 + $0x99] sm:$0xff]
      %v2363 = vpack.c.bf16 %v2344, %v2343
      %v2364 = vpack.c.bf16 %v2346, %v2345
      %v2365 = vpack.c.bf16 %v2348, %v2347
      %v2366 = vpack.c.bf16 %v2350, %v2349
      %v2367 = vpack.c.bf16 %v2352, %v2351
      %v2368 = vpack.c.bf16 %v2354, %v2353
      %v2369 = vpack.c.bf16 %v2356, %v2355
      %v2370 = vpack.c.bf16 %v2358, %v2357
      %v2371 = vpack.c.bf16 %v2360, %v2359
      %v2372 = vpack.c.bf16 %v2362, %v2361
      %v2373 = vld [vmem:[%s15] sm:$0xf]
      %v2374 = vld [vmem:[%s15 + $0x4] sm:$0xf]
      %v2375 = vld [vmem:[%s15 + $0x8] sm:$0xf]
      %v2376 = vld [vmem:[%s15 + $0xc] sm:$0xf]
      %v2377 = vld [vmem:[%s15 + $0x10] sm:$0xf]
      %v2378 = vld [vmem:[%s15 + $0x14] sm:$0xf]
      %v2379 = vld [vmem:[%s15 + $0x18] sm:$0xf]
      %v2380 = vld [vmem:[%s15 + $0x1c] sm:$0xf]
      %v2381 = vld [vmem:[%s15 + $0x20] sm:$0xf]
      %v2382 = vld [vmem:[%s15 + $0x24] sm:$0xf]
      %v2383 = vld [vmem:[%s15 + $0x28] sm:$0xf]
      %v2384 = vld [vmem:[%s15 + $0x2c] sm:$0xf]
      %v2397 = vunpack.c.l.b16 %v2373
      %v2398 = vunpack.c.l.b16 %v2374
      %v2399 = vunpack.c.l.b16 %v2375
      %v2400 = vunpack.c.l.b16 %v2376
      %v2401 = vunpack.c.l.b16 %v2377
      %v2402 = vunpack.c.l.b16 %v2378
      %v2403 = vunpack.c.l.b16 %v2379
      %v2404 = vunpack.c.l.b16 %v2380
      %v2405 = vunpack.c.l.b16 %v2381
      %v2406 = vunpack.c.l.b16 %v2382
      %v2407 = vunpack.c.l.b16 %v2383
      %v2408 = vunpack.c.l.b16 %v2384
      %v2409 = vpack.c.b16 %v2398, %v2397
      %v2410 = vpack.c.b16 %v2400, %v2399
      %v2411 = vpack.c.b16 %v2402, %v2401
      %v2412 = vpack.c.b16 %v2404, %v2403
      %v2413 = vpack.c.b16 %v2406, %v2405
      %v2414 = vpack.c.b16 %v2408, %v2407
      %v2422 = vsel %vm1903, %v2363, 0
      %v2425 = vsel %vm1903, %v2364, 0
      %v2428 = vsel %vm1903, %v2365, 0
      %v2431 = vsel %vm1903, %v2366, 0
      %v2434 = vsel %vm1903, %v2367, 0
      %v2437 = vsel %vm1903, %v2368, 0
      %v2440 = vsel %vm1903, %v2369, 0
      %v2443 = vsel %vm1903, %v2370, 0
      %v2446 = vsel %vm1903, %v2371, 0
      %v2449 = vsel %vm1903, %v2372, 0
      %2451 = vmatprep.subr.bf16.mxu0 0
      %2452 = vmatpush1.bf16.msra.mxu0 0
      %2453 = vmatprep.subr.bf16.mxu0 0
      %2454 = vmatpush1.bf16.msra.mxu0 0
      %2455 = vmatprep.subr.bf16.mxu0 0
      %2456 = vmatpush1.bf16.msra.mxu0 %v2414
      %2457 = vmatprep.subr.bf16.mxu0 0
      %2458 = vmatpush1.bf16.msra.mxu0 %v2413
      %2459 = vmatprep.subr.bf16.mxu0 0
      %2460 = vmatpush1.bf16.msra.mxu0 %v2412
      %2461 = vmatprep.subr.bf16.mxu0 0
      %2462 = vmatpush1.bf16.msra.mxu0 %v2411
      %2463 = vmatprep.subr.bf16.mxu0 0
      %2464 = vmatpush1.bf16.msra.mxu0 %v2410
      %2465 = vmatprep.subr.bf16.mxu0 0
      %2466 = vmatpush1.bf16.msra.mxu0 %v2409
      %2467 = vmatprep.subr.bf16.mxu0 0
      %2468 = vmatpush2.bf16.msra.mxu0 0
      %2469 = vmatprep.subr.bf16.mxu0 0
      %2470 = vmatpush2.bf16.msra.mxu0 0
      %2471 = vmatprep.subr.bf16.mxu0 0
      %2472 = vmatpush2.bf16.msra.mxu0 0
      %2473 = vmatprep.subr.bf16.mxu0 0
      %2474 = vmatpush2.bf16.msra.mxu0 0
      %2475 = vmatprep.subr.bf16.mxu0 0
      %2476 = vmatpush2.bf16.msra.mxu0 0
      %2477 = vmatprep.subr.bf16.mxu0 0
      %2478 = vmatpush2.bf16.msra.mxu0 0
      %2479 = vmatprep.subr.bf16.mxu0 0
      %2480 = vmatpush2.bf16.msra.mxu0 0
      %2481 = vmatprep.subr.bf16.mxu0 0
      %2482 = vmatpush2.bf16.msra.mxu0 0
      %2483 = vmatprep.mubr.bf16.mxu0 0
      %2484 = vmatmul.mubr.bf16.gmra.mxu0 %v2422
      %v2485 = vpop.f32.mrf.mxu0
      %v2486 = vadd.f32 0.0, %v2485
      %v2487 = vpop.f32.mrf.mxu0
      %v2488 = vpop.f32.mrf.mxu0
      %v2489 = vadd.f32 0.0, %v2488
      %v2490 = vpop.f32.mrf.mxu0
      %2491 = vmatprep.mubr.bf16.mxu0 0
      %2492 = vmatmul.mubr.bf16.gmra.mxu0 %v2425
      %v2493 = vpop.f32.mrf.mxu0
      %v2494 = vadd.f32 0.0, %v2493
      %v2495 = vpop.f32.mrf.mxu0
      %v2496 = vpop.f32.mrf.mxu0
      %v2497 = vadd.f32 0.0, %v2496
      %v2498 = vpop.f32.mrf.mxu0
      %2499 = vmatprep.mubr.bf16.mxu0 0
      %2500 = vmatmul.mubr.bf16.gmra.mxu0 %v2428
      %v2501 = vpop.f32.mrf.mxu0
      %v2502 = vadd.f32 0.0, %v2501
      %v2503 = vpop.f32.mrf.mxu0
      %v2504 = vpop.f32.mrf.mxu0
      %v2505 = vadd.f32 0.0, %v2504
      %v2506 = vpop.f32.mrf.mxu0
      %2507 = vmatprep.mubr.bf16.mxu0 0
      %2508 = vmatmul.mubr.bf16.gmra.mxu0 %v2431
      %v2509 = vpop.f32.mrf.mxu0
      %v2510 = vadd.f32 0.0, %v2509
      %v2511 = vpop.f32.mrf.mxu0
      %v2512 = vpop.f32.mrf.mxu0
      %v2513 = vadd.f32 0.0, %v2512
      %v2514 = vpop.f32.mrf.mxu0
      %2515 = vmatprep.mubr.bf16.mxu0 0
      %2516 = vmatmul.mubr.bf16.gmra.mxu0 %v2434
      %v2517 = vpop.f32.mrf.mxu0
      %v2518 = vadd.f32 0.0, %v2517
      %v2519 = vpop.f32.mrf.mxu0
      %v2520 = vpop.f32.mrf.mxu0
      %v2521 = vadd.f32 0.0, %v2520
      %v2522 = vpop.f32.mrf.mxu0
      %2523 = vmatprep.mubr.bf16.mxu0 0
      %2524 = vmatmul.mubr.bf16.gmra.mxu0 %v2437
      %v2525 = vpop.f32.mrf.mxu0
      %v2526 = vadd.f32 0.0, %v2525
      %v2527 = vpop.f32.mrf.mxu0
      %v2528 = vpop.f32.mrf.mxu0
      %v2529 = vadd.f32 0.0, %v2528
      %v2530 = vpop.f32.mrf.mxu0
      %2531 = vmatprep.mubr.bf16.mxu0 0
      %2532 = vmatmul.mubr.bf16.gmra.mxu0 %v2440
      %v2533 = vpop.f32.mrf.mxu0
      %v2534 = vadd.f32 0.0, %v2533
      %v2535 = vpop.f32.mrf.mxu0
      %v2536 = vpop.f32.mrf.mxu0
      %v2537 = vadd.f32 0.0, %v2536
      %v2538 = vpop.f32.mrf.mxu0
      %2539 = vmatprep.mubr.bf16.mxu0 0
      %2540 = vmatmul.mubr.bf16.gmra.mxu0 %v2443
      %v2541 = vpop.f32.mrf.mxu0
      %v2542 = vadd.f32 0.0, %v2541
      %v2543 = vpop.f32.mrf.mxu0
      %v2544 = vpop.f32.mrf.mxu0
      %v2545 = vadd.f32 0.0, %v2544
      %v2546 = vpop.f32.mrf.mxu0
      %2547 = vmatprep.mubr.bf16.mxu0 0
      %2548 = vmatmul.mubr.bf16.gmra.mxu0 %v2446
      %v2549 = vpop.f32.mrf.mxu0
      %v2550 = vadd.f32 0.0, %v2549
      %v2551 = vpop.f32.mrf.mxu0
      %v2552 = vpop.f32.mrf.mxu0
      %v2553 = vadd.f32 0.0, %v2552
      %v2554 = vpop.f32.mrf.mxu0
      %2555 = vmatprep.mubr.bf16.mxu0 0
      %2556 = vmatmul.mubr.bf16.gmra.mxu0 %v2449
      %v2557 = vpop.f32.mrf.mxu0
      %v2558 = vadd.f32 0.0, %v2557
      %v2559 = vpop.f32.mrf.mxu0
      %v2560 = vpop.f32.mrf.mxu0
      %v2561 = vadd.f32 0.0, %v2560
      %v2562 = vpop.f32.mrf.mxu0
      %2563 = vdwg.mxu0
      %v2564 = vld [vmem:[%s17] sm:$0x1]
      %v2566 = vlaneseq
      %v2567 = vshrl.u32 %v2566, 7
      %v2568 = vsub.s32 0, %v2567
      %v2569 = vrot.slane %v2564, %v2568
      %v2571 = vmul.f32 %v2486, %v2569
      %v2572 = vmul.f32 %v2489, %v2569
      %v2573 = vmul.f32 %v2494, %v2569
      %v2574 = vmul.f32 %v2497, %v2569
      %v2575 = vmul.f32 %v2502, %v2569
      %v2576 = vmul.f32 %v2505, %v2569
      %v2577 = vmul.f32 %v2510, %v2569
      %v2578 = vmul.f32 %v2513, %v2569
      %v2579 = vmul.f32 %v2518, %v2569
      %v2580 = vmul.f32 %v2521, %v2569
      %v2581 = vmul.f32 %v2526, %v2569
      %v2582 = vmul.f32 %v2529, %v2569
      %v2583 = vmul.f32 %v2534, %v2569
      %v2584 = vmul.f32 %v2537, %v2569
      %v2585 = vmul.f32 %v2542, %v2569
      %v2586 = vmul.f32 %v2545, %v2569
      %v2587 = vmul.f32 %v2550, %v2569
      %v2588 = vmul.f32 %v2553, %v2569
      %v2589 = vmul.f32 %v2558, %v2569
      %v2590 = vmul.f32 %v2561, %v2569
      %v2591 = vld [vmem:[%s19] sm:$0x1]
      %v2593 = vlaneseq
      %v2594 = vshrl.u32 %v2593, 7
      %v2595 = vsub.s32 0, %v2594
      %v2596 = vrot.slane %v2591, %v2595
      %v2598 = vadd.f32 %v2571, %v2596
      %v2599 = vadd.f32 %v2572, %v2596
      %v2600 = vadd.f32 %v2573, %v2596
      %v2601 = vadd.f32 %v2574, %v2596
      %v2602 = vadd.f32 %v2575, %v2596
      %v2603 = vadd.f32 %v2576, %v2596
      %v2604 = vadd.f32 %v2577, %v2596
      %v2605 = vadd.f32 %v2578, %v2596
      %v2606 = vadd.f32 %v2579, %v2596
      %v2607 = vadd.f32 %v2580, %v2596
      %v2608 = vadd.f32 %v2581, %v2596
      %v2609 = vadd.f32 %v2582, %v2596
      %v2610 = vadd.f32 %v2583, %v2596
      %v2611 = vadd.f32 %v2584, %v2596
      %v2612 = vadd.f32 %v2585, %v2596
      %v2613 = vadd.f32 %v2586, %v2596
      %v2614 = vadd.f32 %v2587, %v2596
      %v2615 = vadd.f32 %v2588, %v2596
      %v2616 = vadd.f32 %v2589, %v2596
      %v2617 = vadd.f32 %v2590, %v2596
      %v2618 = vadd.f32 %v2598, %v1599
      %v2619 = vadd.f32 %v2599, %v1600
      %v2620 = vadd.f32 %v2600, %v1601
      %v2621 = vadd.f32 %v2601, %v1602
      %v2622 = vadd.f32 %v2602, %v1603
      %v2623 = vadd.f32 %v2603, %v1604
      %v2624 = vadd.f32 %v2604, %v1605
      %v2625 = vadd.f32 %v2605, %v1606
      %v2626 = vadd.f32 %v2606, %v1607
      %v2627 = vadd.f32 %v2607, %v1608
      %v2628 = vadd.f32 %v2608, %v1609
      %v2629 = vadd.f32 %v2609, %v1610
      %v2630 = vadd.f32 %v2610, %v1611
      %v2631 = vadd.f32 %v2611, %v1612
      %v2632 = vadd.f32 %v2612, %v1613
      %v2633 = vadd.f32 %v2613, %v1614
      %v2634 = vadd.f32 %v2614, %v1615
      %v2635 = vadd.f32 %v2615, %v1616
      %v2636 = vadd.f32 %v2616, %v1617
      %v2637 = vadd.f32 %v2617, %v1618
      %v2638 = vmax.f32 %v2618, 0.0
      %v2639 = vmax.f32 %v2619, 0.0
      %v2640 = vmax.f32 %v2620, 0.0
      %v2641 = vmax.f32 %v2621, 0.0
      %v2642 = vmax.f32 %v2622, 0.0
      %v2643 = vmax.f32 %v2623, 0.0
      %v2644 = vmax.f32 %v2624, 0.0
      %v2645 = vmax.f32 %v2625, 0.0
      %v2646 = vmax.f32 %v2626, 0.0
      %v2647 = vmax.f32 %v2627, 0.0
      %v2648 = vmax.f32 %v2628, 0.0
      %v2649 = vmax.f32 %v2629, 0.0
      %v2650 = vmax.f32 %v2630, 0.0
      %v2651 = vmax.f32 %v2631, 0.0
      %v2652 = vmax.f32 %v2632, 0.0
      %v2653 = vmax.f32 %v2633, 0.0
      %v2654 = vmax.f32 %v2634, 0.0
      %v2655 = vmax.f32 %v2635, 0.0
      %v2656 = vmax.f32 %v2636, 0.0
      %v2657 = vmax.f32 %v2637, 0.0
      %v2658 = vsel %vm1579, %v2638, 0.0
      %v2659 = vsel %vm1580, %v2639, 0.0
      %v2660 = vsel %vm1581, %v2640, 0.0
      %v2661 = vsel %vm1582, %v2641, 0.0
      %v2662 = vsel %vm1583, %v2642, 0.0
      %v2663 = vsel %vm1584, %v2643, 0.0
      %v2664 = vsel %vm1585, %v2644, 0.0
      %v2665 = vsel %vm1586, %v2645, 0.0
      %v2666 = vsel %vm1587, %v2646, 0.0
      %v2667 = vsel %vm1588, %v2647, 0.0
      %v2668 = vsel %vm1589, %v2648, 0.0
      %v2669 = vsel %vm1590, %v2649, 0.0
      %v2670 = vsel %vm1591, %v2650, 0.0
      %v2671 = vsel %vm1592, %v2651, 0.0
      %v2672 = vsel %vm1593, %v2652, 0.0
      %v2673 = vsel %vm1594, %v2653, 0.0
      %v2674 = vsel %vm1595, %v2654, 0.0
      %v2675 = vsel %vm1596, %v2655, 0.0
      %v2676 = vsel %vm1597, %v2656, 0.0
      %v2677 = vsel %vm1598, %v2657, 0.0
      %2678 = vst.msk [vmem:[#allocation2] sm:$0x3] %vm1619, 0.0
      %2679 = vst.msk [vmem:[#allocation2 + $0xa0] sm:$0x3] %vm1619, 0.0
      %2680 = vst.msk [vmem:[#allocation2 + $0x2] sm:$0xff] %vm1622, %v2658
      %2681 = vst.msk [vmem:[#allocation2 + $0xa] sm:$0xff] %vm1622, %v2659
      %2682 = vst.msk [vmem:[#allocation2 + $0x12] sm:$0xff] %vm1622, %v2660
      %2683 = vst.msk [vmem:[#allocation2 + $0x1a] sm:$0xff] %vm1622, %v2661
      %2684 = vst.msk [vmem:[#allocation2 + $0x22] sm:$0xff] %vm1622, %v2662
      %2685 = vst.msk [vmem:[#allocation2 + $0x2a] sm:$0xff] %vm1622, %v2663
      %2686 = vst.msk [vmem:[#allocation2 + $0x32] sm:$0xff] %vm1622, %v2664
      %2687 = vst.msk [vmem:[#allocation2 + $0x3a] sm:$0xff] %vm1622, %v2665
      %2688 = vst.msk [vmem:[#allocation2 + $0x42] sm:$0xff] %vm1622, %v2666
      %2689 = vst.msk [vmem:[#allocation2 + $0x4a] sm:$0xff] %vm1622, %v2667
      %2690 = vst.msk [vmem:[#allocation2 + $0x52] sm:$0xff] %vm1622, %v2668
      %2691 = vst.msk [vmem:[#allocation2 + $0x5a] sm:$0xff] %vm1622, %v2669
      %2692 = vst.msk [vmem:[#allocation2 + $0x62] sm:$0xff] %vm1622, %v2670
      %2693 = vst.msk [vmem:[#allocation2 + $0x6a] sm:$0xff] %vm1622, %v2671
      %2694 = vst.msk [vmem:[#allocation2 + $0x72] sm:$0xff] %vm1622, %v2672
      %2695 = vst.msk [vmem:[#allocation2 + $0x7a] sm:$0xff] %vm1622, %v2673
      %2696 = vst.msk [vmem:[#allocation2 + $0x82] sm:$0xff] %vm1622, %v2674
      %2697 = vst.msk [vmem:[#allocation2 + $0x8a] sm:$0xff] %vm1622, %v2675
      %2698 = vst.msk [vmem:[#allocation2 + $0x92] sm:$0xff] %vm1622, %v2676
      %2699 = vst.msk [vmem:[#allocation2 + $0x9a] sm:$0xff] %vm1622, %v2677
      %2720 = vrot.lane.b32.xlu0 %v2658, 32
      %v2721 = vpop.permute.xlu0 %2720
      %2722 = vrot.lane.b32.xlu0 %v2659, 32
      %v2723 = vpop.permute.xlu0 %2722
      %2724 = vrot.lane.b32.xlu0 %v2660, 32
      %v2725 = vpop.permute.xlu0 %2724
      %2726 = vrot.lane.b32.xlu0 %v2661, 32
      %v2727 = vpop.permute.xlu0 %2726
      %2728 = vrot.lane.b32.xlu0 %v2662, 32
      %v2729 = vpop.permute.xlu0 %2728
      %2730 = vrot.lane.b32.xlu0 %v2663, 32
      %v2731 = vpop.permute.xlu0 %2730
      %2732 = vrot.lane.b32.xlu0 %v2664, 32
      %v2733 = vpop.permute.xlu0 %2732
      %2734 = vrot.lane.b32.xlu0 %v2665, 32
      %v2735 = vpop.permute.xlu0 %2734
      %2736 = vrot.lane.b32.xlu0 %v2666, 32
      %v2737 = vpop.permute.xlu0 %2736
      %2738 = vrot.lane.b32.xlu0 %v2667, 32
      %v2739 = vpop.permute.xlu0 %2738
      %2740 = vrot.lane.b32.xlu0 %v2668, 32
      %v2741 = vpop.permute.xlu0 %2740
      %2742 = vrot.lane.b32.xlu0 %v2669, 32
      %v2743 = vpop.permute.xlu0 %2742
      %2744 = vrot.lane.b32.xlu0 %v2670, 32
      %v2745 = vpop.permute.xlu0 %2744
      %2746 = vrot.lane.b32.xlu0 %v2671, 32
      %v2747 = vpop.permute.xlu0 %2746
      %2748 = vrot.lane.b32.xlu0 %v2672, 32
      %v2749 = vpop.permute.xlu0 %2748
      %2750 = vrot.lane.b32.xlu0 %v2673, 32
      %v2751 = vpop.permute.xlu0 %2750
      %2752 = vrot.lane.b32.xlu0 %v2674, 32
      %v2753 = vpop.permute.xlu0 %2752
      %2754 = vrot.lane.b32.xlu0 %v2675, 32
      %v2755 = vpop.permute.xlu0 %2754
      %2756 = vrot.lane.b32.xlu0 %v2676, 32
      %v2757 = vpop.permute.xlu0 %2756
      %2758 = vrot.lane.b32.xlu0 %v2677, 32
      %v2759 = vpop.permute.xlu0 %2758
      %2780 = vst.msk [vmem:[#allocation2 + $0x1] sm:$0xff] %vm1723, %v2721
      %2781 = vst.msk [vmem:[#allocation2 + $0x9] sm:$0xff] %vm1723, %v2723
      %2782 = vst.msk [vmem:[#allocation2 + $0x11] sm:$0xff] %vm1723, %v2725
      %2783 = vst.msk [vmem:[#allocation2 + $0x19] sm:$0xff] %vm1723, %v2727
      %2784 = vst.msk [vmem:[#allocation2 + $0x21] sm:$0xff] %vm1723, %v2729
      %2785 = vst.msk [vmem:[#allocation2 + $0x29] sm:$0xff] %vm1723, %v2731
      %2786 = vst.msk [vmem:[#allocation2 + $0x31] sm:$0xff] %vm1723, %v2733
      %2787 = vst.msk [vmem:[#allocation2 + $0x39] sm:$0xff] %vm1723, %v2735
      %2788 = vst.msk [vmem:[#allocation2 + $0x41] sm:$0xff] %vm1723, %v2737
      %2789 = vst.msk [vmem:[#allocation2 + $0x49] sm:$0xff] %vm1723, %v2739
      %2790 = vst.msk [vmem:[#allocation2 + $0x51] sm:$0xff] %vm1723, %v2741
      %2791 = vst.msk [vmem:[#allocation2 + $0x59] sm:$0xff] %vm1723, %v2743
      %2792 = vst.msk [vmem:[#allocation2 + $0x61] sm:$0xff] %vm1723, %v2745
      %2793 = vst.msk [vmem:[#allocation2 + $0x69] sm:$0xff] %vm1723, %v2747
      %2794 = vst.msk [vmem:[#allocation2 + $0x71] sm:$0xff] %vm1723, %v2749
      %2795 = vst.msk [vmem:[#allocation2 + $0x79] sm:$0xff] %vm1723, %v2751
      %2796 = vst.msk [vmem:[#allocation2 + $0x81] sm:$0xff] %vm1723, %v2753
      %2797 = vst.msk [vmem:[#allocation2 + $0x89] sm:$0xff] %vm1723, %v2755
      %2798 = vst.msk [vmem:[#allocation2 + $0x91] sm:$0xff] %vm1723, %v2757
      %2799 = vst.msk [vmem:[#allocation2 + $0x99] sm:$0xff] %vm1723, %v2759
      %2800 = vrot.lane.b32.xlu0 %v2658, 64
      %v2801 = vpop.permute.xlu0 %2800
      %2802 = vrot.lane.b32.xlu0 %v2659, 64
      %v2803 = vpop.permute.xlu0 %2802
      %2804 = vrot.lane.b32.xlu0 %v2660, 64
      %v2805 = vpop.permute.xlu0 %2804
      %2806 = vrot.lane.b32.xlu0 %v2661, 64
      %v2807 = vpop.permute.xlu0 %2806
      %2808 = vrot.lane.b32.xlu0 %v2662, 64
      %v2809 = vpop.permute.xlu0 %2808
      %2810 = vrot.lane.b32.xlu0 %v2663, 64
      %v2811 = vpop.permute.xlu0 %2810
      %2812 = vrot.lane.b32.xlu0 %v2664, 64
      %v2813 = vpop.permute.xlu0 %2812
      %2814 = vrot.lane.b32.xlu0 %v2665, 64
      %v2815 = vpop.permute.xlu0 %2814
      %2816 = vrot.lane.b32.xlu0 %v2666, 64
      %v2817 = vpop.permute.xlu0 %2816
      %2818 = vrot.lane.b32.xlu0 %v2667, 64
      %v2819 = vpop.permute.xlu0 %2818
      %2820 = vrot.lane.b32.xlu0 %v2668, 64
      %v2821 = vpop.permute.xlu0 %2820
      %2822 = vrot.lane.b32.xlu0 %v2669, 64
      %v2823 = vpop.permute.xlu0 %2822
      %2824 = vrot.lane.b32.xlu0 %v2670, 64
      %v2825 = vpop.permute.xlu0 %2824
      %2826 = vrot.lane.b32.xlu0 %v2671, 64
      %v2827 = vpop.permute.xlu0 %2826
      %2828 = vrot.lane.b32.xlu0 %v2672, 64
      %v2829 = vpop.permute.xlu0 %2828
      %2830 = vrot.lane.b32.xlu0 %v2673, 64
      %v2831 = vpop.permute.xlu0 %2830
      %2832 = vrot.lane.b32.xlu0 %v2674, 64
      %v2833 = vpop.permute.xlu0 %2832
      %2834 = vrot.lane.b32.xlu0 %v2675, 64
      %v2835 = vpop.permute.xlu0 %2834
      %2836 = vrot.lane.b32.xlu0 %v2676, 64
      %v2837 = vpop.permute.xlu0 %2836
      %2838 = vrot.lane.b32.xlu0 %v2677, 64
      %v2839 = vpop.permute.xlu0 %2838
      %2860 = vst.msk [vmem:[#allocation2] sm:$0xff] %vm1804, %v2801
      %2861 = vst.msk [vmem:[#allocation2 + $0x8] sm:$0xff] %vm1804, %v2803
      %2862 = vst.msk [vmem:[#allocation2 + $0x10] sm:$0xff] %vm1804, %v2805
      %2863 = vst.msk [vmem:[#allocation2 + $0x18] sm:$0xff] %vm1804, %v2807
      %2864 = vst.msk [vmem:[#allocation2 + $0x20] sm:$0xff] %vm1804, %v2809
      %2865 = vst.msk [vmem:[#allocation2 + $0x28] sm:$0xff] %vm1804, %v2811
      %2866 = vst.msk [vmem:[#allocation2 + $0x30] sm:$0xff] %vm1804, %v2813
      %2867 = vst.msk [vmem:[#allocation2 + $0x38] sm:$0xff] %vm1804, %v2815
      %2868 = vst.msk [vmem:[#allocation2 + $0x40] sm:$0xff] %vm1804, %v2817
      %2869 = vst.msk [vmem:[#allocation2 + $0x48] sm:$0xff] %vm1804, %v2819
      %2870 = vst.msk [vmem:[#allocation2 + $0x50] sm:$0xff] %vm1804, %v2821
      %2871 = vst.msk [vmem:[#allocation2 + $0x58] sm:$0xff] %vm1804, %v2823
      %2872 = vst.msk [vmem:[#allocation2 + $0x60] sm:$0xff] %vm1804, %v2825
      %2873 = vst.msk [vmem:[#allocation2 + $0x68] sm:$0xff] %vm1804, %v2827
      %2874 = vst.msk [vmem:[#allocation2 + $0x70] sm:$0xff] %vm1804, %v2829
      %2875 = vst.msk [vmem:[#allocation2 + $0x78] sm:$0xff] %vm1804, %v2831
      %2876 = vst.msk [vmem:[#allocation2 + $0x80] sm:$0xff] %vm1804, %v2833
      %2877 = vst.msk [vmem:[#allocation2 + $0x88] sm:$0xff] %vm1804, %v2835
      %2878 = vst.msk [vmem:[#allocation2 + $0x90] sm:$0xff] %vm1804, %v2837
      %2879 = vst.msk [vmem:[#allocation2 + $0x98] sm:$0xff] %vm1804, %v2839
      %v2880 = vld [vmem:[#allocation2 + $0x1] sm:$0xff]
      %v2881 = vld [vmem:[#allocation2 + $0x9] sm:$0xff]
      %v2882 = vld [vmem:[#allocation2 + $0x11] sm:$0xff]
      %v2883 = vld [vmem:[#allocation2 + $0x19] sm:$0xff]
      %v2884 = vld [vmem:[#allocation2 + $0x21] sm:$0xff]
      %v2885 = vld [vmem:[#allocation2 + $0x29] sm:$0xff]
      %v2886 = vld [vmem:[#allocation2 + $0x31] sm:$0xff]
      %v2887 = vld [vmem:[#allocation2 + $0x39] sm:$0xff]
      %v2888 = vld [vmem:[#allocation2 + $0x41] sm:$0xff]
      %v2889 = vld [vmem:[#allocation2 + $0x49] sm:$0xff]
      %v2890 = vld [vmem:[#allocation2 + $0x51] sm:$0xff]
      %v2891 = vld [vmem:[#allocation2 + $0x59] sm:$0xff]
      %v2892 = vld [vmem:[#allocation2 + $0x61] sm:$0xff]
      %v2893 = vld [vmem:[#allocation2 + $0x69] sm:$0xff]
      %v2894 = vld [vmem:[#allocation2 + $0x71] sm:$0xff]
      %v2895 = vld [vmem:[#allocation2 + $0x79] sm:$0xff]
      %v2896 = vld [vmem:[#allocation2 + $0x81] sm:$0xff]
      %v2897 = vld [vmem:[#allocation2 + $0x89] sm:$0xff]
      %v2898 = vld [vmem:[#allocation2 + $0x91] sm:$0xff]
      %v2899 = vld [vmem:[#allocation2 + $0x99] sm:$0xff]
      %v2900 = vpack.c.bf16 %v2881, %v2880
      %v2901 = vpack.c.bf16 %v2883, %v2882
      %v2902 = vpack.c.bf16 %v2885, %v2884
      %v2903 = vpack.c.bf16 %v2887, %v2886
      %v2904 = vpack.c.bf16 %v2889, %v2888
      %v2905 = vpack.c.bf16 %v2891, %v2890
      %v2906 = vpack.c.bf16 %v2893, %v2892
      %v2907 = vpack.c.bf16 %v2895, %v2894
      %v2908 = vpack.c.bf16 %v2897, %v2896
      %v2909 = vpack.c.bf16 %v2899, %v2898
      %v2910 = vld [vmem:[%s21] sm:$0xf]
      %v2911 = vld [vmem:[%s21 + $0x4] sm:$0xf]
      %v2912 = vld [vmem:[%s21 + $0x8] sm:$0xf]
      %v2913 = vld [vmem:[%s21 + $0xc] sm:$0xf]
      %v2914 = vld [vmem:[%s21 + $0x10] sm:$0xf]
      %v2915 = vld [vmem:[%s21 + $0x14] sm:$0xf]
      %v2916 = vld [vmem:[%s21 + $0x18] sm:$0xf]
      %v2917 = vld [vmem:[%s21 + $0x1c] sm:$0xf]
      %v2918 = vld [vmem:[%s21 + $0x20] sm:$0xf]
      %v2919 = vld [vmem:[%s21 + $0x24] sm:$0xf]
      %v2920 = vld [vmem:[%s21 + $0x28] sm:$0xf]
      %v2921 = vld [vmem:[%s21 + $0x2c] sm:$0xf]
      %v2934 = vunpack.c.l.b16 %v2910
      %v2935 = vunpack.c.l.b16 %v2911
      %v2936 = vunpack.c.l.b16 %v2912
      %v2937 = vunpack.c.l.b16 %v2913
      %v2938 = vunpack.c.l.b16 %v2914
      %v2939 = vunpack.c.l.b16 %v2915
      %v2940 = vunpack.c.l.b16 %v2916
      %v2941 = vunpack.c.l.b16 %v2917
      %v2942 = vunpack.c.l.b16 %v2918
      %v2943 = vunpack.c.l.b16 %v2919
      %v2944 = vunpack.c.l.b16 %v2920
      %v2945 = vunpack.c.l.b16 %v2921
      %v2946 = vpack.c.b16 %v2935, %v2934
      %v2947 = vpack.c.b16 %v2937, %v2936
      %v2948 = vpack.c.b16 %v2939, %v2938
      %v2949 = vpack.c.b16 %v2941, %v2940
      %v2950 = vpack.c.b16 %v2943, %v2942
      %v2951 = vpack.c.b16 %v2945, %v2944
      %v2959 = vsel %vm1903, %v2900, 0
      %v2962 = vsel %vm1903, %v2901, 0
      %v2965 = vsel %vm1903, %v2902, 0
      %v2968 = vsel %vm1903, %v2903, 0
      %v2971 = vsel %vm1903, %v2904, 0
      %v2974 = vsel %vm1903, %v2905, 0
      %v2977 = vsel %vm1903, %v2906, 0
      %v2980 = vsel %vm1903, %v2907, 0
      %v2983 = vsel %vm1903, %v2908, 0
      %v2986 = vsel %vm1903, %v2909, 0
      %2988 = vmatprep.subr.bf16.mxu0 0
      %2989 = vmatpush1.bf16.msra.mxu0 0
      %2990 = vmatprep.subr.bf16.mxu0 0
      %2991 = vmatpush1.bf16.msra.mxu0 0
      %2992 = vmatprep.subr.bf16.mxu0 0
      %2993 = vmatpush1.bf16.msra.mxu0 %v2951
      %2994 = vmatprep.subr.bf16.mxu0 0
      %2995 = vmatpush1.bf16.msra.mxu0 %v2950
      %2996 = vmatprep.subr.bf16.mxu0 0
      %2997 = vmatpush1.bf16.msra.mxu0 %v2949
      %2998 = vmatprep.subr.bf16.mxu0 0
      %2999 = vmatpush1.bf16.msra.mxu0 %v2948
      %3000 = vmatprep.subr.bf16.mxu0 0
      %3001 = vmatpush1.bf16.msra.mxu0 %v2947
      %3002 = vmatprep.subr.bf16.mxu0 0
      %3003 = vmatpush1.bf16.msra.mxu0 %v2946
      %3004 = vmatprep.subr.bf16.mxu0 0
      %3005 = vmatpush2.bf16.msra.mxu0 0
      %3006 = vmatprep.subr.bf16.mxu0 0
      %3007 = vmatpush2.bf16.msra.mxu0 0
      %3008 = vmatprep.subr.bf16.mxu0 0
      %3009 = vmatpush2.bf16.msra.mxu0 0
      %3010 = vmatprep.subr.bf16.mxu0 0
      %3011 = vmatpush2.bf16.msra.mxu0 0
      %3012 = vmatprep.subr.bf16.mxu0 0
      %3013 = vmatpush2.bf16.msra.mxu0 0
      %3014 = vmatprep.subr.bf16.mxu0 0
      %3015 = vmatpush2.bf16.msra.mxu0 0
      %3016 = vmatprep.subr.bf16.mxu0 0
      %3017 = vmatpush2.bf16.msra.mxu0 0
      %3018 = vmatprep.subr.bf16.mxu0 0
      %3019 = vmatpush2.bf16.msra.mxu0 0
      %3020 = vmatprep.mubr.bf16.mxu0 0
      %3021 = vmatmul.mubr.bf16.gmra.mxu0 %v2959
      %v3022 = vpop.f32.mrf.mxu0
      %v3023 = vadd.f32 0.0, %v3022
      %v3024 = vpop.f32.mrf.mxu0
      %v3025 = vpop.f32.mrf.mxu0
      %v3026 = vadd.f32 0.0, %v3025
      %v3027 = vpop.f32.mrf.mxu0
      %3028 = vmatprep.mubr.bf16.mxu0 0
      %3029 = vmatmul.mubr.bf16.gmra.mxu0 %v2962
      %v3030 = vpop.f32.mrf.mxu0
      %v3031 = vadd.f32 0.0, %v3030
      %v3032 = vpop.f32.mrf.mxu0
      %v3033 = vpop.f32.mrf.mxu0
      %v3034 = vadd.f32 0.0, %v3033
      %v3035 = vpop.f32.mrf.mxu0
      %3036 = vmatprep.mubr.bf16.mxu0 0
      %3037 = vmatmul.mubr.bf16.gmra.mxu0 %v2965
      %v3038 = vpop.f32.mrf.mxu0
      %v3039 = vadd.f32 0.0, %v3038
      %v3040 = vpop.f32.mrf.mxu0
      %v3041 = vpop.f32.mrf.mxu0
      %v3042 = vadd.f32 0.0, %v3041
      %v3043 = vpop.f32.mrf.mxu0
      %3044 = vmatprep.mubr.bf16.mxu0 0
      %3045 = vmatmul.mubr.bf16.gmra.mxu0 %v2968
      %v3046 = vpop.f32.mrf.mxu0
      %v3047 = vadd.f32 0.0, %v3046
      %v3048 = vpop.f32.mrf.mxu0
      %v3049 = vpop.f32.mrf.mxu0
      %v3050 = vadd.f32 0.0, %v3049
      %v3051 = vpop.f32.mrf.mxu0
      %3052 = vmatprep.mubr.bf16.mxu0 0
      %3053 = vmatmul.mubr.bf16.gmra.mxu0 %v2971
      %v3054 = vpop.f32.mrf.mxu0
      %v3055 = vadd.f32 0.0, %v3054
      %v3056 = vpop.f32.mrf.mxu0
      %v3057 = vpop.f32.mrf.mxu0
      %v3058 = vadd.f32 0.0, %v3057
      %v3059 = vpop.f32.mrf.mxu0
      %3060 = vmatprep.mubr.bf16.mxu0 0
      %3061 = vmatmul.mubr.bf16.gmra.mxu0 %v2974
      %v3062 = vpop.f32.mrf.mxu0
      %v3063 = vadd.f32 0.0, %v3062
      %v3064 = vpop.f32.mrf.mxu0
      %v3065 = vpop.f32.mrf.mxu0
      %v3066 = vadd.f32 0.0, %v3065
      %v3067 = vpop.f32.mrf.mxu0
      %3068 = vmatprep.mubr.bf16.mxu0 0
      %3069 = vmatmul.mubr.bf16.gmra.mxu0 %v2977
      %v3070 = vpop.f32.mrf.mxu0
      %v3071 = vadd.f32 0.0, %v3070
      %v3072 = vpop.f32.mrf.mxu0
      %v3073 = vpop.f32.mrf.mxu0
      %v3074 = vadd.f32 0.0, %v3073
      %v3075 = vpop.f32.mrf.mxu0
      %3076 = vmatprep.mubr.bf16.mxu0 0
      %3077 = vmatmul.mubr.bf16.gmra.mxu0 %v2980
      %v3078 = vpop.f32.mrf.mxu0
      %v3079 = vadd.f32 0.0, %v3078
      %v3080 = vpop.f32.mrf.mxu0
      %v3081 = vpop.f32.mrf.mxu0
      %v3082 = vadd.f32 0.0, %v3081
      %v3083 = vpop.f32.mrf.mxu0
      %3084 = vmatprep.mubr.bf16.mxu0 0
      %3085 = vmatmul.mubr.bf16.gmra.mxu0 %v2983
      %v3086 = vpop.f32.mrf.mxu0
      %v3087 = vadd.f32 0.0, %v3086
      %v3088 = vpop.f32.mrf.mxu0
      %v3089 = vpop.f32.mrf.mxu0
      %v3090 = vadd.f32 0.0, %v3089
      %v3091 = vpop.f32.mrf.mxu0
      %3092 = vmatprep.mubr.bf16.mxu0 0
      %3093 = vmatmul.mubr.bf16.gmra.mxu0 %v2986
      %v3094 = vpop.f32.mrf.mxu0
      %v3095 = vadd.f32 0.0, %v3094
      %v3096 = vpop.f32.mrf.mxu0
      %v3097 = vpop.f32.mrf.mxu0
      %v3098 = vadd.f32 0.0, %v3097
      %v3099 = vpop.f32.mrf.mxu0
      %3100 = vdwg.mxu0
      %v3101 = vld [vmem:[%s23] sm:$0x1]
      %v3103 = vlaneseq
      %v3104 = vshrl.u32 %v3103, 7
      %v3105 = vsub.s32 0, %v3104
      %v3106 = vrot.slane %v3101, %v3105
      %v3108 = vmul.f32 %v3023, %v3106
      %v3109 = vmul.f32 %v3026, %v3106
      %v3110 = vmul.f32 %v3031, %v3106
      %v3111 = vmul.f32 %v3034, %v3106
      %v3112 = vmul.f32 %v3039, %v3106
      %v3113 = vmul.f32 %v3042, %v3106
      %v3114 = vmul.f32 %v3047, %v3106
      %v3115 = vmul.f32 %v3050, %v3106
      %v3116 = vmul.f32 %v3055, %v3106
      %v3117 = vmul.f32 %v3058, %v3106
      %v3118 = vmul.f32 %v3063, %v3106
      %v3119 = vmul.f32 %v3066, %v3106
      %v3120 = vmul.f32 %v3071, %v3106
      %v3121 = vmul.f32 %v3074, %v3106
      %v3122 = vmul.f32 %v3079, %v3106
      %v3123 = vmul.f32 %v3082, %v3106
      %v3124 = vmul.f32 %v3087, %v3106
      %v3125 = vmul.f32 %v3090, %v3106
      %v3126 = vmul.f32 %v3095, %v3106
      %v3127 = vmul.f32 %v3098, %v3106
      %v3128 = vld [vmem:[%s25] sm:$0x1]
      %v3130 = vlaneseq
      %v3131 = vshrl.u32 %v3130, 7
      %v3132 = vsub.s32 0, %v3131
      %v3133 = vrot.slane %v3128, %v3132
      %v3135 = vadd.f32 %v3108, %v3133
      %v3136 = vadd.f32 %v3109, %v3133
      %v3137 = vadd.f32 %v3110, %v3133
      %v3138 = vadd.f32 %v3111, %v3133
      %v3139 = vadd.f32 %v3112, %v3133
      %v3140 = vadd.f32 %v3113, %v3133
      %v3141 = vadd.f32 %v3114, %v3133
      %v3142 = vadd.f32 %v3115, %v3133
      %v3143 = vadd.f32 %v3116, %v3133
      %v3144 = vadd.f32 %v3117, %v3133
      %v3145 = vadd.f32 %v3118, %v3133
      %v3146 = vadd.f32 %v3119, %v3133
      %v3147 = vadd.f32 %v3120, %v3133
      %v3148 = vadd.f32 %v3121, %v3133
      %v3149 = vadd.f32 %v3122, %v3133
      %v3150 = vadd.f32 %v3123, %v3133
      %v3151 = vadd.f32 %v3124, %v3133
      %v3152 = vadd.f32 %v3125, %v3133
      %v3153 = vadd.f32 %v3126, %v3133
      %v3154 = vadd.f32 %v3127, %v3133
      %v3155 = vmax.f32 %v3135, 0.0
      %v3156 = vmax.f32 %v3136, 0.0
      %v3157 = vmax.f32 %v3137, 0.0
      %v3158 = vmax.f32 %v3138, 0.0
      %v3159 = vmax.f32 %v3139, 0.0
      %v3160 = vmax.f32 %v3140, 0.0
      %v3161 = vmax.f32 %v3141, 0.0
      %v3162 = vmax.f32 %v3142, 0.0
      %v3163 = vmax.f32 %v3143, 0.0
      %v3164 = vmax.f32 %v3144, 0.0
      %v3165 = vmax.f32 %v3145, 0.0
      %v3166 = vmax.f32 %v3146, 0.0
      %v3167 = vmax.f32 %v3147, 0.0
      %v3168 = vmax.f32 %v3148, 0.0
      %v3169 = vmax.f32 %v3149, 0.0
      %v3170 = vmax.f32 %v3150, 0.0
      %v3171 = vmax.f32 %v3151, 0.0
      %v3172 = vmax.f32 %v3152, 0.0
      %v3173 = vmax.f32 %v3153, 0.0
      %v3174 = vmax.f32 %v3154, 0.0
      %v3175 = vsel %vm1579, %v3155, 0.0
      %v3176 = vsel %vm1580, %v3156, 0.0
      %v3177 = vsel %vm1581, %v3157, 0.0
      %v3178 = vsel %vm1582, %v3158, 0.0
      %v3179 = vsel %vm1583, %v3159, 0.0
      %v3180 = vsel %vm1584, %v3160, 0.0
      %v3181 = vsel %vm1585, %v3161, 0.0
      %v3182 = vsel %vm1586, %v3162, 0.0
      %v3183 = vsel %vm1587, %v3163, 0.0
      %v3184 = vsel %vm1588, %v3164, 0.0
      %v3185 = vsel %vm1589, %v3165, 0.0
      %v3186 = vsel %vm1590, %v3166, 0.0
      %v3187 = vsel %vm1591, %v3167, 0.0
      %v3188 = vsel %vm1592, %v3168, 0.0
      %v3189 = vsel %vm1593, %v3169, 0.0
      %v3190 = vsel %vm1594, %v3170, 0.0
      %v3191 = vsel %vm1595, %v3171, 0.0
      %v3192 = vsel %vm1596, %v3172, 0.0
      %v3193 = vsel %vm1597, %v3173, 0.0
      %v3194 = vsel %vm1598, %v3174, 0.0
      %3195 = vst [vmem:[#allocation3] sm:$0x3] 0.0
      %vm3196 = vcmask 517120
      %3197 = vst.msk [vmem:[#allocation3 + $0x8] sm:$0x3] %vm3196, 0.0
      %3198 = vst [vmem:[#allocation3 + $0x140] sm:$0x3] 0.0
      %3199 = vst.msk [vmem:[#allocation3 + $0x148] sm:$0x3] %vm3196, 0.0
      %vm3220 = vcmask 1041408
      %v3221 = vrot.slane %v3175, 6
      %v3222 = vrot.slane %v3176, 6
      %v3223 = vsel %vm3220, %v3221, %v3222
      %v3224 = vrot.slane %v3177, 6
      %v3225 = vsel %vm3220, %v3222, %v3224
      %v3226 = vrot.slane %v3178, 6
      %v3227 = vsel %vm3220, %v3224, %v3226
      %v3228 = vrot.slane %v3179, 6
      %v3229 = vsel %vm3220, %v3226, %v3228
      %v3230 = vrot.slane %v3180, 6
      %v3231 = vsel %vm3220, %v3228, %v3230
      %v3232 = vrot.slane %v3181, 6
      %v3233 = vsel %vm3220, %v3230, %v3232
      %v3234 = vrot.slane %v3182, 6
      %v3235 = vsel %vm3220, %v3232, %v3234
      %v3236 = vrot.slane %v3183, 6
      %v3237 = vsel %vm3220, %v3234, %v3236
      %v3238 = vrot.slane %v3184, 6
      %v3239 = vsel %vm3220, %v3236, %v3238
      %v3240 = vrot.slane %v3185, 6
      %v3241 = vsel %vm3220, %v3238, %v3240
      %v3242 = vrot.slane %v3186, 6
      %v3243 = vsel %vm3220, %v3240, %v3242
      %v3244 = vrot.slane %v3187, 6
      %v3245 = vsel %vm3220, %v3242, %v3244
      %v3246 = vrot.slane %v3188, 6
      %v3247 = vsel %vm3220, %v3244, %v3246
      %v3248 = vrot.slane %v3189, 6
      %v3249 = vsel %vm3220, %v3246, %v3248
      %v3250 = vrot.slane %v3190, 6
      %v3251 = vsel %vm3220, %v3248, %v3250
      %v3252 = vrot.slane %v3191, 6
      %v3253 = vsel %vm3220, %v3250, %v3252
      %v3254 = vrot.slane %v3192, 6
      %v3255 = vsel %vm3220, %v3252, %v3254
      %v3256 = vrot.slane %v3193, 6
      %v3257 = vsel %vm3220, %v3254, %v3256
      %v3258 = vrot.slane %v3194, 6
      %v3259 = vsel %vm3220, %v3256, %v3258
      %vm3281 = vcmask 523266
      %3282 = vst.msk [vmem:[#allocation3] sm:$0xfc] %vm3281, %v3221
      %vm3283 = vcmask 523264
      %3284 = vst.msk [vmem:[#allocation3 + $0x10] sm:$0xff] %vm3283, %v3223
      %3285 = vst.msk [vmem:[#allocation3 + $0x20] sm:$0xff] %vm3283, %v3225
      %3286 = vst.msk [vmem:[#allocation3 + $0x30] sm:$0xff] %vm3283, %v3227
      %3287 = vst.msk [vmem:[#allocation3 + $0x40] sm:$0xff] %vm3283, %v3229
      %3288 = vst.msk [vmem:[#allocation3 + $0x50] sm:$0xff] %vm3283, %v3231
      %3289 = vst.msk [vmem:[#allocation3 + $0x60] sm:$0xff] %vm3283, %v3233
      %3290 = vst.msk [vmem:[#allocation3 + $0x70] sm:$0xff] %vm3283, %v3235
      %3291 = vst.msk [vmem:[#allocation3 + $0x80] sm:$0xff] %vm3283, %v3237
      %3292 = vst.msk [vmem:[#allocation3 + $0x90] sm:$0xff] %vm3283, %v3239
      %3293 = vst.msk [vmem:[#allocation3 + $0xa0] sm:$0xff] %vm3283, %v3241
      %3294 = vst.msk [vmem:[#allocation3 + $0xb0] sm:$0xff] %vm3283, %v3243
      %3295 = vst.msk [vmem:[#allocation3 + $0xc0] sm:$0xff] %vm3283, %v3245
      %3296 = vst.msk [vmem:[#allocation3 + $0xd0] sm:$0xff] %vm3283, %v3247
      %3297 = vst.msk [vmem:[#allocation3 + $0xe0] sm:$0xff] %vm3283, %v3249
      %3298 = vst.msk [vmem:[#allocation3 + $0xf0] sm:$0xff] %vm3283, %v3251
      %3299 = vst.msk [vmem:[#allocation3 + $0x100] sm:$0xff] %vm3283, %v3253
      %3300 = vst.msk [vmem:[#allocation3 + $0x110] sm:$0xff] %vm3283, %v3255
      %3301 = vst.msk [vmem:[#allocation3 + $0x120] sm:$0xff] %vm3283, %v3257
      %3302 = vst.msk [vmem:[#allocation3 + $0x130] sm:$0xff] %vm3283, %v3259
      %3303 = vst.msk [vmem:[#allocation3 + $0x140] sm:$0x3] %vm3196, %v3258
      %vm3304 = vcmask 1040384
      %v3305 = vrot.slane %v3175, 7
      %v3306 = vrot.slane %v3176, 7
      %v3307 = vsel %vm3304, %v3305, %v3306
      %v3308 = vrot.slane %v3177, 7
      %v3309 = vsel %vm3304, %v3306, %v3308
      %v3310 = vrot.slane %v3178, 7
      %v3311 = vsel %vm3304, %v3308, %v3310
      %v3312 = vrot.slane %v3179, 7
      %v3313 = vsel %vm3304, %v3310, %v3312
      %v3314 = vrot.slane %v3180, 7
      %v3315 = vsel %vm3304, %v3312, %v3314
      %v3316 = vrot.slane %v3181, 7
      %v3317 = vsel %vm3304, %v3314, %v3316
      %v3318 = vrot.slane %v3182, 7
      %v3319 = vsel %vm3304, %v3316, %v3318
      %v3320 = vrot.slane %v3183, 7
      %v3321 = vsel %vm3304, %v3318, %v3320
      %v3322 = vrot.slane %v3184, 7
      %v3323 = vsel %vm3304, %v3320, %v3322
      %v3324 = vrot.slane %v3185, 7
      %v3325 = vsel %vm3304, %v3322, %v3324
      %v3326 = vrot.slane %v3186, 7
      %v3327 = vsel %vm3304, %v3324, %v3326
      %v3328 = vrot.slane %v3187, 7
      %v3329 = vsel %vm3304, %v3326, %v3328
      %v3330 = vrot.slane %v3188, 7
      %v3331 = vsel %vm3304, %v3328, %v3330
      %v3332 = vrot.slane %v3189, 7
      %v3333 = vsel %vm3304, %v3330, %v3332
      %v3334 = vrot.slane %v3190, 7
      %v3335 = vsel %vm3304, %v3332, %v3334
      %v3336 = vrot.slane %v3191, 7
      %v3337 = vsel %vm3304, %v3334, %v3336
      %v3338 = vrot.slane %v3192, 7
      %v3339 = vsel %vm3304, %v3336, %v3338
      %v3340 = vrot.slane %v3193, 7
      %v3341 = vsel %vm3304, %v3338, %v3340
      %v3342 = vrot.slane %v3194, 7
      %v3343 = vsel %vm3304, %v3340, %v3342
      %3344 = vrot.lane.b32.xlu0 %v3305, 64
      %v3345 = vpop.permute.xlu0 %3344
      %3346 = vrot.lane.b32.xlu0 %v3307, 64
      %v3347 = vpop.permute.xlu0 %3346
      %3348 = vrot.lane.b32.xlu0 %v3309, 64
      %v3349 = vpop.permute.xlu0 %3348
      %3350 = vrot.lane.b32.xlu0 %v3311, 64
      %v3351 = vpop.permute.xlu0 %3350
      %3352 = vrot.lane.b32.xlu0 %v3313, 64
      %v3353 = vpop.permute.xlu0 %3352
      %3354 = vrot.lane.b32.xlu0 %v3315, 64
      %v3355 = vpop.permute.xlu0 %3354
      %3356 = vrot.lane.b32.xlu0 %v3317, 64
      %v3357 = vpop.permute.xlu0 %3356
      %3358 = vrot.lane.b32.xlu0 %v3319, 64
      %v3359 = vpop.permute.xlu0 %3358
      %3360 = vrot.lane.b32.xlu0 %v3321, 64
      %v3361 = vpop.permute.xlu0 %3360
      %3362 = vrot.lane.b32.xlu0 %v3323, 64
      %v3363 = vpop.permute.xlu0 %3362
      %3364 = vrot.lane.b32.xlu0 %v3325, 64
      %v3365 = vpop.permute.xlu0 %3364
      %3366 = vrot.lane.b32.xlu0 %v3327, 64
      %v3367 = vpop.permute.xlu0 %3366
      %3368 = vrot.lane.b32.xlu0 %v3329, 64
      %v3369 = vpop.permute.xlu0 %3368
      %3370 = vrot.lane.b32.xlu0 %v3331, 64
      %v3371 = vpop.permute.xlu0 %3370
      %3372 = vrot.lane.b32.xlu0 %v3333, 64
      %v3373 = vpop.permute.xlu0 %3372
      %3374 = vrot.lane.b32.xlu0 %v3335, 64
      %v3375 = vpop.permute.xlu0 %3374
      %3376 = vrot.lane.b32.xlu0 %v3337, 64
      %v3377 = vpop.permute.xlu0 %3376
      %3378 = vrot.lane.b32.xlu0 %v3339, 64
      %v3379 = vpop.permute.xlu0 %3378
      %3380 = vrot.lane.b32.xlu0 %v3341, 64
      %v3381 = vpop.permute.xlu0 %3380
      %3382 = vrot.lane.b32.xlu0 %v3343, 64
      %v3383 = vpop.permute.xlu0 %3382
      %3384 = vrot.lane.b32.xlu0 %v3342, 64
      %v3385 = vpop.permute.xlu0 %3384
      %vm3407 = vcmask 1048065
      %3408 = vst.msk [vmem:[#allocation3] sm:$0xfe] %vm3407, %v3345
      %vm3409 = vcmask 1048064
      %3410 = vst.msk [vmem:[#allocation3 + $0x10] sm:$0xff] %vm3409, %v3347
      %3411 = vst.msk [vmem:[#allocation3 + $0x20] sm:$0xff] %vm3409, %v3349
      %3412 = vst.msk [vmem:[#allocation3 + $0x30] sm:$0xff] %vm3409, %v3351
      %3413 = vst.msk [vmem:[#allocation3 + $0x40] sm:$0xff] %vm3409, %v3353
      %3414 = vst.msk [vmem:[#allocation3 + $0x50] sm:$0xff] %vm3409, %v3355
      %3415 = vst.msk [vmem:[#allocation3 + $0x60] sm:$0xff] %vm3409, %v3357
      %3416 = vst.msk [vmem:[#allocation3 + $0x70] sm:$0xff] %vm3409, %v3359
      %3417 = vst.msk [vmem:[#allocation3 + $0x80] sm:$0xff] %vm3409, %v3361
      %3418 = vst.msk [vmem:[#allocation3 + $0x90] sm:$0xff] %vm3409, %v3363
      %3419 = vst.msk [vmem:[#allocation3 + $0xa0] sm:$0xff] %vm3409, %v3365
      %3420 = vst.msk [vmem:[#allocation3 + $0xb0] sm:$0xff] %vm3409, %v3367
      %3421 = vst.msk [vmem:[#allocation3 + $0xc0] sm:$0xff] %vm3409, %v3369
      %3422 = vst.msk [vmem:[#allocation3 + $0xd0] sm:$0xff] %vm3409, %v3371
      %3423 = vst.msk [vmem:[#allocation3 + $0xe0] sm:$0xff] %vm3409, %v3373
      %3424 = vst.msk [vmem:[#allocation3 + $0xf0] sm:$0xff] %vm3409, %v3375
      %3425 = vst.msk [vmem:[#allocation3 + $0x100] sm:$0xff] %vm3409, %v3377
      %3426 = vst.msk [vmem:[#allocation3 + $0x110] sm:$0xff] %vm3409, %v3379
      %3427 = vst.msk [vmem:[#allocation3 + $0x120] sm:$0xff] %vm3409, %v3381
      %3428 = vst.msk [vmem:[#allocation3 + $0x130] sm:$0xff] %vm3409, %v3383
      %vm3429 = vcmask 1040896
      %3430 = vst.msk [vmem:[#allocation3 + $0x140] sm:$0x1] %vm3429, %v3385
      %3431 = vst.msk [vmem:[#allocation3 + $0x8] sm:$0xff] %vm3283, %v3175
      %3432 = vst.msk [vmem:[#allocation3 + $0x18] sm:$0xff] %vm3283, %v3176
      %3433 = vst.msk [vmem:[#allocation3 + $0x28] sm:$0xff] %vm3283, %v3177
      %3434 = vst.msk [vmem:[#allocation3 + $0x38] sm:$0xff] %vm3283, %v3178
      %3435 = vst.msk [vmem:[#allocation3 + $0x48] sm:$0xff] %vm3283, %v3179
      %3436 = vst.msk [vmem:[#allocation3 + $0x58] sm:$0xff] %vm3283, %v3180
      %3437 = vst.msk [vmem:[#allocation3 + $0x68] sm:$0xff] %vm3283, %v3181
      %3438 = vst.msk [vmem:[#allocation3 + $0x78] sm:$0xff] %vm3283, %v3182
      %3439 = vst.msk [vmem:[#allocation3 + $0x88] sm:$0xff] %vm3283, %v3183
      %3440 = vst.msk [vmem:[#allocation3 + $0x98] sm:$0xff] %vm3283, %v3184
      %3441 = vst.msk [vmem:[#allocation3 + $0xa8] sm:$0xff] %vm3283, %v3185
      %3442 = vst.msk [vmem:[#allocation3 + $0xb8] sm:$0xff] %vm3283, %v3186
      %3443 = vst.msk [vmem:[#allocation3 + $0xc8] sm:$0xff] %vm3283, %v3187
      %3444 = vst.msk [vmem:[#allocation3 + $0xd8] sm:$0xff] %vm3283, %v3188
      %3445 = vst.msk [vmem:[#allocation3 + $0xe8] sm:$0xff] %vm3283, %v3189
      %3446 = vst.msk [vmem:[#allocation3 + $0xf8] sm:$0xff] %vm3283, %v3190
      %3447 = vst.msk [vmem:[#allocation3 + $0x108] sm:$0xff] %vm3283, %v3191
      %3448 = vst.msk [vmem:[#allocation3 + $0x118] sm:$0xff] %vm3283, %v3192
      %3449 = vst.msk [vmem:[#allocation3 + $0x128] sm:$0xff] %vm3283, %v3193
      %3450 = vst.msk [vmem:[#allocation3 + $0x138] sm:$0xff] %vm3283, %v3194
      %v3451 = vld [vmem:[#allocation3] sm:$0xfe]
      %v3452 = vld [vmem:[#allocation3 + $0x8] sm:$0xfe]
      %v3453 = vld [vmem:[#allocation3 + $0x10] sm:$0xff]
      %v3454 = vld [vmem:[#allocation3 + $0x18] sm:$0xff]
      %v3455 = vld [vmem:[#allocation3 + $0x20] sm:$0xff]
      %v3456 = vld [vmem:[#allocation3 + $0x28] sm:$0xff]
      %v3457 = vld [vmem:[#allocation3 + $0x30] sm:$0xff]
      %v3458 = vld [vmem:[#allocation3 + $0x38] sm:$0xff]
      %v3459 = vld [vmem:[#allocation3 + $0x40] sm:$0xff]
      %v3460 = vld [vmem:[#allocation3 + $0x48] sm:$0xff]
      %v3461 = vld [vmem:[#allocation3 + $0x50] sm:$0xff]
      %v3462 = vld [vmem:[#allocation3 + $0x58] sm:$0xff]
      %v3463 = vld [vmem:[#allocation3 + $0x60] sm:$0xff]
      %v3464 = vld [vmem:[#allocation3 + $0x68] sm:$0xff]
      %v3465 = vld [vmem:[#allocation3 + $0x70] sm:$0xff]
      %v3466 = vld [vmem:[#allocation3 + $0x78] sm:$0xff]
      %v3467 = vld [vmem:[#allocation3 + $0x80] sm:$0xff]
      %v3468 = vld [vmem:[#allocation3 + $0x88] sm:$0xff]
      %v3469 = vld [vmem:[#allocation3 + $0x90] sm:$0xff]
      %v3470 = vld [vmem:[#allocation3 + $0x98] sm:$0xff]
      %v3471 = vld [vmem:[#allocation3 + $0xa0] sm:$0xff]
      %v3472 = vld [vmem:[#allocation3 + $0xa8] sm:$0xff]
      %v3473 = vld [vmem:[#allocation3 + $0xb0] sm:$0xff]
      %v3474 = vld [vmem:[#allocation3 + $0xb8] sm:$0xff]
      %v3475 = vld [vmem:[#allocation3 + $0xc0] sm:$0xff]
      %v3476 = vld [vmem:[#allocation3 + $0xc8] sm:$0xff]
      %v3477 = vld [vmem:[#allocation3 + $0xd0] sm:$0xff]
      %v3478 = vld [vmem:[#allocation3 + $0xd8] sm:$0xff]
      %v3479 = vld [vmem:[#allocation3 + $0xe0] sm:$0xff]
      %v3480 = vld [vmem:[#allocation3 + $0xe8] sm:$0xff]
      %v3481 = vld [vmem:[#allocation3 + $0xf0] sm:$0xff]
      %v3482 = vld [vmem:[#allocation3 + $0xf8] sm:$0xff]
      %v3483 = vld [vmem:[#allocation3 + $0x100] sm:$0xff]
      %v3484 = vld [vmem:[#allocation3 + $0x108] sm:$0xff]
      %v3485 = vld [vmem:[#allocation3 + $0x110] sm:$0xff]
      %v3486 = vld [vmem:[#allocation3 + $0x118] sm:$0xff]
      %v3487 = vld [vmem:[#allocation3 + $0x120] sm:$0xff]
      %v3488 = vld [vmem:[#allocation3 + $0x128] sm:$0xff]
      %v3489 = vld [vmem:[#allocation3 + $0x130] sm:$0xff]
      %v3490 = vld [vmem:[#allocation3 + $0x138] sm:$0xff]
      %v3491 = vld [vmem:[#allocation3 + $0x140] sm:$0x1]
      %v3492 = vld [vmem:[#allocation3 + $0x148] sm:$0x1]
      %v3493 = vpack.c.bf16 %v3453, %v3451
      %v3494 = vpack.c.bf16 %v3454, %v3452
      %v3495 = vpack.c.bf16 %v3457, %v3455
      %v3496 = vpack.c.bf16 %v3458, %v3456
      %v3497 = vpack.c.bf16 %v3461, %v3459
      %v3498 = vpack.c.bf16 %v3462, %v3460
      %v3499 = vpack.c.bf16 %v3465, %v3463
      %v3500 = vpack.c.bf16 %v3466, %v3464
      %v3501 = vpack.c.bf16 %v3469, %v3467
      %v3502 = vpack.c.bf16 %v3470, %v3468
      %v3503 = vpack.c.bf16 %v3473, %v3471
      %v3504 = vpack.c.bf16 %v3474, %v3472
      %v3505 = vpack.c.bf16 %v3477, %v3475
      %v3506 = vpack.c.bf16 %v3478, %v3476
      %v3507 = vpack.c.bf16 %v3481, %v3479
      %v3508 = vpack.c.bf16 %v3482, %v3480
      %v3509 = vpack.c.bf16 %v3485, %v3483
      %v3510 = vpack.c.bf16 %v3486, %v3484
      %v3511 = vpack.c.bf16 %v3489, %v3487
      %v3512 = vpack.c.bf16 %v3490, %v3488
      %v3513 = vpack.c.bf16 %v3491, %v3491
      %v3514 = vpack.c.bf16 %v3492, %v3492
      %v3515 = vld [vmem:[%s27] sm:$0xf]
      %v3516 = vld [vmem:[%s27 + $0x4] sm:$0xf]
      %v3517 = vld [vmem:[%s27 + $0x8] sm:$0xf]
      %v3518 = vld [vmem:[%s27 + $0xc] sm:$0xf]
      %v3519 = vld [vmem:[%s27 + $0x10] sm:$0xf]
      %v3520 = vld [vmem:[%s27 + $0x14] sm:$0xf]
      %v3521 = vld [vmem:[%s27 + $0x18] sm:$0xf]
      %v3522 = vld [vmem:[%s27 + $0x1c] sm:$0xf]
      %v3523 = vld [vmem:[%s27 + $0x20] sm:$0xf]
      %v3524 = vld [vmem:[%s27 + $0x24] sm:$0xf]
      %v3525 = vld [vmem:[%s27 + $0x28] sm:$0xf]
      %v3526 = vld [vmem:[%s27 + $0x2c] sm:$0xf]
      %v3527 = vld [vmem:[%s27 + $0x30] sm:$0xf]
      %v3528 = vld [vmem:[%s27 + $0x34] sm:$0xf]
      %v3529 = vld [vmem:[%s27 + $0x38] sm:$0xf]
      %v3530 = vld [vmem:[%s27 + $0x3c] sm:$0xf]
      %v3531 = vld [vmem:[%s27 + $0x40] sm:$0xf]
      %v3532 = vld [vmem:[%s27 + $0x44] sm:$0xf]
      %v3533 = vld [vmem:[%s27 + $0x48] sm:$0xf]
      %v3534 = vld [vmem:[%s27 + $0x4c] sm:$0xf]
      %v3535 = vld [vmem:[%s27 + $0x50] sm:$0xf]
      %v3536 = vld [vmem:[%s27 + $0x54] sm:$0xf]
      %v3537 = vld [vmem:[%s27 + $0x58] sm:$0xf]
      %v3538 = vld [vmem:[%s27 + $0x5c] sm:$0xf]
      %vm3539 = vsmask.f32 7424
      %v3541 = vshrl.u32 %v3493, 16
      %v3543 = vshll.u32 %v3493, 16
      %v3545 = vrot.slane %v3543, 1
      %v3546 = vor.u32 %v3541, %v3545
      %v3548 = vshll.u32 %v3495, 16
      %v3550 = vrot.slane %v3548, 1
      %v3551 = vsel %vm3539, %v3546, %v3550
      %v3553 = vshrl.u32 %v3494, 16
      %v3555 = vshll.u32 %v3494, 16
      %v3557 = vrot.slane %v3555, 1
      %v3558 = vor.u32 %v3553, %v3557
      %v3560 = vshll.u32 %v3496, 16
      %v3562 = vrot.slane %v3560, 1
      %v3563 = vsel %vm3539, %v3558, %v3562
      %v3564 = vshrl.u32 %v3495, 16
      %v3566 = vor.u32 %v3564, %v3550
      %v3568 = vshll.u32 %v3497, 16
      %v3570 = vrot.slane %v3568, 1
      %v3571 = vsel %vm3539, %v3566, %v3570
      %v3572 = vshrl.u32 %v3496, 16
      %v3574 = vor.u32 %v3572, %v3562
      %v3576 = vshll.u32 %v3498, 16
      %v3578 = vrot.slane %v3576, 1
      %v3579 = vsel %vm3539, %v3574, %v3578
      %v3580 = vshrl.u32 %v3497, 16
      %v3582 = vor.u32 %v3580, %v3570
      %v3584 = vshll.u32 %v3499, 16
      %v3586 = vrot.slane %v3584, 1
      %v3587 = vsel %vm3539, %v3582, %v3586
      %v3588 = vshrl.u32 %v3498, 16
      %v3590 = vor.u32 %v3588, %v3578
      %v3592 = vshll.u32 %v3500, 16
      %v3594 = vrot.slane %v3592, 1
      %v3595 = vsel %vm3539, %v3590, %v3594
      %v3596 = vshrl.u32 %v3499, 16
      %v3598 = vor.u32 %v3596, %v3586
      %v3600 = vshll.u32 %v3501, 16
      %v3602 = vrot.slane %v3600, 1
      %v3603 = vsel %vm3539, %v3598, %v3602
      %v3604 = vshrl.u32 %v3500, 16
      %v3606 = vor.u32 %v3604, %v3594
      %v3608 = vshll.u32 %v3502, 16
      %v3610 = vrot.slane %v3608, 1
      %v3611 = vsel %vm3539, %v3606, %v3610
      %v3612 = vshrl.u32 %v3501, 16
      %v3614 = vor.u32 %v3612, %v3602
      %v3616 = vshll.u32 %v3503, 16
      %v3618 = vrot.slane %v3616, 1
      %v3619 = vsel %vm3539, %v3614, %v3618
      %v3620 = vshrl.u32 %v3502, 16
      %v3622 = vor.u32 %v3620, %v3610
      %v3624 = vshll.u32 %v3504, 16
      %v3626 = vrot.slane %v3624, 1
      %v3627 = vsel %vm3539, %v3622, %v3626
      %v3628 = vshrl.u32 %v3503, 16
      %v3630 = vor.u32 %v3628, %v3618
      %v3632 = vshll.u32 %v3505, 16
      %v3634 = vrot.slane %v3632, 1
      %v3635 = vsel %vm3539, %v3630, %v3634
      %v3636 = vshrl.u32 %v3504, 16
      %v3638 = vor.u32 %v3636, %v3626
      %v3640 = vshll.u32 %v3506, 16
      %v3642 = vrot.slane %v3640, 1
      %v3643 = vsel %vm3539, %v3638, %v3642
      %v3644 = vshrl.u32 %v3505, 16
      %v3646 = vor.u32 %v3644, %v3634
      %v3648 = vshll.u32 %v3507, 16
      %v3650 = vrot.slane %v3648, 1
      %v3651 = vsel %vm3539, %v3646, %v3650
      %v3652 = vshrl.u32 %v3506, 16
      %v3654 = vor.u32 %v3652, %v3642
      %v3656 = vshll.u32 %v3508, 16
      %v3658 = vrot.slane %v3656, 1
      %v3659 = vsel %vm3539, %v3654, %v3658
      %v3660 = vshrl.u32 %v3507, 16
      %v3662 = vor.u32 %v3660, %v3650
      %v3664 = vshll.u32 %v3509, 16
      %v3666 = vrot.slane %v3664, 1
      %v3667 = vsel %vm3539, %v3662, %v3666
      %v3668 = vshrl.u32 %v3508, 16
      %v3670 = vor.u32 %v3668, %v3658
      %v3672 = vshll.u32 %v3510, 16
      %v3674 = vrot.slane %v3672, 1
      %v3675 = vsel %vm3539, %v3670, %v3674
      %v3676 = vshrl.u32 %v3509, 16
      %v3678 = vor.u32 %v3676, %v3666
      %v3680 = vshll.u32 %v3511, 16
      %v3682 = vrot.slane %v3680, 1
      %v3683 = vsel %vm3539, %v3678, %v3682
      %v3684 = vshrl.u32 %v3510, 16
      %v3686 = vor.u32 %v3684, %v3674
      %v3688 = vshll.u32 %v3512, 16
      %v3690 = vrot.slane %v3688, 1
      %v3691 = vsel %vm3539, %v3686, %v3690
      %v3692 = vshrl.u32 %v3511, 16
      %v3694 = vor.u32 %v3692, %v3682
      %v3696 = vshll.u32 %v3513, 16
      %v3698 = vrot.slane %v3696, 1
      %v3699 = vsel %vm3539, %v3694, %v3698
      %v3700 = vshrl.u32 %v3512, 16
      %v3702 = vor.u32 %v3700, %v3690
      %v3704 = vshll.u32 %v3514, 16
      %v3706 = vrot.slane %v3704, 1
      %v3707 = vsel %vm3539, %v3702, %v3706
      %v3742 = vunpack.c.l.b16 %v3515
      %v3743 = vunpack.c.l.b16 %v3516
      %v3744 = vunpack.c.l.b16 %v3517
      %v3745 = vunpack.c.l.b16 %v3518
      %v3746 = vunpack.c.l.b16 %v3519
      %v3747 = vunpack.c.l.b16 %v3520
      %v3748 = vunpack.c.l.b16 %v3521
      %v3749 = vunpack.c.l.b16 %v3522
      %v3750 = vunpack.c.l.b16 %v3523
      %v3751 = vunpack.c.l.b16 %v3524
      %v3752 = vunpack.c.l.b16 %v3525
      %v3753 = vunpack.c.l.b16 %v3526
      %v3754 = vunpack.c.l.b16 %v3527
      %v3755 = vunpack.c.l.b16 %v3528
      %v3756 = vunpack.c.l.b16 %v3529
      %v3757 = vunpack.c.l.b16 %v3530
      %v3758 = vunpack.c.l.b16 %v3531
      %v3759 = vunpack.c.l.b16 %v3532
      %v3760 = vunpack.c.l.b16 %v3533
      %v3761 = vunpack.c.l.b16 %v3534
      %v3762 = vunpack.c.l.b16 %v3535
      %v3763 = vunpack.c.l.b16 %v3536
      %v3764 = vunpack.c.l.b16 %v3537
      %v3765 = vunpack.c.l.b16 %v3538
      %v3766 = vpack.c.b16 %v3743, %v3742
      %v3767 = vpack.c.b16 %v3745, %v3744
      %v3768 = vpack.c.b16 %v3747, %v3746
      %v3769 = vpack.c.b16 %v3749, %v3748
      %v3770 = vpack.c.b16 %v3751, %v3750
      %v3771 = vpack.c.b16 %v3753, %v3752
      %v3772 = vpack.c.b16 %v3755, %v3754
      %v3773 = vpack.c.b16 %v3757, %v3756
      %v3774 = vpack.c.b16 %v3759, %v3758
      %v3775 = vpack.c.b16 %v3761, %v3760
      %v3776 = vpack.c.b16 %v3763, %v3762
      %v3777 = vpack.c.b16 %v3765, %v3764
      %v3791 = vsel %vm3283, %v3563, 0
      %v3794 = vsel %vm3283, %v3579, 0
      %v3797 = vsel %vm3283, %v3595, 0
      %v3800 = vsel %vm3283, %v3611, 0
      %v3803 = vsel %vm3283, %v3627, 0
      %v3806 = vsel %vm3283, %v3643, 0
      %v3809 = vsel %vm3283, %v3659, 0
      %v3812 = vsel %vm3283, %v3675, 0
      %v3815 = vsel %vm3283, %v3691, 0
      %v3818 = vsel %vm3283, %v3707, 0
      %3820 = vmatprep.subr.bf16.mxu0 0
      %3821 = vmatpush1.bf16.msra.mxu0 %v3773
      %3822 = vmatprep.subr.bf16.mxu0 0
      %3823 = vmatpush1.bf16.msra.mxu0 %v3772
      %3824 = vmatprep.subr.bf16.mxu0 0
      %3825 = vmatpush1.bf16.msra.mxu0 %v3771
      %3826 = vmatprep.subr.bf16.mxu0 0
      %3827 = vmatpush1.bf16.msra.mxu0 %v3770
      %3828 = vmatprep.subr.bf16.mxu0 0
      %3829 = vmatpush1.bf16.msra.mxu0 %v3769
      %3830 = vmatprep.subr.bf16.mxu0 0
      %3831 = vmatpush1.bf16.msra.mxu0 %v3768
      %3832 = vmatprep.subr.bf16.mxu0 0
      %3833 = vmatpush1.bf16.msra.mxu0 %v3767
      %3834 = vmatprep.subr.bf16.mxu0 0
      %3835 = vmatpush1.bf16.msra.mxu0 %v3766
      %3836 = vmatprep.subr.bf16.mxu0 0
      %3837 = vmatpush2.bf16.msra.mxu0 0
      %3838 = vmatprep.subr.bf16.mxu0 0
      %3839 = vmatpush2.bf16.msra.mxu0 0
      %3840 = vmatprep.subr.bf16.mxu0 0
      %3841 = vmatpush2.bf16.msra.mxu0 0
      %3842 = vmatprep.subr.bf16.mxu0 0
      %3843 = vmatpush2.bf16.msra.mxu0 0
      %3844 = vmatprep.subr.bf16.mxu0 0
      %3845 = vmatpush2.bf16.msra.mxu0 %v3777
      %3846 = vmatprep.subr.bf16.mxu0 0
      %3847 = vmatpush2.bf16.msra.mxu0 %v3776
      %3848 = vmatprep.subr.bf16.mxu0 0
      %3849 = vmatpush2.bf16.msra.mxu0 %v3775
      %3850 = vmatprep.subr.bf16.mxu0 0
      %3851 = vmatpush2.bf16.msra.mxu0 %v3774
      %3852 = vmatprep.mubr.bf16.mxu0 %v3791
      %3853 = vmatmul.mubr.bf16.gmra.mxu0 %v3551
      %v3854 = vpop.f32.mrf.mxu0
      %v3855 = vadd.f32 0.0, %v3854
      %v3856 = vpop.f32.mrf.mxu0
      %v3857 = vpop.f32.mrf.mxu0
      %v3858 = vadd.f32 0.0, %v3857
      %v3859 = vpop.f32.mrf.mxu0
      %3860 = vmatprep.mubr.bf16.mxu0 %v3794
      %3861 = vmatmul.mubr.bf16.gmra.mxu0 %v3571
      %v3862 = vpop.f32.mrf.mxu0
      %v3863 = vadd.f32 0.0, %v3862
      %v3864 = vpop.f32.mrf.mxu0
      %v3865 = vpop.f32.mrf.mxu0
      %v3866 = vadd.f32 0.0, %v3865
      %v3867 = vpop.f32.mrf.mxu0
      %3868 = vmatprep.mubr.bf16.mxu0 %v3797
      %3869 = vmatmul.mubr.bf16.gmra.mxu0 %v3587
      %v3870 = vpop.f32.mrf.mxu0
      %v3871 = vadd.f32 0.0, %v3870
      %v3872 = vpop.f32.mrf.mxu0
      %v3873 = vpop.f32.mrf.mxu0
      %v3874 = vadd.f32 0.0, %v3873
      %v3875 = vpop.f32.mrf.mxu0
      %3876 = vmatprep.mubr.bf16.mxu0 %v3800
      %3877 = vmatmul.mubr.bf16.gmra.mxu0 %v3603
      %v3878 = vpop.f32.mrf.mxu0
      %v3879 = vadd.f32 0.0, %v3878
      %v3880 = vpop.f32.mrf.mxu0
      %v3881 = vpop.f32.mrf.mxu0
      %v3882 = vadd.f32 0.0, %v3881
      %v3883 = vpop.f32.mrf.mxu0
      %3884 = vmatprep.mubr.bf16.mxu0 %v3803
      %3885 = vmatmul.mubr.bf16.gmra.mxu0 %v3619
      %v3886 = vpop.f32.mrf.mxu0
      %v3887 = vadd.f32 0.0, %v3886
      %v3888 = vpop.f32.mrf.mxu0
      %v3889 = vpop.f32.mrf.mxu0
      %v3890 = vadd.f32 0.0, %v3889
      %v3891 = vpop.f32.mrf.mxu0
      %3892 = vmatprep.mubr.bf16.mxu0 %v3806
      %3893 = vmatmul.mubr.bf16.gmra.mxu0 %v3635
      %v3894 = vpop.f32.mrf.mxu0
      %v3895 = vadd.f32 0.0, %v3894
      %v3896 = vpop.f32.mrf.mxu0
      %v3897 = vpop.f32.mrf.mxu0
      %v3898 = vadd.f32 0.0, %v3897
      %v3899 = vpop.f32.mrf.mxu0
      %3900 = vmatprep.mubr.bf16.mxu0 %v3809
      %3901 = vmatmul.mubr.bf16.gmra.mxu0 %v3651
      %v3902 = vpop.f32.mrf.mxu0
      %v3903 = vadd.f32 0.0, %v3902
      %v3904 = vpop.f32.mrf.mxu0
      %v3905 = vpop.f32.mrf.mxu0
      %v3906 = vadd.f32 0.0, %v3905
      %v3907 = vpop.f32.mrf.mxu0
      %3908 = vmatprep.mubr.bf16.mxu0 %v3812
      %3909 = vmatmul.mubr.bf16.gmra.mxu0 %v3667
      %v3910 = vpop.f32.mrf.mxu0
      %v3911 = vadd.f32 0.0, %v3910
      %v3912 = vpop.f32.mrf.mxu0
      %v3913 = vpop.f32.mrf.mxu0
      %v3914 = vadd.f32 0.0, %v3913
      %v3915 = vpop.f32.mrf.mxu0
      %3916 = vmatprep.mubr.bf16.mxu0 %v3815
      %3917 = vmatmul.mubr.bf16.gmra.mxu0 %v3683
      %v3918 = vpop.f32.mrf.mxu0
      %v3919 = vadd.f32 0.0, %v3918
      %v3920 = vpop.f32.mrf.mxu0
      %v3921 = vpop.f32.mrf.mxu0
      %v3922 = vadd.f32 0.0, %v3921
      %v3923 = vpop.f32.mrf.mxu0
      %3924 = vmatprep.mubr.bf16.mxu0 %v3818
      %3925 = vmatmul.mubr.bf16.gmra.mxu0 %v3699
      %v3926 = vpop.f32.mrf.mxu0
      %v3927 = vadd.f32 0.0, %v3926
      %v3928 = vpop.f32.mrf.mxu0
      %v3929 = vpop.f32.mrf.mxu0
      %v3930 = vadd.f32 0.0, %v3929
      %v3931 = vpop.f32.mrf.mxu0
      %3932 = vdwg.mxu0
      %v3933 = vld [vmem:[%s29] sm:$0x1]
      %v3935 = vlaneseq
      %v3936 = vshrl.u32 %v3935, 7
      %v3937 = vsub.s32 0, %v3936
      %v3938 = vrot.slane %v3933, %v3937
      %v3940 = vmul.f32 %v3855, %v3938
      %v3941 = vmul.f32 %v3858, %v3938
      %v3942 = vmul.f32 %v3863, %v3938
      %v3943 = vmul.f32 %v3866, %v3938
      %v3944 = vmul.f32 %v3871, %v3938
      %v3945 = vmul.f32 %v3874, %v3938
      %v3946 = vmul.f32 %v3879, %v3938
      %v3947 = vmul.f32 %v3882, %v3938
      %v3948 = vmul.f32 %v3887, %v3938
      %v3949 = vmul.f32 %v3890, %v3938
      %v3950 = vmul.f32 %v3895, %v3938
      %v3951 = vmul.f32 %v3898, %v3938
      %v3952 = vmul.f32 %v3903, %v3938
      %v3953 = vmul.f32 %v3906, %v3938
      %v3954 = vmul.f32 %v3911, %v3938
      %v3955 = vmul.f32 %v3914, %v3938
      %v3956 = vmul.f32 %v3919, %v3938
      %v3957 = vmul.f32 %v3922, %v3938
      %v3958 = vmul.f32 %v3927, %v3938
      %v3959 = vmul.f32 %v3930, %v3938
      %v3960 = vld [vmem:[%s31] sm:$0x1]
      %v3962 = vlaneseq
      %v3963 = vshrl.u32 %v3962, 7
      %v3964 = vsub.s32 0, %v3963
      %v3965 = vrot.slane %v3960, %v3964
      %v3967 = vadd.f32 %v3940, %v3965
      %v3968 = vadd.f32 %v3941, %v3965
      %v3969 = vadd.f32 %v3942, %v3965
      %v3970 = vadd.f32 %v3943, %v3965
      %v3971 = vadd.f32 %v3944, %v3965
      %v3972 = vadd.f32 %v3945, %v3965
      %v3973 = vadd.f32 %v3946, %v3965
      %v3974 = vadd.f32 %v3947, %v3965
      %v3975 = vadd.f32 %v3948, %v3965
      %v3976 = vadd.f32 %v3949, %v3965
      %v3977 = vadd.f32 %v3950, %v3965
      %v3978 = vadd.f32 %v3951, %v3965
      %v3979 = vadd.f32 %v3952, %v3965
      %v3980 = vadd.f32 %v3953, %v3965
      %v3981 = vadd.f32 %v3954, %v3965
      %v3982 = vadd.f32 %v3955, %v3965
      %v3983 = vadd.f32 %v3956, %v3965
      %v3984 = vadd.f32 %v3957, %v3965
      %v3985 = vadd.f32 %v3958, %v3965
      %v3986 = vadd.f32 %v3959, %v3965
      %v3987 = vpack.c.bf16 %v2659, %v2658
      %v3988 = vpack.c.bf16 %v2661, %v2660
      %v3989 = vpack.c.bf16 %v2663, %v2662
      %v3990 = vpack.c.bf16 %v2665, %v2664
      %v3991 = vpack.c.bf16 %v2667, %v2666
      %v3992 = vpack.c.bf16 %v2669, %v2668
      %v3993 = vpack.c.bf16 %v2671, %v2670
      %v3994 = vpack.c.bf16 %v2673, %v2672
      %v3995 = vpack.c.bf16 %v2675, %v2674
      %v3996 = vpack.c.bf16 %v2677, %v2676
      %v3997 = vld [vmem:[%s33] sm:$0xf]
      %v3998 = vld [vmem:[%s33 + $0x4] sm:$0xf]
      %v3999 = vld [vmem:[%s33 + $0x8] sm:$0xf]
      %v4000 = vld [vmem:[%s33 + $0xc] sm:$0xf]
      %v4001 = vld [vmem:[%s35] sm:$0x1]
      %v4003 = vlaneseq
      %v4004 = vshrl.u32 %v4003, 7
      %v4005 = vsub.s32 0, %v4004
      %v4006 = vrot.slane %v4001, %v4005
      %v4012 = vunpack.c.l.b16 %v3997
      %v4013 = vunpack.c.l.b16 %v3998
      %v4014 = vunpack.c.l.b16 %v3999
      %v4015 = vunpack.c.l.b16 %v4000
      %v4016 = vpack.c.b16 %v4013, %v4012
      %v4017 = vpack.c.b16 %v4015, %v4014
      %v4021 = vsel %vm1622, %v3987, 0
      %v4024 = vsel %vm1622, %v3988, 0
      %v4027 = vsel %vm1622, %v3989, 0
      %v4030 = vsel %vm1622, %v3990, 0
      %v4033 = vsel %vm1622, %v3991, 0
      %v4036 = vsel %vm1622, %v3992, 0
      %v4039 = vsel %vm1622, %v3993, 0
      %v4042 = vsel %vm1622, %v3994, 0
      %v4045 = vsel %vm1622, %v3995, 0
      %v4048 = vsel %vm1622, %v3996, 0
      %4050 = vmatprep.subr.bf16.mxu0 0
      %4051 = vmatpush1.bf16.msra.mxu0 0
      %4052 = vmatprep.subr.bf16.mxu0 0
      %4053 = vmatpush1.bf16.msra.mxu0 0
      %4054 = vmatprep.subr.bf16.mxu0 0
      %4055 = vmatpush1.bf16.msra.mxu0 0
      %4056 = vmatprep.subr.bf16.mxu0 0
      %4057 = vmatpush1.bf16.msra.mxu0 0
      %4058 = vmatprep.subr.bf16.mxu0 0
      %4059 = vmatpush1.bf16.msra.mxu0 0
      %4060 = vmatprep.subr.bf16.mxu0 0
      %4061 = vmatpush1.bf16.msra.mxu0 0
      %4062 = vmatprep.subr.bf16.mxu0 0
      %4063 = vmatpush1.bf16.msra.mxu0 %v4017
      %4064 = vmatprep.subr.bf16.mxu0 0
      %4065 = vmatpush1.bf16.msra.mxu0 %v4016
      %4066 = vmatprep.subr.bf16.mxu0 0
      %4067 = vmatpush2.bf16.msra.mxu0 0
      %4068 = vmatprep.subr.bf16.mxu0 0
      %4069 = vmatpush2.bf16.msra.mxu0 0
      %4070 = vmatprep.subr.bf16.mxu0 0
      %4071 = vmatpush2.bf16.msra.mxu0 0
      %4072 = vmatprep.subr.bf16.mxu0 0
      %4073 = vmatpush2.bf16.msra.mxu0 0
      %4074 = vmatprep.subr.bf16.mxu0 0
      %4075 = vmatpush2.bf16.msra.mxu0 0
      %4076 = vmatprep.subr.bf16.mxu0 0
      %4077 = vmatpush2.bf16.msra.mxu0 0
      %4078 = vmatprep.subr.bf16.mxu0 0
      %4079 = vmatpush2.bf16.msra.mxu0 0
      %4080 = vmatprep.subr.bf16.mxu0 0
      %4081 = vmatpush2.bf16.msra.mxu0 0
      %4082 = vmatprep.mubr.bf16.mxu0 0
      %4083 = vmatmul.mubr.bf16.gmra.mxu0 %v4021
      %v4084 = vpop.f32.mrf.mxu0
      %v4085 = vadd.f32 %v4006, %v4084
      %v4086 = vpop.f32.mrf.mxu0
      %v4087 = vpop.f32.mrf.mxu0
      %v4088 = vadd.f32 %v4006, %v4087
      %v4089 = vpop.f32.mrf.mxu0
      %4090 = vmatprep.mubr.bf16.mxu0 0
      %4091 = vmatmul.mubr.bf16.gmra.mxu0 %v4024
      %v4092 = vpop.f32.mrf.mxu0
      %v4093 = vadd.f32 %v4006, %v4092
      %v4094 = vpop.f32.mrf.mxu0
      %v4095 = vpop.f32.mrf.mxu0
      %v4096 = vadd.f32 %v4006, %v4095
      %v4097 = vpop.f32.mrf.mxu0
      %4098 = vmatprep.mubr.bf16.mxu0 0
      %4099 = vmatmul.mubr.bf16.gmra.mxu0 %v4027
      %v4100 = vpop.f32.mrf.mxu0
      %v4101 = vadd.f32 %v4006, %v4100
      %v4102 = vpop.f32.mrf.mxu0
      %v4103 = vpop.f32.mrf.mxu0
      %v4104 = vadd.f32 %v4006, %v4103
      %v4105 = vpop.f32.mrf.mxu0
      %4106 = vmatprep.mubr.bf16.mxu0 0
      %4107 = vmatmul.mubr.bf16.gmra.mxu0 %v4030
      %v4108 = vpop.f32.mrf.mxu0
      %v4109 = vadd.f32 %v4006, %v4108
      %v4110 = vpop.f32.mrf.mxu0
      %v4111 = vpop.f32.mrf.mxu0
      %v4112 = vadd.f32 %v4006, %v4111
      %v4113 = vpop.f32.mrf.mxu0
      %4114 = vmatprep.mubr.bf16.mxu0 0
      %4115 = vmatmul.mubr.bf16.gmra.mxu0 %v4033
      %v4116 = vpop.f32.mrf.mxu0
      %v4117 = vadd.f32 %v4006, %v4116
      %v4118 = vpop.f32.mrf.mxu0
      %v4119 = vpop.f32.mrf.mxu0
      %v4120 = vadd.f32 %v4006, %v4119
      %v4121 = vpop.f32.mrf.mxu0
      %4122 = vmatprep.mubr.bf16.mxu0 0
      %4123 = vmatmul.mubr.bf16.gmra.mxu0 %v4036
      %v4124 = vpop.f32.mrf.mxu0
      %v4125 = vadd.f32 %v4006, %v4124
      %v4126 = vpop.f32.mrf.mxu0
      %v4127 = vpop.f32.mrf.mxu0
      %v4128 = vadd.f32 %v4006, %v4127
      %v4129 = vpop.f32.mrf.mxu0
      %4130 = vmatprep.mubr.bf16.mxu0 0
      %4131 = vmatmul.mubr.bf16.gmra.mxu0 %v4039
      %v4132 = vpop.f32.mrf.mxu0
      %v4133 = vadd.f32 %v4006, %v4132
      %v4134 = vpop.f32.mrf.mxu0
      %v4135 = vpop.f32.mrf.mxu0
      %v4136 = vadd.f32 %v4006, %v4135
      %v4137 = vpop.f32.mrf.mxu0
      %4138 = vmatprep.mubr.bf16.mxu0 0
      %4139 = vmatmul.mubr.bf16.gmra.mxu0 %v4042
      %v4140 = vpop.f32.mrf.mxu0
      %v4141 = vadd.f32 %v4006, %v4140
      %v4142 = vpop.f32.mrf.mxu0
      %v4143 = vpop.f32.mrf.mxu0
      %v4144 = vadd.f32 %v4006, %v4143
      %v4145 = vpop.f32.mrf.mxu0
      %4146 = vmatprep.mubr.bf16.mxu0 0
      %4147 = vmatmul.mubr.bf16.gmra.mxu0 %v4045
      %v4148 = vpop.f32.mrf.mxu0
      %v4149 = vadd.f32 %v4006, %v4148
      %v4150 = vpop.f32.mrf.mxu0
      %v4151 = vpop.f32.mrf.mxu0
      %v4152 = vadd.f32 %v4006, %v4151
      %v4153 = vpop.f32.mrf.mxu0
      %4154 = vmatprep.mubr.bf16.mxu0 0
      %4155 = vmatmul.mubr.bf16.gmra.mxu0 %v4048
      %v4156 = vpop.f32.mrf.mxu0
      %v4157 = vadd.f32 %v4006, %v4156
      %v4158 = vpop.f32.mrf.mxu0
      %v4159 = vpop.f32.mrf.mxu0
      %v4160 = vadd.f32 %v4006, %v4159
      %v4161 = vpop.f32.mrf.mxu0
      %4162 = vdwg.mxu0
      %v4163 = vadd.f32 %v3967, %v4085
      %v4164 = vadd.f32 %v3968, %v4088
      %v4165 = vadd.f32 %v3969, %v4093
      %v4166 = vadd.f32 %v3970, %v4096
      %v4167 = vadd.f32 %v3971, %v4101
      %v4168 = vadd.f32 %v3972, %v4104
      %v4169 = vadd.f32 %v3973, %v4109
      %v4170 = vadd.f32 %v3974, %v4112
      %v4171 = vadd.f32 %v3975, %v4117
      %v4172 = vadd.f32 %v3976, %v4120
      %v4173 = vadd.f32 %v3977, %v4125
      %v4174 = vadd.f32 %v3978, %v4128
      %v4175 = vadd.f32 %v3979, %v4133
      %v4176 = vadd.f32 %v3980, %v4136
      %v4177 = vadd.f32 %v3981, %v4141
      %v4178 = vadd.f32 %v3982, %v4144
      %v4179 = vadd.f32 %v3983, %v4149
      %v4180 = vadd.f32 %v3984, %v4152
      %v4181 = vadd.f32 %v3985, %v4157
      %v4182 = vadd.f32 %v3986, %v4160
      %v4183 = vmax.f32 %v4163, 0.0
      %v4184 = vmax.f32 %v4164, 0.0
      %v4185 = vmax.f32 %v4165, 0.0
      %v4186 = vmax.f32 %v4166, 0.0
      %v4187 = vmax.f32 %v4167, 0.0
      %v4188 = vmax.f32 %v4168, 0.0
      %v4189 = vmax.f32 %v4169, 0.0
      %v4190 = vmax.f32 %v4170, 0.0
      %v4191 = vmax.f32 %v4171, 0.0
      %v4192 = vmax.f32 %v4172, 0.0
      %v4193 = vmax.f32 %v4173, 0.0
      %v4194 = vmax.f32 %v4174, 0.0
      %v4195 = vmax.f32 %v4175, 0.0
      %v4196 = vmax.f32 %v4176, 0.0
      %v4197 = vmax.f32 %v4177, 0.0
      %v4198 = vmax.f32 %v4178, 0.0
      %v4199 = vmax.f32 %v4179, 0.0
      %v4200 = vmax.f32 %v4180, 0.0
      %v4201 = vmax.f32 %v4181, 0.0
      %v4202 = vmax.f32 %v4182, 0.0
      %v4203 = vsel %vm1579, %v4183, 0.0
      %v4204 = vsel %vm1580, %v4184, 0.0
      %v4205 = vsel %vm1581, %v4185, 0.0
      %v4206 = vsel %vm1582, %v4186, 0.0
      %v4207 = vsel %vm1583, %v4187, 0.0
      %v4208 = vsel %vm1584, %v4188, 0.0
      %v4209 = vsel %vm1585, %v4189, 0.0
      %v4210 = vsel %vm1586, %v4190, 0.0
      %v4211 = vsel %vm1587, %v4191, 0.0
      %v4212 = vsel %vm1588, %v4192, 0.0
      %v4213 = vsel %vm1589, %v4193, 0.0
      %v4214 = vsel %vm1590, %v4194, 0.0
      %v4215 = vsel %vm1591, %v4195, 0.0
      %v4216 = vsel %vm1592, %v4196, 0.0
      %v4217 = vsel %vm1593, %v4197, 0.0
      %v4218 = vsel %vm1594, %v4198, 0.0
      %v4219 = vsel %vm1595, %v4199, 0.0
      %v4220 = vsel %vm1596, %v4200, 0.0
      %v4221 = vsel %vm1597, %v4201, 0.0
      %v4222 = vsel %vm1598, %v4202, 0.0
      %4223 = vst [vmem:[#allocation3] sm:$0x3] 0.0
      %4224 = vst.msk [vmem:[#allocation3 + $0x8] sm:$0x3] %vm3196, 0.0
      %4225 = vst [vmem:[#allocation3 + $0x140] sm:$0x3] 0.0
      %4226 = vst.msk [vmem:[#allocation3 + $0x148] sm:$0x3] %vm3196, 0.0
      %v4247 = vrot.slane %v4203, 6
      %v4248 = vrot.slane %v4204, 6
      %v4249 = vsel %vm3220, %v4247, %v4248
      %v4250 = vrot.slane %v4205, 6
      %v4251 = vsel %vm3220, %v4248, %v4250
      %v4252 = vrot.slane %v4206, 6
      %v4253 = vsel %vm3220, %v4250, %v4252
      %v4254 = vrot.slane %v4207, 6
      %v4255 = vsel %vm3220, %v4252, %v4254
      %v4256 = vrot.slane %v4208, 6
      %v4257 = vsel %vm3220, %v4254, %v4256
      %v4258 = vrot.slane %v4209, 6
      %v4259 = vsel %vm3220, %v4256, %v4258
      %v4260 = vrot.slane %v4210, 6
      %v4261 = vsel %vm3220, %v4258, %v4260
      %v4262 = vrot.slane %v4211, 6
      %v4263 = vsel %vm3220, %v4260, %v4262
      %v4264 = vrot.slane %v4212, 6
      %v4265 = vsel %vm3220, %v4262, %v4264
      %v4266 = vrot.slane %v4213, 6
      %v4267 = vsel %vm3220, %v4264, %v4266
      %v4268 = vrot.slane %v4214, 6
      %v4269 = vsel %vm3220, %v4266, %v4268
      %v4270 = vrot.slane %v4215, 6
      %v4271 = vsel %vm3220, %v4268, %v4270
      %v4272 = vrot.slane %v4216, 6
      %v4273 = vsel %vm3220, %v4270, %v4272
      %v4274 = vrot.slane %v4217, 6
      %v4275 = vsel %vm3220, %v4272, %v4274
      %v4276 = vrot.slane %v4218, 6
      %v4277 = vsel %vm3220, %v4274, %v4276
      %v4278 = vrot.slane %v4219, 6
      %v4279 = vsel %vm3220, %v4276, %v4278
      %v4280 = vrot.slane %v4220, 6
      %v4281 = vsel %vm3220, %v4278, %v4280
      %v4282 = vrot.slane %v4221, 6
      %v4283 = vsel %vm3220, %v4280, %v4282
      %v4284 = vrot.slane %v4222, 6
      %v4285 = vsel %vm3220, %v4282, %v4284
      %4307 = vst.msk [vmem:[#allocation3] sm:$0xfc] %vm3281, %v4247
      %4308 = vst.msk [vmem:[#allocation3 + $0x10] sm:$0xff] %vm3283, %v4249
      %4309 = vst.msk [vmem:[#allocation3 + $0x20] sm:$0xff] %vm3283, %v4251
      %4310 = vst.msk [vmem:[#allocation3 + $0x30] sm:$0xff] %vm3283, %v4253
      %4311 = vst.msk [vmem:[#allocation3 + $0x40] sm:$0xff] %vm3283, %v4255
      %4312 = vst.msk [vmem:[#allocation3 + $0x50] sm:$0xff] %vm3283, %v4257
      %4313 = vst.msk [vmem:[#allocation3 + $0x60] sm:$0xff] %vm3283, %v4259
      %4314 = vst.msk [vmem:[#allocation3 + $0x70] sm:$0xff] %vm3283, %v4261
      %4315 = vst.msk [vmem:[#allocation3 + $0x80] sm:$0xff] %vm3283, %v4263
      %4316 = vst.msk [vmem:[#allocation3 + $0x90] sm:$0xff] %vm3283, %v4265
      %4317 = vst.msk [vmem:[#allocation3 + $0xa0] sm:$0xff] %vm3283, %v4267
      %4318 = vst.msk [vmem:[#allocation3 + $0xb0] sm:$0xff] %vm3283, %v4269
      %4319 = vst.msk [vmem:[#allocation3 + $0xc0] sm:$0xff] %vm3283, %v4271
      %4320 = vst.msk [vmem:[#allocation3 + $0xd0] sm:$0xff] %vm3283, %v4273
      %4321 = vst.msk [vmem:[#allocation3 + $0xe0] sm:$0xff] %vm3283, %v4275
      %4322 = vst.msk [vmem:[#allocation3 + $0xf0] sm:$0xff] %vm3283, %v4277
      %4323 = vst.msk [vmem:[#allocation3 + $0x100] sm:$0xff] %vm3283, %v4279
      %4324 = vst.msk [vmem:[#allocation3 + $0x110] sm:$0xff] %vm3283, %v4281
      %4325 = vst.msk [vmem:[#allocation3 + $0x120] sm:$0xff] %vm3283, %v4283
      %4326 = vst.msk [vmem:[#allocation3 + $0x130] sm:$0xff] %vm3283, %v4285
      %4327 = vst.msk [vmem:[#allocation3 + $0x140] sm:$0x3] %vm3196, %v4284
      %v4328 = vrot.slane %v4203, 7
      %v4329 = vrot.slane %v4204, 7
      %v4330 = vsel %vm3304, %v4328, %v4329
      %v4331 = vrot.slane %v4205, 7
      %v4332 = vsel %vm3304, %v4329, %v4331
      %v4333 = vrot.slane %v4206, 7
      %v4334 = vsel %vm3304, %v4331, %v4333
      %v4335 = vrot.slane %v4207, 7
      %v4336 = vsel %vm3304, %v4333, %v4335
      %v4337 = vrot.slane %v4208, 7
      %v4338 = vsel %vm3304, %v4335, %v4337
      %v4339 = vrot.slane %v4209, 7
      %v4340 = vsel %vm3304, %v4337, %v4339
      %v4341 = vrot.slane %v4210, 7
      %v4342 = vsel %vm3304, %v4339, %v4341
      %v4343 = vrot.slane %v4211, 7
      %v4344 = vsel %vm3304, %v4341, %v4343
      %v4345 = vrot.slane %v4212, 7
      %v4346 = vsel %vm3304, %v4343, %v4345
      %v4347 = vrot.slane %v4213, 7
      %v4348 = vsel %vm3304, %v4345, %v4347
      %v4349 = vrot.slane %v4214, 7
      %v4350 = vsel %vm3304, %v4347, %v4349
      %v4351 = vrot.slane %v4215, 7
      %v4352 = vsel %vm3304, %v4349, %v4351
      %v4353 = vrot.slane %v4216, 7
      %v4354 = vsel %vm3304, %v4351, %v4353
      %v4355 = vrot.slane %v4217, 7
      %v4356 = vsel %vm3304, %v4353, %v4355
      %v4357 = vrot.slane %v4218, 7
      %v4358 = vsel %vm3304, %v4355, %v4357
      %v4359 = vrot.slane %v4219, 7
      %v4360 = vsel %vm3304, %v4357, %v4359
      %v4361 = vrot.slane %v4220, 7
      %v4362 = vsel %vm3304, %v4359, %v4361
      %v4363 = vrot.slane %v4221, 7
      %v4364 = vsel %vm3304, %v4361, %v4363
      %v4365 = vrot.slane %v4222, 7
      %v4366 = vsel %vm3304, %v4363, %v4365
      %4367 = vrot.lane.b32.xlu0 %v4328, 64
      %v4368 = vpop.permute.xlu0 %4367
      %4369 = vrot.lane.b32.xlu0 %v4330, 64
      %v4370 = vpop.permute.xlu0 %4369
      %4371 = vrot.lane.b32.xlu0 %v4332, 64
      %v4372 = vpop.permute.xlu0 %4371
      %4373 = vrot.lane.b32.xlu0 %v4334, 64
      %v4374 = vpop.permute.xlu0 %4373
      %4375 = vrot.lane.b32.xlu0 %v4336, 64
      %v4376 = vpop.permute.xlu0 %4375
      %4377 = vrot.lane.b32.xlu0 %v4338, 64
      %v4378 = vpop.permute.xlu0 %4377
      %4379 = vrot.lane.b32.xlu0 %v4340, 64
      %v4380 = vpop.permute.xlu0 %4379
      %4381 = vrot.lane.b32.xlu0 %v4342, 64
      %v4382 = vpop.permute.xlu0 %4381
      %4383 = vrot.lane.b32.xlu0 %v4344, 64
      %v4384 = vpop.permute.xlu0 %4383
      %4385 = vrot.lane.b32.xlu0 %v4346, 64
      %v4386 = vpop.permute.xlu0 %4385
      %4387 = vrot.lane.b32.xlu0 %v4348, 64
      %v4388 = vpop.permute.xlu0 %4387
      %4389 = vrot.lane.b32.xlu0 %v4350, 64
      %v4390 = vpop.permute.xlu0 %4389
      %4391 = vrot.lane.b32.xlu0 %v4352, 64
      %v4392 = vpop.permute.xlu0 %4391
      %4393 = vrot.lane.b32.xlu0 %v4354, 64
      %v4394 = vpop.permute.xlu0 %4393
      %4395 = vrot.lane.b32.xlu0 %v4356, 64
      %v4396 = vpop.permute.xlu0 %4395
      %4397 = vrot.lane.b32.xlu0 %v4358, 64
      %v4398 = vpop.permute.xlu0 %4397
      %4399 = vrot.lane.b32.xlu0 %v4360, 64
      %v4400 = vpop.permute.xlu0 %4399
      %4401 = vrot.lane.b32.xlu0 %v4362, 64
      %v4402 = vpop.permute.xlu0 %4401
      %4403 = vrot.lane.b32.xlu0 %v4364, 64
      %v4404 = vpop.permute.xlu0 %4403
      %4405 = vrot.lane.b32.xlu0 %v4366, 64
      %v4406 = vpop.permute.xlu0 %4405
      %4407 = vrot.lane.b32.xlu0 %v4365, 64
      %v4408 = vpop.permute.xlu0 %4407
      %4430 = vst.msk [vmem:[#allocation3] sm:$0xfe] %vm3407, %v4368
      %4431 = vst.msk [vmem:[#allocation3 + $0x10] sm:$0xff] %vm3409, %v4370
      %4432 = vst.msk [vmem:[#allocation3 + $0x20] sm:$0xff] %vm3409, %v4372
      %4433 = vst.msk [vmem:[#allocation3 + $0x30] sm:$0xff] %vm3409, %v4374
      %4434 = vst.msk [vmem:[#allocation3 + $0x40] sm:$0xff] %vm3409, %v4376
      %4435 = vst.msk [vmem:[#allocation3 + $0x50] sm:$0xff] %vm3409, %v4378
      %4436 = vst.msk [vmem:[#allocation3 + $0x60] sm:$0xff] %vm3409, %v4380
      %4437 = vst.msk [vmem:[#allocation3 + $0x70] sm:$0xff] %vm3409, %v4382
      %4438 = vst.msk [vmem:[#allocation3 + $0x80] sm:$0xff] %vm3409, %v4384
      %4439 = vst.msk [vmem:[#allocation3 + $0x90] sm:$0xff] %vm3409, %v4386
      %4440 = vst.msk [vmem:[#allocation3 + $0xa0] sm:$0xff] %vm3409, %v4388
      %4441 = vst.msk [vmem:[#allocation3 + $0xb0] sm:$0xff] %vm3409, %v4390
      %4442 = vst.msk [vmem:[#allocation3 + $0xc0] sm:$0xff] %vm3409, %v4392
      %4443 = vst.msk [vmem:[#allocation3 + $0xd0] sm:$0xff] %vm3409, %v4394
      %4444 = vst.msk [vmem:[#allocation3 + $0xe0] sm:$0xff] %vm3409, %v4396
      %4445 = vst.msk [vmem:[#allocation3 + $0xf0] sm:$0xff] %vm3409, %v4398
      %4446 = vst.msk [vmem:[#allocation3 + $0x100] sm:$0xff] %vm3409, %v4400
      %4447 = vst.msk [vmem:[#allocation3 + $0x110] sm:$0xff] %vm3409, %v4402
      %4448 = vst.msk [vmem:[#allocation3 + $0x120] sm:$0xff] %vm3409, %v4404
      %4449 = vst.msk [vmem:[#allocation3 + $0x130] sm:$0xff] %vm3409, %v4406
      %4450 = vst.msk [vmem:[#allocation3 + $0x140] sm:$0x1] %vm3429, %v4408
      %4451 = vst.msk [vmem:[#allocation3 + $0x8] sm:$0xff] %vm3283, %v4203
      %4452 = vst.msk [vmem:[#allocation3 + $0x18] sm:$0xff] %vm3283, %v4204
      %4453 = vst.msk [vmem:[#allocation3 + $0x28] sm:$0xff] %vm3283, %v4205
      %4454 = vst.msk [vmem:[#allocation3 + $0x38] sm:$0xff] %vm3283, %v4206
      %4455 = vst.msk [vmem:[#allocation3 + $0x48] sm:$0xff] %vm3283, %v4207
      %4456 = vst.msk [vmem:[#allocation3 + $0x58] sm:$0xff] %vm3283, %v4208
      %4457 = vst.msk [vmem:[#allocation3 + $0x68] sm:$0xff] %vm3283, %v4209
      %4458 = vst.msk [vmem:[#allocation3 + $0x78] sm:$0xff] %vm3283, %v4210
      %4459 = vst.msk [vmem:[#allocation3 + $0x88] sm:$0xff] %vm3283, %v4211
      %4460 = vst.msk [vmem:[#allocation3 + $0x98] sm:$0xff] %vm3283, %v4212
      %4461 = vst.msk [vmem:[#allocation3 + $0xa8] sm:$0xff] %vm3283, %v4213
      %4462 = vst.msk [vmem:[#allocation3 + $0xb8] sm:$0xff] %vm3283, %v4214
      %4463 = vst.msk [vmem:[#allocation3 + $0xc8] sm:$0xff] %vm3283, %v4215
      %4464 = vst.msk [vmem:[#allocation3 + $0xd8] sm:$0xff] %vm3283, %v4216
      %4465 = vst.msk [vmem:[#allocation3 + $0xe8] sm:$0xff] %vm3283, %v4217
      %4466 = vst.msk [vmem:[#allocation3 + $0xf8] sm:$0xff] %vm3283, %v4218
      %4467 = vst.msk [vmem:[#allocation3 + $0x108] sm:$0xff] %vm3283, %v4219
      %4468 = vst.msk [vmem:[#allocation3 + $0x118] sm:$0xff] %vm3283, %v4220
      %4469 = vst.msk [vmem:[#allocation3 + $0x128] sm:$0xff] %vm3283, %v4221
      %4470 = vst.msk [vmem:[#allocation3 + $0x138] sm:$0xff] %vm3283, %v4222
      %v4471 = vld [vmem:[#allocation3] sm:$0xfe]
      %v4472 = vld [vmem:[#allocation3 + $0x8] sm:$0xfe]
      %v4473 = vld [vmem:[#allocation3 + $0x10] sm:$0xff]
      %v4474 = vld [vmem:[#allocation3 + $0x18] sm:$0xff]
      %v4475 = vld [vmem:[#allocation3 + $0x20] sm:$0xff]
      %v4476 = vld [vmem:[#allocation3 + $0x28] sm:$0xff]
      %v4477 = vld [vmem:[#allocation3 + $0x30] sm:$0xff]
      %v4478 = vld [vmem:[#allocation3 + $0x38] sm:$0xff]
      %v4479 = vld [vmem:[#allocation3 + $0x40] sm:$0xff]
      %v4480 = vld [vmem:[#allocation3 + $0x48] sm:$0xff]
      %v4481 = vld [vmem:[#allocation3 + $0x50] sm:$0xff]
      %v4482 = vld [vmem:[#allocation3 + $0x58] sm:$0xff]
      %v4483 = vld [vmem:[#allocation3 + $0x60] sm:$0xff]
      %v4484 = vld [vmem:[#allocation3 + $0x68] sm:$0xff]
      %v4485 = vld [vmem:[#allocation3 + $0x70] sm:$0xff]
      %v4486 = vld [vmem:[#allocation3 + $0x78] sm:$0xff]
      %v4487 = vld [vmem:[#allocation3 + $0x80] sm:$0xff]
      %v4488 = vld [vmem:[#allocation3 + $0x88] sm:$0xff]
      %v4489 = vld [vmem:[#allocation3 + $0x90] sm:$0xff]
      %v4490 = vld [vmem:[#allocation3 + $0x98] sm:$0xff]
      %v4491 = vld [vmem:[#allocation3 + $0xa0] sm:$0xff]
      %v4492 = vld [vmem:[#allocation3 + $0xa8] sm:$0xff]
      %v4493 = vld [vmem:[#allocation3 + $0xb0] sm:$0xff]
      %v4494 = vld [vmem:[#allocation3 + $0xb8] sm:$0xff]
      %v4495 = vld [vmem:[#allocation3 + $0xc0] sm:$0xff]
      %v4496 = vld [vmem:[#allocation3 + $0xc8] sm:$0xff]
      %v4497 = vld [vmem:[#allocation3 + $0xd0] sm:$0xff]
      %v4498 = vld [vmem:[#allocation3 + $0xd8] sm:$0xff]
      %v4499 = vld [vmem:[#allocation3 + $0xe0] sm:$0xff]
      %v4500 = vld [vmem:[#allocation3 + $0xe8] sm:$0xff]
      %v4501 = vld [vmem:[#allocation3 + $0xf0] sm:$0xff]
      %v4502 = vld [vmem:[#allocation3 + $0xf8] sm:$0xff]
      %v4503 = vld [vmem:[#allocation3 + $0x100] sm:$0xff]
      %v4504 = vld [vmem:[#allocation3 + $0x108] sm:$0xff]
      %v4505 = vld [vmem:[#allocation3 + $0x110] sm:$0xff]
      %v4506 = vld [vmem:[#allocation3 + $0x118] sm:$0xff]
      %v4507 = vld [vmem:[#allocation3 + $0x120] sm:$0xff]
      %v4508 = vld [vmem:[#allocation3 + $0x128] sm:$0xff]
      %v4509 = vld [vmem:[#allocation3 + $0x130] sm:$0xff]
      %v4510 = vld [vmem:[#allocation3 + $0x138] sm:$0xff]
      %v4511 = vld [vmem:[#allocation3 + $0x140] sm:$0x1]
      %v4512 = vld [vmem:[#allocation3 + $0x148] sm:$0x1]
      %v4513 = vpack.c.bf16 %v4473, %v4471
      %v4514 = vpack.c.bf16 %v4474, %v4472
      %v4515 = vpack.c.bf16 %v4477, %v4475
      %v4516 = vpack.c.bf16 %v4478, %v4476
      %v4517 = vpack.c.bf16 %v4481, %v4479
      %v4518 = vpack.c.bf16 %v4482, %v4480
      %v4519 = vpack.c.bf16 %v4485, %v4483
      %v4520 = vpack.c.bf16 %v4486, %v4484
      %v4521 = vpack.c.bf16 %v4489, %v4487
      %v4522 = vpack.c.bf16 %v4490, %v4488
      %v4523 = vpack.c.bf16 %v4493, %v4491
      %v4524 = vpack.c.bf16 %v4494, %v4492
      %v4525 = vpack.c.bf16 %v4497, %v4495
      %v4526 = vpack.c.bf16 %v4498, %v4496
      %v4527 = vpack.c.bf16 %v4501, %v4499
      %v4528 = vpack.c.bf16 %v4502, %v4500
      %v4529 = vpack.c.bf16 %v4505, %v4503
      %v4530 = vpack.c.bf16 %v4506, %v4504
      %v4531 = vpack.c.bf16 %v4509, %v4507
      %v4532 = vpack.c.bf16 %v4510, %v4508
      %v4533 = vpack.c.bf16 %v4511, %v4511
      %v4534 = vpack.c.bf16 %v4512, %v4512
      %v4535 = vld [vmem:[%s37] sm:$0xf]
      %v4536 = vld [vmem:[%s37 + $0x4] sm:$0xf]
      %v4537 = vld [vmem:[%s37 + $0x8] sm:$0xf]
      %v4538 = vld [vmem:[%s37 + $0xc] sm:$0xf]
      %v4539 = vld [vmem:[%s37 + $0x10] sm:$0xf]
      %v4540 = vld [vmem:[%s37 + $0x14] sm:$0xf]
      %v4541 = vld [vmem:[%s37 + $0x18] sm:$0xf]
      %v4542 = vld [vmem:[%s37 + $0x1c] sm:$0xf]
      %v4543 = vld [vmem:[%s37 + $0x20] sm:$0xf]
      %v4544 = vld [vmem:[%s37 + $0x24] sm:$0xf]
      %v4545 = vld [vmem:[%s37 + $0x28] sm:$0xf]
      %v4546 = vld [vmem:[%s37 + $0x2c] sm:$0xf]
      %v4547 = vld [vmem:[%s37 + $0x30] sm:$0xf]
      %v4548 = vld [vmem:[%s37 + $0x34] sm:$0xf]
      %v4549 = vld [vmem:[%s37 + $0x38] sm:$0xf]
      %v4550 = vld [vmem:[%s37 + $0x3c] sm:$0xf]
      %v4551 = vld [vmem:[%s37 + $0x40] sm:$0xf]
      %v4552 = vld [vmem:[%s37 + $0x44] sm:$0xf]
      %v4553 = vld [vmem:[%s37 + $0x48] sm:$0xf]
      %v4554 = vld [vmem:[%s37 + $0x4c] sm:$0xf]
      %v4555 = vld [vmem:[%s37 + $0x50] sm:$0xf]
      %v4556 = vld [vmem:[%s37 + $0x54] sm:$0xf]
      %v4557 = vld [vmem:[%s37 + $0x58] sm:$0xf]
      %v4558 = vld [vmem:[%s37 + $0x5c] sm:$0xf]
      %v4560 = vshrl.u32 %v4513, 16
      %v4562 = vshll.u32 %v4513, 16
      %v4564 = vrot.slane %v4562, 1
      %v4565 = vor.u32 %v4560, %v4564
      %v4567 = vshll.u32 %v4515, 16
      %v4569 = vrot.slane %v4567, 1
      %v4570 = vsel %vm3539, %v4565, %v4569
      %v4572 = vshrl.u32 %v4514, 16
      %v4574 = vshll.u32 %v4514, 16
      %v4576 = vrot.slane %v4574, 1
      %v4577 = vor.u32 %v4572, %v4576
      %v4579 = vshll.u32 %v4516, 16
      %v4581 = vrot.slane %v4579, 1
      %v4582 = vsel %vm3539, %v4577, %v4581
      %v4583 = vshrl.u32 %v4515, 16
      %v4585 = vor.u32 %v4583, %v4569
      %v4587 = vshll.u32 %v4517, 16
      %v4589 = vrot.slane %v4587, 1
      %v4590 = vsel %vm3539, %v4585, %v4589
      %v4591 = vshrl.u32 %v4516, 16
      %v4593 = vor.u32 %v4591, %v4581
      %v4595 = vshll.u32 %v4518, 16
      %v4597 = vrot.slane %v4595, 1
      %v4598 = vsel %vm3539, %v4593, %v4597
      %v4599 = vshrl.u32 %v4517, 16
      %v4601 = vor.u32 %v4599, %v4589
      %v4603 = vshll.u32 %v4519, 16
      %v4605 = vrot.slane %v4603, 1
      %v4606 = vsel %vm3539, %v4601, %v4605
      %v4607 = vshrl.u32 %v4518, 16
      %v4609 = vor.u32 %v4607, %v4597
      %v4611 = vshll.u32 %v4520, 16
      %v4613 = vrot.slane %v4611, 1
      %v4614 = vsel %vm3539, %v4609, %v4613
      %v4615 = vshrl.u32 %v4519, 16
      %v4617 = vor.u32 %v4615, %v4605
      %v4619 = vshll.u32 %v4521, 16
      %v4621 = vrot.slane %v4619, 1
      %v4622 = vsel %vm3539, %v4617, %v4621
      %v4623 = vshrl.u32 %v4520, 16
      %v4625 = vor.u32 %v4623, %v4613
      %v4627 = vshll.u32 %v4522, 16
      %v4629 = vrot.slane %v4627, 1
      %v4630 = vsel %vm3539, %v4625, %v4629
      %v4631 = vshrl.u32 %v4521, 16
      %v4633 = vor.u32 %v4631, %v4621
      %v4635 = vshll.u32 %v4523, 16
      %v4637 = vrot.slane %v4635, 1
      %v4638 = vsel %vm3539, %v4633, %v4637
      %v4639 = vshrl.u32 %v4522, 16
      %v4641 = vor.u32 %v4639, %v4629
      %v4643 = vshll.u32 %v4524, 16
      %v4645 = vrot.slane %v4643, 1
      %v4646 = vsel %vm3539, %v4641, %v4645
      %v4647 = vshrl.u32 %v4523, 16
      %v4649 = vor.u32 %v4647, %v4637
      %v4651 = vshll.u32 %v4525, 16
      %v4653 = vrot.slane %v4651, 1
      %v4654 = vsel %vm3539, %v4649, %v4653
      %v4655 = vshrl.u32 %v4524, 16
      %v4657 = vor.u32 %v4655, %v4645
      %v4659 = vshll.u32 %v4526, 16
      %v4661 = vrot.slane %v4659, 1
      %v4662 = vsel %vm3539, %v4657, %v4661
      %v4663 = vshrl.u32 %v4525, 16
      %v4665 = vor.u32 %v4663, %v4653
      %v4667 = vshll.u32 %v4527, 16
      %v4669 = vrot.slane %v4667, 1
      %v4670 = vsel %vm3539, %v4665, %v4669
      %v4671 = vshrl.u32 %v4526, 16
      %v4673 = vor.u32 %v4671, %v4661
      %v4675 = vshll.u32 %v4528, 16
      %v4677 = vrot.slane %v4675, 1
      %v4678 = vsel %vm3539, %v4673, %v4677
      %v4679 = vshrl.u32 %v4527, 16
      %v4681 = vor.u32 %v4679, %v4669
      %v4683 = vshll.u32 %v4529, 16
      %v4685 = vrot.slane %v4683, 1
      %v4686 = vsel %vm3539, %v4681, %v4685
      %v4687 = vshrl.u32 %v4528, 16
      %v4689 = vor.u32 %v4687, %v4677
      %v4691 = vshll.u32 %v4530, 16
      %v4693 = vrot.slane %v4691, 1
      %v4694 = vsel %vm3539, %v4689, %v4693
      %v4695 = vshrl.u32 %v4529, 16
      %v4697 = vor.u32 %v4695, %v4685
      %v4699 = vshll.u32 %v4531, 16
      %v4701 = vrot.slane %v4699, 1
      %v4702 = vsel %vm3539, %v4697, %v4701
      %v4703 = vshrl.u32 %v4530, 16
      %v4705 = vor.u32 %v4703, %v4693
      %v4707 = vshll.u32 %v4532, 16
      %v4709 = vrot.slane %v4707, 1
      %v4710 = vsel %vm3539, %v4705, %v4709
      %v4711 = vshrl.u32 %v4531, 16
      %v4713 = vor.u32 %v4711, %v4701
      %v4715 = vshll.u32 %v4533, 16
      %v4717 = vrot.slane %v4715, 1
      %v4718 = vsel %vm3539, %v4713, %v4717
      %v4719 = vshrl.u32 %v4532, 16
      %v4721 = vor.u32 %v4719, %v4709
      %v4723 = vshll.u32 %v4534, 16
      %v4725 = vrot.slane %v4723, 1
      %v4726 = vsel %vm3539, %v4721, %v4725
      %v4761 = vunpack.c.l.b16 %v4535
      %v4762 = vunpack.c.l.b16 %v4536
      %v4763 = vunpack.c.l.b16 %v4537
      %v4764 = vunpack.c.l.b16 %v4538
      %v4765 = vunpack.c.l.b16 %v4539
      %v4766 = vunpack.c.l.b16 %v4540
      %v4767 = vunpack.c.l.b16 %v4541
      %v4768 = vunpack.c.l.b16 %v4542
      %v4769 = vunpack.c.l.b16 %v4543
      %v4770 = vunpack.c.l.b16 %v4544
      %v4771 = vunpack.c.l.b16 %v4545
      %v4772 = vunpack.c.l.b16 %v4546
      %v4773 = vunpack.c.l.b16 %v4547
      %v4774 = vunpack.c.l.b16 %v4548
      %v4775 = vunpack.c.l.b16 %v4549
      %v4776 = vunpack.c.l.b16 %v4550
      %v4777 = vunpack.c.l.b16 %v4551
      %v4778 = vunpack.c.l.b16 %v4552
      %v4779 = vunpack.c.l.b16 %v4553
      %v4780 = vunpack.c.l.b16 %v4554
      %v4781 = vunpack.c.l.b16 %v4555
      %v4782 = vunpack.c.l.b16 %v4556
      %v4783 = vunpack.c.l.b16 %v4557
      %v4784 = vunpack.c.l.b16 %v4558
      %v4785 = vpack.c.b16 %v4762, %v4761
      %v4786 = vpack.c.b16 %v4764, %v4763
      %v4787 = vpack.c.b16 %v4766, %v4765
      %v4788 = vpack.c.b16 %v4768, %v4767
      %v4789 = vpack.c.b16 %v4770, %v4769
      %v4790 = vpack.c.b16 %v4772, %v4771
      %v4791 = vpack.c.b16 %v4774, %v4773
      %v4792 = vpack.c.b16 %v4776, %v4775
      %v4793 = vpack.c.b16 %v4778, %v4777
      %v4794 = vpack.c.b16 %v4780, %v4779
      %v4795 = vpack.c.b16 %v4782, %v4781
      %v4796 = vpack.c.b16 %v4784, %v4783
      %v4810 = vsel %vm3283, %v4582, 0
      %v4813 = vsel %vm3283, %v4598, 0
      %v4816 = vsel %vm3283, %v4614, 0
      %v4819 = vsel %vm3283, %v4630, 0
      %v4822 = vsel %vm3283, %v4646, 0
      %v4825 = vsel %vm3283, %v4662, 0
      %v4828 = vsel %vm3283, %v4678, 0
      %v4831 = vsel %vm3283, %v4694, 0
      %v4834 = vsel %vm3283, %v4710, 0
      %v4837 = vsel %vm3283, %v4726, 0
      %4839 = vmatprep.subr.bf16.mxu0 0
      %4840 = vmatpush1.bf16.msra.mxu0 %v4792
      %4841 = vmatprep.subr.bf16.mxu0 0
      %4842 = vmatpush1.bf16.msra.mxu0 %v4791
      %4843 = vmatprep.subr.bf16.mxu0 0
      %4844 = vmatpush1.bf16.msra.mxu0 %v4790
      %4845 = vmatprep.subr.bf16.mxu0 0
      %4846 = vmatpush1.bf16.msra.mxu0 %v4789
      %4847 = vmatprep.subr.bf16.mxu0 0
      %4848 = vmatpush1.bf16.msra.mxu0 %v4788
      %4849 = vmatprep.subr.bf16.mxu0 0
      %4850 = vmatpush1.bf16.msra.mxu0 %v4787
      %4851 = vmatprep.subr.bf16.mxu0 0
      %4852 = vmatpush1.bf16.msra.mxu0 %v4786
      %4853 = vmatprep.subr.bf16.mxu0 0
      %4854 = vmatpush1.bf16.msra.mxu0 %v4785
      %4855 = vmatprep.subr.bf16.mxu0 0
      %4856 = vmatpush2.bf16.msra.mxu0 0
      %4857 = vmatprep.subr.bf16.mxu0 0
      %4858 = vmatpush2.bf16.msra.mxu0 0
      %4859 = vmatprep.subr.bf16.mxu0 0
      %4860 = vmatpush2.bf16.msra.mxu0 0
      %4861 = vmatprep.subr.bf16.mxu0 0
      %4862 = vmatpush2.bf16.msra.mxu0 0
      %4863 = vmatprep.subr.bf16.mxu0 0
      %4864 = vmatpush2.bf16.msra.mxu0 %v4796
      %4865 = vmatprep.subr.bf16.mxu0 0
      %4866 = vmatpush2.bf16.msra.mxu0 %v4795
      %4867 = vmatprep.subr.bf16.mxu0 0
      %4868 = vmatpush2.bf16.msra.mxu0 %v4794
      %4869 = vmatprep.subr.bf16.mxu0 0
      %4870 = vmatpush2.bf16.msra.mxu0 %v4793
      %4871 = vmatprep.mubr.bf16.mxu0 %v4810
      %4872 = vmatmul.mubr.bf16.gmra.mxu0 %v4570
      %v4873 = vpop.f32.mrf.mxu0
      %v4874 = vadd.f32 0.0, %v4873
      %v4875 = vpop.f32.mrf.mxu0
      %v4876 = vpop.f32.mrf.mxu0
      %v4877 = vadd.f32 0.0, %v4876
      %v4878 = vpop.f32.mrf.mxu0
      %4879 = vmatprep.mubr.bf16.mxu0 %v4813
      %4880 = vmatmul.mubr.bf16.gmra.mxu0 %v4590
      %v4881 = vpop.f32.mrf.mxu0
      %v4882 = vadd.f32 0.0, %v4881
      %v4883 = vpop.f32.mrf.mxu0
      %v4884 = vpop.f32.mrf.mxu0
      %v4885 = vadd.f32 0.0, %v4884
      %v4886 = vpop.f32.mrf.mxu0
      %4887 = vmatprep.mubr.bf16.mxu0 %v4816
      %4888 = vmatmul.mubr.bf16.gmra.mxu0 %v4606
      %v4889 = vpop.f32.mrf.mxu0
      %v4890 = vadd.f32 0.0, %v4889
      %v4891 = vpop.f32.mrf.mxu0
      %v4892 = vpop.f32.mrf.mxu0
      %v4893 = vadd.f32 0.0, %v4892
      %v4894 = vpop.f32.mrf.mxu0
      %4895 = vmatprep.mubr.bf16.mxu0 %v4819
      %4896 = vmatmul.mubr.bf16.gmra.mxu0 %v4622
      %v4897 = vpop.f32.mrf.mxu0
      %v4898 = vadd.f32 0.0, %v4897
      %v4899 = vpop.f32.mrf.mxu0
      %v4900 = vpop.f32.mrf.mxu0
      %v4901 = vadd.f32 0.0, %v4900
      %v4902 = vpop.f32.mrf.mxu0
      %4903 = vmatprep.mubr.bf16.mxu0 %v4822
      %4904 = vmatmul.mubr.bf16.gmra.mxu0 %v4638
      %v4905 = vpop.f32.mrf.mxu0
      %v4906 = vadd.f32 0.0, %v4905
      %v4907 = vpop.f32.mrf.mxu0
      %v4908 = vpop.f32.mrf.mxu0
      %v4909 = vadd.f32 0.0, %v4908
      %v4910 = vpop.f32.mrf.mxu0
      %4911 = vmatprep.mubr.bf16.mxu0 %v4825
      %4912 = vmatmul.mubr.bf16.gmra.mxu0 %v4654
      %v4913 = vpop.f32.mrf.mxu0
      %v4914 = vadd.f32 0.0, %v4913
      %v4915 = vpop.f32.mrf.mxu0
      %v4916 = vpop.f32.mrf.mxu0
      %v4917 = vadd.f32 0.0, %v4916
      %v4918 = vpop.f32.mrf.mxu0
      %4919 = vmatprep.mubr.bf16.mxu0 %v4828
      %4920 = vmatmul.mubr.bf16.gmra.mxu0 %v4670
      %v4921 = vpop.f32.mrf.mxu0
      %v4922 = vadd.f32 0.0, %v4921
      %v4923 = vpop.f32.mrf.mxu0
      %v4924 = vpop.f32.mrf.mxu0
      %v4925 = vadd.f32 0.0, %v4924
      %v4926 = vpop.f32.mrf.mxu0
      %4927 = vmatprep.mubr.bf16.mxu0 %v4831
      %4928 = vmatmul.mubr.bf16.gmra.mxu0 %v4686
      %v4929 = vpop.f32.mrf.mxu0
      %v4930 = vadd.f32 0.0, %v4929
      %v4931 = vpop.f32.mrf.mxu0
      %v4932 = vpop.f32.mrf.mxu0
      %v4933 = vadd.f32 0.0, %v4932
      %v4934 = vpop.f32.mrf.mxu0
      %4935 = vmatprep.mubr.bf16.mxu0 %v4834
      %4936 = vmatmul.mubr.bf16.gmra.mxu0 %v4702
      %v4937 = vpop.f32.mrf.mxu0
      %v4938 = vadd.f32 0.0, %v4937
      %v4939 = vpop.f32.mrf.mxu0
      %v4940 = vpop.f32.mrf.mxu0
      %v4941 = vadd.f32 0.0, %v4940
      %v4942 = vpop.f32.mrf.mxu0
      %4943 = vmatprep.mubr.bf16.mxu0 %v4837
      %4944 = vmatmul.mubr.bf16.gmra.mxu0 %v4718
      %v4945 = vpop.f32.mrf.mxu0
      %v4946 = vadd.f32 0.0, %v4945
      %v4947 = vpop.f32.mrf.mxu0
      %v4948 = vpop.f32.mrf.mxu0
      %v4949 = vadd.f32 0.0, %v4948
      %v4950 = vpop.f32.mrf.mxu0
      %4951 = vdwg.mxu0
      %v4952 = vld [vmem:[%s39] sm:$0x1]
      %v4954 = vlaneseq
      %v4955 = vshrl.u32 %v4954, 7
      %v4956 = vsub.s32 0, %v4955
      %v4957 = vrot.slane %v4952, %v4956
      %v4959 = vmul.f32 %v4874, %v4957
      %v4960 = vmul.f32 %v4877, %v4957
      %v4961 = vmul.f32 %v4882, %v4957
      %v4962 = vmul.f32 %v4885, %v4957
      %v4963 = vmul.f32 %v4890, %v4957
      %v4964 = vmul.f32 %v4893, %v4957
      %v4965 = vmul.f32 %v4898, %v4957
      %v4966 = vmul.f32 %v4901, %v4957
      %v4967 = vmul.f32 %v4906, %v4957
      %v4968 = vmul.f32 %v4909, %v4957
      %v4969 = vmul.f32 %v4914, %v4957
      %v4970 = vmul.f32 %v4917, %v4957
      %v4971 = vmul.f32 %v4922, %v4957
      %v4972 = vmul.f32 %v4925, %v4957
      %v4973 = vmul.f32 %v4930, %v4957
      %v4974 = vmul.f32 %v4933, %v4957
      %v4975 = vmul.f32 %v4938, %v4957
      %v4976 = vmul.f32 %v4941, %v4957
      %v4977 = vmul.f32 %v4946, %v4957
      %v4978 = vmul.f32 %v4949, %v4957
      %v4979 = vld [vmem:[%s41] sm:$0x1]
      %v4981 = vlaneseq
      %v4982 = vshrl.u32 %v4981, 7
      %v4983 = vsub.s32 0, %v4982
      %v4984 = vrot.slane %v4979, %v4983
      %v4986 = vadd.f32 %v4959, %v4984
      %v4987 = vadd.f32 %v4960, %v4984
      %v4988 = vadd.f32 %v4961, %v4984
      %v4989 = vadd.f32 %v4962, %v4984
      %v4990 = vadd.f32 %v4963, %v4984
      %v4991 = vadd.f32 %v4964, %v4984
      %v4992 = vadd.f32 %v4965, %v4984
      %v4993 = vadd.f32 %v4966, %v4984
      %v4994 = vadd.f32 %v4967, %v4984
      %v4995 = vadd.f32 %v4968, %v4984
      %v4996 = vadd.f32 %v4969, %v4984
      %v4997 = vadd.f32 %v4970, %v4984
      %v4998 = vadd.f32 %v4971, %v4984
      %v4999 = vadd.f32 %v4972, %v4984
      %v5000 = vadd.f32 %v4973, %v4984
      %v5001 = vadd.f32 %v4974, %v4984
      %v5002 = vadd.f32 %v4975, %v4984
      %v5003 = vadd.f32 %v4976, %v4984
      %v5004 = vadd.f32 %v4977, %v4984
      %v5005 = vadd.f32 %v4978, %v4984
      %v5006 = vmax.f32 %v4986, 0.0
      %v5007 = vmax.f32 %v4987, 0.0
      %v5008 = vmax.f32 %v4988, 0.0
      %v5009 = vmax.f32 %v4989, 0.0
      %v5010 = vmax.f32 %v4990, 0.0
      %v5011 = vmax.f32 %v4991, 0.0
      %v5012 = vmax.f32 %v4992, 0.0
      %v5013 = vmax.f32 %v4993, 0.0
      %v5014 = vmax.f32 %v4994, 0.0
      %v5015 = vmax.f32 %v4995, 0.0
      %v5016 = vmax.f32 %v4996, 0.0
      %v5017 = vmax.f32 %v4997, 0.0
      %v5018 = vmax.f32 %v4998, 0.0
      %v5019 = vmax.f32 %v4999, 0.0
      %v5020 = vmax.f32 %v5000, 0.0
      %v5021 = vmax.f32 %v5001, 0.0
      %v5022 = vmax.f32 %v5002, 0.0
      %v5023 = vmax.f32 %v5003, 0.0
      %v5024 = vmax.f32 %v5004, 0.0
      %v5025 = vmax.f32 %v5005, 0.0
      %v5026 = vsel %vm1579, %v5006, 0.0
      %v5027 = vsel %vm1580, %v5007, 0.0
      %v5028 = vsel %vm1581, %v5008, 0.0
      %v5029 = vsel %vm1582, %v5009, 0.0
      %v5030 = vsel %vm1583, %v5010, 0.0
      %v5031 = vsel %vm1584, %v5011, 0.0
      %v5032 = vsel %vm1585, %v5012, 0.0
      %v5033 = vsel %vm1586, %v5013, 0.0
      %v5034 = vsel %vm1587, %v5014, 0.0
      %v5035 = vsel %vm1588, %v5015, 0.0
      %v5036 = vsel %vm1589, %v5016, 0.0
      %v5037 = vsel %vm1590, %v5017, 0.0
      %v5038 = vsel %vm1591, %v5018, 0.0
      %v5039 = vsel %vm1592, %v5019, 0.0
      %v5040 = vsel %vm1593, %v5020, 0.0
      %v5041 = vsel %vm1594, %v5021, 0.0
      %v5042 = vsel %vm1595, %v5022, 0.0
      %v5043 = vsel %vm1596, %v5023, 0.0
      %v5044 = vsel %vm1597, %v5024, 0.0
      %v5045 = vsel %vm1598, %v5025, 0.0
      %5046 = vst [vmem:[#allocation4] sm:$0x1] 0.0
      %5047 = vst [vmem:[#allocation4 + $0xa1] sm:$0x1] 0.0
      %5048 = vst [vmem:[#allocation4 + $0x1] sm:$0xff] %v5026
      %5049 = vst [vmem:[#allocation4 + $0x9] sm:$0xff] %v5027
      %5050 = vst [vmem:[#allocation4 + $0x11] sm:$0xff] %v5028
      %5051 = vst [vmem:[#allocation4 + $0x19] sm:$0xff] %v5029
      %5052 = vst [vmem:[#allocation4 + $0x21] sm:$0xff] %v5030
      %5053 = vst [vmem:[#allocation4 + $0x29] sm:$0xff] %v5031
      %5054 = vst [vmem:[#allocation4 + $0x31] sm:$0xff] %v5032
      %5055 = vst [vmem:[#allocation4 + $0x39] sm:$0xff] %v5033
      %5056 = vst [vmem:[#allocation4 + $0x41] sm:$0xff] %v5034
      %5057 = vst [vmem:[#allocation4 + $0x49] sm:$0xff] %v5035
      %5058 = vst [vmem:[#allocation4 + $0x51] sm:$0xff] %v5036
      %5059 = vst [vmem:[#allocation4 + $0x59] sm:$0xff] %v5037
      %5060 = vst [vmem:[#allocation4 + $0x61] sm:$0xff] %v5038
      %5061 = vst [vmem:[#allocation4 + $0x69] sm:$0xff] %v5039
      %5062 = vst [vmem:[#allocation4 + $0x71] sm:$0xff] %v5040
      %5063 = vst [vmem:[#allocation4 + $0x79] sm:$0xff] %v5041
      %5064 = vst [vmem:[#allocation4 + $0x81] sm:$0xff] %v5042
      %5065 = vst [vmem:[#allocation4 + $0x89] sm:$0xff] %v5043
      %5066 = vst [vmem:[#allocation4 + $0x91] sm:$0xff] %v5044
      %5067 = vst [vmem:[#allocation4 + $0x99] sm:$0xff] %v5045
      %v5068 = vpack.c.bf16 %v5027, %v5026
      %v5069 = vpack.c.bf16 %v5029, %v5028
      %v5070 = vpack.c.bf16 %v5031, %v5030
      %v5071 = vpack.c.bf16 %v5033, %v5032
      %v5072 = vpack.c.bf16 %v5035, %v5034
      %v5073 = vpack.c.bf16 %v5037, %v5036
      %v5074 = vpack.c.bf16 %v5039, %v5038
      %v5075 = vpack.c.bf16 %v5041, %v5040
      %v5076 = vpack.c.bf16 %v5043, %v5042
      %v5077 = vpack.c.bf16 %v5045, %v5044
      %s5078 = scalar_lea.vmem %s43, 64
      %v5079 = vld [vmem:[%s5078] sm:$0xf]
      %v5080 = vld [vmem:[%s5078 + $0x4] sm:$0xf]
      %v5081 = vld [vmem:[%s5078 + $0x8] sm:$0xf]
      %v5082 = vld [vmem:[%s5078 + $0xc] sm:$0xf]
      %v5083 = vld [vmem:[%s5078 + $0x10] sm:$0xf]
      %v5084 = vld [vmem:[%s5078 + $0x14] sm:$0xf]
      %v5085 = vld [vmem:[%s5078 + $0x18] sm:$0xf]
      %v5086 = vld [vmem:[%s5078 + $0x1c] sm:$0xf]
      %v5087 = vld [vmem:[%s5078 + $0x20] sm:$0xf]
      %v5088 = vld [vmem:[%s5078 + $0x24] sm:$0xf]
      %v5089 = vld [vmem:[%s5078 + $0x28] sm:$0xf]
      %v5090 = vld [vmem:[%s5078 + $0x2c] sm:$0xf]
      %v5091 = vld [vmem:[%s5078 + $0x30] sm:$0xf]
      %v5092 = vld [vmem:[%s5078 + $0x34] sm:$0xf]
      %v5093 = vld [vmem:[%s5078 + $0x38] sm:$0xf]
      %v5094 = vld [vmem:[%s5078 + $0x3c] sm:$0xf]
      %v5095 = vld [vmem:[#allocation4] sm:$0xff]
      %v5096 = vld [vmem:[#allocation4 + $0x8] sm:$0xff]
      %v5097 = vld [vmem:[#allocation4 + $0x10] sm:$0xff]
      %v5098 = vld [vmem:[#allocation4 + $0x18] sm:$0xff]
      %v5099 = vld [vmem:[#allocation4 + $0x20] sm:$0xff]
      %v5100 = vld [vmem:[#allocation4 + $0x28] sm:$0xff]
      %v5101 = vld [vmem:[#allocation4 + $0x30] sm:$0xff]
      %v5102 = vld [vmem:[#allocation4 + $0x38] sm:$0xff]
      %v5103 = vld [vmem:[#allocation4 + $0x40] sm:$0xff]
      %v5104 = vld [vmem:[#allocation4 + $0x48] sm:$0xff]
      %v5105 = vld [vmem:[#allocation4 + $0x50] sm:$0xff]
      %v5106 = vld [vmem:[#allocation4 + $0x58] sm:$0xff]
      %v5107 = vld [vmem:[#allocation4 + $0x60] sm:$0xff]
      %v5108 = vld [vmem:[#allocation4 + $0x68] sm:$0xff]
      %v5109 = vld [vmem:[#allocation4 + $0x70] sm:$0xff]
      %v5110 = vld [vmem:[#allocation4 + $0x78] sm:$0xff]
      %v5111 = vld [vmem:[#allocation4 + $0x80] sm:$0xff]
      %v5112 = vld [vmem:[#allocation4 + $0x88] sm:$0xff]
      %v5113 = vld [vmem:[#allocation4 + $0x90] sm:$0xff]
      %v5114 = vld [vmem:[#allocation4 + $0x98] sm:$0xff]
      %v5115 = vpack.c.bf16 %v5096, %v5095
      %v5116 = vpack.c.bf16 %v5098, %v5097
      %v5117 = vpack.c.bf16 %v5100, %v5099
      %v5118 = vpack.c.bf16 %v5102, %v5101
      %v5119 = vpack.c.bf16 %v5104, %v5103
      %v5120 = vpack.c.bf16 %v5106, %v5105
      %v5121 = vpack.c.bf16 %v5108, %v5107
      %v5122 = vpack.c.bf16 %v5110, %v5109
      %v5123 = vpack.c.bf16 %v5112, %v5111
      %v5124 = vpack.c.bf16 %v5114, %v5113
      %v5125 = vld [vmem:[%s43] sm:$0xf]
      %v5126 = vld [vmem:[%s43 + $0x4] sm:$0xf]
      %v5127 = vld [vmem:[%s43 + $0x8] sm:$0xf]
      %v5128 = vld [vmem:[%s43 + $0xc] sm:$0xf]
      %v5129 = vld [vmem:[%s43 + $0x10] sm:$0xf]
      %v5130 = vld [vmem:[%s43 + $0x14] sm:$0xf]
      %v5131 = vld [vmem:[%s43 + $0x18] sm:$0xf]
      %v5132 = vld [vmem:[%s43 + $0x1c] sm:$0xf]
      %v5133 = vld [vmem:[%s43 + $0x20] sm:$0xf]
      %v5134 = vld [vmem:[%s43 + $0x24] sm:$0xf]
      %v5135 = vld [vmem:[%s43 + $0x28] sm:$0xf]
      %v5136 = vld [vmem:[%s43 + $0x2c] sm:$0xf]
      %v5137 = vld [vmem:[%s43 + $0x30] sm:$0xf]
      %v5138 = vld [vmem:[%s43 + $0x34] sm:$0xf]
      %v5139 = vld [vmem:[%s43 + $0x38] sm:$0xf]
      %v5140 = vld [vmem:[%s43 + $0x3c] sm:$0xf]
      %v5157 = vunpack.c.l.b16 %v5125
      %v5158 = vunpack.c.l.b16 %v5126
      %v5159 = vunpack.c.l.b16 %v5127
      %v5160 = vunpack.c.l.b16 %v5128
      %v5161 = vunpack.c.l.b16 %v5129
      %v5162 = vunpack.c.l.b16 %v5130
      %v5163 = vunpack.c.l.b16 %v5131
      %v5164 = vunpack.c.l.b16 %v5132
      %v5165 = vunpack.c.l.b16 %v5133
      %v5166 = vunpack.c.l.b16 %v5134
      %v5167 = vunpack.c.l.b16 %v5135
      %v5168 = vunpack.c.l.b16 %v5136
      %v5169 = vunpack.c.l.b16 %v5137
      %v5170 = vunpack.c.l.b16 %v5138
      %v5171 = vunpack.c.l.b16 %v5139
      %v5172 = vunpack.c.l.b16 %v5140
      %v5173 = vpack.c.b16 %v5158, %v5157
      %v5174 = vpack.c.b16 %v5160, %v5159
      %v5175 = vpack.c.b16 %v5162, %v5161
      %v5176 = vpack.c.b16 %v5164, %v5163
      %v5177 = vpack.c.b16 %v5166, %v5165
      %v5178 = vpack.c.b16 %v5168, %v5167
      %v5179 = vpack.c.b16 %v5170, %v5169
      %v5180 = vpack.c.b16 %v5172, %v5171
      %5189 = vmatprep.subr.bf16.mxu0 0
      %5190 = vmatpush1.bf16.msra.mxu0 %v5180
      %5191 = vmatprep.subr.bf16.mxu0 0
      %5192 = vmatpush1.bf16.msra.mxu0 %v5179
      %5193 = vmatprep.subr.bf16.mxu0 0
      %5194 = vmatpush1.bf16.msra.mxu0 %v5178
      %5195 = vmatprep.subr.bf16.mxu0 0
      %5196 = vmatpush1.bf16.msra.mxu0 %v5177
      %5197 = vmatprep.subr.bf16.mxu0 0
      %5198 = vmatpush1.bf16.msra.mxu0 %v5176
      %5199 = vmatprep.subr.bf16.mxu0 0
      %5200 = vmatpush1.bf16.msra.mxu0 %v5175
      %5201 = vmatprep.subr.bf16.mxu0 0
      %5202 = vmatpush1.bf16.msra.mxu0 %v5174
      %5203 = vmatprep.subr.bf16.mxu0 0
      %5204 = vmatpush1.bf16.msra.mxu0 %v5173
      %5205 = vmatprep.subr.bf16.mxu0 0
      %5206 = vmatpush2.bf16.msra.mxu0 0
      %5207 = vmatprep.subr.bf16.mxu0 0
      %5208 = vmatpush2.bf16.msra.mxu0 0
      %5209 = vmatprep.subr.bf16.mxu0 0
      %5210 = vmatpush2.bf16.msra.mxu0 0
      %5211 = vmatprep.subr.bf16.mxu0 0
      %5212 = vmatpush2.bf16.msra.mxu0 0
      %5213 = vmatprep.subr.bf16.mxu0 0
      %5214 = vmatpush2.bf16.msra.mxu0 0
      %5215 = vmatprep.subr.bf16.mxu0 0
      %5216 = vmatpush2.bf16.msra.mxu0 0
      %5217 = vmatprep.subr.bf16.mxu0 0
      %5218 = vmatpush2.bf16.msra.mxu0 0
      %5219 = vmatprep.subr.bf16.mxu0 0
      %5220 = vmatpush2.bf16.msra.mxu0 0
      %5221 = vmatprep.mubr.bf16.mxu0 0
      %5222 = vmatmul.mubr.bf16.gmra.mxu0 %v5115
      %v5223 = vpop.f32.mrf.mxu0
      %v5224 = vadd.f32 0.0, %v5223
      %v5225 = vpop.f32.mrf.mxu0
      %v5226 = vpop.f32.mrf.mxu0
      %v5227 = vadd.f32 0.0, %v5226
      %v5228 = vpop.f32.mrf.mxu0
      %5229 = vmatprep.mubr.bf16.mxu0 0
      %5230 = vmatmul.mubr.bf16.gmra.mxu0 %v5116
      %v5231 = vpop.f32.mrf.mxu0
      %v5232 = vadd.f32 0.0, %v5231
      %v5233 = vpop.f32.mrf.mxu0
      %v5234 = vpop.f32.mrf.mxu0
      %v5235 = vadd.f32 0.0, %v5234
      %v5236 = vpop.f32.mrf.mxu0
      %5237 = vmatprep.mubr.bf16.mxu0 0
      %5238 = vmatmul.mubr.bf16.gmra.mxu0 %v5117
      %v5239 = vpop.f32.mrf.mxu0
      %v5240 = vadd.f32 0.0, %v5239
      %v5241 = vpop.f32.mrf.mxu0
      %v5242 = vpop.f32.mrf.mxu0
      %v5243 = vadd.f32 0.0, %v5242
      %v5244 = vpop.f32.mrf.mxu0
      %5245 = vmatprep.mubr.bf16.mxu0 0
      %5246 = vmatmul.mubr.bf16.gmra.mxu0 %v5118
      %v5247 = vpop.f32.mrf.mxu0
      %v5248 = vadd.f32 0.0, %v5247
      %v5249 = vpop.f32.mrf.mxu0
      %v5250 = vpop.f32.mrf.mxu0
      %v5251 = vadd.f32 0.0, %v5250
      %v5252 = vpop.f32.mrf.mxu0
      %5253 = vmatprep.mubr.bf16.mxu0 0
      %5254 = vmatmul.mubr.bf16.gmra.mxu0 %v5119
      %v5255 = vpop.f32.mrf.mxu0
      %v5256 = vadd.f32 0.0, %v5255
      %v5257 = vpop.f32.mrf.mxu0
      %v5258 = vpop.f32.mrf.mxu0
      %v5259 = vadd.f32 0.0, %v5258
      %v5260 = vpop.f32.mrf.mxu0
      %5261 = vmatprep.mubr.bf16.mxu0 0
      %5262 = vmatmul.mubr.bf16.gmra.mxu0 %v5120
      %v5263 = vpop.f32.mrf.mxu0
      %v5264 = vadd.f32 0.0, %v5263
      %v5265 = vpop.f32.mrf.mxu0
      %v5266 = vpop.f32.mrf.mxu0
      %v5267 = vadd.f32 0.0, %v5266
      %v5268 = vpop.f32.mrf.mxu0
      %5269 = vmatprep.mubr.bf16.mxu0 0
      %5270 = vmatmul.mubr.bf16.gmra.mxu0 %v5121
      %v5271 = vpop.f32.mrf.mxu0
      %v5272 = vadd.f32 0.0, %v5271
      %v5273 = vpop.f32.mrf.mxu0
      %v5274 = vpop.f32.mrf.mxu0
      %v5275 = vadd.f32 0.0, %v5274
      %v5276 = vpop.f32.mrf.mxu0
      %5277 = vmatprep.mubr.bf16.mxu0 0
      %5278 = vmatmul.mubr.bf16.gmra.mxu0 %v5122
      %v5279 = vpop.f32.mrf.mxu0
      %v5280 = vadd.f32 0.0, %v5279
      %v5281 = vpop.f32.mrf.mxu0
      %v5282 = vpop.f32.mrf.mxu0
      %v5283 = vadd.f32 0.0, %v5282
      %v5284 = vpop.f32.mrf.mxu0
      %5285 = vmatprep.mubr.bf16.mxu0 0
      %5286 = vmatmul.mubr.bf16.gmra.mxu0 %v5123
      %v5287 = vpop.f32.mrf.mxu0
      %v5288 = vadd.f32 0.0, %v5287
      %v5289 = vpop.f32.mrf.mxu0
      %v5290 = vpop.f32.mrf.mxu0
      %v5291 = vadd.f32 0.0, %v5290
      %v5292 = vpop.f32.mrf.mxu0
      %5293 = vmatprep.mubr.bf16.mxu0 0
      %5294 = vmatmul.mubr.bf16.gmra.mxu0 %v5124
      %v5295 = vpop.f32.mrf.mxu0
      %v5296 = vadd.f32 0.0, %v5295
      %v5297 = vpop.f32.mrf.mxu0
      %v5298 = vpop.f32.mrf.mxu0
      %v5299 = vadd.f32 0.0, %v5298
      %v5300 = vpop.f32.mrf.mxu0
      %5301 = vdwg.mxu0
      %v5318 = vunpack.c.l.b16 %v5079
      %v5319 = vunpack.c.l.b16 %v5080
      %v5320 = vunpack.c.l.b16 %v5081
      %v5321 = vunpack.c.l.b16 %v5082
      %v5322 = vunpack.c.l.b16 %v5083
      %v5323 = vunpack.c.l.b16 %v5084
      %v5324 = vunpack.c.l.b16 %v5085
      %v5325 = vunpack.c.l.b16 %v5086
      %v5326 = vunpack.c.l.b16 %v5087
      %v5327 = vunpack.c.l.b16 %v5088
      %v5328 = vunpack.c.l.b16 %v5089
      %v5329 = vunpack.c.l.b16 %v5090
      %v5330 = vunpack.c.l.b16 %v5091
      %v5331 = vunpack.c.l.b16 %v5092
      %v5332 = vunpack.c.l.b16 %v5093
      %v5333 = vunpack.c.l.b16 %v5094
      %v5334 = vpack.c.b16 %v5319, %v5318
      %v5335 = vpack.c.b16 %v5321, %v5320
      %v5336 = vpack.c.b16 %v5323, %v5322
      %v5337 = vpack.c.b16 %v5325, %v5324
      %v5338 = vpack.c.b16 %v5327, %v5326
      %v5339 = vpack.c.b16 %v5329, %v5328
      %v5340 = vpack.c.b16 %v5331, %v5330
      %v5341 = vpack.c.b16 %v5333, %v5332
      %5350 = vmatprep.subr.bf16.mxu0 0
      %5351 = vmatpush1.bf16.msra.mxu0 %v5341
      %5352 = vmatprep.subr.bf16.mxu0 0
      %5353 = vmatpush1.bf16.msra.mxu0 %v5340
      %5354 = vmatprep.subr.bf16.mxu0 0
      %5355 = vmatpush1.bf16.msra.mxu0 %v5339
      %5356 = vmatprep.subr.bf16.mxu0 0
      %5357 = vmatpush1.bf16.msra.mxu0 %v5338
      %5358 = vmatprep.subr.bf16.mxu0 0
      %5359 = vmatpush1.bf16.msra.mxu0 %v5337
      %5360 = vmatprep.subr.bf16.mxu0 0
      %5361 = vmatpush1.bf16.msra.mxu0 %v5336
      %5362 = vmatprep.subr.bf16.mxu0 0
      %5363 = vmatpush1.bf16.msra.mxu0 %v5335
      %5364 = vmatprep.subr.bf16.mxu0 0
      %5365 = vmatpush1.bf16.msra.mxu0 %v5334
      %5366 = vmatprep.subr.bf16.mxu0 0
      %5367 = vmatpush2.bf16.msra.mxu0 0
      %5368 = vmatprep.subr.bf16.mxu0 0
      %5369 = vmatpush2.bf16.msra.mxu0 0
      %5370 = vmatprep.subr.bf16.mxu0 0
      %5371 = vmatpush2.bf16.msra.mxu0 0
      %5372 = vmatprep.subr.bf16.mxu0 0
      %5373 = vmatpush2.bf16.msra.mxu0 0
      %5374 = vmatprep.subr.bf16.mxu0 0
      %5375 = vmatpush2.bf16.msra.mxu0 0
      %5376 = vmatprep.subr.bf16.mxu0 0
      %5377 = vmatpush2.bf16.msra.mxu0 0
      %5378 = vmatprep.subr.bf16.mxu0 0
      %5379 = vmatpush2.bf16.msra.mxu0 0
      %5380 = vmatprep.subr.bf16.mxu0 0
      %5381 = vmatpush2.bf16.msra.mxu0 0
      %5382 = vmatprep.mubr.bf16.mxu0 0
      %5383 = vmatmul.mubr.bf16.gmra.mxu0 %v5068
      %v5384 = vpop.f32.mrf.mxu0
      %v5385 = vadd.f32 %v5224, %v5384
      %v5386 = vpop.f32.mrf.mxu0
      %v5387 = vpop.f32.mrf.mxu0
      %v5388 = vadd.f32 %v5227, %v5387
      %v5389 = vpop.f32.mrf.mxu0
      %5390 = vmatprep.mubr.bf16.mxu0 0
      %5391 = vmatmul.mubr.bf16.gmra.mxu0 %v5069
      %v5392 = vpop.f32.mrf.mxu0
      %v5393 = vadd.f32 %v5232, %v5392
      %v5394 = vpop.f32.mrf.mxu0
      %v5395 = vpop.f32.mrf.mxu0
      %v5396 = vadd.f32 %v5235, %v5395
      %v5397 = vpop.f32.mrf.mxu0
      %5398 = vmatprep.mubr.bf16.mxu0 0
      %5399 = vmatmul.mubr.bf16.gmra.mxu0 %v5070
      %v5400 = vpop.f32.mrf.mxu0
      %v5401 = vadd.f32 %v5240, %v5400
      %v5402 = vpop.f32.mrf.mxu0
      %v5403 = vpop.f32.mrf.mxu0
      %v5404 = vadd.f32 %v5243, %v5403
      %v5405 = vpop.f32.mrf.mxu0
      %5406 = vmatprep.mubr.bf16.mxu0 0
      %5407 = vmatmul.mubr.bf16.gmra.mxu0 %v5071
      %v5408 = vpop.f32.mrf.mxu0
      %v5409 = vadd.f32 %v5248, %v5408
      %v5410 = vpop.f32.mrf.mxu0
      %v5411 = vpop.f32.mrf.mxu0
      %v5412 = vadd.f32 %v5251, %v5411
      %v5413 = vpop.f32.mrf.mxu0
      %5414 = vmatprep.mubr.bf16.mxu0 0
      %5415 = vmatmul.mubr.bf16.gmra.mxu0 %v5072
      %v5416 = vpop.f32.mrf.mxu0
      %v5417 = vadd.f32 %v5256, %v5416
      %v5418 = vpop.f32.mrf.mxu0
      %v5419 = vpop.f32.mrf.mxu0
      %v5420 = vadd.f32 %v5259, %v5419
      %v5421 = vpop.f32.mrf.mxu0
      %5422 = vmatprep.mubr.bf16.mxu0 0
      %5423 = vmatmul.mubr.bf16.gmra.mxu0 %v5073
      %v5424 = vpop.f32.mrf.mxu0
      %v5425 = vadd.f32 %v5264, %v5424
      %v5426 = vpop.f32.mrf.mxu0
      %v5427 = vpop.f32.mrf.mxu0
      %v5428 = vadd.f32 %v5267, %v5427
      %v5429 = vpop.f32.mrf.mxu0
      %5430 = vmatprep.mubr.bf16.mxu0 0
      %5431 = vmatmul.mubr.bf16.gmra.mxu0 %v5074
      %v5432 = vpop.f32.mrf.mxu0
      %v5433 = vadd.f32 %v5272, %v5432
      %v5434 = vpop.f32.mrf.mxu0
      %v5435 = vpop.f32.mrf.mxu0
      %v5436 = vadd.f32 %v5275, %v5435
      %v5437 = vpop.f32.mrf.mxu0
      %5438 = vmatprep.mubr.bf16.mxu0 0
      %5439 = vmatmul.mubr.bf16.gmra.mxu0 %v5075
      %v5440 = vpop.f32.mrf.mxu0
      %v5441 = vadd.f32 %v5280, %v5440
      %v5442 = vpop.f32.mrf.mxu0
      %v5443 = vpop.f32.mrf.mxu0
      %v5444 = vadd.f32 %v5283, %v5443
      %v5445 = vpop.f32.mrf.mxu0
      %5446 = vmatprep.mubr.bf16.mxu0 0
      %5447 = vmatmul.mubr.bf16.gmra.mxu0 %v5076
      %v5448 = vpop.f32.mrf.mxu0
      %v5449 = vadd.f32 %v5288, %v5448
      %v5450 = vpop.f32.mrf.mxu0
      %v5451 = vpop.f32.mrf.mxu0
      %v5452 = vadd.f32 %v5291, %v5451
      %v5453 = vpop.f32.mrf.mxu0
      %5454 = vmatprep.mubr.bf16.mxu0 0
      %5455 = vmatmul.mubr.bf16.gmra.mxu0 %v5077
      %v5456 = vpop.f32.mrf.mxu0
      %v5457 = vadd.f32 %v5296, %v5456
      %v5458 = vpop.f32.mrf.mxu0
      %v5459 = vpop.f32.mrf.mxu0
      %v5460 = vadd.f32 %v5299, %v5459
      %v5461 = vpop.f32.mrf.mxu0
      %5462 = vdwg.mxu0
      %v5463 = vld [vmem:[#allocation4 + $0x2] sm:$0xff]
      %v5464 = vld [vmem:[#allocation4 + $0xa] sm:$0xff]
      %v5465 = vld [vmem:[#allocation4 + $0x12] sm:$0xff]
      %v5466 = vld [vmem:[#allocation4 + $0x1a] sm:$0xff]
      %v5467 = vld [vmem:[#allocation4 + $0x22] sm:$0xff]
      %v5468 = vld [vmem:[#allocation4 + $0x2a] sm:$0xff]
      %v5469 = vld [vmem:[#allocation4 + $0x32] sm:$0xff]
      %v5470 = vld [vmem:[#allocation4 + $0x3a] sm:$0xff]
      %v5471 = vld [vmem:[#allocation4 + $0x42] sm:$0xff]
      %v5472 = vld [vmem:[#allocation4 + $0x4a] sm:$0xff]
      %v5473 = vld [vmem:[#allocation4 + $0x52] sm:$0xff]
      %v5474 = vld [vmem:[#allocation4 + $0x5a] sm:$0xff]
      %v5475 = vld [vmem:[#allocation4 + $0x62] sm:$0xff]
      %v5476 = vld [vmem:[#allocation4 + $0x6a] sm:$0xff]
      %v5477 = vld [vmem:[#allocation4 + $0x72] sm:$0xff]
      %v5478 = vld [vmem:[#allocation4 + $0x7a] sm:$0xff]
      %v5479 = vld [vmem:[#allocation4 + $0x82] sm:$0xff]
      %v5480 = vld [vmem:[#allocation4 + $0x8a] sm:$0xff]
      %v5481 = vld [vmem:[#allocation4 + $0x92] sm:$0xff]
      %v5482 = vld [vmem:[#allocation4 + $0x9a] sm:$0xff]
      %v5483 = vpack.c.bf16 %v5464, %v5463
      %v5484 = vpack.c.bf16 %v5466, %v5465
      %v5485 = vpack.c.bf16 %v5468, %v5467
      %v5486 = vpack.c.bf16 %v5470, %v5469
      %v5487 = vpack.c.bf16 %v5472, %v5471
      %v5488 = vpack.c.bf16 %v5474, %v5473
      %v5489 = vpack.c.bf16 %v5476, %v5475
      %v5490 = vpack.c.bf16 %v5478, %v5477
      %v5491 = vpack.c.bf16 %v5480, %v5479
      %v5492 = vpack.c.bf16 %v5482, %v5481
      %s5493 = scalar_lea.vmem %s43, 128
      %v5494 = vld [vmem:[%s5493] sm:$0xf]
      %v5495 = vld [vmem:[%s5493 + $0x4] sm:$0xf]
      %v5496 = vld [vmem:[%s5493 + $0x8] sm:$0xf]
      %v5497 = vld [vmem:[%s5493 + $0xc] sm:$0xf]
      %v5498 = vld [vmem:[%s5493 + $0x10] sm:$0xf]
      %v5499 = vld [vmem:[%s5493 + $0x14] sm:$0xf]
      %v5500 = vld [vmem:[%s5493 + $0x18] sm:$0xf]
      %v5501 = vld [vmem:[%s5493 + $0x1c] sm:$0xf]
      %v5502 = vld [vmem:[%s5493 + $0x20] sm:$0xf]
      %v5503 = vld [vmem:[%s5493 + $0x24] sm:$0xf]
      %v5504 = vld [vmem:[%s5493 + $0x28] sm:$0xf]
      %v5505 = vld [vmem:[%s5493 + $0x2c] sm:$0xf]
      %v5506 = vld [vmem:[%s5493 + $0x30] sm:$0xf]
      %v5507 = vld [vmem:[%s5493 + $0x34] sm:$0xf]
      %v5508 = vld [vmem:[%s5493 + $0x38] sm:$0xf]
      %v5509 = vld [vmem:[%s5493 + $0x3c] sm:$0xf]
      %v5526 = vunpack.c.l.b16 %v5494
      %v5527 = vunpack.c.l.b16 %v5495
      %v5528 = vunpack.c.l.b16 %v5496
      %v5529 = vunpack.c.l.b16 %v5497
      %v5530 = vunpack.c.l.b16 %v5498
      %v5531 = vunpack.c.l.b16 %v5499
      %v5532 = vunpack.c.l.b16 %v5500
      %v5533 = vunpack.c.l.b16 %v5501
      %v5534 = vunpack.c.l.b16 %v5502
      %v5535 = vunpack.c.l.b16 %v5503
      %v5536 = vunpack.c.l.b16 %v5504
      %v5537 = vunpack.c.l.b16 %v5505
      %v5538 = vunpack.c.l.b16 %v5506
      %v5539 = vunpack.c.l.b16 %v5507
      %v5540 = vunpack.c.l.b16 %v5508
      %v5541 = vunpack.c.l.b16 %v5509
      %v5542 = vpack.c.b16 %v5527, %v5526
      %v5543 = vpack.c.b16 %v5529, %v5528
      %v5544 = vpack.c.b16 %v5531, %v5530
      %v5545 = vpack.c.b16 %v5533, %v5532
      %v5546 = vpack.c.b16 %v5535, %v5534
      %v5547 = vpack.c.b16 %v5537, %v5536
      %v5548 = vpack.c.b16 %v5539, %v5538
      %v5549 = vpack.c.b16 %v5541, %v5540
      %5558 = vmatprep.subr.bf16.mxu0 0
      %5559 = vmatpush1.bf16.msra.mxu0 %v5549
      %5560 = vmatprep.subr.bf16.mxu0 0
      %5561 = vmatpush1.bf16.msra.mxu0 %v5548
      %5562 = vmatprep.subr.bf16.mxu0 0
      %5563 = vmatpush1.bf16.msra.mxu0 %v5547
      %5564 = vmatprep.subr.bf16.mxu0 0
      %5565 = vmatpush1.bf16.msra.mxu0 %v5546
      %5566 = vmatprep.subr.bf16.mxu0 0
      %5567 = vmatpush1.bf16.msra.mxu0 %v5545
      %5568 = vmatprep.subr.bf16.mxu0 0
      %5569 = vmatpush1.bf16.msra.mxu0 %v5544
      %5570 = vmatprep.subr.bf16.mxu0 0
      %5571 = vmatpush1.bf16.msra.mxu0 %v5543
      %5572 = vmatprep.subr.bf16.mxu0 0
      %5573 = vmatpush1.bf16.msra.mxu0 %v5542
      %5574 = vmatprep.subr.bf16.mxu0 0
      %5575 = vmatpush2.bf16.msra.mxu0 0
      %5576 = vmatprep.subr.bf16.mxu0 0
      %5577 = vmatpush2.bf16.msra.mxu0 0
      %5578 = vmatprep.subr.bf16.mxu0 0
      %5579 = vmatpush2.bf16.msra.mxu0 0
      %5580 = vmatprep.subr.bf16.mxu0 0
      %5581 = vmatpush2.bf16.msra.mxu0 0
      %5582 = vmatprep.subr.bf16.mxu0 0
      %5583 = vmatpush2.bf16.msra.mxu0 0
      %5584 = vmatprep.subr.bf16.mxu0 0
      %5585 = vmatpush2.bf16.msra.mxu0 0
      %5586 = vmatprep.subr.bf16.mxu0 0
      %5587 = vmatpush2.bf16.msra.mxu0 0
      %5588 = vmatprep.subr.bf16.mxu0 0
      %5589 = vmatpush2.bf16.msra.mxu0 0
      %5590 = vmatprep.mubr.bf16.mxu0 0
      %5591 = vmatmul.mubr.bf16.gmra.mxu0 %v5483
      %v5592 = vpop.f32.mrf.mxu0
      %v5593 = vadd.f32 0.0, %v5592
      %v5594 = vpop.f32.mrf.mxu0
      %v5595 = vpop.f32.mrf.mxu0
      %v5596 = vadd.f32 0.0, %v5595
      %v5597 = vpop.f32.mrf.mxu0
      %5598 = vmatprep.mubr.bf16.mxu0 0
      %5599 = vmatmul.mubr.bf16.gmra.mxu0 %v5484
      %v5600 = vpop.f32.mrf.mxu0
      %v5601 = vadd.f32 0.0, %v5600
      %v5602 = vpop.f32.mrf.mxu0
      %v5603 = vpop.f32.mrf.mxu0
      %v5604 = vadd.f32 0.0, %v5603
      %v5605 = vpop.f32.mrf.mxu0
      %5606 = vmatprep.mubr.bf16.mxu0 0
      %5607 = vmatmul.mubr.bf16.gmra.mxu0 %v5485
      %v5608 = vpop.f32.mrf.mxu0
      %v5609 = vadd.f32 0.0, %v5608
      %v5610 = vpop.f32.mrf.mxu0
      %v5611 = vpop.f32.mrf.mxu0
      %v5612 = vadd.f32 0.0, %v5611
      %v5613 = vpop.f32.mrf.mxu0
      %5614 = vmatprep.mubr.bf16.mxu0 0
      %5615 = vmatmul.mubr.bf16.gmra.mxu0 %v5486
      %v5616 = vpop.f32.mrf.mxu0
      %v5617 = vadd.f32 0.0, %v5616
      %v5618 = vpop.f32.mrf.mxu0
      %v5619 = vpop.f32.mrf.mxu0
      %v5620 = vadd.f32 0.0, %v5619
      %v5621 = vpop.f32.mrf.mxu0
      %5622 = vmatprep.mubr.bf16.mxu0 0
      %5623 = vmatmul.mubr.bf16.gmra.mxu0 %v5487
      %v5624 = vpop.f32.mrf.mxu0
      %v5625 = vadd.f32 0.0, %v5624
      %v5626 = vpop.f32.mrf.mxu0
      %v5627 = vpop.f32.mrf.mxu0
      %v5628 = vadd.f32 0.0, %v5627
      %v5629 = vpop.f32.mrf.mxu0
      %5630 = vmatprep.mubr.bf16.mxu0 0
      %5631 = vmatmul.mubr.bf16.gmra.mxu0 %v5488
      %v5632 = vpop.f32.mrf.mxu0
      %v5633 = vadd.f32 0.0, %v5632
      %v5634 = vpop.f32.mrf.mxu0
      %v5635 = vpop.f32.mrf.mxu0
      %v5636 = vadd.f32 0.0, %v5635
      %v5637 = vpop.f32.mrf.mxu0
      %5638 = vmatprep.mubr.bf16.mxu0 0
      %5639 = vmatmul.mubr.bf16.gmra.mxu0 %v5489
      %v5640 = vpop.f32.mrf.mxu0
      %v5641 = vadd.f32 0.0, %v5640
      %v5642 = vpop.f32.mrf.mxu0
      %v5643 = vpop.f32.mrf.mxu0
      %v5644 = vadd.f32 0.0, %v5643
      %v5645 = vpop.f32.mrf.mxu0
      %5646 = vmatprep.mubr.bf16.mxu0 0
      %5647 = vmatmul.mubr.bf16.gmra.mxu0 %v5490
      %v5648 = vpop.f32.mrf.mxu0
      %v5649 = vadd.f32 0.0, %v5648
      %v5650 = vpop.f32.mrf.mxu0
      %v5651 = vpop.f32.mrf.mxu0
      %v5652 = vadd.f32 0.0, %v5651
      %v5653 = vpop.f32.mrf.mxu0
      %5654 = vmatprep.mubr.bf16.mxu0 0
      %5655 = vmatmul.mubr.bf16.gmra.mxu0 %v5491
      %v5656 = vpop.f32.mrf.mxu0
      %v5657 = vadd.f32 0.0, %v5656
      %v5658 = vpop.f32.mrf.mxu0
      %v5659 = vpop.f32.mrf.mxu0
      %v5660 = vadd.f32 0.0, %v5659
      %v5661 = vpop.f32.mrf.mxu0
      %5662 = vmatprep.mubr.bf16.mxu0 0
      %5663 = vmatmul.mubr.bf16.gmra.mxu0 %v5492
      %v5664 = vpop.f32.mrf.mxu0
      %v5665 = vadd.f32 0.0, %v5664
      %v5666 = vpop.f32.mrf.mxu0
      %v5667 = vpop.f32.mrf.mxu0
      %v5668 = vadd.f32 0.0, %v5667
      %v5669 = vpop.f32.mrf.mxu0
      %5670 = vdwg.mxu0
      %v5671 = vadd.f32 %v5385, %v5593
      %v5672 = vadd.f32 %v5388, %v5596
      %v5673 = vadd.f32 %v5393, %v5601
      %v5674 = vadd.f32 %v5396, %v5604
      %v5675 = vadd.f32 %v5401, %v5609
      %v5676 = vadd.f32 %v5404, %v5612
      %v5677 = vadd.f32 %v5409, %v5617
      %v5678 = vadd.f32 %v5412, %v5620
      %v5679 = vadd.f32 %v5417, %v5625
      %v5680 = vadd.f32 %v5420, %v5628
      %v5681 = vadd.f32 %v5425, %v5633
      %v5682 = vadd.f32 %v5428, %v5636
      %v5683 = vadd.f32 %v5433, %v5641
      %v5684 = vadd.f32 %v5436, %v5644
      %v5685 = vadd.f32 %v5441, %v5649
      %v5686 = vadd.f32 %v5444, %v5652
      %v5687 = vadd.f32 %v5449, %v5657
      %v5688 = vadd.f32 %v5452, %v5660
      %v5689 = vadd.f32 %v5457, %v5665
      %v5690 = vadd.f32 %v5460, %v5668
      %v5691 = vld [vmem:[%s45] sm:$0x1]
      %v5693 = vlaneseq
      %v5694 = vshrl.u32 %v5693, 7
      %v5695 = vsub.s32 0, %v5694
      %v5696 = vrot.slane %v5691, %v5695
      %v5698 = vmul.f32 %v5671, %v5696
      %v5699 = vmul.f32 %v5672, %v5696
      %v5700 = vmul.f32 %v5673, %v5696
      %v5701 = vmul.f32 %v5674, %v5696
      %v5702 = vmul.f32 %v5675, %v5696
      %v5703 = vmul.f32 %v5676, %v5696
      %v5704 = vmul.f32 %v5677, %v5696
      %v5705 = vmul.f32 %v5678, %v5696
      %v5706 = vmul.f32 %v5679, %v5696
      %v5707 = vmul.f32 %v5680, %v5696
      %v5708 = vmul.f32 %v5681, %v5696
      %v5709 = vmul.f32 %v5682, %v5696
      %v5710 = vmul.f32 %v5683, %v5696
      %v5711 = vmul.f32 %v5684, %v5696
      %v5712 = vmul.f32 %v5685, %v5696
      %v5713 = vmul.f32 %v5686, %v5696
      %v5714 = vmul.f32 %v5687, %v5696
      %v5715 = vmul.f32 %v5688, %v5696
      %v5716 = vmul.f32 %v5689, %v5696
      %v5717 = vmul.f32 %v5690, %v5696
      %v5718 = vld [vmem:[%s47] sm:$0x1]
      %v5720 = vlaneseq
      %v5721 = vshrl.u32 %v5720, 7
      %v5722 = vsub.s32 0, %v5721
      %v5723 = vrot.slane %v5718, %v5722
      %v5725 = vadd.f32 %v5698, %v5723
      %v5726 = vadd.f32 %v5699, %v5723
      %v5727 = vadd.f32 %v5700, %v5723
      %v5728 = vadd.f32 %v5701, %v5723
      %v5729 = vadd.f32 %v5702, %v5723
      %v5730 = vadd.f32 %v5703, %v5723
      %v5731 = vadd.f32 %v5704, %v5723
      %v5732 = vadd.f32 %v5705, %v5723
      %v5733 = vadd.f32 %v5706, %v5723
      %v5734 = vadd.f32 %v5707, %v5723
      %v5735 = vadd.f32 %v5708, %v5723
      %v5736 = vadd.f32 %v5709, %v5723
      %v5737 = vadd.f32 %v5710, %v5723
      %v5738 = vadd.f32 %v5711, %v5723
      %v5739 = vadd.f32 %v5712, %v5723
      %v5740 = vadd.f32 %v5713, %v5723
      %v5741 = vadd.f32 %v5714, %v5723
      %v5742 = vadd.f32 %v5715, %v5723
      %v5743 = vadd.f32 %v5716, %v5723
      %v5744 = vadd.f32 %v5717, %v5723
      %v5745 = vpack.c.bf16 %v4204, %v4203
      %v5746 = vpack.c.bf16 %v4206, %v4205
      %v5747 = vpack.c.bf16 %v4208, %v4207
      %v5748 = vpack.c.bf16 %v4210, %v4209
      %v5749 = vpack.c.bf16 %v4212, %v4211
      %v5750 = vpack.c.bf16 %v4214, %v4213
      %v5751 = vpack.c.bf16 %v4216, %v4215
      %v5752 = vpack.c.bf16 %v4218, %v4217
      %v5753 = vpack.c.bf16 %v4220, %v4219
      %v5754 = vpack.c.bf16 %v4222, %v4221
      %v5755 = vld [vmem:[%s49] sm:$0xf]
      %v5756 = vld [vmem:[%s49 + $0x4] sm:$0xf]
      %v5757 = vld [vmem:[%s49 + $0x8] sm:$0xf]
      %v5758 = vld [vmem:[%s49 + $0xc] sm:$0xf]
      %v5759 = vld [vmem:[%s49 + $0x10] sm:$0xf]
      %v5760 = vld [vmem:[%s49 + $0x14] sm:$0xf]
      %v5761 = vld [vmem:[%s49 + $0x18] sm:$0xf]
      %v5762 = vld [vmem:[%s49 + $0x1c] sm:$0xf]
      %v5763 = vld [vmem:[%s51] sm:$0x1]
      %v5765 = vlaneseq
      %v5766 = vshrl.u32 %v5765, 7
      %v5767 = vsub.s32 0, %v5766
      %v5768 = vrot.slane %v5763, %v5767
      %v5778 = vunpack.c.l.b16 %v5755
      %v5779 = vunpack.c.l.b16 %v5756
      %v5780 = vunpack.c.l.b16 %v5757
      %v5781 = vunpack.c.l.b16 %v5758
      %v5782 = vunpack.c.l.b16 %v5759
      %v5783 = vunpack.c.l.b16 %v5760
      %v5784 = vunpack.c.l.b16 %v5761
      %v5785 = vunpack.c.l.b16 %v5762
      %v5786 = vpack.c.b16 %v5779, %v5778
      %v5787 = vpack.c.b16 %v5781, %v5780
      %v5788 = vpack.c.b16 %v5783, %v5782
      %v5789 = vpack.c.b16 %v5785, %v5784
      %v5795 = vsel %vm3283, %v5745, 0
      %v5798 = vsel %vm3283, %v5746, 0
      %v5801 = vsel %vm3283, %v5747, 0
      %v5804 = vsel %vm3283, %v5748, 0
      %v5807 = vsel %vm3283, %v5749, 0
      %v5810 = vsel %vm3283, %v5750, 0
      %v5813 = vsel %vm3283, %v5751, 0
      %v5816 = vsel %vm3283, %v5752, 0
      %v5819 = vsel %vm3283, %v5753, 0
      %v5822 = vsel %vm3283, %v5754, 0
      %5824 = vmatprep.subr.bf16.mxu0 0
      %5825 = vmatpush1.bf16.msra.mxu0 0
      %5826 = vmatprep.subr.bf16.mxu0 0
      %5827 = vmatpush1.bf16.msra.mxu0 0
      %5828 = vmatprep.subr.bf16.mxu0 0
      %5829 = vmatpush1.bf16.msra.mxu0 0
      %5830 = vmatprep.subr.bf16.mxu0 0
      %5831 = vmatpush1.bf16.msra.mxu0 0
      %5832 = vmatprep.subr.bf16.mxu0 0
      %5833 = vmatpush1.bf16.msra.mxu0 %v5789
      %5834 = vmatprep.subr.bf16.mxu0 0
      %5835 = vmatpush1.bf16.msra.mxu0 %v5788
      %5836 = vmatprep.subr.bf16.mxu0 0
      %5837 = vmatpush1.bf16.msra.mxu0 %v5787
      %5838 = vmatprep.subr.bf16.mxu0 0
      %5839 = vmatpush1.bf16.msra.mxu0 %v5786
      %5840 = vmatprep.subr.bf16.mxu0 0
      %5841 = vmatpush2.bf16.msra.mxu0 0
      %5842 = vmatprep.subr.bf16.mxu0 0
      %5843 = vmatpush2.bf16.msra.mxu0 0
      %5844 = vmatprep.subr.bf16.mxu0 0
      %5845 = vmatpush2.bf16.msra.mxu0 0
      %5846 = vmatprep.subr.bf16.mxu0 0
      %5847 = vmatpush2.bf16.msra.mxu0 0
      %5848 = vmatprep.subr.bf16.mxu0 0
      %5849 = vmatpush2.bf16.msra.mxu0 0
      %5850 = vmatprep.subr.bf16.mxu0 0
      %5851 = vmatpush2.bf16.msra.mxu0 0
      %5852 = vmatprep.subr.bf16.mxu0 0
      %5853 = vmatpush2.bf16.msra.mxu0 0
      %5854 = vmatprep.subr.bf16.mxu0 0
      %5855 = vmatpush2.bf16.msra.mxu0 0
      %5856 = vmatprep.mubr.bf16.mxu0 0
      %5857 = vmatmul.mubr.bf16.gmra.mxu0 %v5795
      %v5858 = vpop.f32.mrf.mxu0
      %v5859 = vadd.f32 %v5768, %v5858
      %v5860 = vpop.f32.mrf.mxu0
      %v5861 = vpop.f32.mrf.mxu0
      %v5862 = vadd.f32 %v5768, %v5861
      %v5863 = vpop.f32.mrf.mxu0
      %5864 = vmatprep.mubr.bf16.mxu0 0
      %5865 = vmatmul.mubr.bf16.gmra.mxu0 %v5798
      %v5866 = vpop.f32.mrf.mxu0
      %v5867 = vadd.f32 %v5768, %v5866
      %v5868 = vpop.f32.mrf.mxu0
      %v5869 = vpop.f32.mrf.mxu0
      %v5870 = vadd.f32 %v5768, %v5869
      %v5871 = vpop.f32.mrf.mxu0
      %5872 = vmatprep.mubr.bf16.mxu0 0
      %5873 = vmatmul.mubr.bf16.gmra.mxu0 %v5801
      %v5874 = vpop.f32.mrf.mxu0
      %v5875 = vadd.f32 %v5768, %v5874
      %v5876 = vpop.f32.mrf.mxu0
      %v5877 = vpop.f32.mrf.mxu0
      %v5878 = vadd.f32 %v5768, %v5877
      %v5879 = vpop.f32.mrf.mxu0
      %5880 = vmatprep.mubr.bf16.mxu0 0
      %5881 = vmatmul.mubr.bf16.gmra.mxu0 %v5804
      %v5882 = vpop.f32.mrf.mxu0
      %v5883 = vadd.f32 %v5768, %v5882
      %v5884 = vpop.f32.mrf.mxu0
      %v5885 = vpop.f32.mrf.mxu0
      %v5886 = vadd.f32 %v5768, %v5885
      %v5887 = vpop.f32.mrf.mxu0
      %5888 = vmatprep.mubr.bf16.mxu0 0
      %5889 = vmatmul.mubr.bf16.gmra.mxu0 %v5807
      %v5890 = vpop.f32.mrf.mxu0
      %v5891 = vadd.f32 %v5768, %v5890
      %v5892 = vpop.f32.mrf.mxu0
      %v5893 = vpop.f32.mrf.mxu0
      %v5894 = vadd.f32 %v5768, %v5893
      %v5895 = vpop.f32.mrf.mxu0
      %5896 = vmatprep.mubr.bf16.mxu0 0
      %5897 = vmatmul.mubr.bf16.gmra.mxu0 %v5810
      %v5898 = vpop.f32.mrf.mxu0
      %v5899 = vadd.f32 %v5768, %v5898
      %v5900 = vpop.f32.mrf.mxu0
      %v5901 = vpop.f32.mrf.mxu0
      %v5902 = vadd.f32 %v5768, %v5901
      %v5903 = vpop.f32.mrf.mxu0
      %5904 = vmatprep.mubr.bf16.mxu0 0
      %5905 = vmatmul.mubr.bf16.gmra.mxu0 %v5813
      %v5906 = vpop.f32.mrf.mxu0
      %v5907 = vadd.f32 %v5768, %v5906
      %v5908 = vpop.f32.mrf.mxu0
      %v5909 = vpop.f32.mrf.mxu0
      %v5910 = vadd.f32 %v5768, %v5909
      %v5911 = vpop.f32.mrf.mxu0
      %5912 = vmatprep.mubr.bf16.mxu0 0
      %5913 = vmatmul.mubr.bf16.gmra.mxu0 %v5816
      %v5914 = vpop.f32.mrf.mxu0
      %v5915 = vadd.f32 %v5768, %v5914
      %v5916 = vpop.f32.mrf.mxu0
      %v5917 = vpop.f32.mrf.mxu0
      %v5918 = vadd.f32 %v5768, %v5917
      %v5919 = vpop.f32.mrf.mxu0
      %5920 = vmatprep.mubr.bf16.mxu0 0
      %5921 = vmatmul.mubr.bf16.gmra.mxu0 %v5819
      %v5922 = vpop.f32.mrf.mxu0
      %v5923 = vadd.f32 %v5768, %v5922
      %v5924 = vpop.f32.mrf.mxu0
      %v5925 = vpop.f32.mrf.mxu0
      %v5926 = vadd.f32 %v5768, %v5925
      %v5927 = vpop.f32.mrf.mxu0
      %5928 = vmatprep.mubr.bf16.mxu0 0
      %5929 = vmatmul.mubr.bf16.gmra.mxu0 %v5822
      %v5930 = vpop.f32.mrf.mxu0
      %v5931 = vadd.f32 %v5768, %v5930
      %v5932 = vpop.f32.mrf.mxu0
      %v5933 = vpop.f32.mrf.mxu0
      %v5934 = vadd.f32 %v5768, %v5933
      %v5935 = vpop.f32.mrf.mxu0
      %5936 = vdwg.mxu0
      %v5937 = vadd.f32 %v5725, %v5859
      %v5938 = vadd.f32 %v5726, %v5862
      %v5939 = vadd.f32 %v5727, %v5867
      %v5940 = vadd.f32 %v5728, %v5870
      %v5941 = vadd.f32 %v5729, %v5875
      %v5942 = vadd.f32 %v5730, %v5878
      %v5943 = vadd.f32 %v5731, %v5883
      %v5944 = vadd.f32 %v5732, %v5886
      %v5945 = vadd.f32 %v5733, %v5891
      %v5946 = vadd.f32 %v5734, %v5894
      %v5947 = vadd.f32 %v5735, %v5899
      %v5948 = vadd.f32 %v5736, %v5902
      %v5949 = vadd.f32 %v5737, %v5907
      %v5950 = vadd.f32 %v5738, %v5910
      %v5951 = vadd.f32 %v5739, %v5915
      %v5952 = vadd.f32 %v5740, %v5918
      %v5953 = vadd.f32 %v5741, %v5923
      %v5954 = vadd.f32 %v5742, %v5926
      %v5955 = vadd.f32 %v5743, %v5931
      %v5956 = vadd.f32 %v5744, %v5934
      %v5957 = vmax.f32 %v5937, 0.0
      %v5958 = vmax.f32 %v5938, 0.0
      %v5959 = vmax.f32 %v5939, 0.0
      %v5960 = vmax.f32 %v5940, 0.0
      %v5961 = vmax.f32 %v5941, 0.0
      %v5962 = vmax.f32 %v5942, 0.0
      %v5963 = vmax.f32 %v5943, 0.0
      %v5964 = vmax.f32 %v5944, 0.0
      %v5965 = vmax.f32 %v5945, 0.0
      %v5966 = vmax.f32 %v5946, 0.0
      %v5967 = vmax.f32 %v5947, 0.0
      %v5968 = vmax.f32 %v5948, 0.0
      %v5969 = vmax.f32 %v5949, 0.0
      %v5970 = vmax.f32 %v5950, 0.0
      %v5971 = vmax.f32 %v5951, 0.0
      %v5972 = vmax.f32 %v5952, 0.0
      %v5973 = vmax.f32 %v5953, 0.0
      %v5974 = vmax.f32 %v5954, 0.0
      %v5975 = vmax.f32 %v5955, 0.0
      %v5976 = vmax.f32 %v5956, 0.0
      %v5977 = vsel %vm1579, %v5957, 0.0
      %v5978 = vsel %vm1580, %v5958, 0.0
      %v5979 = vsel %vm1581, %v5959, 0.0
      %v5980 = vsel %vm1582, %v5960, 0.0
      %v5981 = vsel %vm1583, %v5961, 0.0
      %v5982 = vsel %vm1584, %v5962, 0.0
      %v5983 = vsel %vm1585, %v5963, 0.0
      %v5984 = vsel %vm1586, %v5964, 0.0
      %v5985 = vsel %vm1587, %v5965, 0.0
      %v5986 = vsel %vm1588, %v5966, 0.0
      %v5987 = vsel %vm1589, %v5967, 0.0
      %v5988 = vsel %vm1590, %v5968, 0.0
      %v5989 = vsel %vm1591, %v5969, 0.0
      %v5990 = vsel %vm1592, %v5970, 0.0
      %v5991 = vsel %vm1593, %v5971, 0.0
      %v5992 = vsel %vm1594, %v5972, 0.0
      %v5993 = vsel %vm1595, %v5973, 0.0
      %v5994 = vsel %vm1596, %v5974, 0.0
      %v5995 = vsel %vm1597, %v5975, 0.0
      %v5996 = vsel %vm1598, %v5976, 0.0
      %5997 = vst [vmem:[#allocation4] sm:$0x1] 0.0
      %5998 = vst [vmem:[#allocation4 + $0xa1] sm:$0x1] 0.0
      %5999 = vst [vmem:[#allocation4 + $0x1] sm:$0xff] %v5977
      %6000 = vst [vmem:[#allocation4 + $0x9] sm:$0xff] %v5978
      %6001 = vst [vmem:[#allocation4 + $0x11] sm:$0xff] %v5979
      %6002 = vst [vmem:[#allocation4 + $0x19] sm:$0xff] %v5980
      %6003 = vst [vmem:[#allocation4 + $0x21] sm:$0xff] %v5981
      %6004 = vst [vmem:[#allocation4 + $0x29] sm:$0xff] %v5982
      %6005 = vst [vmem:[#allocation4 + $0x31] sm:$0xff] %v5983
      %6006 = vst [vmem:[#allocation4 + $0x39] sm:$0xff] %v5984
      %6007 = vst [vmem:[#allocation4 + $0x41] sm:$0xff] %v5985
      %6008 = vst [vmem:[#allocation4 + $0x49] sm:$0xff] %v5986
      %6009 = vst [vmem:[#allocation4 + $0x51] sm:$0xff] %v5987
      %6010 = vst [vmem:[#allocation4 + $0x59] sm:$0xff] %v5988
      %6011 = vst [vmem:[#allocation4 + $0x61] sm:$0xff] %v5989
      %6012 = vst [vmem:[#allocation4 + $0x69] sm:$0xff] %v5990
      %6013 = vst [vmem:[#allocation4 + $0x71] sm:$0xff] %v5991
      %6014 = vst [vmem:[#allocation4 + $0x79] sm:$0xff] %v5992
      %6015 = vst [vmem:[#allocation4 + $0x81] sm:$0xff] %v5993
      %6016 = vst [vmem:[#allocation4 + $0x89] sm:$0xff] %v5994
      %6017 = vst [vmem:[#allocation4 + $0x91] sm:$0xff] %v5995
      %6018 = vst [vmem:[#allocation4 + $0x99] sm:$0xff] %v5996
      %v6019 = vpack.c.bf16 %v5978, %v5977
      %v6020 = vpack.c.bf16 %v5980, %v5979
      %v6021 = vpack.c.bf16 %v5982, %v5981
      %v6022 = vpack.c.bf16 %v5984, %v5983
      %v6023 = vpack.c.bf16 %v5986, %v5985
      %v6024 = vpack.c.bf16 %v5988, %v5987
      %v6025 = vpack.c.bf16 %v5990, %v5989
      %v6026 = vpack.c.bf16 %v5992, %v5991
      %v6027 = vpack.c.bf16 %v5994, %v5993
      %v6028 = vpack.c.bf16 %v5996, %v5995
      %s6029 = scalar_lea.vmem %s53, 128
      %v6030 = vld [vmem:[%s6029] sm:$0xff]
      %v6031 = vld [vmem:[%s6029 + $0x8] sm:$0xff]
      %v6032 = vld [vmem:[%s6029 + $0x10] sm:$0xff]
      %v6033 = vld [vmem:[%s6029 + $0x18] sm:$0xff]
      %v6034 = vld [vmem:[%s6029 + $0x20] sm:$0xff]
      %v6035 = vld [vmem:[%s6029 + $0x28] sm:$0xff]
      %v6036 = vld [vmem:[%s6029 + $0x30] sm:$0xff]
      %v6037 = vld [vmem:[%s6029 + $0x38] sm:$0xff]
      %v6038 = vld [vmem:[%s6029 + $0x40] sm:$0xff]
      %v6039 = vld [vmem:[%s6029 + $0x48] sm:$0xff]
      %v6040 = vld [vmem:[%s6029 + $0x50] sm:$0xff]
      %v6041 = vld [vmem:[%s6029 + $0x58] sm:$0xff]
      %v6042 = vld [vmem:[%s6029 + $0x60] sm:$0xff]
      %v6043 = vld [vmem:[%s6029 + $0x68] sm:$0xff]
      %v6044 = vld [vmem:[%s6029 + $0x70] sm:$0xff]
      %v6045 = vld [vmem:[%s6029 + $0x78] sm:$0xff]
      %v6046 = vld [vmem:[#allocation4] sm:$0xff]
      %v6047 = vld [vmem:[#allocation4 + $0x8] sm:$0xff]
      %v6048 = vld [vmem:[#allocation4 + $0x10] sm:$0xff]
      %v6049 = vld [vmem:[#allocation4 + $0x18] sm:$0xff]
      %v6050 = vld [vmem:[#allocation4 + $0x20] sm:$0xff]
      %v6051 = vld [vmem:[#allocation4 + $0x28] sm:$0xff]
      %v6052 = vld [vmem:[#allocation4 + $0x30] sm:$0xff]
      %v6053 = vld [vmem:[#allocation4 + $0x38] sm:$0xff]
      %v6054 = vld [vmem:[#allocation4 + $0x40] sm:$0xff]
      %v6055 = vld [vmem:[#allocation4 + $0x48] sm:$0xff]
      %v6056 = vld [vmem:[#allocation4 + $0x50] sm:$0xff]
      %v6057 = vld [vmem:[#allocation4 + $0x58] sm:$0xff]
      %v6058 = vld [vmem:[#allocation4 + $0x60] sm:$0xff]
      %v6059 = vld [vmem:[#allocation4 + $0x68] sm:$0xff]
      %v6060 = vld [vmem:[#allocation4 + $0x70] sm:$0xff]
      %v6061 = vld [vmem:[#allocation4 + $0x78] sm:$0xff]
      %v6062 = vld [vmem:[#allocation4 + $0x80] sm:$0xff]
      %v6063 = vld [vmem:[#allocation4 + $0x88] sm:$0xff]
      %v6064 = vld [vmem:[#allocation4 + $0x90] sm:$0xff]
      %v6065 = vld [vmem:[#allocation4 + $0x98] sm:$0xff]
      %v6066 = vpack.c.bf16 %v6047, %v6046
      %v6067 = vpack.c.bf16 %v6049, %v6048
      %v6068 = vpack.c.bf16 %v6051, %v6050
      %v6069 = vpack.c.bf16 %v6053, %v6052
      %v6070 = vpack.c.bf16 %v6055, %v6054
      %v6071 = vpack.c.bf16 %v6057, %v6056
      %v6072 = vpack.c.bf16 %v6059, %v6058
      %v6073 = vpack.c.bf16 %v6061, %v6060
      %v6074 = vpack.c.bf16 %v6063, %v6062
      %v6075 = vpack.c.bf16 %v6065, %v6064
      %v6076 = vld [vmem:[%s53] sm:$0xff]
      %v6077 = vld [vmem:[%s53 + $0x8] sm:$0xff]
      %v6078 = vld [vmem:[%s53 + $0x10] sm:$0xff]
      %v6079 = vld [vmem:[%s53 + $0x18] sm:$0xff]
      %v6080 = vld [vmem:[%s53 + $0x20] sm:$0xff]
      %v6081 = vld [vmem:[%s53 + $0x28] sm:$0xff]
      %v6082 = vld [vmem:[%s53 + $0x30] sm:$0xff]
      %v6083 = vld [vmem:[%s53 + $0x38] sm:$0xff]
      %v6084 = vld [vmem:[%s53 + $0x40] sm:$0xff]
      %v6085 = vld [vmem:[%s53 + $0x48] sm:$0xff]
      %v6086 = vld [vmem:[%s53 + $0x50] sm:$0xff]
      %v6087 = vld [vmem:[%s53 + $0x58] sm:$0xff]
      %v6088 = vld [vmem:[%s53 + $0x60] sm:$0xff]
      %v6089 = vld [vmem:[%s53 + $0x68] sm:$0xff]
      %v6090 = vld [vmem:[%s53 + $0x70] sm:$0xff]
      %v6091 = vld [vmem:[%s53 + $0x78] sm:$0xff]
      %v6108 = vunpack.c.l.b16 %v6076
      %v6109 = vunpack.c.h.b16 %v6076
      %v6110 = vunpack.c.l.b16 %v6077
      %v6111 = vunpack.c.h.b16 %v6077
      %v6112 = vunpack.c.l.b16 %v6078
      %v6113 = vunpack.c.h.b16 %v6078
      %v6114 = vunpack.c.l.b16 %v6079
      %v6115 = vunpack.c.h.b16 %v6079
      %v6116 = vunpack.c.l.b16 %v6080
      %v6117 = vunpack.c.h.b16 %v6080
      %v6118 = vunpack.c.l.b16 %v6081
      %v6119 = vunpack.c.h.b16 %v6081
      %v6120 = vunpack.c.l.b16 %v6082
      %v6121 = vunpack.c.h.b16 %v6082
      %v6122 = vunpack.c.l.b16 %v6083
      %v6123 = vunpack.c.h.b16 %v6083
      %v6124 = vunpack.c.l.b16 %v6084
      %v6125 = vunpack.c.h.b16 %v6084
      %v6126 = vunpack.c.l.b16 %v6085
      %v6127 = vunpack.c.h.b16 %v6085
      %v6128 = vunpack.c.l.b16 %v6086
      %v6129 = vunpack.c.h.b16 %v6086
      %v6130 = vunpack.c.l.b16 %v6087
      %v6131 = vunpack.c.h.b16 %v6087
      %v6132 = vunpack.c.l.b16 %v6088
      %v6133 = vunpack.c.h.b16 %v6088
      %v6134 = vunpack.c.l.b16 %v6089
      %v6135 = vunpack.c.h.b16 %v6089
      %v6136 = vunpack.c.l.b16 %v6090
      %v6137 = vunpack.c.h.b16 %v6090
      %v6138 = vunpack.c.l.b16 %v6091
      %v6139 = vunpack.c.h.b16 %v6091
      %v6140 = vpack.c.b16 %v6110, %v6108
      %v6141 = vpack.c.b16 %v6111, %v6109
      %v6142 = vpack.c.b16 %v6114, %v6112
      %v6143 = vpack.c.b16 %v6115, %v6113
      %v6144 = vpack.c.b16 %v6118, %v6116
      %v6145 = vpack.c.b16 %v6119, %v6117
      %v6146 = vpack.c.b16 %v6122, %v6120
      %v6147 = vpack.c.b16 %v6123, %v6121
      %v6148 = vpack.c.b16 %v6126, %v6124
      %v6149 = vpack.c.b16 %v6127, %v6125
      %v6150 = vpack.c.b16 %v6130, %v6128
      %v6151 = vpack.c.b16 %v6131, %v6129
      %v6152 = vpack.c.b16 %v6134, %v6132
      %v6153 = vpack.c.b16 %v6135, %v6133
      %v6154 = vpack.c.b16 %v6138, %v6136
      %v6155 = vpack.c.b16 %v6139, %v6137
      %6172 = vmatprep.subr.bf16.mxu0 %v6155
      %6173 = vmatpush1.bf16.msra.mxu0 %v6154
      %6174 = vmatprep.subr.bf16.mxu0 %v6153
      %6175 = vmatpush1.bf16.msra.mxu0 %v6152
      %6176 = vmatprep.subr.bf16.mxu0 %v6151
      %6177 = vmatpush1.bf16.msra.mxu0 %v6150
      %6178 = vmatprep.subr.bf16.mxu0 %v6149
      %6179 = vmatpush1.bf16.msra.mxu0 %v6148
      %6180 = vmatprep.subr.bf16.mxu0 %v6147
      %6181 = vmatpush1.bf16.msra.mxu0 %v6146
      %6182 = vmatprep.subr.bf16.mxu0 %v6145
      %6183 = vmatpush1.bf16.msra.mxu0 %v6144
      %6184 = vmatprep.subr.bf16.mxu0 %v6143
      %6185 = vmatpush1.bf16.msra.mxu0 %v6142
      %6186 = vmatprep.subr.bf16.mxu0 %v6141
      %6187 = vmatpush1.bf16.msra.mxu0 %v6140
      %6188 = vmatprep.subr.bf16.mxu0 0
      %6189 = vmatpush2.bf16.msra.mxu0 0
      %6190 = vmatprep.subr.bf16.mxu0 0
      %6191 = vmatpush2.bf16.msra.mxu0 0
      %6192 = vmatprep.subr.bf16.mxu0 0
      %6193 = vmatpush2.bf16.msra.mxu0 0
      %6194 = vmatprep.subr.bf16.mxu0 0
      %6195 = vmatpush2.bf16.msra.mxu0 0
      %6196 = vmatprep.subr.bf16.mxu0 0
      %6197 = vmatpush2.bf16.msra.mxu0 0
      %6198 = vmatprep.subr.bf16.mxu0 0
      %6199 = vmatpush2.bf16.msra.mxu0 0
      %6200 = vmatprep.subr.bf16.mxu0 0
      %6201 = vmatpush2.bf16.msra.mxu0 0
      %6202 = vmatprep.subr.bf16.mxu0 0
      %6203 = vmatpush2.bf16.msra.mxu0 0
      %6204 = vmatprep.mubr.bf16.mxu0 0
      %6205 = vmatmul.mubr.bf16.gmra.mxu0 %v6066
      %v6206 = vpop.f32.mrf.mxu0
      %v6207 = vadd.f32 0.0, %v6206
      %v6208 = vpop.f32.mrf.mxu0
      %v6209 = vadd.f32 0.0, %v6208
      %v6210 = vpop.f32.mrf.mxu0
      %v6211 = vadd.f32 0.0, %v6210
      %v6212 = vpop.f32.mrf.mxu0
      %v6213 = vadd.f32 0.0, %v6212
      %6214 = vmatprep.mubr.bf16.mxu0 0
      %6215 = vmatmul.mubr.bf16.gmra.mxu0 %v6067
      %v6216 = vpop.f32.mrf.mxu0
      %v6217 = vadd.f32 0.0, %v6216
      %v6218 = vpop.f32.mrf.mxu0
      %v6219 = vadd.f32 0.0, %v6218
      %v6220 = vpop.f32.mrf.mxu0
      %v6221 = vadd.f32 0.0, %v6220
      %v6222 = vpop.f32.mrf.mxu0
      %v6223 = vadd.f32 0.0, %v6222
      %6224 = vmatprep.mubr.bf16.mxu0 0
      %6225 = vmatmul.mubr.bf16.gmra.mxu0 %v6068
      %v6226 = vpop.f32.mrf.mxu0
      %v6227 = vadd.f32 0.0, %v6226
      %v6228 = vpop.f32.mrf.mxu0
      %v6229 = vadd.f32 0.0, %v6228
      %v6230 = vpop.f32.mrf.mxu0
      %v6231 = vadd.f32 0.0, %v6230
      %v6232 = vpop.f32.mrf.mxu0
      %v6233 = vadd.f32 0.0, %v6232
      %6234 = vmatprep.mubr.bf16.mxu0 0
      %6235 = vmatmul.mubr.bf16.gmra.mxu0 %v6069
      %v6236 = vpop.f32.mrf.mxu0
      %v6237 = vadd.f32 0.0, %v6236
      %v6238 = vpop.f32.mrf.mxu0
      %v6239 = vadd.f32 0.0, %v6238
      %v6240 = vpop.f32.mrf.mxu0
      %v6241 = vadd.f32 0.0, %v6240
      %v6242 = vpop.f32.mrf.mxu0
      %v6243 = vadd.f32 0.0, %v6242
      %6244 = vmatprep.mubr.bf16.mxu0 0
      %6245 = vmatmul.mubr.bf16.gmra.mxu0 %v6070
      %v6246 = vpop.f32.mrf.mxu0
      %v6247 = vadd.f32 0.0, %v6246
      %v6248 = vpop.f32.mrf.mxu0
      %v6249 = vadd.f32 0.0, %v6248
      %v6250 = vpop.f32.mrf.mxu0
      %v6251 = vadd.f32 0.0, %v6250
      %v6252 = vpop.f32.mrf.mxu0
      %v6253 = vadd.f32 0.0, %v6252
      %6254 = vmatprep.mubr.bf16.mxu0 0
      %6255 = vmatmul.mubr.bf16.gmra.mxu0 %v6071
      %v6256 = vpop.f32.mrf.mxu0
      %v6257 = vadd.f32 0.0, %v6256
      %v6258 = vpop.f32.mrf.mxu0
      %v6259 = vadd.f32 0.0, %v6258
      %v6260 = vpop.f32.mrf.mxu0
      %v6261 = vadd.f32 0.0, %v6260
      %v6262 = vpop.f32.mrf.mxu0
      %v6263 = vadd.f32 0.0, %v6262
      %6264 = vmatprep.mubr.bf16.mxu0 0
      %6265 = vmatmul.mubr.bf16.gmra.mxu0 %v6072
      %v6266 = vpop.f32.mrf.mxu0
      %v6267 = vadd.f32 0.0, %v6266
      %v6268 = vpop.f32.mrf.mxu0
      %v6269 = vadd.f32 0.0, %v6268
      %v6270 = vpop.f32.mrf.mxu0
      %v6271 = vadd.f32 0.0, %v6270
      %v6272 = vpop.f32.mrf.mxu0
      %v6273 = vadd.f32 0.0, %v6272
      %6274 = vmatprep.mubr.bf16.mxu0 0
      %6275 = vmatmul.mubr.bf16.gmra.mxu0 %v6073
      %v6276 = vpop.f32.mrf.mxu0
      %v6277 = vadd.f32 0.0, %v6276
      %v6278 = vpop.f32.mrf.mxu0
      %v6279 = vadd.f32 0.0, %v6278
      %v6280 = vpop.f32.mrf.mxu0
      %v6281 = vadd.f32 0.0, %v6280
      %v6282 = vpop.f32.mrf.mxu0
      %v6283 = vadd.f32 0.0, %v6282
      %6284 = vmatprep.mubr.bf16.mxu0 0
      %6285 = vmatmul.mubr.bf16.gmra.mxu0 %v6074
      %v6286 = vpop.f32.mrf.mxu0
      %v6287 = vadd.f32 0.0, %v6286
      %v6288 = vpop.f32.mrf.mxu0
      %v6289 = vadd.f32 0.0, %v6288
      %v6290 = vpop.f32.mrf.mxu0
      %v6291 = vadd.f32 0.0, %v6290
      %v6292 = vpop.f32.mrf.mxu0
      %v6293 = vadd.f32 0.0, %v6292
      %6294 = vmatprep.mubr.bf16.mxu0 0
      %6295 = vmatmul.mubr.bf16.gmra.mxu0 %v6075
      %v6296 = vpop.f32.mrf.mxu0
      %v6297 = vadd.f32 0.0, %v6296
      %v6298 = vpop.f32.mrf.mxu0
      %v6299 = vadd.f32 0.0, %v6298
      %v6300 = vpop.f32.mrf.mxu0
      %v6301 = vadd.f32 0.0, %v6300
      %v6302 = vpop.f32.mrf.mxu0
      %v6303 = vadd.f32 0.0, %v6302
      %6304 = vdwg.mxu0
      %v6321 = vunpack.c.l.b16 %v6030
      %v6322 = vunpack.c.h.b16 %v6030
      %v6323 = vunpack.c.l.b16 %v6031
      %v6324 = vunpack.c.h.b16 %v6031
      %v6325 = vunpack.c.l.b16 %v6032
      %v6326 = vunpack.c.h.b16 %v6032
      %v6327 = vunpack.c.l.b16 %v6033
      %v6328 = vunpack.c.h.b16 %v6033
      %v6329 = vunpack.c.l.b16 %v6034
      %v6330 = vunpack.c.h.b16 %v6034
      %v6331 = vunpack.c.l.b16 %v6035
      %v6332 = vunpack.c.h.b16 %v6035
      %v6333 = vunpack.c.l.b16 %v6036
      %v6334 = vunpack.c.h.b16 %v6036
      %v6335 = vunpack.c.l.b16 %v6037
      %v6336 = vunpack.c.h.b16 %v6037
      %v6337 = vunpack.c.l.b16 %v6038
      %v6338 = vunpack.c.h.b16 %v6038
      %v6339 = vunpack.c.l.b16 %v6039
      %v6340 = vunpack.c.h.b16 %v6039
      %v6341 = vunpack.c.l.b16 %v6040
      %v6342 = vunpack.c.h.b16 %v6040
      %v6343 = vunpack.c.l.b16 %v6041
      %v6344 = vunpack.c.h.b16 %v6041
      %v6345 = vunpack.c.l.b16 %v6042
      %v6346 = vunpack.c.h.b16 %v6042
      %v6347 = vunpack.c.l.b16 %v6043
      %v6348 = vunpack.c.h.b16 %v6043
      %v6349 = vunpack.c.l.b16 %v6044
      %v6350 = vunpack.c.h.b16 %v6044
      %v6351 = vunpack.c.l.b16 %v6045
      %v6352 = vunpack.c.h.b16 %v6045
      %v6353 = vpack.c.b16 %v6323, %v6321
      %v6354 = vpack.c.b16 %v6324, %v6322
      %v6355 = vpack.c.b16 %v6327, %v6325
      %v6356 = vpack.c.b16 %v6328, %v6326
      %v6357 = vpack.c.b16 %v6331, %v6329
      %v6358 = vpack.c.b16 %v6332, %v6330
      %v6359 = vpack.c.b16 %v6335, %v6333
      %v6360 = vpack.c.b16 %v6336, %v6334
      %v6361 = vpack.c.b16 %v6339, %v6337
      %v6362 = vpack.c.b16 %v6340, %v6338
      %v6363 = vpack.c.b16 %v6343, %v6341
      %v6364 = vpack.c.b16 %v6344, %v6342
      %v6365 = vpack.c.b16 %v6347, %v6345
      %v6366 = vpack.c.b16 %v6348, %v6346
      %v6367 = vpack.c.b16 %v6351, %v6349
      %v6368 = vpack.c.b16 %v6352, %v6350
      %6385 = vmatprep.subr.bf16.mxu0 %v6368
      %6386 = vmatpush1.bf16.msra.mxu0 %v6367
      %6387 = vmatprep.subr.bf16.mxu0 %v6366
      %6388 = vmatpush1.bf16.msra.mxu0 %v6365
      %6389 = vmatprep.subr.bf16.mxu0 %v6364
      %6390 = vmatpush1.bf16.msra.mxu0 %v6363
      %6391 = vmatprep.subr.bf16.mxu0 %v6362
      %6392 = vmatpush1.bf16.msra.mxu0 %v6361
      %6393 = vmatprep.subr.bf16.mxu0 %v6360
      %6394 = vmatpush1.bf16.msra.mxu0 %v6359
      %6395 = vmatprep.subr.bf16.mxu0 %v6358
      %6396 = vmatpush1.bf16.msra.mxu0 %v6357
      %6397 = vmatprep.subr.bf16.mxu0 %v6356
      %6398 = vmatpush1.bf16.msra.mxu0 %v6355
      %6399 = vmatprep.subr.bf16.mxu0 %v6354
      %6400 = vmatpush1.bf16.msra.mxu0 %v6353
      %6401 = vmatprep.subr.bf16.mxu0 0
      %6402 = vmatpush2.bf16.msra.mxu0 0
      %6403 = vmatprep.subr.bf16.mxu0 0
      %6404 = vmatpush2.bf16.msra.mxu0 0
      %6405 = vmatprep.subr.bf16.mxu0 0
      %6406 = vmatpush2.bf16.msra.mxu0 0
      %6407 = vmatprep.subr.bf16.mxu0 0
      %6408 = vmatpush2.bf16.msra.mxu0 0
      %6409 = vmatprep.subr.bf16.mxu0 0
      %6410 = vmatpush2.bf16.msra.mxu0 0
      %6411 = vmatprep.subr.bf16.mxu0 0
      %6412 = vmatpush2.bf16.msra.mxu0 0
      %6413 = vmatprep.subr.bf16.mxu0 0
      %6414 = vmatpush2.bf16.msra.mxu0 0
      %6415 = vmatprep.subr.bf16.mxu0 0
      %6416 = vmatpush2.bf16.msra.mxu0 0
      %6417 = vmatprep.mubr.bf16.mxu0 0
      %6418 = vmatmul.mubr.bf16.gmra.mxu0 %v6019
      %v6419 = vpop.f32.mrf.mxu0
      %v6420 = vadd.f32 %v6207, %v6419
      %v6421 = vpop.f32.mrf.mxu0
      %v6422 = vadd.f32 %v6209, %v6421
      %v6423 = vpop.f32.mrf.mxu0
      %v6424 = vadd.f32 %v6211, %v6423
      %v6425 = vpop.f32.mrf.mxu0
      %v6426 = vadd.f32 %v6213, %v6425
      %6427 = vmatprep.mubr.bf16.mxu0 0
      %6428 = vmatmul.mubr.bf16.gmra.mxu0 %v6020
      %v6429 = vpop.f32.mrf.mxu0
      %v6430 = vadd.f32 %v6217, %v6429
      %v6431 = vpop.f32.mrf.mxu0
      %v6432 = vadd.f32 %v6219, %v6431
      %v6433 = vpop.f32.mrf.mxu0
      %v6434 = vadd.f32 %v6221, %v6433
      %v6435 = vpop.f32.mrf.mxu0
      %v6436 = vadd.f32 %v6223, %v6435
      %6437 = vmatprep.mubr.bf16.mxu0 0
      %6438 = vmatmul.mubr.bf16.gmra.mxu0 %v6021
      %v6439 = vpop.f32.mrf.mxu0
      %v6440 = vadd.f32 %v6227, %v6439
      %v6441 = vpop.f32.mrf.mxu0
      %v6442 = vadd.f32 %v6229, %v6441
      %v6443 = vpop.f32.mrf.mxu0
      %v6444 = vadd.f32 %v6231, %v6443
      %v6445 = vpop.f32.mrf.mxu0
      %v6446 = vadd.f32 %v6233, %v6445
      %6447 = vmatprep.mubr.bf16.mxu0 0
      %6448 = vmatmul.mubr.bf16.gmra.mxu0 %v6022
      %v6449 = vpop.f32.mrf.mxu0
      %v6450 = vadd.f32 %v6237, %v6449
      %v6451 = vpop.f32.mrf.mxu0
      %v6452 = vadd.f32 %v6239, %v6451
      %v6453 = vpop.f32.mrf.mxu0
      %v6454 = vadd.f32 %v6241, %v6453
      %v6455 = vpop.f32.mrf.mxu0
      %v6456 = vadd.f32 %v6243, %v6455
      %6457 = vmatprep.mubr.bf16.mxu0 0
      %6458 = vmatmul.mubr.bf16.gmra.mxu0 %v6023
      %v6459 = vpop.f32.mrf.mxu0
      %v6460 = vadd.f32 %v6247, %v6459
      %v6461 = vpop.f32.mrf.mxu0
      %v6462 = vadd.f32 %v6249, %v6461
      %v6463 = vpop.f32.mrf.mxu0
      %v6464 = vadd.f32 %v6251, %v6463
      %v6465 = vpop.f32.mrf.mxu0
      %v6466 = vadd.f32 %v6253, %v6465
      %6467 = vmatprep.mubr.bf16.mxu0 0
      %6468 = vmatmul.mubr.bf16.gmra.mxu0 %v6024
      %v6469 = vpop.f32.mrf.mxu0
      %v6470 = vadd.f32 %v6257, %v6469
      %v6471 = vpop.f32.mrf.mxu0
      %v6472 = vadd.f32 %v6259, %v6471
      %v6473 = vpop.f32.mrf.mxu0
      %v6474 = vadd.f32 %v6261, %v6473
      %v6475 = vpop.f32.mrf.mxu0
      %v6476 = vadd.f32 %v6263, %v6475
      %6477 = vmatprep.mubr.bf16.mxu0 0
      %6478 = vmatmul.mubr.bf16.gmra.mxu0 %v6025
      %v6479 = vpop.f32.mrf.mxu0
      %v6480 = vadd.f32 %v6267, %v6479
      %v6481 = vpop.f32.mrf.mxu0
      %v6482 = vadd.f32 %v6269, %v6481
      %v6483 = vpop.f32.mrf.mxu0
      %v6484 = vadd.f32 %v6271, %v6483
      %v6485 = vpop.f32.mrf.mxu0
      %v6486 = vadd.f32 %v6273, %v6485
      %6487 = vmatprep.mubr.bf16.mxu0 0
      %6488 = vmatmul.mubr.bf16.gmra.mxu0 %v6026
      %v6489 = vpop.f32.mrf.mxu0
      %v6490 = vadd.f32 %v6277, %v6489
      %v6491 = vpop.f32.mrf.mxu0
      %v6492 = vadd.f32 %v6279, %v6491
      %v6493 = vpop.f32.mrf.mxu0
      %v6494 = vadd.f32 %v6281, %v6493
      %v6495 = vpop.f32.mrf.mxu0
      %v6496 = vadd.f32 %v6283, %v6495
      %6497 = vmatprep.mubr.bf16.mxu0 0
      %6498 = vmatmul.mubr.bf16.gmra.mxu0 %v6027
      %v6499 = vpop.f32.mrf.mxu0
      %v6500 = vadd.f32 %v6287, %v6499
      %v6501 = vpop.f32.mrf.mxu0
      %v6502 = vadd.f32 %v6289, %v6501
      %v6503 = vpop.f32.mrf.mxu0
      %v6504 = vadd.f32 %v6291, %v6503
      %v6505 = vpop.f32.mrf.mxu0
      %v6506 = vadd.f32 %v6293, %v6505
      %6507 = vmatprep.mubr.bf16.mxu0 0
      %6508 = vmatmul.mubr.bf16.gmra.mxu0 %v6028
      %v6509 = vpop.f32.mrf.mxu0
      %v6510 = vadd.f32 %v6297, %v6509
      %v6511 = vpop.f32.mrf.mxu0
      %v6512 = vadd.f32 %v6299, %v6511
      %v6513 = vpop.f32.mrf.mxu0
      %v6514 = vadd.f32 %v6301, %v6513
      %v6515 = vpop.f32.mrf.mxu0
      %v6516 = vadd.f32 %v6303, %v6515
      %6517 = vdwg.mxu0
      %v6518 = vld [vmem:[#allocation4 + $0x2] sm:$0xff]
      %v6519 = vld [vmem:[#allocation4 + $0xa] sm:$0xff]
      %v6520 = vld [vmem:[#allocation4 + $0x12] sm:$0xff]
      %v6521 = vld [vmem:[#allocation4 + $0x1a] sm:$0xff]
      %v6522 = vld [vmem:[#allocation4 + $0x22] sm:$0xff]
      %v6523 = vld [vmem:[#allocation4 + $0x2a] sm:$0xff]
      %v6524 = vld [vmem:[#allocation4 + $0x32] sm:$0xff]
      %v6525 = vld [vmem:[#allocation4 + $0x3a] sm:$0xff]
      %v6526 = vld [vmem:[#allocation4 + $0x42] sm:$0xff]
      %v6527 = vld [vmem:[#allocation4 + $0x4a] sm:$0xff]
      %v6528 = vld [vmem:[#allocation4 + $0x52] sm:$0xff]
      %v6529 = vld [vmem:[#allocation4 + $0x5a] sm:$0xff]
      %v6530 = vld [vmem:[#allocation4 + $0x62] sm:$0xff]
      %v6531 = vld [vmem:[#allocation4 + $0x6a] sm:$0xff]
      %v6532 = vld [vmem:[#allocation4 + $0x72] sm:$0xff]
      %v6533 = vld [vmem:[#allocation4 + $0x7a] sm:$0xff]
      %v6534 = vld [vmem:[#allocation4 + $0x82] sm:$0xff]
      %v6535 = vld [vmem:[#allocation4 + $0x8a] sm:$0xff]
      %v6536 = vld [vmem:[#allocation4 + $0x92] sm:$0xff]
      %v6537 = vld [vmem:[#allocation4 + $0x9a] sm:$0xff]
      %v6538 = vpack.c.bf16 %v6519, %v6518
      %v6539 = vpack.c.bf16 %v6521, %v6520
      %v6540 = vpack.c.bf16 %v6523, %v6522
      %v6541 = vpack.c.bf16 %v6525, %v6524
      %v6542 = vpack.c.bf16 %v6527, %v6526
      %v6543 = vpack.c.bf16 %v6529, %v6528
      %v6544 = vpack.c.bf16 %v6531, %v6530
      %v6545 = vpack.c.bf16 %v6533, %v6532
      %v6546 = vpack.c.bf16 %v6535, %v6534
      %v6547 = vpack.c.bf16 %v6537, %v6536
      %s6548 = scalar_lea.vmem %s53, 256
      %v6549 = vld [vmem:[%s6548] sm:$0xff]
      %v6550 = vld [vmem:[%s6548 + $0x8] sm:$0xff]
      %v6551 = vld [vmem:[%s6548 + $0x10] sm:$0xff]
      %v6552 = vld [vmem:[%s6548 + $0x18] sm:$0xff]
      %v6553 = vld [vmem:[%s6548 + $0x20] sm:$0xff]
      %v6554 = vld [vmem:[%s6548 + $0x28] sm:$0xff]
      %v6555 = vld [vmem:[%s6548 + $0x30] sm:$0xff]
      %v6556 = vld [vmem:[%s6548 + $0x38] sm:$0xff]
      %v6557 = vld [vmem:[%s6548 + $0x40] sm:$0xff]
      %v6558 = vld [vmem:[%s6548 + $0x48] sm:$0xff]
      %v6559 = vld [vmem:[%s6548 + $0x50] sm:$0xff]
      %v6560 = vld [vmem:[%s6548 + $0x58] sm:$0xff]
      %v6561 = vld [vmem:[%s6548 + $0x60] sm:$0xff]
      %v6562 = vld [vmem:[%s6548 + $0x68] sm:$0xff]
      %v6563 = vld [vmem:[%s6548 + $0x70] sm:$0xff]
      %v6564 = vld [vmem:[%s6548 + $0x78] sm:$0xff]
      %v6581 = vunpack.c.l.b16 %v6549
      %v6582 = vunpack.c.h.b16 %v6549
      %v6583 = vunpack.c.l.b16 %v6550
      %v6584 = vunpack.c.h.b16 %v6550
      %v6585 = vunpack.c.l.b16 %v6551
      %v6586 = vunpack.c.h.b16 %v6551
      %v6587 = vunpack.c.l.b16 %v6552
      %v6588 = vunpack.c.h.b16 %v6552
      %v6589 = vunpack.c.l.b16 %v6553
      %v6590 = vunpack.c.h.b16 %v6553
      %v6591 = vunpack.c.l.b16 %v6554
      %v6592 = vunpack.c.h.b16 %v6554
      %v6593 = vunpack.c.l.b16 %v6555
      %v6594 = vunpack.c.h.b16 %v6555
      %v6595 = vunpack.c.l.b16 %v6556
      %v6596 = vunpack.c.h.b16 %v6556
      %v6597 = vunpack.c.l.b16 %v6557
      %v6598 = vunpack.c.h.b16 %v6557
      %v6599 = vunpack.c.l.b16 %v6558
      %v6600 = vunpack.c.h.b16 %v6558
      %v6601 = vunpack.c.l.b16 %v6559
      %v6602 = vunpack.c.h.b16 %v6559
      %v6603 = vunpack.c.l.b16 %v6560
      %v6604 = vunpack.c.h.b16 %v6560
      %v6605 = vunpack.c.l.b16 %v6561
      %v6606 = vunpack.c.h.b16 %v6561
      %v6607 = vunpack.c.l.b16 %v6562
      %v6608 = vunpack.c.h.b16 %v6562
      %v6609 = vunpack.c.l.b16 %v6563
      %v6610 = vunpack.c.h.b16 %v6563
      %v6611 = vunpack.c.l.b16 %v6564
      %v6612 = vunpack.c.h.b16 %v6564
      %v6613 = vpack.c.b16 %v6583, %v6581
      %v6614 = vpack.c.b16 %v6584, %v6582
      %v6615 = vpack.c.b16 %v6587, %v6585
      %v6616 = vpack.c.b16 %v6588, %v6586
      %v6617 = vpack.c.b16 %v6591, %v6589
      %v6618 = vpack.c.b16 %v6592, %v6590
      %v6619 = vpack.c.b16 %v6595, %v6593
      %v6620 = vpack.c.b16 %v6596, %v6594
      %v6621 = vpack.c.b16 %v6599, %v6597
      %v6622 = vpack.c.b16 %v6600, %v6598
      %v6623 = vpack.c.b16 %v6603, %v6601
      %v6624 = vpack.c.b16 %v6604, %v6602
      %v6625 = vpack.c.b16 %v6607, %v6605
      %v6626 = vpack.c.b16 %v6608, %v6606
      %v6627 = vpack.c.b16 %v6611, %v6609
      %v6628 = vpack.c.b16 %v6612, %v6610
      %6645 = vmatprep.subr.bf16.mxu0 %v6628
      %6646 = vmatpush1.bf16.msra.mxu0 %v6627
      %6647 = vmatprep.subr.bf16.mxu0 %v6626
      %6648 = vmatpush1.bf16.msra.mxu0 %v6625
      %6649 = vmatprep.subr.bf16.mxu0 %v6624
      %6650 = vmatpush1.bf16.msra.mxu0 %v6623
      %6651 = vmatprep.subr.bf16.mxu0 %v6622
      %6652 = vmatpush1.bf16.msra.mxu0 %v6621
      %6653 = vmatprep.subr.bf16.mxu0 %v6620
      %6654 = vmatpush1.bf16.msra.mxu0 %v6619
      %6655 = vmatprep.subr.bf16.mxu0 %v6618
      %6656 = vmatpush1.bf16.msra.mxu0 %v6617
      %6657 = vmatprep.subr.bf16.mxu0 %v6616
      %6658 = vmatpush1.bf16.msra.mxu0 %v6615
      %6659 = vmatprep.subr.bf16.mxu0 %v6614
      %6660 = vmatpush1.bf16.msra.mxu0 %v6613
      %6661 = vmatprep.subr.bf16.mxu0 0
      %6662 = vmatpush2.bf16.msra.mxu0 0
      %6663 = vmatprep.subr.bf16.mxu0 0
      %6664 = vmatpush2.bf16.msra.mxu0 0
      %6665 = vmatprep.subr.bf16.mxu0 0
      %6666 = vmatpush2.bf16.msra.mxu0 0
      %6667 = vmatprep.subr.bf16.mxu0 0
      %6668 = vmatpush2.bf16.msra.mxu0 0
      %6669 = vmatprep.subr.bf16.mxu0 0
      %6670 = vmatpush2.bf16.msra.mxu0 0
      %6671 = vmatprep.subr.bf16.mxu0 0
      %6672 = vmatpush2.bf16.msra.mxu0 0
      %6673 = vmatprep.subr.bf16.mxu0 0
      %6674 = vmatpush2.bf16.msra.mxu0 0
      %6675 = vmatprep.subr.bf16.mxu0 0
      %6676 = vmatpush2.bf16.msra.mxu0 0
      %6677 = vmatprep.mubr.bf16.mxu0 0
      %6678 = vmatmul.mubr.bf16.gmra.mxu0 %v6538
      %v6679 = vpop.f32.mrf.mxu0
      %v6680 = vadd.f32 0.0, %v6679
      %v6681 = vpop.f32.mrf.mxu0
      %v6682 = vadd.f32 0.0, %v6681
      %v6683 = vpop.f32.mrf.mxu0
      %v6684 = vadd.f32 0.0, %v6683
      %v6685 = vpop.f32.mrf.mxu0
      %v6686 = vadd.f32 0.0, %v6685
      %6687 = vmatprep.mubr.bf16.mxu0 0
      %6688 = vmatmul.mubr.bf16.gmra.mxu0 %v6539
      %v6689 = vpop.f32.mrf.mxu0
      %v6690 = vadd.f32 0.0, %v6689
      %v6691 = vpop.f32.mrf.mxu0
      %v6692 = vadd.f32 0.0, %v6691
      %v6693 = vpop.f32.mrf.mxu0
      %v6694 = vadd.f32 0.0, %v6693
      %v6695 = vpop.f32.mrf.mxu0
      %v6696 = vadd.f32 0.0, %v6695
      %6697 = vmatprep.mubr.bf16.mxu0 0
      %6698 = vmatmul.mubr.bf16.gmra.mxu0 %v6540
      %v6699 = vpop.f32.mrf.mxu0
      %v6700 = vadd.f32 0.0, %v6699
      %v6701 = vpop.f32.mrf.mxu0
      %v6702 = vadd.f32 0.0, %v6701
      %v6703 = vpop.f32.mrf.mxu0
      %v6704 = vadd.f32 0.0, %v6703
      %v6705 = vpop.f32.mrf.mxu0
      %v6706 = vadd.f32 0.0, %v6705
      %6707 = vmatprep.mubr.bf16.mxu0 0
      %6708 = vmatmul.mubr.bf16.gmra.mxu0 %v6541
      %v6709 = vpop.f32.mrf.mxu0
      %v6710 = vadd.f32 0.0, %v6709
      %v6711 = vpop.f32.mrf.mxu0
      %v6712 = vadd.f32 0.0, %v6711
      %v6713 = vpop.f32.mrf.mxu0
      %v6714 = vadd.f32 0.0, %v6713
      %v6715 = vpop.f32.mrf.mxu0
      %v6716 = vadd.f32 0.0, %v6715
      %6717 = vmatprep.mubr.bf16.mxu0 0
      %6718 = vmatmul.mubr.bf16.gmra.mxu0 %v6542
      %v6719 = vpop.f32.mrf.mxu0
      %v6720 = vadd.f32 0.0, %v6719
      %v6721 = vpop.f32.mrf.mxu0
      %v6722 = vadd.f32 0.0, %v6721
      %v6723 = vpop.f32.mrf.mxu0
      %v6724 = vadd.f32 0.0, %v6723
      %v6725 = vpop.f32.mrf.mxu0
      %v6726 = vadd.f32 0.0, %v6725
      %6727 = vmatprep.mubr.bf16.mxu0 0
      %6728 = vmatmul.mubr.bf16.gmra.mxu0 %v6543
      %v6729 = vpop.f32.mrf.mxu0
      %v6730 = vadd.f32 0.0, %v6729
      %v6731 = vpop.f32.mrf.mxu0
      %v6732 = vadd.f32 0.0, %v6731
      %v6733 = vpop.f32.mrf.mxu0
      %v6734 = vadd.f32 0.0, %v6733
      %v6735 = vpop.f32.mrf.mxu0
      %v6736 = vadd.f32 0.0, %v6735
      %6737 = vmatprep.mubr.bf16.mxu0 0
      %6738 = vmatmul.mubr.bf16.gmra.mxu0 %v6544
      %v6739 = vpop.f32.mrf.mxu0
      %v6740 = vadd.f32 0.0, %v6739
      %v6741 = vpop.f32.mrf.mxu0
      %v6742 = vadd.f32 0.0, %v6741
      %v6743 = vpop.f32.mrf.mxu0
      %v6744 = vadd.f32 0.0, %v6743
      %v6745 = vpop.f32.mrf.mxu0
      %v6746 = vadd.f32 0.0, %v6745
      %6747 = vmatprep.mubr.bf16.mxu0 0
      %6748 = vmatmul.mubr.bf16.gmra.mxu0 %v6545
      %v6749 = vpop.f32.mrf.mxu0
      %v6750 = vadd.f32 0.0, %v6749
      %v6751 = vpop.f32.mrf.mxu0
      %v6752 = vadd.f32 0.0, %v6751
      %v6753 = vpop.f32.mrf.mxu0
      %v6754 = vadd.f32 0.0, %v6753
      %v6755 = vpop.f32.mrf.mxu0
      %v6756 = vadd.f32 0.0, %v6755
      %6757 = vmatprep.mubr.bf16.mxu0 0
      %6758 = vmatmul.mubr.bf16.gmra.mxu0 %v6546
      %v6759 = vpop.f32.mrf.mxu0
      %v6760 = vadd.f32 0.0, %v6759
      %v6761 = vpop.f32.mrf.mxu0
      %v6762 = vadd.f32 0.0, %v6761
      %v6763 = vpop.f32.mrf.mxu0
      %v6764 = vadd.f32 0.0, %v6763
      %v6765 = vpop.f32.mrf.mxu0
      %v6766 = vadd.f32 0.0, %v6765
      %6767 = vmatprep.mubr.bf16.mxu0 0
      %6768 = vmatmul.mubr.bf16.gmra.mxu0 %v6547
      %v6769 = vpop.f32.mrf.mxu0
      %v6770 = vadd.f32 0.0, %v6769
      %v6771 = vpop.f32.mrf.mxu0
      %v6772 = vadd.f32 0.0, %v6771
      %v6773 = vpop.f32.mrf.mxu0
      %v6774 = vadd.f32 0.0, %v6773
      %v6775 = vpop.f32.mrf.mxu0
      %v6776 = vadd.f32 0.0, %v6775
      %6777 = vdwg.mxu0
      %v6778 = vadd.f32 %v6420, %v6680
      %v6779 = vadd.f32 %v6422, %v6682
      %v6780 = vadd.f32 %v6424, %v6684
      %v6781 = vadd.f32 %v6426, %v6686
      %v6782 = vadd.f32 %v6430, %v6690
      %v6783 = vadd.f32 %v6432, %v6692
      %v6784 = vadd.f32 %v6434, %v6694
      %v6785 = vadd.f32 %v6436, %v6696
      %v6786 = vadd.f32 %v6440, %v6700
      %v6787 = vadd.f32 %v6442, %v6702
      %v6788 = vadd.f32 %v6444, %v6704
      %v6789 = vadd.f32 %v6446, %v6706
      %v6790 = vadd.f32 %v6450, %v6710
      %v6791 = vadd.f32 %v6452, %v6712
      %v6792 = vadd.f32 %v6454, %v6714
      %v6793 = vadd.f32 %v6456, %v6716
      %v6794 = vadd.f32 %v6460, %v6720
      %v6795 = vadd.f32 %v6462, %v6722
      %v6796 = vadd.f32 %v6464, %v6724
      %v6797 = vadd.f32 %v6466, %v6726
      %v6798 = vadd.f32 %v6470, %v6730
      %v6799 = vadd.f32 %v6472, %v6732
      %v6800 = vadd.f32 %v6474, %v6734
      %v6801 = vadd.f32 %v6476, %v6736
      %v6802 = vadd.f32 %v6480, %v6740
      %v6803 = vadd.f32 %v6482, %v6742
      %v6804 = vadd.f32 %v6484, %v6744
      %v6805 = vadd.f32 %v6486, %v6746
      %v6806 = vadd.f32 %v6490, %v6750
      %v6807 = vadd.f32 %v6492, %v6752
      %v6808 = vadd.f32 %v6494, %v6754
      %v6809 = vadd.f32 %v6496, %v6756
      %v6810 = vadd.f32 %v6500, %v6760
      %v6811 = vadd.f32 %v6502, %v6762
      %v6812 = vadd.f32 %v6504, %v6764
      %v6813 = vadd.f32 %v6506, %v6766
      %v6814 = vadd.f32 %v6510, %v6770
      %v6815 = vadd.f32 %v6512, %v6772
      %v6816 = vadd.f32 %v6514, %v6774
      %v6817 = vadd.f32 %v6516, %v6776
      %v6818 = vld [vmem:[%s55] sm:$0x3]
      %v6820 = vlaneseq
      %v6821 = vshrl.u32 %v6820, 7
      %v6822 = vsub.s32 0, %v6821
      %v6823 = vrot.slane %v6818, %v6822
      %v6824 = vlaneseq
      %v6825 = vshrl.u32 %v6824, 7
      %v6826 = vsub.s32 1, %v6825
      %v6827 = vrot.slane %v6818, %v6826
      %v6830 = vmul.f32 %v6778, %v6823
      %v6831 = vmul.f32 %v6779, %v6827
      %v6832 = vmul.f32 %v6780, %v6823
      %v6833 = vmul.f32 %v6781, %v6827
      %v6834 = vmul.f32 %v6782, %v6823
      %v6835 = vmul.f32 %v6783, %v6827
      %v6836 = vmul.f32 %v6784, %v6823
      %v6837 = vmul.f32 %v6785, %v6827
      %v6838 = vmul.f32 %v6786, %v6823
      %v6839 = vmul.f32 %v6787, %v6827
      %v6840 = vmul.f32 %v6788, %v6823
      %v6841 = vmul.f32 %v6789, %v6827
      %v6842 = vmul.f32 %v6790, %v6823
      %v6843 = vmul.f32 %v6791, %v6827
      %v6844 = vmul.f32 %v6792, %v6823
      %v6845 = vmul.f32 %v6793, %v6827
      %v6846 = vmul.f32 %v6794, %v6823
      %v6847 = vmul.f32 %v6795, %v6827
      %v6848 = vmul.f32 %v6796, %v6823
      %v6849 = vmul.f32 %v6797, %v6827
      %v6850 = vmul.f32 %v6798, %v6823
      %v6851 = vmul.f32 %v6799, %v6827
      %v6852 = vmul.f32 %v6800, %v6823
      %v6853 = vmul.f32 %v6801, %v6827
      %v6854 = vmul.f32 %v6802, %v6823
      %v6855 = vmul.f32 %v6803, %v6827
      %v6856 = vmul.f32 %v6804, %v6823
      %v6857 = vmul.f32 %v6805, %v6827
      %v6858 = vmul.f32 %v6806, %v6823
      %v6859 = vmul.f32 %v6807, %v6827
      %v6860 = vmul.f32 %v6808, %v6823
      %v6861 = vmul.f32 %v6809, %v6827
      %v6862 = vmul.f32 %v6810, %v6823
      %v6863 = vmul.f32 %v6811, %v6827
      %v6864 = vmul.f32 %v6812, %v6823
      %v6865 = vmul.f32 %v6813, %v6827
      %v6866 = vmul.f32 %v6814, %v6823
      %v6867 = vmul.f32 %v6815, %v6827
      %v6868 = vmul.f32 %v6816, %v6823
      %v6869 = vmul.f32 %v6817, %v6827
      %v6870 = vld [vmem:[%s57] sm:$0x3]
      %v6872 = vlaneseq
      %v6873 = vshrl.u32 %v6872, 7
      %v6874 = vsub.s32 0, %v6873
      %v6875 = vrot.slane %v6870, %v6874
      %v6876 = vlaneseq
      %v6877 = vshrl.u32 %v6876, 7
      %v6878 = vsub.s32 1, %v6877
      %v6879 = vrot.slane %v6870, %v6878
      %v6882 = vadd.f32 %v6830, %v6875
      %v6883 = vadd.f32 %v6831, %v6879
      %v6884 = vadd.f32 %v6832, %v6875
      %v6885 = vadd.f32 %v6833, %v6879
      %v6886 = vadd.f32 %v6834, %v6875
      %v6887 = vadd.f32 %v6835, %v6879
      %v6888 = vadd.f32 %v6836, %v6875
      %v6889 = vadd.f32 %v6837, %v6879
      %v6890 = vadd.f32 %v6838, %v6875
      %v6891 = vadd.f32 %v6839, %v6879
      %v6892 = vadd.f32 %v6840, %v6875
      %v6893 = vadd.f32 %v6841, %v6879
      %v6894 = vadd.f32 %v6842, %v6875
      %v6895 = vadd.f32 %v6843, %v6879
      %v6896 = vadd.f32 %v6844, %v6875
      %v6897 = vadd.f32 %v6845, %v6879
      %v6898 = vadd.f32 %v6846, %v6875
      %v6899 = vadd.f32 %v6847, %v6879
      %v6900 = vadd.f32 %v6848, %v6875
      %v6901 = vadd.f32 %v6849, %v6879
      %v6902 = vadd.f32 %v6850, %v6875
      %v6903 = vadd.f32 %v6851, %v6879
      %v6904 = vadd.f32 %v6852, %v6875
      %v6905 = vadd.f32 %v6853, %v6879
      %v6906 = vadd.f32 %v6854, %v6875
      %v6907 = vadd.f32 %v6855, %v6879
      %v6908 = vadd.f32 %v6856, %v6875
      %v6909 = vadd.f32 %v6857, %v6879
      %v6910 = vadd.f32 %v6858, %v6875
      %v6911 = vadd.f32 %v6859, %v6879
      %v6912 = vadd.f32 %v6860, %v6875
      %v6913 = vadd.f32 %v6861, %v6879
      %v6914 = vadd.f32 %v6862, %v6875
      %v6915 = vadd.f32 %v6863, %v6879
      %v6916 = vadd.f32 %v6864, %v6875
      %v6917 = vadd.f32 %v6865, %v6879
      %v6918 = vadd.f32 %v6866, %v6875
      %v6919 = vadd.f32 %v6867, %v6879
      %v6920 = vadd.f32 %v6868, %v6875
      %v6921 = vadd.f32 %v6869, %v6879
      %v6922 = vmax.f32 %v6882, 0.0
      %v6923 = vmax.f32 %v6883, 0.0
      %v6924 = vmax.f32 %v6884, 0.0
      %v6925 = vmax.f32 %v6885, 0.0
      %v6926 = vmax.f32 %v6886, 0.0
      %v6927 = vmax.f32 %v6887, 0.0
      %v6928 = vmax.f32 %v6888, 0.0
      %v6929 = vmax.f32 %v6889, 0.0
      %v6930 = vmax.f32 %v6890, 0.0
      %v6931 = vmax.f32 %v6891, 0.0
      %v6932 = vmax.f32 %v6892, 0.0
      %v6933 = vmax.f32 %v6893, 0.0
      %v6934 = vmax.f32 %v6894, 0.0
      %v6935 = vmax.f32 %v6895, 0.0
      %v6936 = vmax.f32 %v6896, 0.0
      %v6937 = vmax.f32 %v6897, 0.0
      %v6938 = vmax.f32 %v6898, 0.0
      %v6939 = vmax.f32 %v6899, 0.0
      %v6940 = vmax.f32 %v6900, 0.0
      %v6941 = vmax.f32 %v6901, 0.0
      %v6942 = vmax.f32 %v6902, 0.0
      %v6943 = vmax.f32 %v6903, 0.0
      %v6944 = vmax.f32 %v6904, 0.0
      %v6945 = vmax.f32 %v6905, 0.0
      %v6946 = vmax.f32 %v6906, 0.0
      %v6947 = vmax.f32 %v6907, 0.0
      %v6948 = vmax.f32 %v6908, 0.0
      %v6949 = vmax.f32 %v6909, 0.0
      %v6950 = vmax.f32 %v6910, 0.0
      %v6951 = vmax.f32 %v6911, 0.0
      %v6952 = vmax.f32 %v6912, 0.0
      %v6953 = vmax.f32 %v6913, 0.0
      %v6954 = vmax.f32 %v6914, 0.0
      %v6955 = vmax.f32 %v6915, 0.0
      %v6956 = vmax.f32 %v6916, 0.0
      %v6957 = vmax.f32 %v6917, 0.0
      %v6958 = vmax.f32 %v6918, 0.0
      %v6959 = vmax.f32 %v6919, 0.0
      %v6960 = vmax.f32 %v6920, 0.0
      %v6961 = vmax.f32 %v6921, 0.0
      %v6962 = vsel %vm1579, %v6922, 0.0
      %v6963 = vsel %vm1579, %v6923, 0.0
      %v6964 = vsel %vm1580, %v6924, 0.0
      %v6965 = vsel %vm1580, %v6925, 0.0
      %v6966 = vsel %vm1581, %v6926, 0.0
      %v6967 = vsel %vm1581, %v6927, 0.0
      %v6968 = vsel %vm1582, %v6928, 0.0
      %v6969 = vsel %vm1582, %v6929, 0.0
      %v6970 = vsel %vm1583, %v6930, 0.0
      %v6971 = vsel %vm1583, %v6931, 0.0
      %v6972 = vsel %vm1584, %v6932, 0.0
      %v6973 = vsel %vm1584, %v6933, 0.0
      %v6974 = vsel %vm1585, %v6934, 0.0
      %v6975 = vsel %vm1585, %v6935, 0.0
      %v6976 = vsel %vm1586, %v6936, 0.0
      %v6977 = vsel %vm1586, %v6937, 0.0
      %v6978 = vsel %vm1587, %v6938, 0.0
      %v6979 = vsel %vm1587, %v6939, 0.0
      %v6980 = vsel %vm1588, %v6940, 0.0
      %v6981 = vsel %vm1588, %v6941, 0.0
      %v6982 = vsel %vm1589, %v6942, 0.0
      %v6983 = vsel %vm1589, %v6943, 0.0
      %v6984 = vsel %vm1590, %v6944, 0.0
      %v6985 = vsel %vm1590, %v6945, 0.0
      %v6986 = vsel %vm1591, %v6946, 0.0
      %v6987 = vsel %vm1591, %v6947, 0.0
      %v6988 = vsel %vm1592, %v6948, 0.0
      %v6989 = vsel %vm1592, %v6949, 0.0
      %v6990 = vsel %vm1593, %v6950, 0.0
      %v6991 = vsel %vm1593, %v6951, 0.0
      %v6992 = vsel %vm1594, %v6952, 0.0
      %v6993 = vsel %vm1594, %v6953, 0.0
      %v6994 = vsel %vm1595, %v6954, 0.0
      %v6995 = vsel %vm1595, %v6955, 0.0
      %v6996 = vsel %vm1596, %v6956, 0.0
      %v6997 = vsel %vm1596, %v6957, 0.0
      %v6998 = vsel %vm1597, %v6958, 0.0
      %v6999 = vsel %vm1597, %v6959, 0.0
      %v7000 = vsel %vm1598, %v6960, 0.0
      %v7001 = vsel %vm1598, %v6961, 0.0
      %v7002 = vlaneseq
      %vm7003 = vcmp.ge.s32.totalorder %v7002, 0
      %vm7004 = vcmp.lt.s32.totalorder %v7002, 256
      %vm7005 = vmand %vm7003, %vm7004
      %7006 = vst.msk [vmem:[#allocation5] ss:$8 sm:$0x3] %vm7005, 0.0
      %7007 = vst.msk [vmem:[#allocation5] ss:$8 sm:$0x0] %vm7005, 0.0
      %s7008 = scalar_lea.vmem [#allocation5], 321
      %7009 = vst.msk [vmem:[%s7008] ss:$8 sm:$0x3] %vm7005, 0.0
      %7010 = vst.msk [vmem:[%s7008] ss:$8 sm:$0x0] %vm7005, 0.0
      %v7051 = vrot.slane %v6962, 7
      %v7052 = vrot.slane %v6963, 7
      %v7053 = vrot.slane %v6964, 7
      %v7054 = vsel %vm3304, %v7051, %v7053
      %v7055 = vrot.slane %v6965, 7
      %v7056 = vsel %vm3304, %v7052, %v7055
      %v7057 = vrot.slane %v6966, 7
      %v7058 = vsel %vm3304, %v7053, %v7057
      %v7059 = vrot.slane %v6967, 7
      %v7060 = vsel %vm3304, %v7055, %v7059
      %v7061 = vrot.slane %v6968, 7
      %v7062 = vsel %vm3304, %v7057, %v7061
      %v7063 = vrot.slane %v6969, 7
      %v7064 = vsel %vm3304, %v7059, %v7063
      %v7065 = vrot.slane %v6970, 7
      %v7066 = vsel %vm3304, %v7061, %v7065
      %v7067 = vrot.slane %v6971, 7
      %v7068 = vsel %vm3304, %v7063, %v7067
      %v7069 = vrot.slane %v6972, 7
      %v7070 = vsel %vm3304, %v7065, %v7069
      %v7071 = vrot.slane %v6973, 7
      %v7072 = vsel %vm3304, %v7067, %v7071
      %v7073 = vrot.slane %v6974, 7
      %v7074 = vsel %vm3304, %v7069, %v7073
      %v7075 = vrot.slane %v6975, 7
      %v7076 = vsel %vm3304, %v7071, %v7075
      %v7077 = vrot.slane %v6976, 7
      %v7078 = vsel %vm3304, %v7073, %v7077
      %v7079 = vrot.slane %v6977, 7
      %v7080 = vsel %vm3304, %v7075, %v7079
      %v7081 = vrot.slane %v6978, 7
      %v7082 = vsel %vm3304, %v7077, %v7081
      %v7083 = vrot.slane %v6979, 7
      %v7084 = vsel %vm3304, %v7079, %v7083
      %v7085 = vrot.slane %v6980, 7
      %v7086 = vsel %vm3304, %v7081, %v7085
      %v7087 = vrot.slane %v6981, 7
      %v7088 = vsel %vm3304, %v7083, %v7087
      %v7089 = vrot.slane %v6982, 7
      %v7090 = vsel %vm3304, %v7085, %v7089
      %v7091 = vrot.slane %v6983, 7
      %v7092 = vsel %vm3304, %v7087, %v7091
      %v7093 = vrot.slane %v6984, 7
      %v7094 = vsel %vm3304, %v7089, %v7093
      %v7095 = vrot.slane %v6985, 7
      %v7096 = vsel %vm3304, %v7091, %v7095
      %v7097 = vrot.slane %v6986, 7
      %v7098 = vsel %vm3304, %v7093, %v7097
      %v7099 = vrot.slane %v6987, 7
      %v7100 = vsel %vm3304, %v7095, %v7099
      %v7101 = vrot.slane %v6988, 7
      %v7102 = vsel %vm3304, %v7097, %v7101
      %v7103 = vrot.slane %v6989, 7
      %v7104 = vsel %vm3304, %v7099, %v7103
      %v7105 = vrot.slane %v6990, 7
      %v7106 = vsel %vm3304, %v7101, %v7105
      %v7107 = vrot.slane %v6991, 7
      %v7108 = vsel %vm3304, %v7103, %v7107
      %v7109 = vrot.slane %v6992, 7
      %v7110 = vsel %vm3304, %v7105, %v7109
      %v7111 = vrot.slane %v6993, 7
      %v7112 = vsel %vm3304, %v7107, %v7111
      %v7113 = vrot.slane %v6994, 7
      %v7114 = vsel %vm3304, %v7109, %v7113
      %v7115 = vrot.slane %v6995, 7
      %v7116 = vsel %vm3304, %v7111, %v7115
      %v7117 = vrot.slane %v6996, 7
      %v7118 = vsel %vm3304, %v7113, %v7117
      %v7119 = vrot.slane %v6997, 7
      %v7120 = vsel %vm3304, %v7115, %v7119
      %v7121 = vrot.slane %v6998, 7
      %v7122 = vsel %vm3304, %v7117, %v7121
      %v7123 = vrot.slane %v6999, 7
      %v7124 = vsel %vm3304, %v7119, %v7123
      %v7125 = vrot.slane %v7000, 7
      %v7126 = vsel %vm3304, %v7121, %v7125
      %v7127 = vrot.slane %v7001, 7
      %v7128 = vsel %vm3304, %v7123, %v7127
      %7171 = vst [vmem:[#allocation5] sm:$0xfe] %v7051
      %7172 = vst [vmem:[#allocation5 + $0x8] sm:$0xfe] %v7052
      %7173 = vst [vmem:[#allocation5 + $0x10] sm:$0xff] %v7054
      %7174 = vst [vmem:[#allocation5 + $0x18] sm:$0xff] %v7056
      %7175 = vst [vmem:[#allocation5 + $0x20] sm:$0xff] %v7058
      %7176 = vst [vmem:[#allocation5 + $0x28] sm:$0xff] %v7060
      %7177 = vst [vmem:[#allocation5 + $0x30] sm:$0xff] %v7062
      %7178 = vst [vmem:[#allocation5 + $0x38] sm:$0xff] %v7064
      %7179 = vst [vmem:[#allocation5 + $0x40] sm:$0xff] %v7066
      %7180 = vst [vmem:[#allocation5 + $0x48] sm:$0xff] %v7068
      %7181 = vst [vmem:[#allocation5 + $0x50] sm:$0xff] %v7070
      %7182 = vst [vmem:[#allocation5 + $0x58] sm:$0xff] %v7072
      %7183 = vst [vmem:[#allocation5 + $0x60] sm:$0xff] %v7074
      %7184 = vst [vmem:[#allocation5 + $0x68] sm:$0xff] %v7076
      %7185 = vst [vmem:[#allocation5 + $0x70] sm:$0xff] %v7078
      %7186 = vst [vmem:[#allocation5 + $0x78] sm:$0xff] %v7080
      %7187 = vst [vmem:[#allocation5 + $0x80] sm:$0xff] %v7082
      %7188 = vst [vmem:[#allocation5 + $0x88] sm:$0xff] %v7084
      %7189 = vst [vmem:[#allocation5 + $0x90] sm:$0xff] %v7086
      %7190 = vst [vmem:[#allocation5 + $0x98] sm:$0xff] %v7088
      %7191 = vst [vmem:[#allocation5 + $0xa0] sm:$0xff] %v7090
      %7192 = vst [vmem:[#allocation5 + $0xa8] sm:$0xff] %v7092
      %7193 = vst [vmem:[#allocation5 + $0xb0] sm:$0xff] %v7094
      %7194 = vst [vmem:[#allocation5 + $0xb8] sm:$0xff] %v7096
      %7195 = vst [vmem:[#allocation5 + $0xc0] sm:$0xff] %v7098
      %7196 = vst [vmem:[#allocation5 + $0xc8] sm:$0xff] %v7100
      %7197 = vst [vmem:[#allocation5 + $0xd0] sm:$0xff] %v7102
      %7198 = vst [vmem:[#allocation5 + $0xd8] sm:$0xff] %v7104
      %7199 = vst [vmem:[#allocation5 + $0xe0] sm:$0xff] %v7106
      %7200 = vst [vmem:[#allocation5 + $0xe8] sm:$0xff] %v7108
      %7201 = vst [vmem:[#allocation5 + $0xf0] sm:$0xff] %v7110
      %7202 = vst [vmem:[#allocation5 + $0xf8] sm:$0xff] %v7112
      %7203 = vst [vmem:[#allocation5 + $0x100] sm:$0xff] %v7114
      %7204 = vst [vmem:[#allocation5 + $0x108] sm:$0xff] %v7116
      %7205 = vst [vmem:[#allocation5 + $0x110] sm:$0xff] %v7118
      %7206 = vst [vmem:[#allocation5 + $0x118] sm:$0xff] %v7120
      %7207 = vst [vmem:[#allocation5 + $0x120] sm:$0xff] %v7122
      %7208 = vst [vmem:[#allocation5 + $0x128] sm:$0xff] %v7124
      %7209 = vst [vmem:[#allocation5 + $0x130] sm:$0xff] %v7126
      %7210 = vst [vmem:[#allocation5 + $0x138] sm:$0xff] %v7128
      %7211 = vst [vmem:[#allocation5 + $0x140] sm:$0x1] %v7125
      %7212 = vst [vmem:[#allocation5 + $0x148] sm:$0x1] %v7127
      %v7213 = vpack.c.bf16 %v6964, %v6962
      %v7214 = vpack.c.bf16 %v6965, %v6963
      %v7215 = vpack.c.bf16 %v6968, %v6966
      %v7216 = vpack.c.bf16 %v6969, %v6967
      %v7217 = vpack.c.bf16 %v6972, %v6970
      %v7218 = vpack.c.bf16 %v6973, %v6971
      %v7219 = vpack.c.bf16 %v6976, %v6974
      %v7220 = vpack.c.bf16 %v6977, %v6975
      %v7221 = vpack.c.bf16 %v6980, %v6978
      %v7222 = vpack.c.bf16 %v6981, %v6979
      %v7223 = vpack.c.bf16 %v6984, %v6982
      %v7224 = vpack.c.bf16 %v6985, %v6983
      %v7225 = vpack.c.bf16 %v6988, %v6986
      %v7226 = vpack.c.bf16 %v6989, %v6987
      %v7227 = vpack.c.bf16 %v6992, %v6990
      %v7228 = vpack.c.bf16 %v6993, %v6991
      %v7229 = vpack.c.bf16 %v6996, %v6994
      %v7230 = vpack.c.bf16 %v6997, %v6995
      %v7231 = vpack.c.bf16 %v7000, %v6998
      %v7232 = vpack.c.bf16 %v7001, %v6999
      %s7233 = scalar_lea.vmem %s59, 256
      %v7234 = vld [vmem:[%s7233] sm:$0xff]
      %v7235 = vld [vmem:[%s7233 + $0x8] sm:$0xff]
      %v7236 = vld [vmem:[%s7233 + $0x10] sm:$0xff]
      %v7237 = vld [vmem:[%s7233 + $0x18] sm:$0xff]
      %v7238 = vld [vmem:[%s7233 + $0x20] sm:$0xff]
      %v7239 = vld [vmem:[%s7233 + $0x28] sm:$0xff]
      %v7240 = vld [vmem:[%s7233 + $0x30] sm:$0xff]
      %v7241 = vld [vmem:[%s7233 + $0x38] sm:$0xff]
      %v7242 = vld [vmem:[%s7233 + $0x40] sm:$0xff]
      %v7243 = vld [vmem:[%s7233 + $0x48] sm:$0xff]
      %v7244 = vld [vmem:[%s7233 + $0x50] sm:$0xff]
      %v7245 = vld [vmem:[%s7233 + $0x58] sm:$0xff]
      %v7246 = vld [vmem:[%s7233 + $0x60] sm:$0xff]
      %v7247 = vld [vmem:[%s7233 + $0x68] sm:$0xff]
      %v7248 = vld [vmem:[%s7233 + $0x70] sm:$0xff]
      %v7249 = vld [vmem:[%s7233 + $0x78] sm:$0xff]
      %v7250 = vld [vmem:[%s7233 + $0x80] sm:$0xff]
      %v7251 = vld [vmem:[%s7233 + $0x88] sm:$0xff]
      %v7252 = vld [vmem:[%s7233 + $0x90] sm:$0xff]
      %v7253 = vld [vmem:[%s7233 + $0x98] sm:$0xff]
      %v7254 = vld [vmem:[%s7233 + $0xa0] sm:$0xff]
      %v7255 = vld [vmem:[%s7233 + $0xa8] sm:$0xff]
      %v7256 = vld [vmem:[%s7233 + $0xb0] sm:$0xff]
      %v7257 = vld [vmem:[%s7233 + $0xb8] sm:$0xff]
      %v7258 = vld [vmem:[%s7233 + $0xc0] sm:$0xff]
      %v7259 = vld [vmem:[%s7233 + $0xc8] sm:$0xff]
      %v7260 = vld [vmem:[%s7233 + $0xd0] sm:$0xff]
      %v7261 = vld [vmem:[%s7233 + $0xd8] sm:$0xff]
      %v7262 = vld [vmem:[%s7233 + $0xe0] sm:$0xff]
      %v7263 = vld [vmem:[%s7233 + $0xe8] sm:$0xff]
      %v7264 = vld [vmem:[%s7233 + $0xf0] sm:$0xff]
      %v7265 = vld [vmem:[%s7233 + $0xf8] sm:$0xff]
      %v7266 = vld [vmem:[#allocation5] sm:$0xff]
      %v7267 = vld [vmem:[#allocation5 + $0x8] sm:$0xff]
      %v7268 = vld [vmem:[#allocation5 + $0x10] sm:$0xff]
      %v7269 = vld [vmem:[#allocation5 + $0x18] sm:$0xff]
      %v7270 = vld [vmem:[#allocation5 + $0x20] sm:$0xff]
      %v7271 = vld [vmem:[#allocation5 + $0x28] sm:$0xff]
      %v7272 = vld [vmem:[#allocation5 + $0x30] sm:$0xff]
      %v7273 = vld [vmem:[#allocation5 + $0x38] sm:$0xff]
      %v7274 = vld [vmem:[#allocation5 + $0x40] sm:$0xff]
      %v7275 = vld [vmem:[#allocation5 + $0x48] sm:$0xff]
      %v7276 = vld [vmem:[#allocation5 + $0x50] sm:$0xff]
      %v7277 = vld [vmem:[#allocation5 + $0x58] sm:$0xff]
      %v7278 = vld [vmem:[#allocation5 + $0x60] sm:$0xff]
      %v7279 = vld [vmem:[#allocation5 + $0x68] sm:$0xff]
      %v7280 = vld [vmem:[#allocation5 + $0x70] sm:$0xff]
      %v7281 = vld [vmem:[#allocation5 + $0x78] sm:$0xff]
      %v7282 = vld [vmem:[#allocation5 + $0x80] sm:$0xff]
      %v7283 = vld [vmem:[#allocation5 + $0x88] sm:$0xff]
      %v7284 = vld [vmem:[#allocation5 + $0x90] sm:$0xff]
      %v7285 = vld [vmem:[#allocation5 + $0x98] sm:$0xff]
      %v7286 = vld [vmem:[#allocation5 + $0xa0] sm:$0xff]
      %v7287 = vld [vmem:[#allocation5 + $0xa8] sm:$0xff]
      %v7288 = vld [vmem:[#allocation5 + $0xb0] sm:$0xff]
      %v7289 = vld [vmem:[#allocation5 + $0xb8] sm:$0xff]
      %v7290 = vld [vmem:[#allocation5 + $0xc0] sm:$0xff]
      %v7291 = vld [vmem:[#allocation5 + $0xc8] sm:$0xff]
      %v7292 = vld [vmem:[#allocation5 + $0xd0] sm:$0xff]
      %v7293 = vld [vmem:[#allocation5 + $0xd8] sm:$0xff]
      %v7294 = vld [vmem:[#allocation5 + $0xe0] sm:$0xff]
      %v7295 = vld [vmem:[#allocation5 + $0xe8] sm:$0xff]
      %v7296 = vld [vmem:[#allocation5 + $0xf0] sm:$0xff]
      %v7297 = vld [vmem:[#allocation5 + $0xf8] sm:$0xff]
      %v7298 = vld [vmem:[#allocation5 + $0x100] sm:$0xff]
      %v7299 = vld [vmem:[#allocation5 + $0x108] sm:$0xff]
      %v7300 = vld [vmem:[#allocation5 + $0x110] sm:$0xff]
      %v7301 = vld [vmem:[#allocation5 + $0x118] sm:$0xff]
      %v7302 = vld [vmem:[#allocation5 + $0x120] sm:$0xff]
      %v7303 = vld [vmem:[#allocation5 + $0x128] sm:$0xff]
      %v7304 = vld [vmem:[#allocation5 + $0x130] sm:$0xff]
      %v7305 = vld [vmem:[#allocation5 + $0x138] sm:$0xff]
      %v7306 = vpack.c.bf16 %v7268, %v7266
      %v7307 = vpack.c.bf16 %v7269, %v7267
      %v7308 = vpack.c.bf16 %v7272, %v7270
      %v7309 = vpack.c.bf16 %v7273, %v7271
      %v7310 = vpack.c.bf16 %v7276, %v7274
      %v7311 = vpack.c.bf16 %v7277, %v7275
      %v7312 = vpack.c.bf16 %v7280, %v7278
      %v7313 = vpack.c.bf16 %v7281, %v7279
      %v7314 = vpack.c.bf16 %v7284, %v7282
      %v7315 = vpack.c.bf16 %v7285, %v7283
      %v7316 = vpack.c.bf16 %v7288, %v7286
      %v7317 = vpack.c.bf16 %v7289, %v7287
      %v7318 = vpack.c.bf16 %v7292, %v7290
      %v7319 = vpack.c.bf16 %v7293, %v7291
      %v7320 = vpack.c.bf16 %v7296, %v7294
      %v7321 = vpack.c.bf16 %v7297, %v7295
      %v7322 = vpack.c.bf16 %v7300, %v7298
      %v7323 = vpack.c.bf16 %v7301, %v7299
      %v7324 = vpack.c.bf16 %v7304, %v7302
      %v7325 = vpack.c.bf16 %v7305, %v7303
      %v7326 = vld [vmem:[%s59] sm:$0xff]
      %v7327 = vld [vmem:[%s59 + $0x8] sm:$0xff]
      %v7328 = vld [vmem:[%s59 + $0x10] sm:$0xff]
      %v7329 = vld [vmem:[%s59 + $0x18] sm:$0xff]
      %v7330 = vld [vmem:[%s59 + $0x20] sm:$0xff]
      %v7331 = vld [vmem:[%s59 + $0x28] sm:$0xff]
      %v7332 = vld [vmem:[%s59 + $0x30] sm:$0xff]
      %v7333 = vld [vmem:[%s59 + $0x38] sm:$0xff]
      %v7334 = vld [vmem:[%s59 + $0x40] sm:$0xff]
      %v7335 = vld [vmem:[%s59 + $0x48] sm:$0xff]
      %v7336 = vld [vmem:[%s59 + $0x50] sm:$0xff]
      %v7337 = vld [vmem:[%s59 + $0x58] sm:$0xff]
      %v7338 = vld [vmem:[%s59 + $0x60] sm:$0xff]
      %v7339 = vld [vmem:[%s59 + $0x68] sm:$0xff]
      %v7340 = vld [vmem:[%s59 + $0x70] sm:$0xff]
      %v7341 = vld [vmem:[%s59 + $0x78] sm:$0xff]
      %v7342 = vld [vmem:[%s59 + $0x80] sm:$0xff]
      %v7343 = vld [vmem:[%s59 + $0x88] sm:$0xff]
      %v7344 = vld [vmem:[%s59 + $0x90] sm:$0xff]
      %v7345 = vld [vmem:[%s59 + $0x98] sm:$0xff]
      %v7346 = vld [vmem:[%s59 + $0xa0] sm:$0xff]
      %v7347 = vld [vmem:[%s59 + $0xa8] sm:$0xff]
      %v7348 = vld [vmem:[%s59 + $0xb0] sm:$0xff]
      %v7349 = vld [vmem:[%s59 + $0xb8] sm:$0xff]
      %v7350 = vld [vmem:[%s59 + $0xc0] sm:$0xff]
      %v7351 = vld [vmem:[%s59 + $0xc8] sm:$0xff]
      %v7352 = vld [vmem:[%s59 + $0xd0] sm:$0xff]
      %v7353 = vld [vmem:[%s59 + $0xd8] sm:$0xff]
      %v7354 = vld [vmem:[%s59 + $0xe0] sm:$0xff]
      %v7355 = vld [vmem:[%s59 + $0xe8] sm:$0xff]
      %v7356 = vld [vmem:[%s59 + $0xf0] sm:$0xff]
      %v7357 = vld [vmem:[%s59 + $0xf8] sm:$0xff]
      %v7390 = vunpack.c.l.b16 %v7326
      %v7391 = vunpack.c.h.b16 %v7326
      %v7392 = vunpack.c.l.b16 %v7327
      %v7393 = vunpack.c.h.b16 %v7327
      %v7394 = vunpack.c.l.b16 %v7328
      %v7395 = vunpack.c.h.b16 %v7328
      %v7396 = vunpack.c.l.b16 %v7329
      %v7397 = vunpack.c.h.b16 %v7329
      %v7398 = vunpack.c.l.b16 %v7330
      %v7399 = vunpack.c.h.b16 %v7330
      %v7400 = vunpack.c.l.b16 %v7331
      %v7401 = vunpack.c.h.b16 %v7331
      %v7402 = vunpack.c.l.b16 %v7332
      %v7403 = vunpack.c.h.b16 %v7332
      %v7404 = vunpack.c.l.b16 %v7333
      %v7405 = vunpack.c.h.b16 %v7333
      %v7406 = vunpack.c.l.b16 %v7334
      %v7407 = vunpack.c.h.b16 %v7334
      %v7408 = vunpack.c.l.b16 %v7335
      %v7409 = vunpack.c.h.b16 %v7335
      %v7410 = vunpack.c.l.b16 %v7336
      %v7411 = vunpack.c.h.b16 %v7336
      %v7412 = vunpack.c.l.b16 %v7337
      %v7413 = vunpack.c.h.b16 %v7337
      %v7414 = vunpack.c.l.b16 %v7338
      %v7415 = vunpack.c.h.b16 %v7338
      %v7416 = vunpack.c.l.b16 %v7339
      %v7417 = vunpack.c.h.b16 %v7339
      %v7418 = vunpack.c.l.b16 %v7340
      %v7419 = vunpack.c.h.b16 %v7340
      %v7420 = vunpack.c.l.b16 %v7341
      %v7421 = vunpack.c.h.b16 %v7341
      %v7422 = vunpack.c.l.b16 %v7342
      %v7423 = vunpack.c.h.b16 %v7342
      %v7424 = vunpack.c.l.b16 %v7343
      %v7425 = vunpack.c.h.b16 %v7343
      %v7426 = vunpack.c.l.b16 %v7344
      %v7427 = vunpack.c.h.b16 %v7344
      %v7428 = vunpack.c.l.b16 %v7345
      %v7429 = vunpack.c.h.b16 %v7345
      %v7430 = vunpack.c.l.b16 %v7346
      %v7431 = vunpack.c.h.b16 %v7346
      %v7432 = vunpack.c.l.b16 %v7347
      %v7433 = vunpack.c.h.b16 %v7347
      %v7434 = vunpack.c.l.b16 %v7348
      %v7435 = vunpack.c.h.b16 %v7348
      %v7436 = vunpack.c.l.b16 %v7349
      %v7437 = vunpack.c.h.b16 %v7349
      %v7438 = vunpack.c.l.b16 %v7350
      %v7439 = vunpack.c.h.b16 %v7350
      %v7440 = vunpack.c.l.b16 %v7351
      %v7441 = vunpack.c.h.b16 %v7351
      %v7442 = vunpack.c.l.b16 %v7352
      %v7443 = vunpack.c.h.b16 %v7352
      %v7444 = vunpack.c.l.b16 %v7353
      %v7445 = vunpack.c.h.b16 %v7353
      %v7446 = vunpack.c.l.b16 %v7354
      %v7447 = vunpack.c.h.b16 %v7354
      %v7448 = vunpack.c.l.b16 %v7355
      %v7449 = vunpack.c.h.b16 %v7355
      %v7450 = vunpack.c.l.b16 %v7356
      %v7451 = vunpack.c.h.b16 %v7356
      %v7452 = vunpack.c.l.b16 %v7357
      %v7453 = vunpack.c.h.b16 %v7357
      %v7454 = vpack.c.b16 %v7392, %v7390
      %v7455 = vpack.c.b16 %v7393, %v7391
      %v7456 = vpack.c.b16 %v7396, %v7394
      %v7457 = vpack.c.b16 %v7397, %v7395
      %v7458 = vpack.c.b16 %v7400, %v7398
      %v7459 = vpack.c.b16 %v7401, %v7399
      %v7460 = vpack.c.b16 %v7404, %v7402
      %v7461 = vpack.c.b16 %v7405, %v7403
      %v7462 = vpack.c.b16 %v7408, %v7406
      %v7463 = vpack.c.b16 %v7409, %v7407
      %v7464 = vpack.c.b16 %v7412, %v7410
      %v7465 = vpack.c.b16 %v7413, %v7411
      %v7466 = vpack.c.b16 %v7416, %v7414
      %v7467 = vpack.c.b16 %v7417, %v7415
      %v7468 = vpack.c.b16 %v7420, %v7418
      %v7469 = vpack.c.b16 %v7421, %v7419
      %v7470 = vpack.c.b16 %v7424, %v7422
      %v7471 = vpack.c.b16 %v7425, %v7423
      %v7472 = vpack.c.b16 %v7428, %v7426
      %v7473 = vpack.c.b16 %v7429, %v7427
      %v7474 = vpack.c.b16 %v7432, %v7430
      %v7475 = vpack.c.b16 %v7433, %v7431
      %v7476 = vpack.c.b16 %v7436, %v7434
      %v7477 = vpack.c.b16 %v7437, %v7435
      %v7478 = vpack.c.b16 %v7440, %v7438
      %v7479 = vpack.c.b16 %v7441, %v7439
      %v7480 = vpack.c.b16 %v7444, %v7442
      %v7481 = vpack.c.b16 %v7445, %v7443
      %v7482 = vpack.c.b16 %v7448, %v7446
      %v7483 = vpack.c.b16 %v7449, %v7447
      %v7484 = vpack.c.b16 %v7452, %v7450
      %v7485 = vpack.c.b16 %v7453, %v7451
      %7518 = vmatprep.subr.bf16.mxu0 %v7469
      %7519 = vmatpush1.bf16.msra.mxu0 %v7468
      %7520 = vmatprep.subr.bf16.mxu0 %v7467
      %7521 = vmatpush1.bf16.msra.mxu0 %v7466
      %7522 = vmatprep.subr.bf16.mxu0 %v7465
      %7523 = vmatpush1.bf16.msra.mxu0 %v7464
      %7524 = vmatprep.subr.bf16.mxu0 %v7463
      %7525 = vmatpush1.bf16.msra.mxu0 %v7462
      %7526 = vmatprep.subr.bf16.mxu0 %v7461
      %7527 = vmatpush1.bf16.msra.mxu0 %v7460
      %7528 = vmatprep.subr.bf16.mxu0 %v7459
      %7529 = vmatpush1.bf16.msra.mxu0 %v7458
      %7530 = vmatprep.subr.bf16.mxu0 %v7457
      %7531 = vmatpush1.bf16.msra.mxu0 %v7456
      %7532 = vmatprep.subr.bf16.mxu0 %v7455
      %7533 = vmatpush1.bf16.msra.mxu0 %v7454
      %7534 = vmatprep.subr.bf16.mxu0 %v7485
      %7535 = vmatpush2.bf16.msra.mxu0 %v7484
      %7536 = vmatprep.subr.bf16.mxu0 %v7483
      %7537 = vmatpush2.bf16.msra.mxu0 %v7482
      %7538 = vmatprep.subr.bf16.mxu0 %v7481
      %7539 = vmatpush2.bf16.msra.mxu0 %v7480
      %7540 = vmatprep.subr.bf16.mxu0 %v7479
      %7541 = vmatpush2.bf16.msra.mxu0 %v7478
      %7542 = vmatprep.subr.bf16.mxu0 %v7477
      %7543 = vmatpush2.bf16.msra.mxu0 %v7476
      %7544 = vmatprep.subr.bf16.mxu0 %v7475
      %7545 = vmatpush2.bf16.msra.mxu0 %v7474
      %7546 = vmatprep.subr.bf16.mxu0 %v7473
      %7547 = vmatpush2.bf16.msra.mxu0 %v7472
      %7548 = vmatprep.subr.bf16.mxu0 %v7471
      %7549 = vmatpush2.bf16.msra.mxu0 %v7470
      %7550 = vmatprep.mubr.bf16.mxu0 %v7307
      %7551 = vmatmul.mubr.bf16.gmra.mxu0 %v7306
      %v7552 = vpop.f32.mrf.mxu0
      %v7553 = vpop.f32.mrf.mxu0
      %v7554 = vpop.f32.mrf.mxu0
      %v7555 = vpop.f32.mrf.mxu0
      %7556 = vmatprep.mubr.bf16.mxu0 %v7309
      %7557 = vmatmul.mubr.bf16.gmra.mxu0 %v7308
      %v7558 = vpop.f32.mrf.mxu0
      %v7559 = vadd.f32 0.0, %v7558
      %v7560 = vpop.f32.mrf.mxu0
      %v7561 = vadd.f32 0.0, %v7560
      %v7562 = vpop.f32.mrf.mxu0
      %v7563 = vadd.f32 0.0, %v7562
      %v7564 = vpop.f32.mrf.mxu0
      %v7565 = vadd.f32 0.0, %v7564
      %7566 = vmatprep.mubr.bf16.mxu0 %v7311
      %7567 = vmatmul.mubr.bf16.gmra.mxu0 %v7310
      %v7568 = vpop.f32.mrf.mxu0
      %v7569 = vadd.f32 0.0, %v7568
      %v7570 = vpop.f32.mrf.mxu0
      %v7571 = vadd.f32 0.0, %v7570
      %v7572 = vpop.f32.mrf.mxu0
      %v7573 = vadd.f32 0.0, %v7572
      %v7574 = vpop.f32.mrf.mxu0
      %v7575 = vadd.f32 0.0, %v7574
      %7576 = vmatprep.mubr.bf16.mxu0 %v7313
      %7577 = vmatmul.mubr.bf16.gmra.mxu0 %v7312
      %v7578 = vpop.f32.mrf.mxu0
      %v7579 = vadd.f32 0.0, %v7578
      %v7580 = vpop.f32.mrf.mxu0
      %v7581 = vadd.f32 0.0, %v7580
      %v7582 = vpop.f32.mrf.mxu0
      %v7583 = vadd.f32 0.0, %v7582
      %v7584 = vpop.f32.mrf.mxu0
      %v7585 = vadd.f32 0.0, %v7584
      %7586 = vmatprep.mubr.bf16.mxu0 %v7315
      %7587 = vmatmul.mubr.bf16.gmra.mxu0 %v7314
      %v7588 = vpop.f32.mrf.mxu0
      %v7589 = vadd.f32 0.0, %v7588
      %v7590 = vpop.f32.mrf.mxu0
      %v7591 = vadd.f32 0.0, %v7590
      %v7592 = vpop.f32.mrf.mxu0
      %v7593 = vadd.f32 0.0, %v7592
      %v7594 = vpop.f32.mrf.mxu0
      %v7595 = vadd.f32 0.0, %v7594
      %7596 = vmatprep.mubr.bf16.mxu0 %v7317
      %7597 = vmatmul.mubr.bf16.gmra.mxu0 %v7316
      %v7598 = vpop.f32.mrf.mxu0
      %v7599 = vadd.f32 0.0, %v7598
      %v7600 = vpop.f32.mrf.mxu0
      %v7601 = vadd.f32 0.0, %v7600
      %v7602 = vpop.f32.mrf.mxu0
      %v7603 = vadd.f32 0.0, %v7602
      %v7604 = vpop.f32.mrf.mxu0
      %v7605 = vadd.f32 0.0, %v7604
      %7606 = vmatprep.mubr.bf16.mxu0 %v7319
      %7607 = vmatmul.mubr.bf16.gmra.mxu0 %v7318
      %v7608 = vpop.f32.mrf.mxu0
      %v7609 = vadd.f32 0.0, %v7608
      %v7610 = vpop.f32.mrf.mxu0
      %v7611 = vadd.f32 0.0, %v7610
      %v7612 = vpop.f32.mrf.mxu0
      %v7613 = vadd.f32 0.0, %v7612
      %v7614 = vpop.f32.mrf.mxu0
      %v7615 = vadd.f32 0.0, %v7614
      %7616 = vmatprep.mubr.bf16.mxu0 %v7321
      %7617 = vmatmul.mubr.bf16.gmra.mxu0 %v7320
      %v7618 = vpop.f32.mrf.mxu0
      %v7619 = vadd.f32 0.0, %v7618
      %v7620 = vpop.f32.mrf.mxu0
      %v7621 = vadd.f32 0.0, %v7620
      %v7622 = vpop.f32.mrf.mxu0
      %v7623 = vadd.f32 0.0, %v7622
      %v7624 = vpop.f32.mrf.mxu0
      %v7625 = vadd.f32 0.0, %v7624
      %7626 = vmatprep.mubr.bf16.mxu0 %v7323
      %7627 = vmatmul.mubr.bf16.gmra.mxu0 %v7322
      %v7628 = vpop.f32.mrf.mxu0
      %v7629 = vadd.f32 0.0, %v7628
      %v7630 = vpop.f32.mrf.mxu0
      %v7631 = vadd.f32 0.0, %v7630
      %v7632 = vpop.f32.mrf.mxu0
      %v7633 = vadd.f32 0.0, %v7632
      %v7634 = vpop.f32.mrf.mxu0
      %v7635 = vadd.f32 0.0, %v7634
      %7636 = vmatprep.mubr.bf16.mxu0 %v7325
      %7637 = vmatmul.mubr.bf16.gmra.mxu0 %v7324
      %v7638 = vpop.f32.mrf.mxu0
      %v7639 = vpop.f32.mrf.mxu0
      %v7640 = vpop.f32.mrf.mxu0
      %v7641 = vpop.f32.mrf.mxu0
      %7642 = vdwg.mxu0
      %v7675 = vunpack.c.l.b16 %v7234
      %v7676 = vunpack.c.h.b16 %v7234
      %v7677 = vunpack.c.l.b16 %v7235
      %v7678 = vunpack.c.h.b16 %v7235
      %v7679 = vunpack.c.l.b16 %v7236
      %v7680 = vunpack.c.h.b16 %v7236
      %v7681 = vunpack.c.l.b16 %v7237
      %v7682 = vunpack.c.h.b16 %v7237
      %v7683 = vunpack.c.l.b16 %v7238
      %v7684 = vunpack.c.h.b16 %v7238
      %v7685 = vunpack.c.l.b16 %v7239
      %v7686 = vunpack.c.h.b16 %v7239
      %v7687 = vunpack.c.l.b16 %v7240
      %v7688 = vunpack.c.h.b16 %v7240
      %v7689 = vunpack.c.l.b16 %v7241
      %v7690 = vunpack.c.h.b16 %v7241
      %v7691 = vunpack.c.l.b16 %v7242
      %v7692 = vunpack.c.h.b16 %v7242
      %v7693 = vunpack.c.l.b16 %v7243
      %v7694 = vunpack.c.h.b16 %v7243
      %v7695 = vunpack.c.l.b16 %v7244
      %v7696 = vunpack.c.h.b16 %v7244
      %v7697 = vunpack.c.l.b16 %v7245
      %v7698 = vunpack.c.h.b16 %v7245
      %v7699 = vunpack.c.l.b16 %v7246
      %v7700 = vunpack.c.h.b16 %v7246
      %v7701 = vunpack.c.l.b16 %v7247
      %v7702 = vunpack.c.h.b16 %v7247
      %v7703 = vunpack.c.l.b16 %v7248
      %v7704 = vunpack.c.h.b16 %v7248
      %v7705 = vunpack.c.l.b16 %v7249
      %v7706 = vunpack.c.h.b16 %v7249
      %v7707 = vunpack.c.l.b16 %v7250
      %v7708 = vunpack.c.h.b16 %v7250
      %v7709 = vunpack.c.l.b16 %v7251
      %v7710 = vunpack.c.h.b16 %v7251
      %v7711 = vunpack.c.l.b16 %v7252
      %v7712 = vunpack.c.h.b16 %v7252
      %v7713 = vunpack.c.l.b16 %v7253
      %v7714 = vunpack.c.h.b16 %v7253
      %v7715 = vunpack.c.l.b16 %v7254
      %v7716 = vunpack.c.h.b16 %v7254
      %v7717 = vunpack.c.l.b16 %v7255
      %v7718 = vunpack.c.h.b16 %v7255
      %v7719 = vunpack.c.l.b16 %v7256
      %v7720 = vunpack.c.h.b16 %v7256
      %v7721 = vunpack.c.l.b16 %v7257
      %v7722 = vunpack.c.h.b16 %v7257
      %v7723 = vunpack.c.l.b16 %v7258
      %v7724 = vunpack.c.h.b16 %v7258
      %v7725 = vunpack.c.l.b16 %v7259
      %v7726 = vunpack.c.h.b16 %v7259
      %v7727 = vunpack.c.l.b16 %v7260
      %v7728 = vunpack.c.h.b16 %v7260
      %v7729 = vunpack.c.l.b16 %v7261
      %v7730 = vunpack.c.h.b16 %v7261
      %v7731 = vunpack.c.l.b16 %v7262
      %v7732 = vunpack.c.h.b16 %v7262
      %v7733 = vunpack.c.l.b16 %v7263
      %v7734 = vunpack.c.h.b16 %v7263
      %v7735 = vunpack.c.l.b16 %v7264
      %v7736 = vunpack.c.h.b16 %v7264
      %v7737 = vunpack.c.l.b16 %v7265
      %v7738 = vunpack.c.h.b16 %v7265
      %v7739 = vpack.c.b16 %v7677, %v7675
      %v7740 = vpack.c.b16 %v7678, %v7676
      %v7741 = vpack.c.b16 %v7681, %v7679
      %v7742 = vpack.c.b16 %v7682, %v7680
      %v7743 = vpack.c.b16 %v7685, %v7683
      %v7744 = vpack.c.b16 %v7686, %v7684
      %v7745 = vpack.c.b16 %v7689, %v7687
      %v7746 = vpack.c.b16 %v7690, %v7688
      %v7747 = vpack.c.b16 %v7693, %v7691
      %v7748 = vpack.c.b16 %v7694, %v7692
      %v7749 = vpack.c.b16 %v7697, %v7695
      %v7750 = vpack.c.b16 %v7698, %v7696
      %v7751 = vpack.c.b16 %v7701, %v7699
      %v7752 = vpack.c.b16 %v7702, %v7700
      %v7753 = vpack.c.b16 %v7705, %v7703
      %v7754 = vpack.c.b16 %v7706, %v7704
      %v7755 = vpack.c.b16 %v7709, %v7707
      %v7756 = vpack.c.b16 %v7710, %v7708
      %v7757 = vpack.c.b16 %v7713, %v7711
      %v7758 = vpack.c.b16 %v7714, %v7712
      %v7759 = vpack.c.b16 %v7717, %v7715
      %v7760 = vpack.c.b16 %v7718, %v7716
      %v7761 = vpack.c.b16 %v7721, %v7719
      %v7762 = vpack.c.b16 %v7722, %v7720
      %v7763 = vpack.c.b16 %v7725, %v7723
      %v7764 = vpack.c.b16 %v7726, %v7724
      %v7765 = vpack.c.b16 %v7729, %v7727
      %v7766 = vpack.c.b16 %v7730, %v7728
      %v7767 = vpack.c.b16 %v7733, %v7731
      %v7768 = vpack.c.b16 %v7734, %v7732
      %v7769 = vpack.c.b16 %v7737, %v7735
      %v7770 = vpack.c.b16 %v7738, %v7736
      %7803 = vmatprep.subr.bf16.mxu0 %v7754
      %7804 = vmatpush1.bf16.msra.mxu0 %v7753
      %7805 = vmatprep.subr.bf16.mxu0 %v7752
      %7806 = vmatpush1.bf16.msra.mxu0 %v7751
      %7807 = vmatprep.subr.bf16.mxu0 %v7750
      %7808 = vmatpush1.bf16.msra.mxu0 %v7749
      %7809 = vmatprep.subr.bf16.mxu0 %v7748
      %7810 = vmatpush1.bf16.msra.mxu0 %v7747
      %7811 = vmatprep.subr.bf16.mxu0 %v7746
      %7812 = vmatpush1.bf16.msra.mxu0 %v7745
      %7813 = vmatprep.subr.bf16.mxu0 %v7744
      %7814 = vmatpush1.bf16.msra.mxu0 %v7743
      %7815 = vmatprep.subr.bf16.mxu0 %v7742
      %7816 = vmatpush1.bf16.msra.mxu0 %v7741
      %7817 = vmatprep.subr.bf16.mxu0 %v7740
      %7818 = vmatpush1.bf16.msra.mxu0 %v7739
      %7819 = vmatprep.subr.bf16.mxu0 %v7770
      %7820 = vmatpush2.bf16.msra.mxu0 %v7769
      %7821 = vmatprep.subr.bf16.mxu0 %v7768
      %7822 = vmatpush2.bf16.msra.mxu0 %v7767
      %7823 = vmatprep.subr.bf16.mxu0 %v7766
      %7824 = vmatpush2.bf16.msra.mxu0 %v7765
      %7825 = vmatprep.subr.bf16.mxu0 %v7764
      %7826 = vmatpush2.bf16.msra.mxu0 %v7763
      %7827 = vmatprep.subr.bf16.mxu0 %v7762
      %7828 = vmatpush2.bf16.msra.mxu0 %v7761
      %7829 = vmatprep.subr.bf16.mxu0 %v7760
      %7830 = vmatpush2.bf16.msra.mxu0 %v7759
      %7831 = vmatprep.subr.bf16.mxu0 %v7758
      %7832 = vmatpush2.bf16.msra.mxu0 %v7757
      %7833 = vmatprep.subr.bf16.mxu0 %v7756
      %7834 = vmatpush2.bf16.msra.mxu0 %v7755
      %7835 = vmatprep.mubr.bf16.mxu0 %v7214
      %7836 = vmatmul.mubr.bf16.gmra.mxu0 %v7213
      %v7837 = vpop.f32.mrf.mxu0
      %v7838 = vpop.f32.mrf.mxu0
      %v7839 = vpop.f32.mrf.mxu0
      %v7840 = vpop.f32.mrf.mxu0
      %7841 = vmatprep.mubr.bf16.mxu0 %v7216
      %7842 = vmatmul.mubr.bf16.gmra.mxu0 %v7215
      %v7843 = vpop.f32.mrf.mxu0
      %v7844 = vadd.f32 %v7559, %v7843
      %v7845 = vpop.f32.mrf.mxu0
      %v7846 = vadd.f32 %v7561, %v7845
      %v7847 = vpop.f32.mrf.mxu0
      %v7848 = vadd.f32 %v7563, %v7847
      %v7849 = vpop.f32.mrf.mxu0
      %v7850 = vadd.f32 %v7565, %v7849
      %7851 = vmatprep.mubr.bf16.mxu0 %v7218
      %7852 = vmatmul.mubr.bf16.gmra.mxu0 %v7217
      %v7853 = vpop.f32.mrf.mxu0
      %v7854 = vadd.f32 %v7569, %v7853
      %v7855 = vpop.f32.mrf.mxu0
      %v7856 = vadd.f32 %v7571, %v7855
      %v7857 = vpop.f32.mrf.mxu0
      %v7858 = vadd.f32 %v7573, %v7857
      %v7859 = vpop.f32.mrf.mxu0
      %v7860 = vadd.f32 %v7575, %v7859
      %7861 = vmatprep.mubr.bf16.mxu0 %v7220
      %7862 = vmatmul.mubr.bf16.gmra.mxu0 %v7219
      %v7863 = vpop.f32.mrf.mxu0
      %v7864 = vadd.f32 %v7579, %v7863
      %v7865 = vpop.f32.mrf.mxu0
      %v7866 = vadd.f32 %v7581, %v7865
      %v7867 = vpop.f32.mrf.mxu0
      %v7868 = vadd.f32 %v7583, %v7867
      %v7869 = vpop.f32.mrf.mxu0
      %v7870 = vadd.f32 %v7585, %v7869
      %7871 = vmatprep.mubr.bf16.mxu0 %v7222
      %7872 = vmatmul.mubr.bf16.gmra.mxu0 %v7221
      %v7873 = vpop.f32.mrf.mxu0
      %v7874 = vadd.f32 %v7589, %v7873
      %v7875 = vpop.f32.mrf.mxu0
      %v7876 = vadd.f32 %v7591, %v7875
      %v7877 = vpop.f32.mrf.mxu0
      %v7878 = vadd.f32 %v7593, %v7877
      %v7879 = vpop.f32.mrf.mxu0
      %v7880 = vadd.f32 %v7595, %v7879
      %7881 = vmatprep.mubr.bf16.mxu0 %v7224
      %7882 = vmatmul.mubr.bf16.gmra.mxu0 %v7223
      %v7883 = vpop.f32.mrf.mxu0
      %v7884 = vadd.f32 %v7599, %v7883
      %v7885 = vpop.f32.mrf.mxu0
      %v7886 = vadd.f32 %v7601, %v7885
      %v7887 = vpop.f32.mrf.mxu0
      %v7888 = vadd.f32 %v7603, %v7887
      %v7889 = vpop.f32.mrf.mxu0
      %v7890 = vadd.f32 %v7605, %v7889
      %7891 = vmatprep.mubr.bf16.mxu0 %v7226
      %7892 = vmatmul.mubr.bf16.gmra.mxu0 %v7225
      %v7893 = vpop.f32.mrf.mxu0
      %v7894 = vadd.f32 %v7609, %v7893
      %v7895 = vpop.f32.mrf.mxu0
      %v7896 = vadd.f32 %v7611, %v7895
      %v7897 = vpop.f32.mrf.mxu0
      %v7898 = vadd.f32 %v7613, %v7897
      %v7899 = vpop.f32.mrf.mxu0
      %v7900 = vadd.f32 %v7615, %v7899
      %7901 = vmatprep.mubr.bf16.mxu0 %v7228
      %7902 = vmatmul.mubr.bf16.gmra.mxu0 %v7227
      %v7903 = vpop.f32.mrf.mxu0
      %v7904 = vadd.f32 %v7619, %v7903
      %v7905 = vpop.f32.mrf.mxu0
      %v7906 = vadd.f32 %v7621, %v7905
      %v7907 = vpop.f32.mrf.mxu0
      %v7908 = vadd.f32 %v7623, %v7907
      %v7909 = vpop.f32.mrf.mxu0
      %v7910 = vadd.f32 %v7625, %v7909
      %7911 = vmatprep.mubr.bf16.mxu0 %v7230
      %7912 = vmatmul.mubr.bf16.gmra.mxu0 %v7229
      %v7913 = vpop.f32.mrf.mxu0
      %v7914 = vadd.f32 %v7629, %v7913
      %v7915 = vpop.f32.mrf.mxu0
      %v7916 = vadd.f32 %v7631, %v7915
      %v7917 = vpop.f32.mrf.mxu0
      %v7918 = vadd.f32 %v7633, %v7917
      %v7919 = vpop.f32.mrf.mxu0
      %v7920 = vadd.f32 %v7635, %v7919
      %7921 = vmatprep.mubr.bf16.mxu0 %v7232
      %7922 = vmatmul.mubr.bf16.gmra.mxu0 %v7231
      %v7923 = vpop.f32.mrf.mxu0
      %v7924 = vpop.f32.mrf.mxu0
      %v7925 = vpop.f32.mrf.mxu0
      %v7926 = vpop.f32.mrf.mxu0
      %7927 = vdwg.mxu0
      %v7928 = vld [vmem:[#allocation5] sm:$0xfc]
      %v7929 = vld [vmem:[#allocation5 + $0x8] sm:$0xfc]
      %v7930 = vld [vmem:[#allocation5 + $0x10] sm:$0xff]
      %v7931 = vld [vmem:[#allocation5 + $0x18] sm:$0xff]
      %v7932 = vld [vmem:[#allocation5 + $0x20] sm:$0xff]
      %v7933 = vld [vmem:[#allocation5 + $0x28] sm:$0xff]
      %v7934 = vld [vmem:[#allocation5 + $0x30] sm:$0xff]
      %v7935 = vld [vmem:[#allocation5 + $0x38] sm:$0xff]
      %v7936 = vld [vmem:[#allocation5 + $0x40] sm:$0xff]
      %v7937 = vld [vmem:[#allocation5 + $0x48] sm:$0xff]
      %v7938 = vld [vmem:[#allocation5 + $0x50] sm:$0xff]
      %v7939 = vld [vmem:[#allocation5 + $0x58] sm:$0xff]
      %v7940 = vld [vmem:[#allocation5 + $0x60] sm:$0xff]
      %v7941 = vld [vmem:[#allocation5 + $0x68] sm:$0xff]
      %v7942 = vld [vmem:[#allocation5 + $0x70] sm:$0xff]
      %v7943 = vld [vmem:[#allocation5 + $0x78] sm:$0xff]
      %v7944 = vld [vmem:[#allocation5 + $0x80] sm:$0xff]
      %v7945 = vld [vmem:[#allocation5 + $0x88] sm:$0xff]
      %v7946 = vld [vmem:[#allocation5 + $0x90] sm:$0xff]
      %v7947 = vld [vmem:[#allocation5 + $0x98] sm:$0xff]
      %v7948 = vld [vmem:[#allocation5 + $0xa0] sm:$0xff]
      %v7949 = vld [vmem:[#allocation5 + $0xa8] sm:$0xff]
      %v7950 = vld [vmem:[#allocation5 + $0xb0] sm:$0xff]
      %v7951 = vld [vmem:[#allocation5 + $0xb8] sm:$0xff]
      %v7952 = vld [vmem:[#allocation5 + $0xc0] sm:$0xff]
      %v7953 = vld [vmem:[#allocation5 + $0xc8] sm:$0xff]
      %v7954 = vld [vmem:[#allocation5 + $0xd0] sm:$0xff]
      %v7955 = vld [vmem:[#allocation5 + $0xd8] sm:$0xff]
      %v7956 = vld [vmem:[#allocation5 + $0xe0] sm:$0xff]
      %v7957 = vld [vmem:[#allocation5 + $0xe8] sm:$0xff]
      %v7958 = vld [vmem:[#allocation5 + $0xf0] sm:$0xff]
      %v7959 = vld [vmem:[#allocation5 + $0xf8] sm:$0xff]
      %v7960 = vld [vmem:[#allocation5 + $0x100] sm:$0xff]
      %v7961 = vld [vmem:[#allocation5 + $0x108] sm:$0xff]
      %v7962 = vld [vmem:[#allocation5 + $0x110] sm:$0xff]
      %v7963 = vld [vmem:[#allocation5 + $0x118] sm:$0xff]
      %v7964 = vld [vmem:[#allocation5 + $0x120] sm:$0xff]
      %v7965 = vld [vmem:[#allocation5 + $0x128] sm:$0xff]
      %v7966 = vld [vmem:[#allocation5 + $0x130] sm:$0xff]
      %v7967 = vld [vmem:[#allocation5 + $0x138] sm:$0xff]
      %v7968 = vld [vmem:[#allocation5 + $0x140] sm:$0x3]
      %v7969 = vld [vmem:[#allocation5 + $0x148] sm:$0x3]
      %v7970 = vpack.c.bf16 %v7930, %v7928
      %v7971 = vpack.c.bf16 %v7931, %v7929
      %v7972 = vpack.c.bf16 %v7934, %v7932
      %v7973 = vpack.c.bf16 %v7935, %v7933
      %v7974 = vpack.c.bf16 %v7938, %v7936
      %v7975 = vpack.c.bf16 %v7939, %v7937
      %v7976 = vpack.c.bf16 %v7942, %v7940
      %v7977 = vpack.c.bf16 %v7943, %v7941
      %v7978 = vpack.c.bf16 %v7946, %v7944
      %v7979 = vpack.c.bf16 %v7947, %v7945
      %v7980 = vpack.c.bf16 %v7950, %v7948
      %v7981 = vpack.c.bf16 %v7951, %v7949
      %v7982 = vpack.c.bf16 %v7954, %v7952
      %v7983 = vpack.c.bf16 %v7955, %v7953
      %v7984 = vpack.c.bf16 %v7958, %v7956
      %v7985 = vpack.c.bf16 %v7959, %v7957
      %v7986 = vpack.c.bf16 %v7962, %v7960
      %v7987 = vpack.c.bf16 %v7963, %v7961
      %v7988 = vpack.c.bf16 %v7966, %v7964
      %v7989 = vpack.c.bf16 %v7967, %v7965
      %v7990 = vpack.c.bf16 %v7968, %v7968
      %v7991 = vpack.c.bf16 %v7969, %v7969
      %s7992 = scalar_lea.vmem %s59, 512
      %v7993 = vld [vmem:[%s7992] sm:$0xff]
      %v7994 = vld [vmem:[%s7992 + $0x8] sm:$0xff]
      %v7995 = vld [vmem:[%s7992 + $0x10] sm:$0xff]
      %v7996 = vld [vmem:[%s7992 + $0x18] sm:$0xff]
      %v7997 = vld [vmem:[%s7992 + $0x20] sm:$0xff]
      %v7998 = vld [vmem:[%s7992 + $0x28] sm:$0xff]
      %v7999 = vld [vmem:[%s7992 + $0x30] sm:$0xff]
      %v8000 = vld [vmem:[%s7992 + $0x38] sm:$0xff]
      %v8001 = vld [vmem:[%s7992 + $0x40] sm:$0xff]
      %v8002 = vld [vmem:[%s7992 + $0x48] sm:$0xff]
      %v8003 = vld [vmem:[%s7992 + $0x50] sm:$0xff]
      %v8004 = vld [vmem:[%s7992 + $0x58] sm:$0xff]
      %v8005 = vld [vmem:[%s7992 + $0x60] sm:$0xff]
      %v8006 = vld [vmem:[%s7992 + $0x68] sm:$0xff]
      %v8007 = vld [vmem:[%s7992 + $0x70] sm:$0xff]
      %v8008 = vld [vmem:[%s7992 + $0x78] sm:$0xff]
      %v8009 = vld [vmem:[%s7992 + $0x80] sm:$0xff]
      %v8010 = vld [vmem:[%s7992 + $0x88] sm:$0xff]
      %v8011 = vld [vmem:[%s7992 + $0x90] sm:$0xff]
      %v8012 = vld [vmem:[%s7992 + $0x98] sm:$0xff]
      %v8013 = vld [vmem:[%s7992 + $0xa0] sm:$0xff]
      %v8014 = vld [vmem:[%s7992 + $0xa8] sm:$0xff]
      %v8015 = vld [vmem:[%s7992 + $0xb0] sm:$0xff]
      %v8016 = vld [vmem:[%s7992 + $0xb8] sm:$0xff]
      %v8017 = vld [vmem:[%s7992 + $0xc0] sm:$0xff]
      %v8018 = vld [vmem:[%s7992 + $0xc8] sm:$0xff]
      %v8019 = vld [vmem:[%s7992 + $0xd0] sm:$0xff]
      %v8020 = vld [vmem:[%s7992 + $0xd8] sm:$0xff]
      %v8021 = vld [vmem:[%s7992 + $0xe0] sm:$0xff]
      %v8022 = vld [vmem:[%s7992 + $0xe8] sm:$0xff]
      %v8023 = vld [vmem:[%s7992 + $0xf0] sm:$0xff]
      %v8024 = vld [vmem:[%s7992 + $0xf8] sm:$0xff]
      %vm8047 = vcmask 1046528
      %v8048 = vrot.slane %v7970, 1
      %v8049 = vrot.slane %v7972, 1
      %v8050 = vsel %vm8047, %v8048, %v8049
      %v8051 = vrot.slane %v7971, 1
      %v8052 = vrot.slane %v7973, 1
      %v8053 = vsel %vm8047, %v8051, %v8052
      %v8054 = vrot.slane %v7974, 1
      %v8055 = vsel %vm8047, %v8049, %v8054
      %v8056 = vrot.slane %v7975, 1
      %v8057 = vsel %vm8047, %v8052, %v8056
      %v8058 = vrot.slane %v7976, 1
      %v8059 = vsel %vm8047, %v8054, %v8058
      %v8060 = vrot.slane %v7977, 1
      %v8061 = vsel %vm8047, %v8056, %v8060
      %v8062 = vrot.slane %v7978, 1
      %v8063 = vsel %vm8047, %v8058, %v8062
      %v8064 = vrot.slane %v7979, 1
      %v8065 = vsel %vm8047, %v8060, %v8064
      %v8066 = vrot.slane %v7980, 1
      %v8067 = vsel %vm8047, %v8062, %v8066
      %v8068 = vrot.slane %v7981, 1
      %v8069 = vsel %vm8047, %v8064, %v8068
      %v8070 = vrot.slane %v7982, 1
      %v8071 = vsel %vm8047, %v8066, %v8070
      %v8072 = vrot.slane %v7983, 1
      %v8073 = vsel %vm8047, %v8068, %v8072
      %v8074 = vrot.slane %v7984, 1
      %v8075 = vsel %vm8047, %v8070, %v8074
      %v8076 = vrot.slane %v7985, 1
      %v8077 = vsel %vm8047, %v8072, %v8076
      %v8078 = vrot.slane %v7986, 1
      %v8079 = vsel %vm8047, %v8074, %v8078
      %v8080 = vrot.slane %v7987, 1
      %v8081 = vsel %vm8047, %v8076, %v8080
      %v8082 = vrot.slane %v7988, 1
      %v8083 = vsel %vm8047, %v8078, %v8082
      %v8084 = vrot.slane %v7989, 1
      %v8085 = vsel %vm8047, %v8080, %v8084
      %v8086 = vrot.slane %v7990, 1
      %v8087 = vsel %vm8047, %v8082, %v8086
      %v8088 = vrot.slane %v7991, 1
      %v8089 = vsel %vm8047, %v8084, %v8088
      %v8142 = vunpack.c.l.b16 %v7993
      %v8143 = vunpack.c.h.b16 %v7993
      %v8144 = vunpack.c.l.b16 %v7994
      %v8145 = vunpack.c.h.b16 %v7994
      %v8146 = vunpack.c.l.b16 %v7995
      %v8147 = vunpack.c.h.b16 %v7995
      %v8148 = vunpack.c.l.b16 %v7996
      %v8149 = vunpack.c.h.b16 %v7996
      %v8150 = vunpack.c.l.b16 %v7997
      %v8151 = vunpack.c.h.b16 %v7997
      %v8152 = vunpack.c.l.b16 %v7998
      %v8153 = vunpack.c.h.b16 %v7998
      %v8154 = vunpack.c.l.b16 %v7999
      %v8155 = vunpack.c.h.b16 %v7999
      %v8156 = vunpack.c.l.b16 %v8000
      %v8157 = vunpack.c.h.b16 %v8000
      %v8158 = vunpack.c.l.b16 %v8001
      %v8159 = vunpack.c.h.b16 %v8001
      %v8160 = vunpack.c.l.b16 %v8002
      %v8161 = vunpack.c.h.b16 %v8002
      %v8162 = vunpack.c.l.b16 %v8003
      %v8163 = vunpack.c.h.b16 %v8003
      %v8164 = vunpack.c.l.b16 %v8004
      %v8165 = vunpack.c.h.b16 %v8004
      %v8166 = vunpack.c.l.b16 %v8005
      %v8167 = vunpack.c.h.b16 %v8005
      %v8168 = vunpack.c.l.b16 %v8006
      %v8169 = vunpack.c.h.b16 %v8006
      %v8170 = vunpack.c.l.b16 %v8007
      %v8171 = vunpack.c.h.b16 %v8007
      %v8172 = vunpack.c.l.b16 %v8008
      %v8173 = vunpack.c.h.b16 %v8008
      %v8174 = vunpack.c.l.b16 %v8009
      %v8175 = vunpack.c.h.b16 %v8009
      %v8176 = vunpack.c.l.b16 %v8010
      %v8177 = vunpack.c.h.b16 %v8010
      %v8178 = vunpack.c.l.b16 %v8011
      %v8179 = vunpack.c.h.b16 %v8011
      %v8180 = vunpack.c.l.b16 %v8012
      %v8181 = vunpack.c.h.b16 %v8012
      %v8182 = vunpack.c.l.b16 %v8013
      %v8183 = vunpack.c.h.b16 %v8013
      %v8184 = vunpack.c.l.b16 %v8014
      %v8185 = vunpack.c.h.b16 %v8014
      %v8186 = vunpack.c.l.b16 %v8015
      %v8187 = vunpack.c.h.b16 %v8015
      %v8188 = vunpack.c.l.b16 %v8016
      %v8189 = vunpack.c.h.b16 %v8016
      %v8190 = vunpack.c.l.b16 %v8017
      %v8191 = vunpack.c.h.b16 %v8017
      %v8192 = vunpack.c.l.b16 %v8018
      %v8193 = vunpack.c.h.b16 %v8018
      %v8194 = vunpack.c.l.b16 %v8019
      %v8195 = vunpack.c.h.b16 %v8019
      %v8196 = vunpack.c.l.b16 %v8020
      %v8197 = vunpack.c.h.b16 %v8020
      %v8198 = vunpack.c.l.b16 %v8021
      %v8199 = vunpack.c.h.b16 %v8021
      %v8200 = vunpack.c.l.b16 %v8022
      %v8201 = vunpack.c.h.b16 %v8022
      %v8202 = vunpack.c.l.b16 %v8023
      %v8203 = vunpack.c.h.b16 %v8023
      %v8204 = vunpack.c.l.b16 %v8024
      %v8205 = vunpack.c.h.b16 %v8024
      %v8206 = vpack.c.b16 %v8144, %v8142
      %v8207 = vpack.c.b16 %v8145, %v8143
      %v8208 = vpack.c.b16 %v8148, %v8146
      %v8209 = vpack.c.b16 %v8149, %v8147
      %v8210 = vpack.c.b16 %v8152, %v8150
      %v8211 = vpack.c.b16 %v8153, %v8151
      %v8212 = vpack.c.b16 %v8156, %v8154
      %v8213 = vpack.c.b16 %v8157, %v8155
      %v8214 = vpack.c.b16 %v8160, %v8158
      %v8215 = vpack.c.b16 %v8161, %v8159
      %v8216 = vpack.c.b16 %v8164, %v8162
      %v8217 = vpack.c.b16 %v8165, %v8163
      %v8218 = vpack.c.b16 %v8168, %v8166
      %v8219 = vpack.c.b16 %v8169, %v8167
      %v8220 = vpack.c.b16 %v8172, %v8170
      %v8221 = vpack.c.b16 %v8173, %v8171
      %v8222 = vpack.c.b16 %v8176, %v8174
      %v8223 = vpack.c.b16 %v8177, %v8175
      %v8224 = vpack.c.b16 %v8180, %v8178
      %v8225 = vpack.c.b16 %v8181, %v8179
      %v8226 = vpack.c.b16 %v8184, %v8182
      %v8227 = vpack.c.b16 %v8185, %v8183
      %v8228 = vpack.c.b16 %v8188, %v8186
      %v8229 = vpack.c.b16 %v8189, %v8187
      %v8230 = vpack.c.b16 %v8192, %v8190
      %v8231 = vpack.c.b16 %v8193, %v8191
      %v8232 = vpack.c.b16 %v8196, %v8194
      %v8233 = vpack.c.b16 %v8197, %v8195
      %v8234 = vpack.c.b16 %v8200, %v8198
      %v8235 = vpack.c.b16 %v8201, %v8199
      %v8236 = vpack.c.b16 %v8204, %v8202
      %v8237 = vpack.c.b16 %v8205, %v8203
      %8270 = vmatprep.subr.bf16.mxu0 %v8221
      %8271 = vmatpush1.bf16.msra.mxu0 %v8220
      %8272 = vmatprep.subr.bf16.mxu0 %v8219
      %8273 = vmatpush1.bf16.msra.mxu0 %v8218
      %8274 = vmatprep.subr.bf16.mxu0 %v8217
      %8275 = vmatpush1.bf16.msra.mxu0 %v8216
      %8276 = vmatprep.subr.bf16.mxu0 %v8215
      %8277 = vmatpush1.bf16.msra.mxu0 %v8214
      %8278 = vmatprep.subr.bf16.mxu0 %v8213
      %8279 = vmatpush1.bf16.msra.mxu0 %v8212
      %8280 = vmatprep.subr.bf16.mxu0 %v8211
      %8281 = vmatpush1.bf16.msra.mxu0 %v8210
      %8282 = vmatprep.subr.bf16.mxu0 %v8209
      %8283 = vmatpush1.bf16.msra.mxu0 %v8208
      %8284 = vmatprep.subr.bf16.mxu0 %v8207
      %8285 = vmatpush1.bf16.msra.mxu0 %v8206
      %8286 = vmatprep.subr.bf16.mxu0 %v8237
      %8287 = vmatpush2.bf16.msra.mxu0 %v8236
      %8288 = vmatprep.subr.bf16.mxu0 %v8235
      %8289 = vmatpush2.bf16.msra.mxu0 %v8234
      %8290 = vmatprep.subr.bf16.mxu0 %v8233
      %8291 = vmatpush2.bf16.msra.mxu0 %v8232
      %8292 = vmatprep.subr.bf16.mxu0 %v8231
      %8293 = vmatpush2.bf16.msra.mxu0 %v8230
      %8294 = vmatprep.subr.bf16.mxu0 %v8229
      %8295 = vmatpush2.bf16.msra.mxu0 %v8228
      %8296 = vmatprep.subr.bf16.mxu0 %v8227
      %8297 = vmatpush2.bf16.msra.mxu0 %v8226
      %8298 = vmatprep.subr.bf16.mxu0 %v8225
      %8299 = vmatpush2.bf16.msra.mxu0 %v8224
      %8300 = vmatprep.subr.bf16.mxu0 %v8223
      %8301 = vmatpush2.bf16.msra.mxu0 %v8222
      %8302 = vmatprep.mubr.bf16.mxu0 %v8053
      %8303 = vmatmul.mubr.bf16.gmra.mxu0 %v8050
      %v8304 = vpop.f32.mrf.mxu0
      %v8305 = vpop.f32.mrf.mxu0
      %v8306 = vpop.f32.mrf.mxu0
      %v8307 = vpop.f32.mrf.mxu0
      %8308 = vmatprep.mubr.bf16.mxu0 %v8057
      %8309 = vmatmul.mubr.bf16.gmra.mxu0 %v8055
      %v8310 = vpop.f32.mrf.mxu0
      %v8311 = vadd.f32 0.0, %v8310
      %v8312 = vpop.f32.mrf.mxu0
      %v8313 = vadd.f32 0.0, %v8312
      %v8314 = vpop.f32.mrf.mxu0
      %v8315 = vadd.f32 0.0, %v8314
      %v8316 = vpop.f32.mrf.mxu0
      %v8317 = vadd.f32 0.0, %v8316
      %8318 = vmatprep.mubr.bf16.mxu0 %v8061
      %8319 = vmatmul.mubr.bf16.gmra.mxu0 %v8059
      %v8320 = vpop.f32.mrf.mxu0
      %v8321 = vadd.f32 0.0, %v8320
      %v8322 = vpop.f32.mrf.mxu0
      %v8323 = vadd.f32 0.0, %v8322
      %v8324 = vpop.f32.mrf.mxu0
      %v8325 = vadd.f32 0.0, %v8324
      %v8326 = vpop.f32.mrf.mxu0
      %v8327 = vadd.f32 0.0, %v8326
      %8328 = vmatprep.mubr.bf16.mxu0 %v8065
      %8329 = vmatmul.mubr.bf16.gmra.mxu0 %v8063
      %v8330 = vpop.f32.mrf.mxu0
      %v8331 = vadd.f32 0.0, %v8330
      %v8332 = vpop.f32.mrf.mxu0
      %v8333 = vadd.f32 0.0, %v8332
      %v8334 = vpop.f32.mrf.mxu0
      %v8335 = vadd.f32 0.0, %v8334
      %v8336 = vpop.f32.mrf.mxu0
      %v8337 = vadd.f32 0.0, %v8336
      %8338 = vmatprep.mubr.bf16.mxu0 %v8069
      %8339 = vmatmul.mubr.bf16.gmra.mxu0 %v8067
      %v8340 = vpop.f32.mrf.mxu0
      %v8341 = vadd.f32 0.0, %v8340
      %v8342 = vpop.f32.mrf.mxu0
      %v8343 = vadd.f32 0.0, %v8342
      %v8344 = vpop.f32.mrf.mxu0
      %v8345 = vadd.f32 0.0, %v8344
      %v8346 = vpop.f32.mrf.mxu0
      %v8347 = vadd.f32 0.0, %v8346
      %8348 = vmatprep.mubr.bf16.mxu0 %v8073
      %8349 = vmatmul.mubr.bf16.gmra.mxu0 %v8071
      %v8350 = vpop.f32.mrf.mxu0
      %v8351 = vadd.f32 0.0, %v8350
      %v8352 = vpop.f32.mrf.mxu0
      %v8353 = vadd.f32 0.0, %v8352
      %v8354 = vpop.f32.mrf.mxu0
      %v8355 = vadd.f32 0.0, %v8354
      %v8356 = vpop.f32.mrf.mxu0
      %v8357 = vadd.f32 0.0, %v8356
      %8358 = vmatprep.mubr.bf16.mxu0 %v8077
      %8359 = vmatmul.mubr.bf16.gmra.mxu0 %v8075
      %v8360 = vpop.f32.mrf.mxu0
      %v8361 = vadd.f32 0.0, %v8360
      %v8362 = vpop.f32.mrf.mxu0
      %v8363 = vadd.f32 0.0, %v8362
      %v8364 = vpop.f32.mrf.mxu0
      %v8365 = vadd.f32 0.0, %v8364
      %v8366 = vpop.f32.mrf.mxu0
      %v8367 = vadd.f32 0.0, %v8366
      %8368 = vmatprep.mubr.bf16.mxu0 %v8081
      %8369 = vmatmul.mubr.bf16.gmra.mxu0 %v8079
      %v8370 = vpop.f32.mrf.mxu0
      %v8371 = vadd.f32 0.0, %v8370
      %v8372 = vpop.f32.mrf.mxu0
      %v8373 = vadd.f32 0.0, %v8372
      %v8374 = vpop.f32.mrf.mxu0
      %v8375 = vadd.f32 0.0, %v8374
      %v8376 = vpop.f32.mrf.mxu0
      %v8377 = vadd.f32 0.0, %v8376
      %8378 = vmatprep.mubr.bf16.mxu0 %v8085
      %8379 = vmatmul.mubr.bf16.gmra.mxu0 %v8083
      %v8380 = vpop.f32.mrf.mxu0
      %v8381 = vadd.f32 0.0, %v8380
      %v8382 = vpop.f32.mrf.mxu0
      %v8383 = vadd.f32 0.0, %v8382
      %v8384 = vpop.f32.mrf.mxu0
      %v8385 = vadd.f32 0.0, %v8384
      %v8386 = vpop.f32.mrf.mxu0
      %v8387 = vadd.f32 0.0, %v8386
      %8388 = vmatprep.mubr.bf16.mxu0 %v8089
      %8389 = vmatmul.mubr.bf16.gmra.mxu0 %v8087
      %v8390 = vpop.f32.mrf.mxu0
      %v8391 = vpop.f32.mrf.mxu0
      %v8392 = vpop.f32.mrf.mxu0
      %v8393 = vpop.f32.mrf.mxu0
      %8394 = vdwg.mxu0
      %v8395 = vadd.f32 %v7844, %v8311
      %v8396 = vadd.f32 %v7846, %v8313
      %v8397 = vadd.f32 %v7848, %v8315
      %v8398 = vadd.f32 %v7850, %v8317
      %v8399 = vadd.f32 %v7854, %v8321
      %v8400 = vadd.f32 %v7856, %v8323
      %v8401 = vadd.f32 %v7858, %v8325
      %v8402 = vadd.f32 %v7860, %v8327
      %v8403 = vadd.f32 %v7864, %v8331
      %v8404 = vadd.f32 %v7866, %v8333
      %v8405 = vadd.f32 %v7868, %v8335
      %v8406 = vadd.f32 %v7870, %v8337
      %v8407 = vadd.f32 %v7874, %v8341
      %v8408 = vadd.f32 %v7876, %v8343
      %v8409 = vadd.f32 %v7878, %v8345
      %v8410 = vadd.f32 %v7880, %v8347
      %v8411 = vadd.f32 %v7884, %v8351
      %v8412 = vadd.f32 %v7886, %v8353
      %v8413 = vadd.f32 %v7888, %v8355
      %v8414 = vadd.f32 %v7890, %v8357
      %v8415 = vadd.f32 %v7894, %v8361
      %v8416 = vadd.f32 %v7896, %v8363
      %v8417 = vadd.f32 %v7898, %v8365
      %v8418 = vadd.f32 %v7900, %v8367
      %v8419 = vadd.f32 %v7904, %v8371
      %v8420 = vadd.f32 %v7906, %v8373
      %v8421 = vadd.f32 %v7908, %v8375
      %v8422 = vadd.f32 %v7910, %v8377
      %v8423 = vadd.f32 %v7914, %v8381
      %v8424 = vadd.f32 %v7916, %v8383
      %v8425 = vadd.f32 %v7918, %v8385
      %v8426 = vadd.f32 %v7920, %v8387
      %v8427 = vld [vmem:[%s61] sm:$0x3]
      %v8429 = vlaneseq
      %v8430 = vshrl.u32 %v8429, 7
      %v8431 = vsub.s32 0, %v8430
      %v8432 = vrot.slane %v8427, %v8431
      %v8433 = vlaneseq
      %v8434 = vshrl.u32 %v8433, 7
      %v8435 = vsub.s32 1, %v8434
      %v8436 = vrot.slane %v8427, %v8435
      %v8439 = vmul.f32 %v8395, %v8432
      %v8440 = vmul.f32 %v8396, %v8436
      %v8441 = vmul.f32 %v8397, %v8432
      %v8442 = vmul.f32 %v8398, %v8436
      %v8443 = vmul.f32 %v8399, %v8432
      %v8444 = vmul.f32 %v8400, %v8436
      %v8445 = vmul.f32 %v8401, %v8432
      %v8446 = vmul.f32 %v8402, %v8436
      %v8447 = vmul.f32 %v8403, %v8432
      %v8448 = vmul.f32 %v8404, %v8436
      %v8449 = vmul.f32 %v8405, %v8432
      %v8450 = vmul.f32 %v8406, %v8436
      %v8451 = vmul.f32 %v8407, %v8432
      %v8452 = vmul.f32 %v8408, %v8436
      %v8453 = vmul.f32 %v8409, %v8432
      %v8454 = vmul.f32 %v8410, %v8436
      %v8455 = vmul.f32 %v8411, %v8432
      %v8456 = vmul.f32 %v8412, %v8436
      %v8457 = vmul.f32 %v8413, %v8432
      %v8458 = vmul.f32 %v8414, %v8436
      %v8459 = vmul.f32 %v8415, %v8432
      %v8460 = vmul.f32 %v8416, %v8436
      %v8461 = vmul.f32 %v8417, %v8432
      %v8462 = vmul.f32 %v8418, %v8436
      %v8463 = vmul.f32 %v8419, %v8432
      %v8464 = vmul.f32 %v8420, %v8436
      %v8465 = vmul.f32 %v8421, %v8432
      %v8466 = vmul.f32 %v8422, %v8436
      %v8467 = vmul.f32 %v8423, %v8432
      %v8468 = vmul.f32 %v8424, %v8436
      %v8469 = vmul.f32 %v8425, %v8432
      %v8470 = vmul.f32 %v8426, %v8436
      %v8471 = vld [vmem:[%s63] sm:$0x3]
      %v8473 = vlaneseq
      %v8474 = vshrl.u32 %v8473, 7
      %v8475 = vsub.s32 0, %v8474
      %v8476 = vrot.slane %v8471, %v8475
      %v8477 = vlaneseq
      %v8478 = vshrl.u32 %v8477, 7
      %v8479 = vsub.s32 1, %v8478
      %v8480 = vrot.slane %v8471, %v8479
      %v8483 = vadd.f32 %v8439, %v8476
      %v8484 = vadd.f32 %v8440, %v8480
      %v8485 = vadd.f32 %v8441, %v8476
      %v8486 = vadd.f32 %v8442, %v8480
      %v8487 = vadd.f32 %v8443, %v8476
      %v8488 = vadd.f32 %v8444, %v8480
      %v8489 = vadd.f32 %v8445, %v8476
      %v8490 = vadd.f32 %v8446, %v8480
      %v8491 = vadd.f32 %v8447, %v8476
      %v8492 = vadd.f32 %v8448, %v8480
      %v8493 = vadd.f32 %v8449, %v8476
      %v8494 = vadd.f32 %v8450, %v8480
      %v8495 = vadd.f32 %v8451, %v8476
      %v8496 = vadd.f32 %v8452, %v8480
      %v8497 = vadd.f32 %v8453, %v8476
      %v8498 = vadd.f32 %v8454, %v8480
      %v8499 = vadd.f32 %v8455, %v8476
      %v8500 = vadd.f32 %v8456, %v8480
      %v8501 = vadd.f32 %v8457, %v8476
      %v8502 = vadd.f32 %v8458, %v8480
      %v8503 = vadd.f32 %v8459, %v8476
      %v8504 = vadd.f32 %v8460, %v8480
      %v8505 = vadd.f32 %v8461, %v8476
      %v8506 = vadd.f32 %v8462, %v8480
      %v8507 = vadd.f32 %v8463, %v8476
      %v8508 = vadd.f32 %v8464, %v8480
      %v8509 = vadd.f32 %v8465, %v8476
      %v8510 = vadd.f32 %v8466, %v8480
      %v8511 = vadd.f32 %v8467, %v8476
      %v8512 = vadd.f32 %v8468, %v8480
      %v8513 = vadd.f32 %v8469, %v8476
      %v8514 = vadd.f32 %v8470, %v8480
      %v8515 = vld [vmem:[%s65] sm:$0xff]
      %v8516 = vld [vmem:[%s65 + $0x8] sm:$0xff]
      %v8517 = vld [vmem:[%s65 + $0x10] sm:$0xff]
      %v8518 = vld [vmem:[%s65 + $0x18] sm:$0xff]
      %v8519 = vld [vmem:[%s65 + $0x20] sm:$0xff]
      %v8520 = vld [vmem:[%s65 + $0x28] sm:$0xff]
      %v8521 = vld [vmem:[%s65 + $0x30] sm:$0xff]
      %v8522 = vld [vmem:[%s65 + $0x38] sm:$0xff]
      %v8523 = vld [vmem:[%s65 + $0x40] sm:$0xff]
      %v8524 = vld [vmem:[%s65 + $0x48] sm:$0xff]
      %v8525 = vld [vmem:[%s65 + $0x50] sm:$0xff]
      %v8526 = vld [vmem:[%s65 + $0x58] sm:$0xff]
      %v8527 = vld [vmem:[%s65 + $0x60] sm:$0xff]
      %v8528 = vld [vmem:[%s65 + $0x68] sm:$0xff]
      %v8529 = vld [vmem:[%s65 + $0x70] sm:$0xff]
      %v8530 = vld [vmem:[%s65 + $0x78] sm:$0xff]
      %v8531 = vld [vmem:[%s67] sm:$0x3]
      %v8533 = vlaneseq
      %v8534 = vshrl.u32 %v8533, 7
      %v8535 = vsub.s32 0, %v8534
      %v8536 = vrot.slane %v8531, %v8535
      %v8537 = vlaneseq
      %v8538 = vshrl.u32 %v8537, 7
      %v8539 = vsub.s32 1, %v8538
      %v8540 = vrot.slane %v8531, %v8539
      %v8559 = vunpack.c.l.b16 %v8515
      %v8560 = vunpack.c.h.b16 %v8515
      %v8561 = vunpack.c.l.b16 %v8516
      %v8562 = vunpack.c.h.b16 %v8516
      %v8563 = vunpack.c.l.b16 %v8517
      %v8564 = vunpack.c.h.b16 %v8517
      %v8565 = vunpack.c.l.b16 %v8518
      %v8566 = vunpack.c.h.b16 %v8518
      %v8567 = vunpack.c.l.b16 %v8519
      %v8568 = vunpack.c.h.b16 %v8519
      %v8569 = vunpack.c.l.b16 %v8520
      %v8570 = vunpack.c.h.b16 %v8520
      %v8571 = vunpack.c.l.b16 %v8521
      %v8572 = vunpack.c.h.b16 %v8521
      %v8573 = vunpack.c.l.b16 %v8522
      %v8574 = vunpack.c.h.b16 %v8522
      %v8575 = vunpack.c.l.b16 %v8523
      %v8576 = vunpack.c.h.b16 %v8523
      %v8577 = vunpack.c.l.b16 %v8524
      %v8578 = vunpack.c.h.b16 %v8524
      %v8579 = vunpack.c.l.b16 %v8525
      %v8580 = vunpack.c.h.b16 %v8525
      %v8581 = vunpack.c.l.b16 %v8526
      %v8582 = vunpack.c.h.b16 %v8526
      %v8583 = vunpack.c.l.b16 %v8527
      %v8584 = vunpack.c.h.b16 %v8527
      %v8585 = vunpack.c.l.b16 %v8528
      %v8586 = vunpack.c.h.b16 %v8528
      %v8587 = vunpack.c.l.b16 %v8529
      %v8588 = vunpack.c.h.b16 %v8529
      %v8589 = vunpack.c.l.b16 %v8530
      %v8590 = vunpack.c.h.b16 %v8530
      %v8591 = vpack.c.b16 %v8561, %v8559
      %v8592 = vpack.c.b16 %v8562, %v8560
      %v8593 = vpack.c.b16 %v8565, %v8563
      %v8594 = vpack.c.b16 %v8566, %v8564
      %v8595 = vpack.c.b16 %v8569, %v8567
      %v8596 = vpack.c.b16 %v8570, %v8568
      %v8597 = vpack.c.b16 %v8573, %v8571
      %v8598 = vpack.c.b16 %v8574, %v8572
      %v8599 = vpack.c.b16 %v8577, %v8575
      %v8600 = vpack.c.b16 %v8578, %v8576
      %v8601 = vpack.c.b16 %v8581, %v8579
      %v8602 = vpack.c.b16 %v8582, %v8580
      %v8603 = vpack.c.b16 %v8585, %v8583
      %v8604 = vpack.c.b16 %v8586, %v8584
      %v8605 = vpack.c.b16 %v8589, %v8587
      %v8606 = vpack.c.b16 %v8590, %v8588
      %8623 = vmatprep.subr.bf16.mxu0 %v8606
      %8624 = vmatpush1.bf16.msra.mxu0 %v8605
      %8625 = vmatprep.subr.bf16.mxu0 %v8604
      %8626 = vmatpush1.bf16.msra.mxu0 %v8603
      %8627 = vmatprep.subr.bf16.mxu0 %v8602
      %8628 = vmatpush1.bf16.msra.mxu0 %v8601
      %8629 = vmatprep.subr.bf16.mxu0 %v8600
      %8630 = vmatpush1.bf16.msra.mxu0 %v8599
      %8631 = vmatprep.subr.bf16.mxu0 %v8598
      %8632 = vmatpush1.bf16.msra.mxu0 %v8597
      %8633 = vmatprep.subr.bf16.mxu0 %v8596
      %8634 = vmatpush1.bf16.msra.mxu0 %v8595
      %8635 = vmatprep.subr.bf16.mxu0 %v8594
      %8636 = vmatpush1.bf16.msra.mxu0 %v8593
      %8637 = vmatprep.subr.bf16.mxu0 %v8592
      %8638 = vmatpush1.bf16.msra.mxu0 %v8591
      %8639 = vmatprep.subr.bf16.mxu0 0
      %8640 = vmatpush2.bf16.msra.mxu0 0
      %8641 = vmatprep.subr.bf16.mxu0 0
      %8642 = vmatpush2.bf16.msra.mxu0 0
      %8643 = vmatprep.subr.bf16.mxu0 0
      %8644 = vmatpush2.bf16.msra.mxu0 0
      %8645 = vmatprep.subr.bf16.mxu0 0
      %8646 = vmatpush2.bf16.msra.mxu0 0
      %8647 = vmatprep.subr.bf16.mxu0 0
      %8648 = vmatpush2.bf16.msra.mxu0 0
      %8649 = vmatprep.subr.bf16.mxu0 0
      %8650 = vmatpush2.bf16.msra.mxu0 0
      %8651 = vmatprep.subr.bf16.mxu0 0
      %8652 = vmatpush2.bf16.msra.mxu0 0
      %8653 = vmatprep.subr.bf16.mxu0 0
      %8654 = vmatpush2.bf16.msra.mxu0 0
      %8655 = vmatprep.mubr.bf16.mxu0 0
      %8656 = vmatmul.mubr.bf16.gmra.mxu0 %v6019
      %v8657 = vpop.f32.mrf.mxu0
      %v8658 = vpop.f32.mrf.mxu0
      %v8659 = vpop.f32.mrf.mxu0
      %v8660 = vpop.f32.mrf.mxu0
      %8661 = vmatprep.mubr.bf16.mxu0 0
      %8662 = vmatmul.mubr.bf16.gmra.mxu0 %v6020
      %v8663 = vpop.f32.mrf.mxu0
      %v8664 = vadd.f32 %v8536, %v8663
      %v8665 = vpop.f32.mrf.mxu0
      %v8666 = vadd.f32 %v8540, %v8665
      %v8667 = vpop.f32.mrf.mxu0
      %v8668 = vadd.f32 %v8536, %v8667
      %v8669 = vpop.f32.mrf.mxu0
      %v8670 = vadd.f32 %v8540, %v8669
      %8671 = vmatprep.mubr.bf16.mxu0 0
      %8672 = vmatmul.mubr.bf16.gmra.mxu0 %v6021
      %v8673 = vpop.f32.mrf.mxu0
      %v8674 = vadd.f32 %v8536, %v8673
      %v8675 = vpop.f32.mrf.mxu0
      %v8676 = vadd.f32 %v8540, %v8675
      %v8677 = vpop.f32.mrf.mxu0
      %v8678 = vadd.f32 %v8536, %v8677
      %v8679 = vpop.f32.mrf.mxu0
      %v8680 = vadd.f32 %v8540, %v8679
      %8681 = vmatprep.mubr.bf16.mxu0 0
      %8682 = vmatmul.mubr.bf16.gmra.mxu0 %v6022
      %v8683 = vpop.f32.mrf.mxu0
      %v8684 = vadd.f32 %v8536, %v8683
      %v8685 = vpop.f32.mrf.mxu0
      %v8686 = vadd.f32 %v8540, %v8685
      %v8687 = vpop.f32.mrf.mxu0
      %v8688 = vadd.f32 %v8536, %v8687
      %v8689 = vpop.f32.mrf.mxu0
      %v8690 = vadd.f32 %v8540, %v8689
      %8691 = vmatprep.mubr.bf16.mxu0 0
      %8692 = vmatmul.mubr.bf16.gmra.mxu0 %v6023
      %v8693 = vpop.f32.mrf.mxu0
      %v8694 = vadd.f32 %v8536, %v8693
      %v8695 = vpop.f32.mrf.mxu0
      %v8696 = vadd.f32 %v8540, %v8695
      %v8697 = vpop.f32.mrf.mxu0
      %v8698 = vadd.f32 %v8536, %v8697
      %v8699 = vpop.f32.mrf.mxu0
      %v8700 = vadd.f32 %v8540, %v8699
      %8701 = vmatprep.mubr.bf16.mxu0 0
      %8702 = vmatmul.mubr.bf16.gmra.mxu0 %v6024
      %v8703 = vpop.f32.mrf.mxu0
      %v8704 = vadd.f32 %v8536, %v8703
      %v8705 = vpop.f32.mrf.mxu0
      %v8706 = vadd.f32 %v8540, %v8705
      %v8707 = vpop.f32.mrf.mxu0
      %v8708 = vadd.f32 %v8536, %v8707
      %v8709 = vpop.f32.mrf.mxu0
      %v8710 = vadd.f32 %v8540, %v8709
      %8711 = vmatprep.mubr.bf16.mxu0 0
      %8712 = vmatmul.mubr.bf16.gmra.mxu0 %v6025
      %v8713 = vpop.f32.mrf.mxu0
      %v8714 = vadd.f32 %v8536, %v8713
      %v8715 = vpop.f32.mrf.mxu0
      %v8716 = vadd.f32 %v8540, %v8715
      %v8717 = vpop.f32.mrf.mxu0
      %v8718 = vadd.f32 %v8536, %v8717
      %v8719 = vpop.f32.mrf.mxu0
      %v8720 = vadd.f32 %v8540, %v8719
      %8721 = vmatprep.mubr.bf16.mxu0 0
      %8722 = vmatmul.mubr.bf16.gmra.mxu0 %v6026
      %v8723 = vpop.f32.mrf.mxu0
      %v8724 = vadd.f32 %v8536, %v8723
      %v8725 = vpop.f32.mrf.mxu0
      %v8726 = vadd.f32 %v8540, %v8725
      %v8727 = vpop.f32.mrf.mxu0
      %v8728 = vadd.f32 %v8536, %v8727
      %v8729 = vpop.f32.mrf.mxu0
      %v8730 = vadd.f32 %v8540, %v8729
      %8731 = vmatprep.mubr.bf16.mxu0 0
      %8732 = vmatmul.mubr.bf16.gmra.mxu0 %v6027
      %v8733 = vpop.f32.mrf.mxu0
      %v8734 = vadd.f32 %v8536, %v8733
      %v8735 = vpop.f32.mrf.mxu0
      %v8736 = vadd.f32 %v8540, %v8735
      %v8737 = vpop.f32.mrf.mxu0
      %v8738 = vadd.f32 %v8536, %v8737
      %v8739 = vpop.f32.mrf.mxu0
      %v8740 = vadd.f32 %v8540, %v8739
      %8741 = vmatprep.mubr.bf16.mxu0 0
      %8742 = vmatmul.mubr.bf16.gmra.mxu0 %v6028
      %v8743 = vpop.f32.mrf.mxu0
      %v8744 = vpop.f32.mrf.mxu0
      %v8745 = vpop.f32.mrf.mxu0
      %v8746 = vpop.f32.mrf.mxu0
      %8747 = vdwg.mxu0
      %v8748 = vadd.f32 %v8483, %v8664
      %v8749 = vadd.f32 %v8484, %v8666
      %v8750 = vadd.f32 %v8485, %v8668
      %v8751 = vadd.f32 %v8486, %v8670
      %v8752 = vadd.f32 %v8487, %v8674
      %v8753 = vadd.f32 %v8488, %v8676
      %v8754 = vadd.f32 %v8489, %v8678
      %v8755 = vadd.f32 %v8490, %v8680
      %v8756 = vadd.f32 %v8491, %v8684
      %v8757 = vadd.f32 %v8492, %v8686
      %v8758 = vadd.f32 %v8493, %v8688
      %v8759 = vadd.f32 %v8494, %v8690
      %v8760 = vadd.f32 %v8495, %v8694
      %v8761 = vadd.f32 %v8496, %v8696
      %v8762 = vadd.f32 %v8497, %v8698
      %v8763 = vadd.f32 %v8498, %v8700
      %v8764 = vadd.f32 %v8499, %v8704
      %v8765 = vadd.f32 %v8500, %v8706
      %v8766 = vadd.f32 %v8501, %v8708
      %v8767 = vadd.f32 %v8502, %v8710
      %v8768 = vadd.f32 %v8503, %v8714
      %v8769 = vadd.f32 %v8504, %v8716
      %v8770 = vadd.f32 %v8505, %v8718
      %v8771 = vadd.f32 %v8506, %v8720
      %v8772 = vadd.f32 %v8507, %v8724
      %v8773 = vadd.f32 %v8508, %v8726
      %v8774 = vadd.f32 %v8509, %v8728
      %v8775 = vadd.f32 %v8510, %v8730
      %v8776 = vadd.f32 %v8511, %v8734
      %v8777 = vadd.f32 %v8512, %v8736
      %v8778 = vadd.f32 %v8513, %v8738
      %v8779 = vadd.f32 %v8514, %v8740
      %v8780 = vmax.f32 %v8748, 0.0
      %v8781 = vmax.f32 %v8749, 0.0
      %v8782 = vmax.f32 %v8750, 0.0
      %v8783 = vmax.f32 %v8751, 0.0
      %v8784 = vmax.f32 %v8752, 0.0
      %v8785 = vmax.f32 %v8753, 0.0
      %v8786 = vmax.f32 %v8754, 0.0
      %v8787 = vmax.f32 %v8755, 0.0
      %v8788 = vmax.f32 %v8756, 0.0
      %v8789 = vmax.f32 %v8757, 0.0
      %v8790 = vmax.f32 %v8758, 0.0
      %v8791 = vmax.f32 %v8759, 0.0
      %v8792 = vmax.f32 %v8760, 0.0
      %v8793 = vmax.f32 %v8761, 0.0
      %v8794 = vmax.f32 %v8762, 0.0
      %v8795 = vmax.f32 %v8763, 0.0
      %v8796 = vmax.f32 %v8764, 0.0
      %v8797 = vmax.f32 %v8765, 0.0
      %v8798 = vmax.f32 %v8766, 0.0
      %v8799 = vmax.f32 %v8767, 0.0
      %v8800 = vmax.f32 %v8768, 0.0
      %v8801 = vmax.f32 %v8769, 0.0
      %v8802 = vmax.f32 %v8770, 0.0
      %v8803 = vmax.f32 %v8771, 0.0
      %v8804 = vmax.f32 %v8772, 0.0
      %v8805 = vmax.f32 %v8773, 0.0
      %v8806 = vmax.f32 %v8774, 0.0
      %v8807 = vmax.f32 %v8775, 0.0
      %v8808 = vmax.f32 %v8776, 0.0
      %v8809 = vmax.f32 %v8777, 0.0
      %v8810 = vmax.f32 %v8778, 0.0
      %v8811 = vmax.f32 %v8779, 0.0
      %v8812 = vpack.c.bf16 %v8782, %v8780
      %v8813 = vpack.c.bf16 %v8783, %v8781
      %v8814 = vpack.c.bf16 %v8786, %v8784
      %v8815 = vpack.c.bf16 %v8787, %v8785
      %v8816 = vpack.c.bf16 %v8790, %v8788
      %v8817 = vpack.c.bf16 %v8791, %v8789
      %v8818 = vpack.c.bf16 %v8794, %v8792
      %v8819 = vpack.c.bf16 %v8795, %v8793
      %v8820 = vpack.c.bf16 %v8798, %v8796
      %v8821 = vpack.c.bf16 %v8799, %v8797
      %v8822 = vpack.c.bf16 %v8802, %v8800
      %v8823 = vpack.c.bf16 %v8803, %v8801
      %v8824 = vpack.c.bf16 %v8806, %v8804
      %v8825 = vpack.c.bf16 %v8807, %v8805
      %v8826 = vpack.c.bf16 %v8810, %v8808
      %v8827 = vpack.c.bf16 %v8811, %v8809
      %v8828 = vld [vmem:[%s69] sm:$0xf]
      %v8829 = vld [vmem:[%s69 + $0x4] sm:$0xf]
      %v8830 = vld [vmem:[%s69 + $0x8] sm:$0xf]
      %v8831 = vld [vmem:[%s69 + $0xc] sm:$0xf]
      %v8832 = vld [vmem:[%s69 + $0x10] sm:$0xf]
      %v8833 = vld [vmem:[%s69 + $0x14] sm:$0xf]
      %v8834 = vld [vmem:[%s69 + $0x18] sm:$0xf]
      %v8835 = vld [vmem:[%s69 + $0x1c] sm:$0xf]
      %v8836 = vld [vmem:[%s69 + $0x20] sm:$0xf]
      %v8837 = vld [vmem:[%s69 + $0x24] sm:$0xf]
      %v8838 = vld [vmem:[%s69 + $0x28] sm:$0xf]
      %v8839 = vld [vmem:[%s69 + $0x2c] sm:$0xf]
      %v8840 = vld [vmem:[%s69 + $0x30] sm:$0xf]
      %v8841 = vld [vmem:[%s69 + $0x34] sm:$0xf]
      %v8842 = vld [vmem:[%s69 + $0x38] sm:$0xf]
      %v8843 = vld [vmem:[%s69 + $0x3c] sm:$0xf]
      %v8844 = vld [vmem:[%s69 + $0x40] sm:$0xf]
      %v8845 = vld [vmem:[%s69 + $0x44] sm:$0xf]
      %v8846 = vld [vmem:[%s69 + $0x48] sm:$0xf]
      %v8847 = vld [vmem:[%s69 + $0x4c] sm:$0xf]
      %v8848 = vld [vmem:[%s69 + $0x50] sm:$0xf]
      %v8849 = vld [vmem:[%s69 + $0x54] sm:$0xf]
      %v8850 = vld [vmem:[%s69 + $0x58] sm:$0xf]
      %v8851 = vld [vmem:[%s69 + $0x5c] sm:$0xf]
      %v8852 = vld [vmem:[%s69 + $0x60] sm:$0xf]
      %v8853 = vld [vmem:[%s69 + $0x64] sm:$0xf]
      %v8854 = vld [vmem:[%s69 + $0x68] sm:$0xf]
      %v8855 = vld [vmem:[%s69 + $0x6c] sm:$0xf]
      %v8856 = vld [vmem:[%s69 + $0x70] sm:$0xf]
      %v8857 = vld [vmem:[%s69 + $0x74] sm:$0xf]
      %v8858 = vld [vmem:[%s69 + $0x78] sm:$0xf]
      %v8859 = vld [vmem:[%s69 + $0x7c] sm:$0xf]
      %v8860 = vld [vmem:[%s71] sm:$0x1]
      %v8862 = vlaneseq
      %v8863 = vshrl.u32 %v8862, 7
      %v8864 = vsub.s32 0, %v8863
      %v8865 = vrot.slane %v8860, %v8864
      %v8899 = vunpack.c.l.b16 %v8828
      %v8900 = vunpack.c.l.b16 %v8829
      %v8901 = vunpack.c.l.b16 %v8830
      %v8902 = vunpack.c.l.b16 %v8831
      %v8903 = vunpack.c.l.b16 %v8832
      %v8904 = vunpack.c.l.b16 %v8833
      %v8905 = vunpack.c.l.b16 %v8834
      %v8906 = vunpack.c.l.b16 %v8835
      %v8907 = vunpack.c.l.b16 %v8836
      %v8908 = vunpack.c.l.b16 %v8837
      %v8909 = vunpack.c.l.b16 %v8838
      %v8910 = vunpack.c.l.b16 %v8839
      %v8911 = vunpack.c.l.b16 %v8840
      %v8912 = vunpack.c.l.b16 %v8841
      %v8913 = vunpack.c.l.b16 %v8842
      %v8914 = vunpack.c.l.b16 %v8843
      %v8915 = vunpack.c.l.b16 %v8844
      %v8916 = vunpack.c.l.b16 %v8845
      %v8917 = vunpack.c.l.b16 %v8846
      %v8918 = vunpack.c.l.b16 %v8847
      %v8919 = vunpack.c.l.b16 %v8848
      %v8920 = vunpack.c.l.b16 %v8849
      %v8921 = vunpack.c.l.b16 %v8850
      %v8922 = vunpack.c.l.b16 %v8851
      %v8923 = vunpack.c.l.b16 %v8852
      %v8924 = vunpack.c.l.b16 %v8853
      %v8925 = vunpack.c.l.b16 %v8854
      %v8926 = vunpack.c.l.b16 %v8855
      %v8927 = vunpack.c.l.b16 %v8856
      %v8928 = vunpack.c.l.b16 %v8857
      %v8929 = vunpack.c.l.b16 %v8858
      %v8930 = vunpack.c.l.b16 %v8859
      %v8931 = vpack.c.b16 %v8900, %v8899
      %v8932 = vpack.c.b16 %v8902, %v8901
      %v8933 = vpack.c.b16 %v8904, %v8903
      %v8934 = vpack.c.b16 %v8906, %v8905
      %v8935 = vpack.c.b16 %v8908, %v8907
      %v8936 = vpack.c.b16 %v8910, %v8909
      %v8937 = vpack.c.b16 %v8912, %v8911
      %v8938 = vpack.c.b16 %v8914, %v8913
      %v8939 = vpack.c.b16 %v8916, %v8915
      %v8940 = vpack.c.b16 %v8918, %v8917
      %v8941 = vpack.c.b16 %v8920, %v8919
      %v8942 = vpack.c.b16 %v8922, %v8921
      %v8943 = vpack.c.b16 %v8924, %v8923
      %v8944 = vpack.c.b16 %v8926, %v8925
      %v8945 = vpack.c.b16 %v8928, %v8927
      %v8946 = vpack.c.b16 %v8930, %v8929
      %8963 = vmatprep.subr.bf16.mxu0 0
      %8964 = vmatpush1.bf16.msra.mxu0 %v8938
      %8965 = vmatprep.subr.bf16.mxu0 0
      %8966 = vmatpush1.bf16.msra.mxu0 %v8937
      %8967 = vmatprep.subr.bf16.mxu0 0
      %8968 = vmatpush1.bf16.msra.mxu0 %v8936
      %8969 = vmatprep.subr.bf16.mxu0 0
      %8970 = vmatpush1.bf16.msra.mxu0 %v8935
      %8971 = vmatprep.subr.bf16.mxu0 0
      %8972 = vmatpush1.bf16.msra.mxu0 %v8934
      %8973 = vmatprep.subr.bf16.mxu0 0
      %8974 = vmatpush1.bf16.msra.mxu0 %v8933
      %8975 = vmatprep.subr.bf16.mxu0 0
      %8976 = vmatpush1.bf16.msra.mxu0 %v8932
      %8977 = vmatprep.subr.bf16.mxu0 0
      %8978 = vmatpush1.bf16.msra.mxu0 %v8931
      %8979 = vmatprep.subr.bf16.mxu0 0
      %8980 = vmatpush2.bf16.msra.mxu0 %v8946
      %8981 = vmatprep.subr.bf16.mxu0 0
      %8982 = vmatpush2.bf16.msra.mxu0 %v8945
      %8983 = vmatprep.subr.bf16.mxu0 0
      %8984 = vmatpush2.bf16.msra.mxu0 %v8944
      %8985 = vmatprep.subr.bf16.mxu0 0
      %8986 = vmatpush2.bf16.msra.mxu0 %v8943
      %8987 = vmatprep.subr.bf16.mxu0 0
      %8988 = vmatpush2.bf16.msra.mxu0 %v8942
      %8989 = vmatprep.subr.bf16.mxu0 0
      %8990 = vmatpush2.bf16.msra.mxu0 %v8941
      %8991 = vmatprep.subr.bf16.mxu0 0
      %8992 = vmatpush2.bf16.msra.mxu0 %v8940
      %8993 = vmatprep.subr.bf16.mxu0 0
      %8994 = vmatpush2.bf16.msra.mxu0 %v8939
      %8995 = vmatprep.mubr.bf16.mxu0 %v8813
      %8996 = vmatmul.mubr.bf16.gmra.mxu0 %v8812
      %v8997 = vpop.f32.mrf.mxu0
      %v8998 = vadd.f32 %v8865, %v8997
      %v8999 = vpop.f32.mrf.mxu0
      %v9000 = vpop.f32.mrf.mxu0
      %v9001 = vadd.f32 %v8865, %v9000
      %v9002 = vpop.f32.mrf.mxu0
      %9003 = vmatprep.mubr.bf16.mxu0 %v8815
      %9004 = vmatmul.mubr.bf16.gmra.mxu0 %v8814
      %v9005 = vpop.f32.mrf.mxu0
      %v9006 = vadd.f32 %v8865, %v9005
      %v9007 = vpop.f32.mrf.mxu0
      %v9008 = vpop.f32.mrf.mxu0
      %v9009 = vadd.f32 %v8865, %v9008
      %v9010 = vpop.f32.mrf.mxu0
      %9011 = vmatprep.mubr.bf16.mxu0 %v8817
      %9012 = vmatmul.mubr.bf16.gmra.mxu0 %v8816
      %v9013 = vpop.f32.mrf.mxu0
      %v9014 = vadd.f32 %v8865, %v9013
      %v9015 = vpop.f32.mrf.mxu0
      %v9016 = vpop.f32.mrf.mxu0
      %v9017 = vadd.f32 %v8865, %v9016
      %v9018 = vpop.f32.mrf.mxu0
      %9019 = vmatprep.mubr.bf16.mxu0 %v8819
      %9020 = vmatmul.mubr.bf16.gmra.mxu0 %v8818
      %v9021 = vpop.f32.mrf.mxu0
      %v9022 = vadd.f32 %v8865, %v9021
      %v9023 = vpop.f32.mrf.mxu0
      %v9024 = vpop.f32.mrf.mxu0
      %v9025 = vadd.f32 %v8865, %v9024
      %v9026 = vpop.f32.mrf.mxu0
      %9027 = vmatprep.mubr.bf16.mxu0 %v8821
      %9028 = vmatmul.mubr.bf16.gmra.mxu0 %v8820
      %v9029 = vpop.f32.mrf.mxu0
      %v9030 = vadd.f32 %v8865, %v9029
      %v9031 = vpop.f32.mrf.mxu0
      %v9032 = vpop.f32.mrf.mxu0
      %v9033 = vadd.f32 %v8865, %v9032
      %v9034 = vpop.f32.mrf.mxu0
      %9035 = vmatprep.mubr.bf16.mxu0 %v8823
      %9036 = vmatmul.mubr.bf16.gmra.mxu0 %v8822
      %v9037 = vpop.f32.mrf.mxu0
      %v9038 = vadd.f32 %v8865, %v9037
      %v9039 = vpop.f32.mrf.mxu0
      %v9040 = vpop.f32.mrf.mxu0
      %v9041 = vadd.f32 %v8865, %v9040
      %v9042 = vpop.f32.mrf.mxu0
      %9043 = vmatprep.mubr.bf16.mxu0 %v8825
      %9044 = vmatmul.mubr.bf16.gmra.mxu0 %v8824
      %v9045 = vpop.f32.mrf.mxu0
      %v9046 = vadd.f32 %v8865, %v9045
      %v9047 = vpop.f32.mrf.mxu0
      %v9048 = vpop.f32.mrf.mxu0
      %v9049 = vadd.f32 %v8865, %v9048
      %v9050 = vpop.f32.mrf.mxu0
      %9051 = vmatprep.mubr.bf16.mxu0 %v8827
      %9052 = vmatmul.mubr.bf16.gmra.mxu0 %v8826
      %v9053 = vpop.f32.mrf.mxu0
      %v9054 = vadd.f32 %v8865, %v9053
      %v9055 = vpop.f32.mrf.mxu0
      %v9056 = vpop.f32.mrf.mxu0
      %v9057 = vadd.f32 %v8865, %v9056
      %v9058 = vpop.f32.mrf.mxu0
      %9059 = vdwg.mxu0
      %9060 = vst [vmem:[%s1134] sm:$0xff] %v8998
      %9061 = vst [vmem:[%s1134 + $0x8] sm:$0xff] %v9001
      %9062 = vst [vmem:[%s1134 + $0x10] sm:$0xff] %v9006
      %9063 = vst [vmem:[%s1134 + $0x18] sm:$0xff] %v9009
      %9064 = vst [vmem:[%s1134 + $0x20] sm:$0xff] %v9014
      %9065 = vst [vmem:[%s1134 + $0x28] sm:$0xff] %v9017
      %9066 = vst [vmem:[%s1134 + $0x30] sm:$0xff] %v9022
      %9067 = vst [vmem:[%s1134 + $0x38] sm:$0xff] %v9025
      %9068 = vst [vmem:[%s1134 + $0x40] sm:$0xff] %v9030
      %9069 = vst [vmem:[%s1134 + $0x48] sm:$0xff] %v9033
      %9070 = vst [vmem:[%s1134 + $0x50] sm:$0xff] %v9038
      %9071 = vst [vmem:[%s1134 + $0x58] sm:$0xff] %v9041
      %9072 = vst [vmem:[%s1134 + $0x60] sm:$0xff] %v9046
      %9073 = vst [vmem:[%s1134 + $0x68] sm:$0xff] %v9049
      %9074 = vst [vmem:[%s1134 + $0x70] sm:$0xff] %v9054
      %9075 = vst [vmem:[%s1134 + $0x78] sm:$0xff] %v9057
      %s9076 = smul.u32 16, %s89
      %p9077 = scmp.lt.s32.totalorder %s88, 1
      %s9078 = scalar_select %p9077, %s88, 1
      %p9079 = scmp.lt.s32.totalorder %s9076, 47
      %s9080 = scalar_select %p9079, %s9076, 47
      %s9081 = smul.addr %s9078, 48
      %s9082 = sadd.s32 %s9080, %s9081
      %s9083 = smul.addr %s9082, 8
      %s9084 = scalar_lea.vmem %s73, %s9083
      // Predicated region
      $region165: #{transaid_forward.1} parent=163 // pred_check
        %p9085 = pneg %p879
      $region166: #{transaid_forward.1} parent=163 // pred_check_branch
        %9087 = sbr.rel (%p9085) target = $region168
      $region167: #{transaid_forward.1} parent=163 // pred_region
        %s9088 = smul.u32 16, %s89
      $region168: #{transaid_forward.1} parent=163 // pred_fallthru
        _
    $region164: #{transaid_forward.1} parent=5 // pred_fallthru
      _
    %p9089 = scmp.le.s32.totalorder 2, %s79
    // Predicated region
    $region169: #{transaid_forward.1} parent=5 // pred_check
      %p9090 = pneg %p9089
    $region170: #{transaid_forward.1} parent=5 // pred_check_branch
      %9092 = sbr.rel (%p9090) target = $region172
    $region171: #{transaid_forward.1} parent=5 // pred_region
      %s9093 = ssub.s32 %s79, 2
      // Predicated region
      $region173: #{transaid_forward.1} parent=171 // pred_check
        %p9094 = pneg %p885
      $region174: #{transaid_forward.1} parent=171 // pred_check_branch
        %9096 = sbr.rel (%p9094) target = $region176
      $region175: #{transaid_forward.1} parent=171 // pred_region
        %s9097 = smul.u32 16, %s91
        %p9098 = scmp.lt.s32.totalorder %s90, 1
        %s9099 = scalar_select %p9098, %s90, 1
        %p9100 = scmp.lt.s32.totalorder %s9097, 47
        %s9101 = scalar_select %p9100, %s9097, 47
        %s9102 = smul.addr %s9099, 48
        %s9103 = sadd.s32 %s9101, %s9102
        %s9104 = smul.addr %s9103, 8
        %s9105 = scalar_lea.vmem %s73, %s9104
      $region176: #{transaid_forward.1} parent=171 // pred_fallthru
        _
    $region172: #{transaid_forward.1} parent=5 // pred_fallthru
      _
  $region6: #{transaid_forward.1} parent=0 // loop_footer
    %s83 = sadd.s32 1, %s79
  $region7: #{transaid_forward.1} parent=0 // loop_footer_branch
    %78 = sbr.rel target = $region3
  $region8: #{transaid_forward.1} parent=0 // loop_exit
    _

</llo_original>
